<compile_context>
chip_gen: v7x
topology: tpu7x:2x2x1
jax: 0.10.0
libtpu: 0.0.40
codegen_flags: <defaults>
</compile_context>

<pallas_src>
import functools

import numpy as np
import jax
import jax.numpy as jnp
from jax.experimental import pallas as pl
from jax.experimental.pallas import tpu as pltpu

# ----------------------------- configuration --------------------------------
B, D, C = 16, 32, 16         # batch, feature dim, number of true classes
C_PAD = 128                  # class axis of the logits padded to one lane width
ALPHA = 0.1
T_PLATT = 1.3                # TODO(synk): platt_logits SGD calibration not reproduced; T kept at its init value 1.3.
KREG, LAMDA = 5, 0.01        # TODO(synk): pick_parameters / pick_kreg / pick_lamda_* tuning loops not reproduced; fixed deterministically.
QHAT = 0.93                  # TODO(synk): conformal_calibration_logits (np.quantile over a calibration set) not reproduced; Qhat fixed.


def _round_up(v, m):
    return ((v + m - 1) // m) * m


def _pick_tile_b(bsz, tile_b_max=128):
    """Batch tile: multiple of 8, <= tile_b_max, and >=2 grid steps when possible."""
    b8 = _round_up(max(int(bsz), 1), 8)
    tile = min(tile_b_max, b8)
    if b8 // tile < 2 and b8 >= 16:          # split even small batches across 2 TCs (v7x)
        tile = max(8, (b8 // 2) // 8 * 8)
    return tile


# ------------------------------ fused kernel ---------------------------------
def _conformal_kernel(sf_ref,                                    # SMEM scalar prefetch: [1/T, Qhat]
                      x_ref, u_ref, w_ref, b_ref, pen_ref,       # VMEM inputs
                      logits_ref, idx_ref, sizes_ref,            # VMEM outputs
                      *, c_true, r_sort, randomized, allow_zero_sets):
    inv_t = sf_ref[0]
    tau = sf_ref[1]

    tb = x_ref.shape[0]
    cp = w_ref.shape[1]
    R = r_sort                                  # round_up(c_true, 8) << 128

    # ---- classifier head: logits = x @ W + b (MXU), lane-dense 128-wide ----
    logits = jnp.dot(x_ref[...], w_ref[...],
                     preferred_element_type=jnp.float32) + b_ref[...]
    logits_ref[...] = logits

    # ---- temperature-scaled softmax over the narrowed class slab ------------
    lg = logits[:, :R]                                          # (tb, R)
    posr = jax.lax.broadcasted_iota(jnp.int32, (tb, R), 1)
    valid = posr < c_true
    z = jnp.where(valid, lg * inv_t, -1e30)
    z = z - jnp.max(z, axis=1, keepdims=True)
    e = jnp.exp(z)
    scores = e / jnp.sum(e, axis=1, keepdims=True)
    scores = jnp.where(valid, scores, 0.0)                      # padded classes exactly 0

    # ---- batch-invariant (R, R) masks, hoisted out of the 3-D compares ------
    sub_i = jax.lax.broadcasted_iota(jnp.int32, (R, R), 0)      # sublane index
    lan_i = jax.lax.broadcasted_iota(jnp.int32, (R, R), 1)      # lane index
    eye_m = sub_i == lan_i
    lt_m = lan_i < sub_i                                        # index tie-break
    le_m = lan_i <= sub_i                                       # cumsum mask

    # ---- descending argsort via rank-by-comparison (narrowed to R x R) ------
    s_lane = scores[:, None, :]                                 # value = scores[i, lane]
    s_sub = jnp.sum(jnp.where(eye_m, s_lane, 0.0), axis=2, keepdims=True)   # scores[i, sub]
    beats = (s_lane > s_sub) | ((s_lane == s_sub) & lt_m)       # class `lane` precedes `sub`
    rank = jnp.sum(beats.astype(jnp.int32), axis=2)             # (tb, R): rank of class j

    onehot = rank[:, None, :] == sub_i                          # (tb, pos r, class j)
    ordered = jnp.sum(jnp.where(onehot, s_lane, 0.0), axis=2)   # (tb, R) sorted scores
    idx_r = jnp.sum(jnp.where(onehot, lan_i, 0), axis=2)        # (tb, R) sorted class ids

    # cumulative sum over ordered positions (lower-triangular masked reduce)
    cumsum = jnp.sum(jnp.where(le_m, ordered[:, None, :], 0.0), axis=2)     # (tb, R)

    # ---- gcq(): prediction-set sizes ----------------------------------------
    pen = pen_ref[...]                                          # (1, R) penalties cumsum
    le = (cumsum + pen <= tau) & valid
    sizes_base = jnp.sum(le.astype(jnp.int32), axis=1, keepdims=True) + 1
    sizes_base = jnp.minimum(sizes_base, c_true)

    if randomized:
        # boundary "gather" at column sizes_base - 1 via a one-hot mask
        sel = posr == (sizes_base - 1)
        ord_sel = jnp.sum(jnp.where(sel, ordered, 0.0), axis=1, keepdims=True)
        cum_sel = jnp.sum(jnp.where(sel, cumsum, 0.0), axis=1, keepdims=True)
        pen_sel = jnp.sum(jnp.where(sel, pen, 0.0), axis=1, keepdims=True)
        v = (tau - (cum_sel - ord_sel) - pen_sel) / jnp.maximum(ord_sel, 1e-30)
        u = u_ref[...]                                          # (tb, 1) per-row uniform
        sizes = sizes_base - (u >= v).astype(jnp.int32)
    else:
        sizes = sizes_base

    # Qhat == 1.0 -> full sets (scalar predicate, arithmetic blend)
    is_full = (tau == 1.0).astype(jnp.int32)
    sizes = sizes * (1 - is_full) + c_true * is_full
    if not allow_zero_sets:
        sizes = jnp.maximum(sizes, 1)
    sizes_ref[...] = sizes

    # sorted-indices output: dense 128-lane store, real entries in lanes [0, R)
    lane_cp = jax.lax.broadcasted_iota(jnp.int32, (tb, cp), 1)
    idx_ref[...] = lane_cp                    # positions >= R: identity (sliced off on host)
    idx_ref[:, :R] = idx_r


@functools.lru_cache(maxsize=None)
def _build_conformal_call(b_pad, d, c_pad, r_sort, tile_b, c_true,
                          randomized, allow_zero_sets):
    kernel = functools.partial(_conformal_kernel, c_true=c_true, r_sort=r_sort,
                               randomized=randomized, allow_zero_sets=allow_zero_sets)
    return pl.pallas_call(
        kernel,
        out_shape=(jax.ShapeDtypeStruct((b_pad, c_pad), jnp.float32),   # logits
                   jax.ShapeDtypeStruct((b_pad, c_pad), jnp.int32),     # sorted class indices I
                   jax.ShapeDtypeStruct((b_pad, 1), jnp.int32)),        # prediction-set sizes
        grid_spec=pltpu.PrefetchScalarGridSpec(
            num_scalar_prefetch=1,
            grid=(b_pad // tile_b,),
            in_specs=[
                pl.BlockSpec((tile_b, d), lambda i, sf: (i, 0)),        # x tile
                pl.BlockSpec((tile_b, 1), lambda i, sf: (i, 0)),        # per-row uniforms
                pl.BlockSpec((d, c_pad), lambda i, sf: (0, 0)),         # W (replicated)
                pl.BlockSpec((1, c_pad), lambda i, sf: (0, 0)),         # bias
                pl.BlockSpec((1, r_sort), lambda i, sf: (0, 0)),        # penalties cumsum
            ],
            out_specs=(
                pl.BlockSpec((tile_b, c_pad), lambda i, sf: (i, 0)),
                pl.BlockSpec((tile_b, c_pad), lambda i, sf: (i, 0)),
                pl.BlockSpec((tile_b, 1), lambda i, sf: (i, 0)),
            ),
        ),
        compiler_params=pltpu.CompilerParams(
            dimension_semantics=("parallel",),   # batch tiles shard across TCs (v7x megacore)
        ),
    )


@functools.partial(jax.jit, static_argnames=("c_true", "r_sort", "tile_b",
                                             "randomized", "allow_zero_sets"))
def _device_forward(x, sf, seed, w_p, b_p, pen_p,
                    c_true, r_sort, tile_b, randomized, allow_zero_sets):
    bsz, d = x.shape
    c_pad = w_p.shape[1]
    b_pad = _round_up(bsz, tile_b)
    x_p = x if b_pad == bsz else jnp.pad(x, ((0, b_pad - bsz), (0, 0)))
    if randomized:
        # one uniform per row, matching np.random.random(V.shape) in gcq()
        u = jax.random.uniform(jax.random.PRNGKey(seed), (b_pad, 1), dtype=jnp.float32)
    else:
        u = jnp.zeros((b_pad, 1), jnp.float32)
    call = _build_conformal_call(b_pad, d, c_pad, r_sort, tile_b, c_true,
                                 randomized, allow_zero_sets)
    logits_p, idx_p, sizes_p = call(sf, x_p, u, w_p, b_p, pen_p)
    return logits_p[:bsz, :c_true], idx_p[:bsz, :c_true], sizes_p[:bsz, 0]


# ------------------------------ forward glue ---------------------------------
def make_conformal_forward(W, bvec, penalties, T, qhat, num_classes,
                           c_pad=C_PAD, tile_b_max=128):
    """Pads the (fixed) parameters once and returns forward(x, seed, ...)."""
    d, c_true = W.shape
    assert c_true == num_classes and c_true <= c_pad
    c_pad = _round_up(max(c_pad, c_true), 128)
    r_sort = min(_round_up(c_true, 8), c_pad)
    pad = c_pad - c_true
    w_p = jnp.asarray(np.pad(np.asarray(W, np.float32), ((0, 0), (0, pad))))
    b_p = jnp.asarray(np.pad(np.asarray(bvec, np.float32).reshape(1, -1), ((0, 0), (0, pad))))
    pen_cs = np.cumsum(np.asarray(penalties, np.float32), axis=1)       # (1, c_true)
    pen_p = jnp.asarray(np.pad(pen_cs, ((0, 0), (0, r_sort - c_true)), mode="edge"))
    sf = jnp.asarray([1.0 / float(T), float(qhat)], dtype=jnp.float32)

    def forward(x, seed=0, randomized=True, allow_zero_sets=False):
        bsz = int(x.shape[0])
        tile_b = _pick_tile_b(bsz, tile_b_max)
        logits, idx, sizes = _device_forward(
            x, sf, jnp.asarray(seed, dtype=jnp.int32), w_p, b_p, pen_p,
            c_true=c_true, r_sort=r_sort, tile_b=tile_b,
            randomized=bool(randomized), allow_zero_sets=bool(allow_zero_sets))
        # single D2H round trip for both ragged-set ingredients
        idx_np, sizes_np = jax.device_get((idx, sizes))
        # ragged Python-list prediction sets (host-side by construction)
        S = [idx_np[i, :int(sizes_np[i])] for i in range(bsz)]
        return logits, S

    return forward


# ---------------------------------- main --------------------------------------
if __name__ == "__main__":
    key = jax.random.PRNGKey(0)
    kx, kw, kb = jax.random.split(key, 3)

    # deterministic synthetic inputs / parameters for the linear classifier head
    x = jax.random.normal(kx, (B, D), dtype=jnp.float32)
    W = jax.random.normal(kw, (D, C), dtype=jnp.float32) * 0.1
    bvec = jax.random.normal(kb, (1, C), dtype=jnp.float32) * 0.01

    penalties = np.zeros((1, C), dtype=np.float32)
    penalties[:, KREG:] += LAMDA                      # self.penalties[:, kreg:] += lamda

    forward = make_conformal_forward(W, bvec, penalties, T_PLATT, QHAT, C)

    logits, S = forward(x, seed=1234, randomized=True, allow_zero_sets=False)
    jax.block_until_ready(logits)

    # sanity: logits match the linear head, prediction sets are well formed
    ref_logits = np.asarray(x) @ np.asarray(W) + np.asarray(bvec)
    np.testing.assert_allclose(np.asarray(logits), ref_logits, rtol=1e-2, atol=1e-2)
    z = ref_logits / T_PLATT
    z = z - z.max(axis=1, keepdims=True)
    sc = np.exp(z)
    sc = sc / sc.sum(axis=1, keepdims=True)

    assert logits.shape == (B, C)
    assert len(S) == B
    for i, s in enumerate(S):
        assert 1 <= s.shape[0] <= C
        assert np.all((s >= 0) & (s < C))
        assert len(np.unique(s)) == s.shape[0]
        vals = sc[i, s]
        assert np.all(np.diff(vals) <= 1e-6)          # listed in descending score order
        assert int(s[0]) == int(np.argmax(sc[i]))     # top-1 class always in the set

    # exercise the non-randomized static branch too
    logits2, S2 = forward(x, seed=0, randomized=False, allow_zero_sets=False)
    jax.block_until_ready(logits2)
    assert len(S2) == B and all(1 <= t.shape[0] <= C for t in S2)

    print("KERNEL_OK")
</pallas_src>

<mosaic_0001>
module attributes {stable_mosaic.version = 11 : i64} {
  func.func @_conformal_kernel(%arg0: i32, %arg1: memref<2xf32, #tpu.memory_space<smem>>, %arg2: memref<8x32xf32, #tpu.memory_space<vmem>>, %arg3: memref<8x1xf32, #tpu.memory_space<vmem>>, %arg4: memref<32x128xf32, #tpu.memory_space<vmem>>, %arg5: memref<1x128xf32, #tpu.memory_space<vmem>>, %arg6: memref<1x16xf32, #tpu.memory_space<vmem>>, %arg7: memref<8x128xf32, #tpu.memory_space<vmem>>, %arg8: memref<8x128xi32, #tpu.memory_space<vmem>>, %arg9: memref<8x1xi32, #tpu.memory_space<vmem>>) attributes {dimension_semantics = [#tpu.dimension_semantics<parallel>], iteration_bounds = array<i64: 2>, scalar_prefetch = 1 : i64, scratch_operands = 0 : i64, tpu.core_type = #tpu.core_type<tc>, window_params = [{transform_indices = @transform_0, window_bounds = array<i64: 8, 32>}, {transform_indices = @transform_1, window_bounds = array<i64: 8, 1>}, {pipeline_mode = #tpu.pipeline_mode<synchronous>, transform_indices = @transform_2, window_bounds = array<i64: 32, 128>}, {pipeline_mode = #tpu.pipeline_mode<synchronous>, transform_indices = @transform_3, window_bounds = array<i64: 1, 128>}, {pipeline_mode = #tpu.pipeline_mode<synchronous>, transform_indices = @transform_4, window_bounds = array<i64: 1, 16>}, {transform_indices = @transform_5, window_bounds = array<i64: 8, 128>}, {transform_indices = @transform_6, window_bounds = array<i64: 8, 128>}, {transform_indices = @transform_7, window_bounds = array<i64: 8, 1>}]} {
    %c0 = arith.constant 0 : index
    %0 = memref.load %arg1[%c0] : memref<2xf32, #tpu.memory_space<smem>>
    %c1 = arith.constant 1 : index
    %1 = memref.load %arg1[%c1] : memref<2xf32, #tpu.memory_space<smem>>
    %c0_0 = arith.constant 0 : index
    %c0_1 = arith.constant 0 : index
    %2 = vector.load %arg2[%c0_0, %c0_1] : memref<8x32xf32, #tpu.memory_space<vmem>>, vector<8x32xf32>
    %c0_2 = arith.constant 0 : index
    %c0_3 = arith.constant 0 : index
    %3 = vector.load %arg4[%c0_2, %c0_3] : memref<32x128xf32, #tpu.memory_space<vmem>>, vector<32x128xf32>
    %cst = arith.constant dense<0.000000e+00> : vector<8x128xf32>
    %4 = tpu.matmul %2, %3, %cst {dimension_numbers = #tpu.dot_dimension_numbers<[1], [0], [0], [1], [0, 0, 1, 1], [], []>} : vector<8x32xf32>, vector<32x128xf32>, vector<8x128xf32> -> vector<8x128xf32>
    %c0_4 = arith.constant 0 : index
    %c0_5 = arith.constant 0 : index
    %5 = vector.load %arg5[%c0_4, %c0_5] : memref<1x128xf32, #tpu.memory_space<vmem>>, vector<1x128xf32>
    %6 = vector.broadcast %5 : vector<1x128xf32> to vector<8x128xf32>
    %7 = arith.addf %4, %6 : vector<8x128xf32>
    %c0_6 = arith.constant 0 : index
    %c0_7 = arith.constant 0 : index
    %8 = vector.load %arg7[%c0_6, %c0_7] : memref<8x128xf32, #tpu.memory_space<vmem>>, vector<8x128xf32>
    tpu.vector_store %arg7[%c0_6, %c0_7], %7 {strides = array<i32>} : memref<8x128xf32, #tpu.memory_space<vmem>>, vector<8x128xf32>,
    %9 = vector.extract_strided_slice %7 {offsets = [0, 0], sizes = [8, 16], strides = [1, 1]} : vector<8x128xf32> to vector<8x16xf32>
    %10 = tpu.iota {dimensions = array<i32: 1>} : vector<8x16xi32>
    %c16_i32 = arith.constant 16 : i32
    %11 = vector.broadcast %c16_i32 : i32 to vector<8x16xi32>
    %12 = arith.cmpi slt, %10, %11 : vector<8x16xi32>
    %13 = vector.broadcast %0 : f32 to vector<8x16xf32>
    %14 = arith.mulf %9, %13 : vector<8x16xf32>
    %cst_8 = arith.constant -1.000000e+30 : f32
    %15 = vector.broadcast %cst_8 : f32 to vector<8x16xf32>
    %16 = arith.select %12, %14, %15 : vector<8x16xi1>, vector<8x16xf32>
    %cst_9 = arith.constant dense<0xFF800000> : vector<8xf32>
    %17 = vector.multi_reduction <maximumf>, %16, %cst_9 [1] : vector<8x16xf32> to vector<8xf32>
    %18 = vector.shape_cast %17 : vector<8xf32> to vector<8x1xf32>
    %19 = vector.broadcast %18 : vector<8x1xf32> to vector<8x16xf32>
    %20 = arith.subf %16, %19 : vector<8x16xf32>
    %21 = math.exp %20 : vector<8x16xf32>
    %cst_10 = arith.constant dense<0.000000e+00> : vector<8xf32>
    %22 = vector.multi_reduction <add>, %21, %cst_10 [1] : vector<8x16xf32> to vector<8xf32>
    %23 = vector.shape_cast %22 : vector<8xf32> to vector<8x1xf32>
    %24 = vector.broadcast %23 : vector<8x1xf32> to vector<8x16xf32>
    %25 = arith.divf %21, %24 : vector<8x16xf32>
    %cst_11 = arith.constant 0.000000e+00 : f32
    %26 = vector.broadcast %cst_11 : f32 to vector<8x16xf32>
    %27 = arith.select %12, %25, %26 : vector<8x16xi1>, vector<8x16xf32>
    %28 = tpu.iota {dimensions = array<i32: 0>} : vector<16x16xi32>
    %29 = tpu.iota {dimensions = array<i32: 1>} : vector<16x16xi32>
    %30 = arith.cmpi eq, %28, %29 : vector<16x16xi32>
    %31 = arith.cmpi slt, %29, %28 : vector<16x16xi32>
    %32 = arith.cmpi sle, %29, %28 : vector<16x16xi32>
    %33 = vector.shape_cast %27 : vector<8x16xf32> to vector<8x1x16xf32>
    %cst_12 = arith.constant 0.000000e+00 : f32
    %34 = vector.shape_cast %30 : vector<16x16xi1> to vector<1x16x16xi1>
    %35 = vector.broadcast %34 : vector<1x16x16xi1> to vector<8x16x16xi1>
    %36 = vector.shape_cast %33 : vector<8x1x16xf32> to vector<8x1x16xf32>
    %37 = vector.broadcast %36 : vector<8x1x16xf32> to vector<8x16x16xf32>
    %38 = vector.broadcast %cst_12 : f32 to vector<8x16x16xf32>
    %39 = arith.select %35, %37, %38 : vector<8x16x16xi1>, vector<8x16x16xf32>
    %cst_13 = arith.constant dense<0.000000e+00> : vector<8x16xf32>
    %40 = vector.multi_reduction <add>, %39, %cst_13 [2] : vector<8x16x16xf32> to vector<8x16xf32>
    %41 = vector.shape_cast %40 : vector<8x16xf32> to vector<8x16x1xf32>
    %42 = vector.broadcast %33 : vector<8x1x16xf32> to vector<8x16x16xf32>
    %43 = vector.broadcast %41 : vector<8x16x1xf32> to vector<8x16x16xf32>
    %44 = arith.cmpf ogt, %42, %43 : vector<8x16x16xf32>
    %45 = vector.broadcast %33 : vector<8x1x16xf32> to vector<8x16x16xf32>
    %46 = vector.broadcast %41 : vector<8x16x1xf32> to vector<8x16x16xf32>
    %47 = arith.cmpf oeq, %45, %46 : vector<8x16x16xf32>
    %48 = vector.shape_cast %31 : vector<16x16xi1> to vector<1x16x16xi1>
    %49 = vector.broadcast %48 : vector<1x16x16xi1> to vector<8x16x16xi1>
    %50 = arith.andi %47, %49 : vector<8x16x16xi1>
    %51 = arith.ori %44, %50 : vector<8x16x16xi1>
    %52 = arith.extui %51 : vector<8x16x16xi1> to vector<8x16x16xi32>
    %cst_14 = arith.constant dense<0> : vector<8x16xi32>
    %53 = vector.multi_reduction <add>, %52, %cst_14 [2] : vector<8x16x16xi32> to vector<8x16xi32>
    %54 = vector.shape_cast %53 : vector<8x16xi32> to vector<8x1x16xi32>
    %55 = vector.shape_cast %28 : vector<16x16xi32> to vector<1x16x16xi32>
    %56 = vector.broadcast %54 : vector<8x1x16xi32> to vector<8x16x16xi32>
    %57 = vector.broadcast %55 : vector<1x16x16xi32> to vector<8x16x16xi32>
    %58 = arith.cmpi eq, %56, %57 : vector<8x16x16xi32>
    %cst_15 = arith.constant 0.000000e+00 : f32
    %59 = vector.shape_cast %33 : vector<8x1x16xf32> to vector<8x1x16xf32>
    %60 = vector.broadcast %59 : vector<8x1x16xf32> to vector<8x16x16xf32>
    %61 = vector.broadcast %cst_15 : f32 to vector<8x16x16xf32>
    %62 = arith.select %58, %60, %61 : vector<8x16x16xi1>, vector<8x16x16xf32>
    %cst_16 = arith.constant dense<0.000000e+00> : vector<8x16xf32>
    %63 = vector.multi_reduction <add>, %62, %cst_16 [2] : vector<8x16x16xf32> to vector<8x16xf32>
    %c0_i32 = arith.constant 0 : i32
    %64 = vector.shape_cast %29 : vector<16x16xi32> to vector<1x16x16xi32>
    %65 = vector.broadcast %64 : vector<1x16x16xi32> to vector<8x16x16xi32>
    %66 = vector.broadcast %c0_i32 : i32 to vector<8x16x16xi32>
    %67 = arith.select %58, %65, %66 : vector<8x16x16xi1>, vector<8x16x16xi32>
    %cst_17 = arith.constant dense<0> : vector<8x16xi32>
    %68 = vector.multi_reduction <add>, %67, %cst_17 [2] : vector<8x16x16xi32> to vector<8x16xi32>
    %69 = vector.shape_cast %63 : vector<8x16xf32> to vector<8x1x16xf32>
    %cst_18 = arith.constant 0.000000e+00 : f32
    %70 = vector.shape_cast %32 : vector<16x16xi1> to vector<1x16x16xi1>
    %71 = vector.broadcast %70 : vector<1x16x16xi1> to vector<8x16x16xi1>
    %72 = vector.shape_cast %69 : vector<8x1x16xf32> to vector<8x1x16xf32>
    %73 = vector.broadcast %72 : vector<8x1x16xf32> to vector<8x16x16xf32>
    %74 = vector.broadcast %cst_18 : f32 to vector<8x16x16xf32>
    %75 = arith.select %71, %73, %74 : vector<8x16x16xi1>, vector<8x16x16xf32>
    %cst_19 = arith.constant dense<0.000000e+00> : vector<8x16xf32>
    %76 = vector.multi_reduction <add>, %75, %cst_19 [2] : vector<8x16x16xf32> to vector<8x16xf32>
    %c0_20 = arith.constant 0 : index
    %c0_21 = arith.constant 0 : index
    %77 = vector.load %arg6[%c0_20, %c0_21] : memref<1x16xf32, #tpu.memory_space<vmem>>, vector<1x16xf32>
    %78 = vector.broadcast %77 : vector<1x16xf32> to vector<8x16xf32>
    %79 = arith.addf %76, %78 : vector<8x16xf32>
    %80 = vector.broadcast %1 : f32 to vector<8x16xf32>
    %81 = arith.cmpf ole, %79, %80 : vector<8x16xf32>
    %82 = arith.andi %81, %12 : vector<8x16xi1>
    %83 = arith.extui %82 : vector<8x16xi1> to vector<8x16xi32>
    %cst_22 = arith.constant dense<0> : vector<8xi32>
    %84 = vector.multi_reduction <add>, %83, %cst_22 [1] : vector<8x16xi32> to vector<8xi32>
    %85 = vector.shape_cast %84 : vector<8xi32> to vector<8x1xi32>
    %c1_i32 = arith.constant 1 : i32
    %86 = vector.broadcast %c1_i32 : i32 to vector<8x1xi32>
    %87 = arith.addi %85, %86 : vector<8x1xi32>
    %c16_i32_23 = arith.constant 16 : i32
    %88 = vector.broadcast %c16_i32_23 : i32 to vector<8x1xi32>
    %89 = arith.minsi %87, %88 : vector<8x1xi32>
    %c1_i32_24 = arith.constant 1 : i32
    %90 = vector.broadcast %c1_i32_24 : i32 to vector<8x1xi32>
    %91 = arith.subi %89, %90 : vector<8x1xi32>
    %92 = vector.broadcast %91 : vector<8x1xi32> to vector<8x16xi32>
    %93 = arith.cmpi eq, %10, %92 : vector<8x16xi32>
    %cst_25 = arith.constant 0.000000e+00 : f32
    %94 = vector.broadcast %cst_25 : f32 to vector<8x16xf32>
    %95 = arith.select %93, %63, %94 : vector<8x16xi1>, vector<8x16xf32>
    %cst_26 = arith.constant dense<0.000000e+00> : vector<8xf32>
    %96 = vector.multi_reduction <add>, %95, %cst_26 [1] : vector<8x16xf32> to vector<8xf32>
    %97 = vector.shape_cast %96 : vector<8xf32> to vector<8x1xf32>
    %cst_27 = arith.constant 0.000000e+00 : f32
    %98 = vector.broadcast %cst_27 : f32 to vector<8x16xf32>
    %99 = arith.select %93, %76, %98 : vector<8x16xi1>, vector<8x16xf32>
    %cst_28 = arith.constant dense<0.000000e+00> : vector<8xf32>
    %100 = vector.multi_reduction <add>, %99, %cst_28 [1] : vector<8x16xf32> to vector<8xf32>
    %101 = vector.shape_cast %100 : vector<8xf32> to vector<8x1xf32>
    %cst_29 = arith.constant 0.000000e+00 : f32
    %102 = vector.shape_cast %77 : vector<1x16xf32> to vector<1x16xf32>
    %103 = vector.broadcast %102 : vector<1x16xf32> to vector<8x16xf32>
    %104 = vector.broadcast %cst_29 : f32 to vector<8x16xf32>
    %105 = arith.select %93, %103, %104 : vector<8x16xi1>, vector<8x16xf32>
    %cst_30 = arith.constant dense<0.000000e+00> : vector<8xf32>
    %106 = vector.multi_reduction <add>, %105, %cst_30 [1] : vector<8x16xf32> to vector<8xf32>
    %107 = vector.shape_cast %106 : vector<8xf32> to vector<8x1xf32>
    %108 = arith.subf %101, %97 : vector<8x1xf32>
    %109 = vector.broadcast %1 : f32 to vector<8x1xf32>
    %110 = arith.subf %109, %108 : vector<8x1xf32>
    %111 = arith.subf %110, %107 : vector<8x1xf32>
    %cst_31 = arith.constant 1.000000e-30 : f32
    %112 = vector.broadcast %cst_31 : f32 to vector<8x1xf32>
    %113 = arith.maximumf %97, %112 : vector<8x1xf32>
    %114 = arith.divf %111, %113 : vector<8x1xf32>
    %c0_32 = arith.constant 0 : index
    %c0_33 = arith.constant 0 : index
    %115 = vector.load %arg3[%c0_32, %c0_33] : memref<8x1xf32, #tpu.memory_space<vmem>>, vector<8x1xf32>
    %116 = arith.cmpf oge, %115, %114 : vector<8x1xf32>
    %117 = arith.extui %116 : vector<8x1xi1> to vector<8x1xi32>
    %118 = arith.subi %89, %117 : vector<8x1xi32>
    %cst_34 = arith.constant 1.000000e+00 : f32
    %119 = arith.cmpf oeq, %1, %cst_34 : f32
    %120 = arith.extui %119 : i1 to i32
    %c1_i32_35 = arith.constant 1 : i32
    %121 = arith.subi %c1_i32_35, %120 : i32
    %122 = vector.broadcast %121 : i32 to vector<8x1xi32>
    %123 = arith.muli %118, %122 : vector<8x1xi32>
    %c16_i32_36 = arith.constant 16 : i32
    %124 = arith.muli %c16_i32_36, %120 : i32
    %125 = vector.broadcast %124 : i32 to vector<8x1xi32>
    %126 = arith.addi %123, %125 : vector<8x1xi32>
    %c1_i32_37 = arith.constant 1 : i32
    %127 = vector.broadcast %c1_i32_37 : i32 to vector<8x1xi32>
    %128 = arith.maxsi %126, %127 : vector<8x1xi32>
    %c0_38 = arith.constant 0 : index
    %c0_39 = arith.constant 0 : index
    %129 = vector.load %arg9[%c0_38, %c0_39] : memref<8x1xi32, #tpu.memory_space<vmem>>, vector<8x1xi32>
    tpu.vector_store %arg9[%c0_38, %c0_39], %128 {strides = array<i32>} : memref<8x1xi32, #tpu.memory_space<vmem>>, vector<8x1xi32>,
    %130 = tpu.iota {dimensions = array<i32: 1>} : vector<8x128xi32>
    %c0_40 = arith.constant 0 : index
    %c0_41 = arith.constant 0 : index
    %131 = vector.load %arg8[%c0_40, %c0_41] : memref<8x128xi32, #tpu.memory_space<vmem>>, vector<8x128xi32>
    tpu.vector_store %arg8[%c0_40, %c0_41], %130 {strides = array<i32>} : memref<8x128xi32, #tpu.memory_space<vmem>>, vector<8x128xi32>,
    %c0_42 = arith.constant 0 : index
    %c0_43 = arith.constant 0 : index
    %132 = vector.load %arg8[%c0_42, %c0_43] : memref<8x128xi32, #tpu.memory_space<vmem>>, vector<8x16xi32>
    tpu.vector_store %arg8[%c0_42, %c0_43], %68 {strides = array<i32>} : memref<8x128xi32, #tpu.memory_space<vmem>>, vector<8x16xi32>,
    return
  }
  func.func @transform_0(%arg0: i32, %arg1: memref<2xf32, #tpu.memory_space<smem>>) -> (i32, i32) {
    %c0_i32 = arith.constant 0 : i32
    %c0_i32_0 = arith.constant 0 : i32
    return %arg0, %c0_i32 : i32, i32
  }
  func.func @transform_1(%arg0: i32, %arg1: memref<2xf32, #tpu.memory_space<smem>>) -> (i32, i32) {
    %c0_i32 = arith.constant 0 : i32
    %c0_i32_0 = arith.constant 0 : i32
    return %arg0, %c0_i32 : i32, i32
  }
  func.func @transform_2(%arg0: i32, %arg1: memref<2xf32, #tpu.memory_space<smem>>) -> (i32, i32) {
    %c0_i32 = arith.constant 0 : i32
    %c0_i32_0 = arith.constant 0 : i32
    %c0_i32_1 = arith.constant 0 : i32
    return %c0_i32, %c0_i32_0 : i32, i32
  }
  func.func @transform_3(%arg0: i32, %arg1: memref<2xf32, #tpu.memory_space<smem>>) -> (i32, i32) {
    %c0_i32 = arith.constant 0 : i32
    %c0_i32_0 = arith.constant 0 : i32
    %c0_i32_1 = arith.constant 0 : i32
    return %c0_i32, %c0_i32_0 : i32, i32
  }
  func.func @transform_4(%arg0: i32, %arg1: memref<2xf32, #tpu.memory_space<smem>>) -> (i32, i32) {
    %c0_i32 = arith.constant 0 : i32
    %c0_i32_0 = arith.constant 0 : i32
    %c0_i32_1 = arith.constant 0 : i32
    return %c0_i32, %c0_i32_0 : i32, i32
  }
  func.func @transform_5(%arg0: i32, %arg1: memref<2xf32, #tpu.memory_space<smem>>) -> (i32, i32) {
    %c0_i32 = arith.constant 0 : i32
    %c0_i32_0 = arith.constant 0 : i32
    return %arg0, %c0_i32 : i32, i32
  }
  func.func @transform_6(%arg0: i32, %arg1: memref<2xf32, #tpu.memory_space<smem>>) -> (i32, i32) {
    %c0_i32 = arith.constant 0 : i32
    %c0_i32_0 = arith.constant 0 : i32
    return %arg0, %c0_i32 : i32, i32
  }
  func.func @transform_7(%arg0: i32, %arg1: memref<2xf32, #tpu.memory_space<smem>>) -> (i32, i32) {
    %c0_i32 = arith.constant 0 : i32
    %c0_i32_0 = arith.constant 0 : i32
    return %arg0, %c0_i32 : i32, i32
  }
}

</mosaic_0001>

<llo_original>
// kernel: _device_forward.1
$region0: #{_device_forward.1}
  #allocation0 [shape = 'u32[]', space=smem, size = 0x4, offset = 0x4, fixed_abs, tag = 'smem constant byte address 0x4 - core index']
  #allocation1 [shape = 'u32[144,128]{1,0:T(1,128)}', space=vmem, size = 0x12000, scoped, tag = 'internal scratch']
  #allocation2 [shape = 's32[1]{0}', space=sflag, size = 0x4, scoped, tag = 'scoped memory for _device_forward.1']
  #allocation3 [shape = 'u8[512]{0}', space=smem, size = 0x200, scoped, tag = 'prefetched SMEM operand 0']
  %s0 = inlined_call_operand.vmem [shape: f32[2], index: 0, kind: input, shape index: {}]
  %s1 = inlined_call_operand.vmem [shape: f32[16,32], index: 1, kind: input, shape index: {}]
  %s2 = inlined_call_operand.vmem [shape: f32[16,1], index: 2, kind: input, shape index: {}]
  %s3 = inlined_call_operand.vmem [shape: f32[32,128], index: 3, kind: input, shape index: {}]
  %s4 = inlined_call_operand.vmem [shape: f32[1,128], index: 4, kind: input, shape index: {}]
  %s5 = inlined_call_operand.vmem [shape: f32[1,16], index: 5, kind: input, shape index: {}]
  %s6 = inlined_call_operand.hbm [shape: f32[16,128], index: 6, kind: output, shape index: {0}]
  %s7 = inlined_call_operand.hbm [shape: s32[16,128], index: 7, kind: output, shape index: {1}]
  %s8 = inlined_call_operand.vmem [shape: s32[16,1], index: 8, kind: output, shape index: {2}]
  %9 = xla_tuple %s6, %s7, %s8
  %s10 = sld [smem:[#allocation0]]
  $region69: #{_device_forward.1} parent=0
    _
  %s12 = ssub.s32 1, %s10
  %s13 = scalar_select 0, %s12, %s10
  %s14 = sshll.u32 %s0, 4
  %s15 = int_to_ptr.vmem [resolvable:$true] %s14
  %17 = dma.vmem_to_smem %s15, 16, [#allocation3], [#allocation2]
  %18 = dma.done [#allocation2], 16
  %19 = sfence
  $region1: #{_device_forward.1} parent=0
    #allocation4 [shape = 'u8[8192]{0}', space=vmem, size = 0x2000, scoped, tag = 'output window, operand 0']
    #allocation5 [shape = 's32[2]{0}', space=sflag, size = 0x8, scoped, tag = 'scoped memory for _device_forward.1']
    #allocation6 [shape = 'u8[8192]{0}', space=vmem, size = 0x2000, scoped, tag = 'output window, operand 1']
    #allocation7 [shape = 's32[2]{0}', space=sflag, size = 0x8, scoped, tag = 'scoped memory for _device_forward.1']
    %20 = vsyncpa [#allocation5], 0
    %s21 = scalar_lea.sflag [#allocation5], 1
    %22 = vsyncpa %s21, 0
    %23 = vsyncpa [#allocation7], 0
    %s24 = scalar_lea.sflag [#allocation7], 1
    %25 = vsyncpa %s24, 0
    loop: start=0, step=1, limit=4
    $region2: #{_device_forward.1} parent=1 // loop_pre_header
      _
    $region3: #{_device_forward.1} parent=1 // loop_header
      %s27 = sphi 0, %s31
      %p28 = scmp.ge.s32.totalorder %s27, 4
      %s37 = sphi 0, %s39
      %s40 = sphi 0, %s37
      %s41 = sphi 0, %s40
      %s57 = sphi 0, %s41
      %s63 = sphi 0, %s65
      %s66 = sphi 0, %s63
      %s67 = sphi 0, %s66
      %s83 = sphi 0, %s67
      %s87 = sphi 0, %s87
      %s89 = sphi 0, %s87
      %s90 = sphi 0, %s89
      %s104 = sphi 0, %s90
      %s108 = sphi 0, %s108
      %s110 = sphi 0, %s108
      %s111 = sphi 0, %s110
      %s125 = sphi 0, %s111
      %s129 = sphi 0, %s129
      %s131 = sphi 0, %s129
      %s132 = sphi 0, %s131
      %s146 = sphi 0, %s132
      %s152 = sphi 0, %s154
      %s155 = sphi 0, %s152
      %s156 = sphi 0, %s155
      %s172 = sphi 0, %s156
      %s178 = sphi 0, %s180
      %s181 = sphi 0, %s178
      %s182 = sphi 0, %s181
      %s198 = sphi 0, %s182
      %s204 = sphi 0, %s206
      %s207 = sphi 0, %s204
      %s208 = sphi 0, %s207
      %s224 = sphi 0, %s208
    $region4: #{_device_forward.1} parent=1 // loop_header_branch
      %30 = sbr.rel (%p28) target = $region8
    $region5: #{_device_forward.1} parent=1 // loop_body
      %s32 = ssub.s32 %s27, 1
      %s33 = ssub.s32 %s27, 2
      %s34 = sadd.s32 %s27, 1
      %s35 = ssub.s32 %s27, %s34
      %p36 = scmp.eq.s32.totalorder %s35, 0
      %s38 = sadd.s32 %s37, 1
      %s39 = scalar_select %p36, %s37, %s38
      %p42 = pneg %p36
      %p43 = scmp.eq.s32.totalorder %s27, 1
      %p44 = por %p42, %p43
      %p45 = scmp.ne.s32.totalorder %s37, %s40
      %p46 = scmp.eq.s32.totalorder %s27, 0
      %p47 = por %p45, %p46
      %p48 = scmp.ne.s32.totalorder %s37, %s40
      %p49 = scmp.eq.s32.totalorder %s32, 1
      %p50 = por %p48, %p49
      %p51 = scmp.ne.s32.totalorder %s40, %s41
      %p52 = scmp.eq.s32.totalorder %s32, 0
      %p53 = por %p51, %p52
      %p54 = scmp.ne.s32.totalorder %s40, %s41
      %p55 = scmp.eq.s32.totalorder %s33, 1
      %p56 = por %p54, %p55
      %p58 = scmp.ne.s32.totalorder %s41, %s57
      %p59 = scmp.eq.s32.totalorder %s33, 0
      %p60 = por %p58, %p59
      %s61 = ssub.s32 %s27, %s34
      %p62 = scmp.eq.s32.totalorder %s61, 0
      %s64 = sadd.s32 %s63, 1
      %s65 = scalar_select %p62, %s63, %s64
      %p68 = pneg %p62
      %p69 = scmp.eq.s32.totalorder %s27, 1
      %p70 = por %p68, %p69
      %p71 = scmp.ne.s32.totalorder %s63, %s66
      %p72 = scmp.eq.s32.totalorder %s27, 0
      %p73 = por %p71, %p72
      %p74 = scmp.ne.s32.totalorder %s63, %s66
      %p75 = scmp.eq.s32.totalorder %s32, 1
      %p76 = por %p74, %p75
      %p77 = scmp.ne.s32.totalorder %s66, %s67
      %p78 = scmp.eq.s32.totalorder %s32, 0
      %p79 = por %p77, %p78
      %p80 = scmp.ne.s32.totalorder %s66, %s67
      %p81 = scmp.eq.s32.totalorder %s33, 1
      %p82 = por %p80, %p81
      %p84 = scmp.ne.s32.totalorder %s67, %s83
      %p85 = scmp.eq.s32.totalorder %s33, 0
      %p86 = por %p84, %p85
      %s88 = sadd.s32 %s87, 1
      %p91 = scmp.eq.s32.totalorder %s27, 1
      %p92 = scmp.ne.s32.totalorder %s87, %s89
      %p93 = scmp.eq.s32.totalorder %s27, 0
      %p94 = por %p92, %p93
      %p95 = scmp.ne.s32.totalorder %s87, %s89
      %p96 = scmp.eq.s32.totalorder %s32, 1
      %p97 = por %p95, %p96
      %p98 = scmp.ne.s32.totalorder %s89, %s90
      %p99 = scmp.eq.s32.totalorder %s32, 0
      %p100 = por %p98, %p99
      %p101 = scmp.ne.s32.totalorder %s89, %s90
      %p102 = scmp.eq.s32.totalorder %s33, 1
      %p103 = por %p101, %p102
      %p105 = scmp.ne.s32.totalorder %s90, %s104
      %p106 = scmp.eq.s32.totalorder %s33, 0
      %p107 = por %p105, %p106
      %s109 = sadd.s32 %s108, 1
      %p112 = scmp.eq.s32.totalorder %s27, 1
      %p113 = scmp.ne.s32.totalorder %s108, %s110
      %p114 = scmp.eq.s32.totalorder %s27, 0
      %p115 = por %p113, %p114
      %p116 = scmp.ne.s32.totalorder %s108, %s110
      %p117 = scmp.eq.s32.totalorder %s32, 1
      %p118 = por %p116, %p117
      %p119 = scmp.ne.s32.totalorder %s110, %s111
      %p120 = scmp.eq.s32.totalorder %s32, 0
      %p121 = por %p119, %p120
      %p122 = scmp.ne.s32.totalorder %s110, %s111
      %p123 = scmp.eq.s32.totalorder %s33, 1
      %p124 = por %p122, %p123
      %p126 = scmp.ne.s32.totalorder %s111, %s125
      %p127 = scmp.eq.s32.totalorder %s33, 0
      %p128 = por %p126, %p127
      %s130 = sadd.s32 %s129, 1
      %p133 = scmp.eq.s32.totalorder %s27, 1
      %p134 = scmp.ne.s32.totalorder %s129, %s131
      %p135 = scmp.eq.s32.totalorder %s27, 0
      %p136 = por %p134, %p135
      %p137 = scmp.ne.s32.totalorder %s129, %s131
      %p138 = scmp.eq.s32.totalorder %s32, 1
      %p139 = por %p137, %p138
      %p140 = scmp.ne.s32.totalorder %s131, %s132
      %p141 = scmp.eq.s32.totalorder %s32, 0
      %p142 = por %p140, %p141
      %p143 = scmp.ne.s32.totalorder %s131, %s132
      %p144 = scmp.eq.s32.totalorder %s33, 1
      %p145 = por %p143, %p144
      %p147 = scmp.ne.s32.totalorder %s132, %s146
      %p148 = scmp.eq.s32.totalorder %s33, 0
      %p149 = por %p147, %p148
      %s150 = ssub.s32 %s27, %s34
      %p151 = scmp.eq.s32.totalorder %s150, 0
      %s153 = sadd.s32 %s152, 1
      %s154 = scalar_select %p151, %s152, %s153
      %p157 = pneg %p151
      %p158 = scmp.eq.s32.totalorder %s27, 1
      %p159 = por %p157, %p158
      %p160 = scmp.ne.s32.totalorder %s152, %s155
      %p161 = scmp.eq.s32.totalorder %s27, 0
      %p162 = por %p160, %p161
      %p163 = scmp.ne.s32.totalorder %s152, %s155
      %p164 = scmp.eq.s32.totalorder %s32, 1
      %p165 = por %p163, %p164
      %p166 = scmp.ne.s32.totalorder %s155, %s156
      %p167 = scmp.eq.s32.totalorder %s32, 0
      %p168 = por %p166, %p167
      %p169 = scmp.ne.s32.totalorder %s155, %s156
      %p170 = scmp.eq.s32.totalorder %s33, 1
      %p171 = por %p169, %p170
      %p173 = scmp.ne.s32.totalorder %s156, %s172
      %p174 = scmp.eq.s32.totalorder %s33, 0
      %p175 = por %p173, %p174
      %s176 = ssub.s32 %s27, %s34
      %p177 = scmp.eq.s32.totalorder %s176, 0
      %s179 = sadd.s32 %s178, 1
      %s180 = scalar_select %p177, %s178, %s179
      %p183 = pneg %p177
      %p184 = scmp.eq.s32.totalorder %s27, 1
      %p185 = por %p183, %p184
      %p186 = scmp.ne.s32.totalorder %s178, %s181
      %p187 = scmp.eq.s32.totalorder %s27, 0
      %p188 = por %p186, %p187
      %p189 = scmp.ne.s32.totalorder %s178, %s181
      %p190 = scmp.eq.s32.totalorder %s32, 1
      %p191 = por %p189, %p190
      %p192 = scmp.ne.s32.totalorder %s181, %s182
      %p193 = scmp.eq.s32.totalorder %s32, 0
      %p194 = por %p192, %p193
      %p195 = scmp.ne.s32.totalorder %s181, %s182
      %p196 = scmp.eq.s32.totalorder %s33, 1
      %p197 = por %p195, %p196
      %p199 = scmp.ne.s32.totalorder %s182, %s198
      %p200 = scmp.eq.s32.totalorder %s33, 0
      %p201 = por %p199, %p200
      %s202 = ssub.s32 %s27, %s34
      %p203 = scmp.eq.s32.totalorder %s202, 0
      %s205 = sadd.s32 %s204, 1
      %s206 = scalar_select %p203, %s204, %s205
      %p209 = pneg %p203
      %p210 = scmp.eq.s32.totalorder %s27, 1
      %p211 = por %p209, %p210
      %p212 = scmp.ne.s32.totalorder %s204, %s207
      %p213 = scmp.eq.s32.totalorder %s27, 0
      %p214 = por %p212, %p213
      %p215 = scmp.ne.s32.totalorder %s204, %s207
      %p216 = scmp.eq.s32.totalorder %s32, 1
      %p217 = por %p215, %p216
      %p218 = scmp.ne.s32.totalorder %s207, %s208
      %p219 = scmp.eq.s32.totalorder %s32, 0
      %p220 = por %p218, %p219
      %p221 = scmp.ne.s32.totalorder %s207, %s208
      %p222 = scmp.eq.s32.totalorder %s33, 1
      %p223 = por %p221, %p222
      %p225 = scmp.ne.s32.totalorder %s208, %s224
      %p226 = scmp.eq.s32.totalorder %s33, 0
      %p227 = por %p225, %p226
      %p228 = scmp.le.s32.totalorder 1, %s27
      %p229 = scmp.lt.s32.totalorder %s27, 3
      %p230 = pnand %p228, %p229
      %p231 = pneg %p230
      // Predicated region
      $region9: #{_device_forward.1} parent=5 // pred_check
        _
      $region10: #{_device_forward.1} parent=5 // pred_check_branch
        %233 = sbr.rel (%p230) target = $region12
      $region11: #{_device_forward.1} parent=5 // pred_region
        %s234 = ssub.s32 %s27, 1
        // Predicated region
        $region13: #{_device_forward.1} parent=11 // pred_check
          %p235 = pneg %p100
        $region14: #{_device_forward.1} parent=11 // pred_check_branch
          %237 = sbr.rel (%p235) target = $region16
        $region15: #{_device_forward.1} parent=11 // pred_region
          _
        $region16: #{_device_forward.1} parent=11 // pred_fallthru
          _
        // Predicated region
        $region17: #{_device_forward.1} parent=11 // pred_check
          %p238 = pneg %p121
        $region18: #{_device_forward.1} parent=11 // pred_check_branch
          %240 = sbr.rel (%p238) target = $region20
        $region19: #{_device_forward.1} parent=11 // pred_region
          _
        $region20: #{_device_forward.1} parent=11 // pred_fallthru
          _
        // Predicated region
        $region21: #{_device_forward.1} parent=11 // pred_check
          %p241 = pneg %p142
        $region22: #{_device_forward.1} parent=11 // pred_check_branch
          %243 = sbr.rel (%p241) target = $region24
        $region23: #{_device_forward.1} parent=11 // pred_region
          _
        $region24: #{_device_forward.1} parent=11 // pred_fallthru
          _
      $region12: #{_device_forward.1} parent=5 // pred_fallthru
        _
      %p244 = scmp.lt.s32.totalorder %s27, 2
      // Predicated region
      $region25: #{_device_forward.1} parent=5 // pred_check
        %p245 = pneg %p244
      $region26: #{_device_forward.1} parent=5 // pred_check_branch
        %247 = sbr.rel (%p245) target = $region28
      $region27: #{_device_forward.1} parent=5 // pred_region
        // Predicated region
        $region29: #{_device_forward.1} parent=27 // pred_check
          %p248 = pneg %p47
        $region30: #{_device_forward.1} parent=27 // pred_check_branch
          %250 = sbr.rel (%p248) target = $region32
        $region31: #{_device_forward.1} parent=27 // pred_region
          %p251 = scmp.lt.s32.totalorder %s27, 1
          %s252 = scalar_select %p251, %s27, 1
          %s253 = smul.addr %s252, 8
          %s254 = scalar_lea.vmem %s1, %s253
        $region32: #{_device_forward.1} parent=27 // pred_fallthru
          _
        // Predicated region
        $region33: #{_device_forward.1} parent=27 // pred_check
          %p255 = pneg %p73
        $region34: #{_device_forward.1} parent=27 // pred_check_branch
          %257 = sbr.rel (%p255) target = $region36
        $region35: #{_device_forward.1} parent=27 // pred_region
          %p258 = scmp.lt.s32.totalorder %s27, 1
          %s259 = scalar_select %p258, %s27, 1
          %s260 = smul.addr %s259, 8
          %s261 = scalar_lea.vmem %s2, %s260
        $region36: #{_device_forward.1} parent=27 // pred_fallthru
          _
      $region28: #{_device_forward.1} parent=5 // pred_fallthru
        _
      %p262 = scmp.le.s32.totalorder 1, %s27
      %p263 = scmp.lt.s32.totalorder %s27, 3
      %p264 = pnand %p262, %p263
      %p265 = pneg %p264
      // Predicated region
      $region37: #{_device_forward.1} parent=5 // pred_check
        _
      $region38: #{_device_forward.1} parent=5 // pred_check_branch
        %267 = sbr.rel (%p264) target = $region40
      $region39: #{_device_forward.1} parent=5 // pred_region
        %s268 = ssub.s32 %s27, 1
        %p269 = scmp.lt.s32.totalorder %s32, 1
        %s270 = scalar_select %p269, %s32, 1
        %s271 = smul.addr %s270, 8
        %s272 = scalar_lea.vmem %s1, %s271
        %p273 = pneg %p53
        %p274 = pneg %p50
        %p275 = scmp.lt.s32.totalorder %s32, 1
        %s276 = scalar_select %p275, %s32, 1
        %s277 = smul.addr %s276, 8
        %s278 = scalar_lea.vmem %s2, %s277
        %p279 = pneg %p79
        %p280 = pneg %p76
        %p281 = pneg %p100
        %p282 = pneg %p97
        %p283 = pneg %p121
        %p284 = pneg %p118
        %p285 = pneg %p142
        %p286 = pneg %p139
        %p287 = pneg %p168
        %p288 = pneg %p165
        %s289 = sand.u32 %s155, 1
        %s290 = scalar_lea.sflag [#allocation5], %s289
        %s291 = sand.u32 %s155, 1
        %s292 = smul.addr %s291, 8
        %s293 = scalar_lea.vmem [#allocation4], %s292
        %p294 = pneg %p194
        %p295 = pneg %p191
        %s296 = sand.u32 %s181, 1
        %s297 = scalar_lea.sflag [#allocation7], %s296
        %s298 = sand.u32 %s181, 1
        %s299 = smul.addr %s298, 8
        %s300 = scalar_lea.vmem [#allocation6], %s299
        %p301 = pneg %p220
        %p302 = pneg %p217
        %p303 = scmp.lt.s32.totalorder %s32, 1
        %s304 = scalar_select %p303, %s32, 1
        %s305 = smul.addr %s304, 8
        %s306 = scalar_lea.vmem %s8, %s305
        %p307 = scmp.lt.s32.totalorder %s32, 1
        %s308 = scalar_select %p307, %s32, 1
        %s309 = smul.addr %s308, 8
        %s310 = scalar_lea.vmem %s1, %s309
        %p311 = scmp.lt.s32.totalorder %s32, 1
        %s312 = scalar_select %p311, %s32, 1
        %s313 = smul.addr %s312, 8
        %s314 = scalar_lea.vmem %s2, %s313
        %p315 = scmp.lt.s32.totalorder %s32, 1
        %s316 = scalar_select %p315, %s32, 1
        %s317 = smul.addr %s316, 8
        %s318 = scalar_lea.vmem %s8, %s317
        %s319 = sld [smem:[#allocation3]]
        %s320 = sld [smem:[#allocation3 + $0x1]]
        %v321 = vld [vmem:[%s310] sm:$0xff]
        %v322 = vld [vmem:[%s3] sm:$0xff]
        %v323 = vld [vmem:[%s3 + $0x8] sm:$0xff]
        %v324 = vld [vmem:[%s3 + $0x10] sm:$0xff]
        %v325 = vld [vmem:[%s3 + $0x18] sm:$0xff]
        %v326 = vld [vmem:[%s4] sm:$0x1]
        %v328 = vlaneseq
        %v329 = vshrl.u32 %v328, 7
        %v330 = vsub.s32 0, %v329
        %v331 = vrot.slane %v326, %v330
        %vm333 = vcmask 261120
        %v335 = vsel %vm333, %v321, 0
        %337 = vmatprep.subr.mxu0 0.0
        %338 = vmatpush1.msra.mxu0 %v322
        %339 = vmatprep.subr.mxu0 0.0
        %340 = vmatpush1.msra.mxu0 %v323
        %341 = vmatprep.subr.mxu0 0.0
        %342 = vmatpush1.msra.mxu0 %v324
        %343 = vmatprep.subr.mxu0 0.0
        %344 = vmatpush1.msra.mxu0 %v325
        %345 = vmatprep.subr.mxu0 0.0
        %346 = vmatpush1.msra.mxu0 0.0
        %347 = vmatprep.subr.mxu0 0.0
        %348 = vmatpush1.msra.mxu0 0.0
        %349 = vmatprep.subr.mxu0 0.0
        %350 = vmatpush1.msra.mxu0 0.0
        %351 = vmatprep.subr.mxu0 0.0
        %352 = vmatpush1.msra.mxu0 0.0
        %353 = vmatprep.subr.mxu0 0.0
        %354 = vmatpush1.msra.mxu0 0.0
        %355 = vmatprep.subr.mxu0 0.0
        %356 = vmatpush1.msra.mxu0 0.0
        %357 = vmatprep.subr.mxu0 0.0
        %358 = vmatpush1.msra.mxu0 0.0
        %359 = vmatprep.subr.mxu0 0.0
        %360 = vmatpush1.msra.mxu0 0.0
        %361 = vmatprep.subr.mxu0 0.0
        %362 = vmatpush1.msra.mxu0 0.0
        %363 = vmatprep.subr.mxu0 0.0
        %364 = vmatpush1.msra.mxu0 0.0
        %365 = vmatprep.subr.mxu0 0.0
        %366 = vmatpush1.msra.mxu0 0.0
        %367 = vmatprep.subr.mxu0 0.0
        %368 = vmatpush1.msra.mxu0 0.0
        %369 = vmatprep.subr.mxu0 0.0
        %370 = vmatpush1.msra.mxu0 0.0
        %371 = vmatprep.subr.mxu0 0.0
        %372 = vmatpush1.msra.mxu0 0.0
        %373 = vmatprep.subr.mxu0 0.0
        %374 = vmatpush1.msra.mxu0 0.0
        %375 = vmatprep.subr.mxu0 0.0
        %376 = vmatpush1.msra.mxu0 0.0
        %377 = vmatprep.subr.mxu0 0.0
        %378 = vmatpush1.msra.mxu0 0.0
        %379 = vmatprep.subr.mxu0 0.0
        %380 = vmatpush1.msra.mxu0 0.0
        %381 = vmatprep.subr.mxu0 0.0
        %382 = vmatpush1.msra.mxu0 0.0
        %383 = vmatprep.subr.mxu0 0.0
        %384 = vmatpush1.msra.mxu0 0.0
        %385 = vmatprep.subr.mxu0 0.0
        %386 = vmatpush1.msra.mxu0 0.0
        %387 = vmatprep.subr.mxu0 0.0
        %388 = vmatpush1.msra.mxu0 0.0
        %389 = vmatprep.subr.mxu0 0.0
        %390 = vmatpush1.msra.mxu0 0.0
        %391 = vmatprep.subr.mxu0 0.0
        %392 = vmatpush1.msra.mxu0 0.0
        %393 = vmatprep.subr.mxu0 0.0
        %394 = vmatpush1.msra.mxu0 0.0
        %395 = vmatprep.subr.mxu0 0.0
        %396 = vmatpush1.msra.mxu0 0.0
        %397 = vmatprep.subr.mxu0 0.0
        %398 = vmatpush1.msra.mxu0 0.0
        %399 = vmatprep.subr.mxu0 0.0
        %400 = vmatpush1.msra.mxu0 0.0
        %401 = vmatprep.mubr.f32.mxu0 0.0
        %402 = vmatmul.mubr.f32.gmra.mrb[0].mxu0 %v335
        %v403 = vpop.f32.mrb[0].mxu0
        %v404 = vadd.f32 %v331, %v403
        %v405 = vpop.f32.mrb[0].mxu0
        %406 = vdwg.mxu0
        %407 = vst [vmem:[%s293] sm:$0xff] %v404
        %v408 = vlaneseq
        %v409 = vand.u32 %v408, 127
        %vm410 = vcmp.lt.s32.totalorder %v409, 16
        %v411 = vstv %s319
        %v412 = vmul.f32 %v404, %v411
        %v413 = vsel %vm410, %v412, -1e+30
        %vm414 = vcmask 130048
        %v415 = vsel %vm414, %v413, -inf
        %416 = vmax.xlane.f32.xlu0 %v415
        %v417 = vpop.xlane.xlu0 %416
        %v418 = vsub.f32 %v413, %v417
        %v419 = vmul.f32 %v418, 1.442695
        %v420 = vpow.pop %v419
        %v421 = vsel %vm414, %v420, 0.0
        %422 = vadd.xlane.f32.xlu0 %v421
        %v423 = vpop.xlane.xlu0 %422
        %v424 = vrcp.pop %v423
        %v425 = vmul.f32 %v420, %v424
        %v426 = vsel %vm410, %v425, 0.0
        %v427 = vlaneseq
        %v428 = vshrl.u32 %v427, 7
        %v429 = vadd.s32 %v428, 8
        %vm430 = vcmp.eq.s32.totalorder %v428, %v409
        %vm431 = vcmp.eq.s32.totalorder %v429, %v409
        %vm432 = vcmp.lt.s32.totalorder %v409, %v428
        %vm433 = vcmp.lt.s32.totalorder %v409, %v429
        %vm434 = vcmp.le.s32.totalorder %v409, %v428
        %vm435 = vcmp.le.s32.totalorder %v409, %v429
        %v437 = vcombine.high %v426, %v426
        %v439 = vunpack.c.l.s4 1966171168
        %v440 = vunpack.c.0.s8 %v439
        %v441 = vlaneseq
        %v442 = vshrl.u32 %v441, 7
        %v443 = vsub.s32 %v440, %v442
        %v444 = vrot.slane %v426, %v443
        %v446 = vunpack.c.l.s4 1966171168
        %v447 = vunpack.c.0.s8 %v446
        %v448 = vlaneseq
        %v449 = vshrl.u32 %v448, 7
        %v450 = vsub.s32 %v447, %v449
        %v451 = vrot.slane %v437, %v450
        %v452 = vcombine.high %v444, %v444
        %v453 = vcombine.high %v451, %v451
        %v455 = vunpack.c.l.s4 1966171168
        %v456 = vunpack.c.0.s8 %v455
        %v457 = vlaneseq
        %v458 = vshrl.u32 %v457, 7
        %v459 = vsub.s32 %v456, %v458
        %v460 = vrot.slane %v444, %v459
        %v462 = vunpack.c.l.s4 1966171168
        %v463 = vunpack.c.0.s8 %v462
        %v464 = vlaneseq
        %v465 = vshrl.u32 %v464, 7
        %v466 = vsub.s32 %v463, %v465
        %v467 = vrot.slane %v451, %v466
        %v469 = vunpack.c.l.s4 1966171168
        %v470 = vunpack.c.0.s8 %v469
        %v471 = vlaneseq
        %v472 = vshrl.u32 %v471, 7
        %v473 = vsub.s32 %v470, %v472
        %v474 = vrot.slane %v452, %v473
        %v476 = vunpack.c.l.s4 1966171168
        %v477 = vunpack.c.0.s8 %v476
        %v478 = vlaneseq
        %v479 = vshrl.u32 %v478, 7
        %v480 = vsub.s32 %v477, %v479
        %v481 = vrot.slane %v453, %v480
        %v482 = vcombine.high %v460, %v460
        %v483 = vcombine.high %v467, %v467
        %v484 = vcombine.high %v474, %v474
        %v485 = vcombine.high %v481, %v481
        %v486 = vsel %vm430, 1, 0
        %v487 = vsel %vm431, 1, 0
        %vm488 = vcmp.eq.s32.totalorder %v486, 1
        %vm489 = vcmp.eq.s32.totalorder %v487, 1
        %v490 = vlaneseq
        %v491 = vshrl.u32 %v490, 7
        %v492 = vsub.s32 0, %v491
        %v493 = vrot.slane %v460, %v492
        %v494 = vlaneseq
        %v495 = vshrl.u32 %v494, 7
        %v496 = vsub.s32 0, %v495
        %v497 = vrot.slane %v474, %v496
        %v498 = vlaneseq
        %v499 = vshrl.u32 %v498, 7
        %v500 = vsub.s32 0, %v499
        %v501 = vrot.slane %v482, %v500
        %v502 = vlaneseq
        %v503 = vshrl.u32 %v502, 7
        %v504 = vsub.s32 0, %v503
        %v505 = vrot.slane %v484, %v504
        %v506 = vlaneseq
        %v507 = vshrl.u32 %v506, 7
        %v508 = vsub.s32 0, %v507
        %v509 = vrot.slane %v467, %v508
        %v510 = vlaneseq
        %v511 = vshrl.u32 %v510, 7
        %v512 = vsub.s32 0, %v511
        %v513 = vrot.slane %v481, %v512
        %v514 = vlaneseq
        %v515 = vshrl.u32 %v514, 7
        %v516 = vsub.s32 0, %v515
        %v517 = vrot.slane %v483, %v516
        %v518 = vlaneseq
        %v519 = vshrl.u32 %v518, 7
        %v520 = vsub.s32 0, %v519
        %v521 = vrot.slane %v485, %v520
        %v530 = vsel %vm488, %v493, 0.0
        %v531 = vsel %vm489, %v493, 0.0
        %v532 = vsel %vm488, %v497, 0.0
        %v533 = vsel %vm489, %v497, 0.0
        %v534 = vsel %vm488, %v501, 0.0
        %v535 = vsel %vm489, %v501, 0.0
        %v536 = vsel %vm488, %v505, 0.0
        %v537 = vsel %vm489, %v505, 0.0
        %v538 = vsel %vm488, %v509, 0.0
        %v539 = vsel %vm489, %v509, 0.0
        %v540 = vsel %vm488, %v513, 0.0
        %v541 = vsel %vm489, %v513, 0.0
        %v542 = vsel %vm488, %v517, 0.0
        %v543 = vsel %vm489, %v517, 0.0
        %v544 = vsel %vm488, %v521, 0.0
        %v545 = vsel %vm489, %v521, 0.0
        %v546 = vsel %vm414, %v530, 0.0
        %547 = vadd.xlane.f32.xlu0 %v546
        %v548 = vpop.xlane.xlu0 %547
        %v549 = vsel %vm414, %v531, 0.0
        %550 = vadd.xlane.f32.xlu0 %v549
        %v551 = vpop.xlane.xlu0 %550
        %v552 = vsel %vm414, %v532, 0.0
        %553 = vadd.xlane.f32.xlu0 %v552
        %v554 = vpop.xlane.xlu0 %553
        %v555 = vsel %vm414, %v533, 0.0
        %556 = vadd.xlane.f32.xlu0 %v555
        %v557 = vpop.xlane.xlu0 %556
        %v558 = vsel %vm414, %v534, 0.0
        %559 = vadd.xlane.f32.xlu0 %v558
        %v560 = vpop.xlane.xlu0 %559
        %v561 = vsel %vm414, %v535, 0.0
        %562 = vadd.xlane.f32.xlu0 %v561
        %v563 = vpop.xlane.xlu0 %562
        %v564 = vsel %vm414, %v536, 0.0
        %565 = vadd.xlane.f32.xlu0 %v564
        %v566 = vpop.xlane.xlu0 %565
        %v567 = vsel %vm414, %v537, 0.0
        %568 = vadd.xlane.f32.xlu0 %v567
        %v569 = vpop.xlane.xlu0 %568
        %v570 = vsel %vm414, %v538, 0.0
        %571 = vadd.xlane.f32.xlu0 %v570
        %v572 = vpop.xlane.xlu0 %571
        %v573 = vsel %vm414, %v539, 0.0
        %574 = vadd.xlane.f32.xlu0 %v573
        %v575 = vpop.xlane.xlu0 %574
        %v576 = vsel %vm414, %v540, 0.0
        %577 = vadd.xlane.f32.xlu0 %v576
        %v578 = vpop.xlane.xlu0 %577
        %v579 = vsel %vm414, %v541, 0.0
        %580 = vadd.xlane.f32.xlu0 %v579
        %v581 = vpop.xlane.xlu0 %580
        %v582 = vsel %vm414, %v542, 0.0
        %583 = vadd.xlane.f32.xlu0 %v582
        %v584 = vpop.xlane.xlu0 %583
        %v585 = vsel %vm414, %v543, 0.0
        %586 = vadd.xlane.f32.xlu0 %v585
        %v587 = vpop.xlane.xlu0 %586
        %v588 = vsel %vm414, %v544, 0.0
        %589 = vadd.xlane.f32.xlu0 %v588
        %v590 = vpop.xlane.xlu0 %589
        %v591 = vsel %vm414, %v545, 0.0
        %592 = vadd.xlane.f32.xlu0 %v591
        %v593 = vpop.xlane.xlu0 %592
        %vm594 = vcmp.gt.f32.partialorder %v493, %v548
        %vm595 = vcmp.gt.f32.partialorder %v493, %v551
        %vm596 = vcmp.gt.f32.partialorder %v497, %v554
        %vm597 = vcmp.gt.f32.partialorder %v497, %v557
        %vm598 = vcmp.gt.f32.partialorder %v501, %v560
        %vm599 = vcmp.gt.f32.partialorder %v501, %v563
        %vm600 = vcmp.gt.f32.partialorder %v505, %v566
        %vm601 = vcmp.gt.f32.partialorder %v505, %v569
        %vm602 = vcmp.gt.f32.partialorder %v509, %v572
        %vm603 = vcmp.gt.f32.partialorder %v509, %v575
        %vm604 = vcmp.gt.f32.partialorder %v513, %v578
        %vm605 = vcmp.gt.f32.partialorder %v513, %v581
        %vm606 = vcmp.gt.f32.partialorder %v517, %v584
        %vm607 = vcmp.gt.f32.partialorder %v517, %v587
        %vm608 = vcmp.gt.f32.partialorder %v521, %v590
        %vm609 = vcmp.gt.f32.partialorder %v521, %v593
        %vm610 = vcmp.eq.f32.partialorder %v493, %v548
        %vm611 = vcmp.eq.f32.partialorder %v493, %v551
        %vm612 = vcmp.eq.f32.partialorder %v497, %v554
        %vm613 = vcmp.eq.f32.partialorder %v497, %v557
        %vm614 = vcmp.eq.f32.partialorder %v501, %v560
        %vm615 = vcmp.eq.f32.partialorder %v501, %v563
        %vm616 = vcmp.eq.f32.partialorder %v505, %v566
        %vm617 = vcmp.eq.f32.partialorder %v505, %v569
        %vm618 = vcmp.eq.f32.partialorder %v509, %v572
        %vm619 = vcmp.eq.f32.partialorder %v509, %v575
        %vm620 = vcmp.eq.f32.partialorder %v513, %v578
        %vm621 = vcmp.eq.f32.partialorder %v513, %v581
        %vm622 = vcmp.eq.f32.partialorder %v517, %v584
        %vm623 = vcmp.eq.f32.partialorder %v517, %v587
        %vm624 = vcmp.eq.f32.partialorder %v521, %v590
        %vm625 = vcmp.eq.f32.partialorder %v521, %v593
        %v626 = vsel %vm432, 1, 0
        %v627 = vsel %vm433, 1, 0
        %vm628 = vcmp.eq.s32.totalorder %v626, 1
        %vm629 = vcmp.eq.s32.totalorder %v627, 1
        %vm630 = vmand %vm610, %vm628
        %vm631 = vmand %vm611, %vm629
        %vm632 = vmand %vm612, %vm628
        %vm633 = vmand %vm613, %vm629
        %vm634 = vmand %vm614, %vm628
        %vm635 = vmand %vm615, %vm629
        %vm636 = vmand %vm616, %vm628
        %vm637 = vmand %vm617, %vm629
        %vm638 = vmand %vm618, %vm628
        %vm639 = vmand %vm619, %vm629
        %vm640 = vmand %vm620, %vm628
        %vm641 = vmand %vm621, %vm629
        %vm642 = vmand %vm622, %vm628
        %vm643 = vmand %vm623, %vm629
        %vm644 = vmand %vm624, %vm628
        %vm645 = vmand %vm625, %vm629
        %vm646 = vmor %vm594, %vm630
        %vm647 = vmor %vm595, %vm631
        %vm648 = vmor %vm596, %vm632
        %vm649 = vmor %vm597, %vm633
        %vm650 = vmor %vm598, %vm634
        %vm651 = vmor %vm599, %vm635
        %vm652 = vmor %vm600, %vm636
        %vm653 = vmor %vm601, %vm637
        %vm654 = vmor %vm602, %vm638
        %vm655 = vmor %vm603, %vm639
        %vm656 = vmor %vm604, %vm640
        %vm657 = vmor %vm605, %vm641
        %vm658 = vmor %vm606, %vm642
        %vm659 = vmor %vm607, %vm643
        %vm660 = vmor %vm608, %vm644
        %vm661 = vmor %vm609, %vm645
        %v662 = vsel %vm646, 1, 0
        %v663 = vsel %vm647, 1, 0
        %v664 = vsel %vm648, 1, 0
        %v665 = vsel %vm649, 1, 0
        %v666 = vsel %vm650, 1, 0
        %v667 = vsel %vm651, 1, 0
        %v668 = vsel %vm652, 1, 0
        %v669 = vsel %vm653, 1, 0
        %v670 = vsel %vm654, 1, 0
        %v671 = vsel %vm655, 1, 0
        %v672 = vsel %vm656, 1, 0
        %v673 = vsel %vm657, 1, 0
        %v674 = vsel %vm658, 1, 0
        %v675 = vsel %vm659, 1, 0
        %v676 = vsel %vm660, 1, 0
        %v677 = vsel %vm661, 1, 0
        %v678 = vsel %vm414, %v662, 0
        %v679 = vand.u32 %v678, 65535
        %v680 = vshrl.u32 %v678, 16
        %v681 = vcvt.s32.f32 %v679
        %v682 = vcvt.s32.f32 %v680
        %683 = vadd.xlane.f32.xlu0 %v681
        %v684 = vpop.xlane.xlu0 %683
        %685 = vadd.xlane.f32.xlu0 %v682
        %v686 = vpop.xlane.xlu0 %685
        %v687 = vcvt.f32.s32 %v684
        %v688 = vcvt.f32.s32 %v686
        %v689 = vshll.u32 %v688, 16
        %v690 = vadd.s32 %v689, %v687
        %v691 = vsel %vm414, %v663, 0
        %v692 = vand.u32 %v691, 65535
        %v693 = vshrl.u32 %v691, 16
        %v694 = vcvt.s32.f32 %v692
        %v695 = vcvt.s32.f32 %v693
        %696 = vadd.xlane.f32.xlu0 %v694
        %v697 = vpop.xlane.xlu0 %696
        %698 = vadd.xlane.f32.xlu0 %v695
        %v699 = vpop.xlane.xlu0 %698
        %v700 = vcvt.f32.s32 %v697
        %v701 = vcvt.f32.s32 %v699
        %v702 = vshll.u32 %v701, 16
        %v703 = vadd.s32 %v702, %v700
        %v704 = vsel %vm414, %v664, 0
        %v705 = vand.u32 %v704, 65535
        %v706 = vshrl.u32 %v704, 16
        %v707 = vcvt.s32.f32 %v705
        %v708 = vcvt.s32.f32 %v706
        %709 = vadd.xlane.f32.xlu0 %v707
        %v710 = vpop.xlane.xlu0 %709
        %711 = vadd.xlane.f32.xlu0 %v708
        %v712 = vpop.xlane.xlu0 %711
        %v713 = vcvt.f32.s32 %v710
        %v714 = vcvt.f32.s32 %v712
        %v715 = vshll.u32 %v714, 16
        %v716 = vadd.s32 %v715, %v713
        %v717 = vsel %vm414, %v665, 0
        %v718 = vand.u32 %v717, 65535
        %v719 = vshrl.u32 %v717, 16
        %v720 = vcvt.s32.f32 %v718
        %v721 = vcvt.s32.f32 %v719
        %722 = vadd.xlane.f32.xlu0 %v720
        %v723 = vpop.xlane.xlu0 %722
        %724 = vadd.xlane.f32.xlu0 %v721
        %v725 = vpop.xlane.xlu0 %724
        %v726 = vcvt.f32.s32 %v723
        %v727 = vcvt.f32.s32 %v725
        %v728 = vshll.u32 %v727, 16
        %v729 = vadd.s32 %v728, %v726
        %v730 = vsel %vm414, %v666, 0
        %v731 = vand.u32 %v730, 65535
        %v732 = vshrl.u32 %v730, 16
        %v733 = vcvt.s32.f32 %v731
        %v734 = vcvt.s32.f32 %v732
        %735 = vadd.xlane.f32.xlu0 %v733
        %v736 = vpop.xlane.xlu0 %735
        %737 = vadd.xlane.f32.xlu0 %v734
        %v738 = vpop.xlane.xlu0 %737
        %v739 = vcvt.f32.s32 %v736
        %v740 = vcvt.f32.s32 %v738
        %v741 = vshll.u32 %v740, 16
        %v742 = vadd.s32 %v741, %v739
        %v743 = vsel %vm414, %v667, 0
        %v744 = vand.u32 %v743, 65535
        %v745 = vshrl.u32 %v743, 16
        %v746 = vcvt.s32.f32 %v744
        %v747 = vcvt.s32.f32 %v745
        %748 = vadd.xlane.f32.xlu0 %v746
        %v749 = vpop.xlane.xlu0 %748
        %750 = vadd.xlane.f32.xlu0 %v747
        %v751 = vpop.xlane.xlu0 %750
        %v752 = vcvt.f32.s32 %v749
        %v753 = vcvt.f32.s32 %v751
        %v754 = vshll.u32 %v753, 16
        %v755 = vadd.s32 %v754, %v752
        %v756 = vsel %vm414, %v668, 0
        %v757 = vand.u32 %v756, 65535
        %v758 = vshrl.u32 %v756, 16
        %v759 = vcvt.s32.f32 %v757
        %v760 = vcvt.s32.f32 %v758
        %761 = vadd.xlane.f32.xlu0 %v759
        %v762 = vpop.xlane.xlu0 %761
        %763 = vadd.xlane.f32.xlu0 %v760
        %v764 = vpop.xlane.xlu0 %763
        %v765 = vcvt.f32.s32 %v762
        %v766 = vcvt.f32.s32 %v764
        %v767 = vshll.u32 %v766, 16
        %v768 = vadd.s32 %v767, %v765
        %v769 = vsel %vm414, %v669, 0
        %v770 = vand.u32 %v769, 65535
        %v771 = vshrl.u32 %v769, 16
        %v772 = vcvt.s32.f32 %v770
        %v773 = vcvt.s32.f32 %v771
        %774 = vadd.xlane.f32.xlu0 %v772
        %v775 = vpop.xlane.xlu0 %774
        %776 = vadd.xlane.f32.xlu0 %v773
        %v777 = vpop.xlane.xlu0 %776
        %v778 = vcvt.f32.s32 %v775
        %v779 = vcvt.f32.s32 %v777
        %v780 = vshll.u32 %v779, 16
        %v781 = vadd.s32 %v780, %v778
        %v782 = vsel %vm414, %v670, 0
        %v783 = vand.u32 %v782, 65535
        %v784 = vshrl.u32 %v782, 16
        %v785 = vcvt.s32.f32 %v783
        %v786 = vcvt.s32.f32 %v784
        %787 = vadd.xlane.f32.xlu0 %v785
        %v788 = vpop.xlane.xlu0 %787
        %789 = vadd.xlane.f32.xlu0 %v786
        %v790 = vpop.xlane.xlu0 %789
        %v791 = vcvt.f32.s32 %v788
        %v792 = vcvt.f32.s32 %v790
        %v793 = vshll.u32 %v792, 16
        %v794 = vadd.s32 %v793, %v791
        %v795 = vsel %vm414, %v671, 0
        %v796 = vand.u32 %v795, 65535
        %v797 = vshrl.u32 %v795, 16
        %v798 = vcvt.s32.f32 %v796
        %v799 = vcvt.s32.f32 %v797
        %800 = vadd.xlane.f32.xlu0 %v798
        %v801 = vpop.xlane.xlu0 %800
        %802 = vadd.xlane.f32.xlu0 %v799
        %v803 = vpop.xlane.xlu0 %802
        %v804 = vcvt.f32.s32 %v801
        %v805 = vcvt.f32.s32 %v803
        %v806 = vshll.u32 %v805, 16
        %v807 = vadd.s32 %v806, %v804
        %v808 = vsel %vm414, %v672, 0
        %v809 = vand.u32 %v808, 65535
        %v810 = vshrl.u32 %v808, 16
        %v811 = vcvt.s32.f32 %v809
        %v812 = vcvt.s32.f32 %v810
        %813 = vadd.xlane.f32.xlu0 %v811
        %v814 = vpop.xlane.xlu0 %813
        %815 = vadd.xlane.f32.xlu0 %v812
        %v816 = vpop.xlane.xlu0 %815
        %v817 = vcvt.f32.s32 %v814
        %v818 = vcvt.f32.s32 %v816
        %v819 = vshll.u32 %v818, 16
        %v820 = vadd.s32 %v819, %v817
        %v821 = vsel %vm414, %v673, 0
        %v822 = vand.u32 %v821, 65535
        %v823 = vshrl.u32 %v821, 16
        %v824 = vcvt.s32.f32 %v822
        %v825 = vcvt.s32.f32 %v823
        %826 = vadd.xlane.f32.xlu0 %v824
        %v827 = vpop.xlane.xlu0 %826
        %828 = vadd.xlane.f32.xlu0 %v825
        %v829 = vpop.xlane.xlu0 %828
        %v830 = vcvt.f32.s32 %v827
        %v831 = vcvt.f32.s32 %v829
        %v832 = vshll.u32 %v831, 16
        %v833 = vadd.s32 %v832, %v830
        %v834 = vsel %vm414, %v674, 0
        %v835 = vand.u32 %v834, 65535
        %v836 = vshrl.u32 %v834, 16
        %v837 = vcvt.s32.f32 %v835
        %v838 = vcvt.s32.f32 %v836
        %839 = vadd.xlane.f32.xlu0 %v837
        %v840 = vpop.xlane.xlu0 %839
        %841 = vadd.xlane.f32.xlu0 %v838
        %v842 = vpop.xlane.xlu0 %841
        %v843 = vcvt.f32.s32 %v840
        %v844 = vcvt.f32.s32 %v842
        %v845 = vshll.u32 %v844, 16
        %v846 = vadd.s32 %v845, %v843
        %v847 = vsel %vm414, %v675, 0
        %v848 = vand.u32 %v847, 65535
        %v849 = vshrl.u32 %v847, 16
        %v850 = vcvt.s32.f32 %v848
        %v851 = vcvt.s32.f32 %v849
        %852 = vadd.xlane.f32.xlu0 %v850
        %v853 = vpop.xlane.xlu0 %852
        %854 = vadd.xlane.f32.xlu0 %v851
        %v855 = vpop.xlane.xlu0 %854
        %v856 = vcvt.f32.s32 %v853
        %v857 = vcvt.f32.s32 %v855
        %v858 = vshll.u32 %v857, 16
        %v859 = vadd.s32 %v858, %v856
        %v860 = vsel %vm414, %v676, 0
        %v861 = vand.u32 %v860, 65535
        %v862 = vshrl.u32 %v860, 16
        %v863 = vcvt.s32.f32 %v861
        %v864 = vcvt.s32.f32 %v862
        %865 = vadd.xlane.f32.xlu0 %v863
        %v866 = vpop.xlane.xlu0 %865
        %867 = vadd.xlane.f32.xlu0 %v864
        %v868 = vpop.xlane.xlu0 %867
        %v869 = vcvt.f32.s32 %v866
        %v870 = vcvt.f32.s32 %v868
        %v871 = vshll.u32 %v870, 16
        %v872 = vadd.s32 %v871, %v869
        %v873 = vsel %vm414, %v677, 0
        %v874 = vand.u32 %v873, 65535
        %v875 = vshrl.u32 %v873, 16
        %v876 = vcvt.s32.f32 %v874
        %v877 = vcvt.s32.f32 %v875
        %878 = vadd.xlane.f32.xlu0 %v876
        %v879 = vpop.xlane.xlu0 %878
        %880 = vadd.xlane.f32.xlu0 %v877
        %v881 = vpop.xlane.xlu0 %880
        %v882 = vcvt.f32.s32 %v879
        %v883 = vcvt.f32.s32 %v881
        %v884 = vshll.u32 %v883, 16
        %v885 = vadd.s32 %v884, %v882
        %v886 = vlaneseq
        %v887 = vshrl.u32 %v886, 7
        %v888 = vsub.s32 0, %v887
        %v889 = vrot.slane %v428, %v888
        %v890 = vlaneseq
        %v891 = vshrl.u32 %v890, 7
        %v892 = vsub.s32 1, %v891
        %v893 = vrot.slane %v428, %v892
        %v894 = vlaneseq
        %v895 = vshrl.u32 %v894, 7
        %v896 = vsub.s32 2, %v895
        %v897 = vrot.slane %v428, %v896
        %v898 = vlaneseq
        %v899 = vshrl.u32 %v898, 7
        %v900 = vsub.s32 3, %v899
        %v901 = vrot.slane %v428, %v900
        %v902 = vlaneseq
        %v903 = vshrl.u32 %v902, 7
        %v904 = vsub.s32 4, %v903
        %v905 = vrot.slane %v428, %v904
        %v906 = vlaneseq
        %v907 = vshrl.u32 %v906, 7
        %v908 = vsub.s32 5, %v907
        %v909 = vrot.slane %v428, %v908
        %v910 = vlaneseq
        %v911 = vshrl.u32 %v910, 7
        %v912 = vsub.s32 6, %v911
        %v913 = vrot.slane %v428, %v912
        %v914 = vlaneseq
        %v915 = vshrl.u32 %v914, 7
        %v916 = vsub.s32 7, %v915
        %v917 = vrot.slane %v428, %v916
        %v918 = vlaneseq
        %v919 = vshrl.u32 %v918, 7
        %v920 = vsub.s32 0, %v919
        %v921 = vrot.slane %v429, %v920
        %v922 = vlaneseq
        %v923 = vshrl.u32 %v922, 7
        %v924 = vsub.s32 1, %v923
        %v925 = vrot.slane %v429, %v924
        %v926 = vlaneseq
        %v927 = vshrl.u32 %v926, 7
        %v928 = vsub.s32 2, %v927
        %v929 = vrot.slane %v429, %v928
        %v930 = vlaneseq
        %v931 = vshrl.u32 %v930, 7
        %v932 = vsub.s32 3, %v931
        %v933 = vrot.slane %v429, %v932
        %v934 = vlaneseq
        %v935 = vshrl.u32 %v934, 7
        %v936 = vsub.s32 4, %v935
        %v937 = vrot.slane %v429, %v936
        %v938 = vlaneseq
        %v939 = vshrl.u32 %v938, 7
        %v940 = vsub.s32 5, %v939
        %v941 = vrot.slane %v429, %v940
        %v942 = vlaneseq
        %v943 = vshrl.u32 %v942, 7
        %v944 = vsub.s32 6, %v943
        %v945 = vrot.slane %v429, %v944
        %v946 = vlaneseq
        %v947 = vshrl.u32 %v946, 7
        %v948 = vsub.s32 7, %v947
        %v949 = vrot.slane %v429, %v948
        %vm950 = vcmp.eq.s32.totalorder %v690, %v889
        %vm951 = vcmp.eq.s32.totalorder %v703, %v889
        %vm952 = vcmp.eq.s32.totalorder %v690, %v893
        %vm953 = vcmp.eq.s32.totalorder %v703, %v893
        %vm954 = vcmp.eq.s32.totalorder %v690, %v897
        %vm955 = vcmp.eq.s32.totalorder %v703, %v897
        %vm956 = vcmp.eq.s32.totalorder %v690, %v901
        %vm957 = vcmp.eq.s32.totalorder %v703, %v901
        %vm958 = vcmp.eq.s32.totalorder %v690, %v905
        %vm959 = vcmp.eq.s32.totalorder %v703, %v905
        %vm960 = vcmp.eq.s32.totalorder %v690, %v909
        %vm961 = vcmp.eq.s32.totalorder %v703, %v909
        %vm962 = vcmp.eq.s32.totalorder %v690, %v913
        %vm963 = vcmp.eq.s32.totalorder %v703, %v913
        %vm964 = vcmp.eq.s32.totalorder %v690, %v917
        %vm965 = vcmp.eq.s32.totalorder %v703, %v917
        %vm966 = vcmp.eq.s32.totalorder %v690, %v921
        %vm967 = vcmp.eq.s32.totalorder %v703, %v921
        %vm968 = vcmp.eq.s32.totalorder %v690, %v925
        %vm969 = vcmp.eq.s32.totalorder %v703, %v925
        %vm970 = vcmp.eq.s32.totalorder %v690, %v929
        %vm971 = vcmp.eq.s32.totalorder %v703, %v929
        %vm972 = vcmp.eq.s32.totalorder %v690, %v933
        %vm973 = vcmp.eq.s32.totalorder %v703, %v933
        %vm974 = vcmp.eq.s32.totalorder %v690, %v937
        %vm975 = vcmp.eq.s32.totalorder %v703, %v937
        %vm976 = vcmp.eq.s32.totalorder %v690, %v941
        %vm977 = vcmp.eq.s32.totalorder %v703, %v941
        %vm978 = vcmp.eq.s32.totalorder %v690, %v945
        %vm979 = vcmp.eq.s32.totalorder %v703, %v945
        %vm980 = vcmp.eq.s32.totalorder %v690, %v949
        %vm981 = vcmp.eq.s32.totalorder %v703, %v949
        %vm982 = vcmp.eq.s32.totalorder %v716, %v889
        %vm983 = vcmp.eq.s32.totalorder %v729, %v889
        %vm984 = vcmp.eq.s32.totalorder %v716, %v893
        %vm985 = vcmp.eq.s32.totalorder %v729, %v893
        %vm986 = vcmp.eq.s32.totalorder %v716, %v897
        %vm987 = vcmp.eq.s32.totalorder %v729, %v897
        %vm988 = vcmp.eq.s32.totalorder %v716, %v901
        %vm989 = vcmp.eq.s32.totalorder %v729, %v901
        %vm990 = vcmp.eq.s32.totalorder %v716, %v905
        %vm991 = vcmp.eq.s32.totalorder %v729, %v905
        %vm992 = vcmp.eq.s32.totalorder %v716, %v909
        %vm993 = vcmp.eq.s32.totalorder %v729, %v909
        %vm994 = vcmp.eq.s32.totalorder %v716, %v913
        %vm995 = vcmp.eq.s32.totalorder %v729, %v913
        %vm996 = vcmp.eq.s32.totalorder %v716, %v917
        %vm997 = vcmp.eq.s32.totalorder %v729, %v917
        %vm998 = vcmp.eq.s32.totalorder %v716, %v921
        %vm999 = vcmp.eq.s32.totalorder %v729, %v921
        %vm1000 = vcmp.eq.s32.totalorder %v716, %v925
        %vm1001 = vcmp.eq.s32.totalorder %v729, %v925
        %vm1002 = vcmp.eq.s32.totalorder %v716, %v929
        %vm1003 = vcmp.eq.s32.totalorder %v729, %v929
        %vm1004 = vcmp.eq.s32.totalorder %v716, %v933
        %vm1005 = vcmp.eq.s32.totalorder %v729, %v933
        %vm1006 = vcmp.eq.s32.totalorder %v716, %v937
        %vm1007 = vcmp.eq.s32.totalorder %v729, %v937
        %vm1008 = vcmp.eq.s32.totalorder %v716, %v941
        %vm1009 = vcmp.eq.s32.totalorder %v729, %v941
        %vm1010 = vcmp.eq.s32.totalorder %v716, %v945
        %vm1011 = vcmp.eq.s32.totalorder %v729, %v945
        %vm1012 = vcmp.eq.s32.totalorder %v716, %v949
        %vm1013 = vcmp.eq.s32.totalorder %v729, %v949
        %vm1014 = vcmp.eq.s32.totalorder %v742, %v889
        %vm1015 = vcmp.eq.s32.totalorder %v755, %v889
        %vm1016 = vcmp.eq.s32.totalorder %v742, %v893
        %vm1017 = vcmp.eq.s32.totalorder %v755, %v893
        %vm1018 = vcmp.eq.s32.totalorder %v742, %v897
        %vm1019 = vcmp.eq.s32.totalorder %v755, %v897
        %vm1020 = vcmp.eq.s32.totalorder %v742, %v901
        %vm1021 = vcmp.eq.s32.totalorder %v755, %v901
        %vm1022 = vcmp.eq.s32.totalorder %v742, %v905
        %vm1023 = vcmp.eq.s32.totalorder %v755, %v905
        %vm1024 = vcmp.eq.s32.totalorder %v742, %v909
        %vm1025 = vcmp.eq.s32.totalorder %v755, %v909
        %vm1026 = vcmp.eq.s32.totalorder %v742, %v913
        %vm1027 = vcmp.eq.s32.totalorder %v755, %v913
        %vm1028 = vcmp.eq.s32.totalorder %v742, %v917
        %vm1029 = vcmp.eq.s32.totalorder %v755, %v917
        %vm1030 = vcmp.eq.s32.totalorder %v742, %v921
        %vm1031 = vcmp.eq.s32.totalorder %v755, %v921
        %vm1032 = vcmp.eq.s32.totalorder %v742, %v925
        %vm1033 = vcmp.eq.s32.totalorder %v755, %v925
        %vm1034 = vcmp.eq.s32.totalorder %v742, %v929
        %vm1035 = vcmp.eq.s32.totalorder %v755, %v929
        %vm1036 = vcmp.eq.s32.totalorder %v742, %v933
        %vm1037 = vcmp.eq.s32.totalorder %v755, %v933
        %vm1038 = vcmp.eq.s32.totalorder %v742, %v937
        %vm1039 = vcmp.eq.s32.totalorder %v755, %v937
        %vm1040 = vcmp.eq.s32.totalorder %v742, %v941
        %vm1041 = vcmp.eq.s32.totalorder %v755, %v941
        %vm1042 = vcmp.eq.s32.totalorder %v742, %v945
        %vm1043 = vcmp.eq.s32.totalorder %v755, %v945
        %vm1044 = vcmp.eq.s32.totalorder %v742, %v949
        %vm1045 = vcmp.eq.s32.totalorder %v755, %v949
        %vm1046 = vcmp.eq.s32.totalorder %v768, %v889
        %vm1047 = vcmp.eq.s32.totalorder %v781, %v889
        %vm1048 = vcmp.eq.s32.totalorder %v768, %v893
        %vm1049 = vcmp.eq.s32.totalorder %v781, %v893
        %vm1050 = vcmp.eq.s32.totalorder %v768, %v897
        %vm1051 = vcmp.eq.s32.totalorder %v781, %v897
        %vm1052 = vcmp.eq.s32.totalorder %v768, %v901
        %vm1053 = vcmp.eq.s32.totalorder %v781, %v901
        %vm1054 = vcmp.eq.s32.totalorder %v768, %v905
        %vm1055 = vcmp.eq.s32.totalorder %v781, %v905
        %vm1056 = vcmp.eq.s32.totalorder %v768, %v909
        %vm1057 = vcmp.eq.s32.totalorder %v781, %v909
        %vm1058 = vcmp.eq.s32.totalorder %v768, %v913
        %vm1059 = vcmp.eq.s32.totalorder %v781, %v913
        %vm1060 = vcmp.eq.s32.totalorder %v768, %v917
        %vm1061 = vcmp.eq.s32.totalorder %v781, %v917
        %vm1062 = vcmp.eq.s32.totalorder %v768, %v921
        %vm1063 = vcmp.eq.s32.totalorder %v781, %v921
        %vm1064 = vcmp.eq.s32.totalorder %v768, %v925
        %vm1065 = vcmp.eq.s32.totalorder %v781, %v925
        %vm1066 = vcmp.eq.s32.totalorder %v768, %v929
        %vm1067 = vcmp.eq.s32.totalorder %v781, %v929
        %vm1068 = vcmp.eq.s32.totalorder %v768, %v933
        %vm1069 = vcmp.eq.s32.totalorder %v781, %v933
        %vm1070 = vcmp.eq.s32.totalorder %v768, %v937
        %vm1071 = vcmp.eq.s32.totalorder %v781, %v937
        %vm1072 = vcmp.eq.s32.totalorder %v768, %v941
        %vm1073 = vcmp.eq.s32.totalorder %v781, %v941
        %vm1074 = vcmp.eq.s32.totalorder %v768, %v945
        %vm1075 = vcmp.eq.s32.totalorder %v781, %v945
        %vm1076 = vcmp.eq.s32.totalorder %v768, %v949
        %vm1077 = vcmp.eq.s32.totalorder %v781, %v949
        %vm1078 = vcmp.eq.s32.totalorder %v794, %v889
        %vm1079 = vcmp.eq.s32.totalorder %v807, %v889
        %vm1080 = vcmp.eq.s32.totalorder %v794, %v893
        %vm1081 = vcmp.eq.s32.totalorder %v807, %v893
        %vm1082 = vcmp.eq.s32.totalorder %v794, %v897
        %vm1083 = vcmp.eq.s32.totalorder %v807, %v897
        %vm1084 = vcmp.eq.s32.totalorder %v794, %v901
        %vm1085 = vcmp.eq.s32.totalorder %v807, %v901
        %vm1086 = vcmp.eq.s32.totalorder %v794, %v905
        %vm1087 = vcmp.eq.s32.totalorder %v807, %v905
        %vm1088 = vcmp.eq.s32.totalorder %v794, %v909
        %vm1089 = vcmp.eq.s32.totalorder %v807, %v909
        %vm1090 = vcmp.eq.s32.totalorder %v794, %v913
        %vm1091 = vcmp.eq.s32.totalorder %v807, %v913
        %vm1092 = vcmp.eq.s32.totalorder %v794, %v917
        %vm1093 = vcmp.eq.s32.totalorder %v807, %v917
        %vm1094 = vcmp.eq.s32.totalorder %v794, %v921
        %vm1095 = vcmp.eq.s32.totalorder %v807, %v921
        %vm1096 = vcmp.eq.s32.totalorder %v794, %v925
        %vm1097 = vcmp.eq.s32.totalorder %v807, %v925
        %vm1098 = vcmp.eq.s32.totalorder %v794, %v929
        %vm1099 = vcmp.eq.s32.totalorder %v807, %v929
        %vm1100 = vcmp.eq.s32.totalorder %v794, %v933
        %vm1101 = vcmp.eq.s32.totalorder %v807, %v933
        %vm1102 = vcmp.eq.s32.totalorder %v794, %v937
        %vm1103 = vcmp.eq.s32.totalorder %v807, %v937
        %vm1104 = vcmp.eq.s32.totalorder %v794, %v941
        %vm1105 = vcmp.eq.s32.totalorder %v807, %v941
        %vm1106 = vcmp.eq.s32.totalorder %v794, %v945
        %vm1107 = vcmp.eq.s32.totalorder %v807, %v945
        %vm1108 = vcmp.eq.s32.totalorder %v794, %v949
        %vm1109 = vcmp.eq.s32.totalorder %v807, %v949
        %vm1110 = vcmp.eq.s32.totalorder %v820, %v889
        %vm1111 = vcmp.eq.s32.totalorder %v833, %v889
        %vm1112 = vcmp.eq.s32.totalorder %v820, %v893
        %vm1113 = vcmp.eq.s32.totalorder %v833, %v893
        %vm1114 = vcmp.eq.s32.totalorder %v820, %v897
        %vm1115 = vcmp.eq.s32.totalorder %v833, %v897
        %vm1116 = vcmp.eq.s32.totalorder %v820, %v901
        %vm1117 = vcmp.eq.s32.totalorder %v833, %v901
        %vm1118 = vcmp.eq.s32.totalorder %v820, %v905
        %vm1119 = vcmp.eq.s32.totalorder %v833, %v905
        %vm1120 = vcmp.eq.s32.totalorder %v820, %v909
        %vm1121 = vcmp.eq.s32.totalorder %v833, %v909
        %vm1122 = vcmp.eq.s32.totalorder %v820, %v913
        %vm1123 = vcmp.eq.s32.totalorder %v833, %v913
        %vm1124 = vcmp.eq.s32.totalorder %v820, %v917
        %vm1125 = vcmp.eq.s32.totalorder %v833, %v917
        %vm1126 = vcmp.eq.s32.totalorder %v820, %v921
        %vm1127 = vcmp.eq.s32.totalorder %v833, %v921
        %vm1128 = vcmp.eq.s32.totalorder %v820, %v925
        %vm1129 = vcmp.eq.s32.totalorder %v833, %v925
        %vm1130 = vcmp.eq.s32.totalorder %v820, %v929
        %vm1131 = vcmp.eq.s32.totalorder %v833, %v929
        %vm1132 = vcmp.eq.s32.totalorder %v820, %v933
        %vm1133 = vcmp.eq.s32.totalorder %v833, %v933
        %vm1134 = vcmp.eq.s32.totalorder %v820, %v937
        %vm1135 = vcmp.eq.s32.totalorder %v833, %v937
        %vm1136 = vcmp.eq.s32.totalorder %v820, %v941
        %vm1137 = vcmp.eq.s32.totalorder %v833, %v941
        %vm1138 = vcmp.eq.s32.totalorder %v820, %v945
        %vm1139 = vcmp.eq.s32.totalorder %v833, %v945
        %vm1140 = vcmp.eq.s32.totalorder %v820, %v949
        %vm1141 = vcmp.eq.s32.totalorder %v833, %v949
        %vm1142 = vcmp.eq.s32.totalorder %v846, %v889
        %vm1143 = vcmp.eq.s32.totalorder %v859, %v889
        %vm1144 = vcmp.eq.s32.totalorder %v846, %v893
        %vm1145 = vcmp.eq.s32.totalorder %v859, %v893
        %vm1146 = vcmp.eq.s32.totalorder %v846, %v897
        %vm1147 = vcmp.eq.s32.totalorder %v859, %v897
        %vm1148 = vcmp.eq.s32.totalorder %v846, %v901
        %vm1149 = vcmp.eq.s32.totalorder %v859, %v901
        %vm1150 = vcmp.eq.s32.totalorder %v846, %v905
        %vm1151 = vcmp.eq.s32.totalorder %v859, %v905
        %vm1152 = vcmp.eq.s32.totalorder %v846, %v909
        %vm1153 = vcmp.eq.s32.totalorder %v859, %v909
        %vm1154 = vcmp.eq.s32.totalorder %v846, %v913
        %vm1155 = vcmp.eq.s32.totalorder %v859, %v913
        %vm1156 = vcmp.eq.s32.totalorder %v846, %v917
        %vm1157 = vcmp.eq.s32.totalorder %v859, %v917
        %vm1158 = vcmp.eq.s32.totalorder %v846, %v921
        %vm1159 = vcmp.eq.s32.totalorder %v859, %v921
        %vm1160 = vcmp.eq.s32.totalorder %v846, %v925
        %vm1161 = vcmp.eq.s32.totalorder %v859, %v925
        %vm1162 = vcmp.eq.s32.totalorder %v846, %v929
        %vm1163 = vcmp.eq.s32.totalorder %v859, %v929
        %vm1164 = vcmp.eq.s32.totalorder %v846, %v933
        %vm1165 = vcmp.eq.s32.totalorder %v859, %v933
        %vm1166 = vcmp.eq.s32.totalorder %v846, %v937
        %vm1167 = vcmp.eq.s32.totalorder %v859, %v937
        %vm1168 = vcmp.eq.s32.totalorder %v846, %v941
        %vm1169 = vcmp.eq.s32.totalorder %v859, %v941
        %vm1170 = vcmp.eq.s32.totalorder %v846, %v945
        %vm1171 = vcmp.eq.s32.totalorder %v859, %v945
        %vm1172 = vcmp.eq.s32.totalorder %v846, %v949
        %vm1173 = vcmp.eq.s32.totalorder %v859, %v949
        %vm1174 = vcmp.eq.s32.totalorder %v872, %v889
        %vm1175 = vcmp.eq.s32.totalorder %v885, %v889
        %vm1176 = vcmp.eq.s32.totalorder %v872, %v893
        %vm1177 = vcmp.eq.s32.totalorder %v885, %v893
        %vm1178 = vcmp.eq.s32.totalorder %v872, %v897
        %vm1179 = vcmp.eq.s32.totalorder %v885, %v897
        %vm1180 = vcmp.eq.s32.totalorder %v872, %v901
        %vm1181 = vcmp.eq.s32.totalorder %v885, %v901
        %vm1182 = vcmp.eq.s32.totalorder %v872, %v905
        %vm1183 = vcmp.eq.s32.totalorder %v885, %v905
        %vm1184 = vcmp.eq.s32.totalorder %v872, %v909
        %vm1185 = vcmp.eq.s32.totalorder %v885, %v909
        %vm1186 = vcmp.eq.s32.totalorder %v872, %v913
        %vm1187 = vcmp.eq.s32.totalorder %v885, %v913
        %vm1188 = vcmp.eq.s32.totalorder %v872, %v917
        %vm1189 = vcmp.eq.s32.totalorder %v885, %v917
        %vm1190 = vcmp.eq.s32.totalorder %v872, %v921
        %vm1191 = vcmp.eq.s32.totalorder %v885, %v921
        %vm1192 = vcmp.eq.s32.totalorder %v872, %v925
        %vm1193 = vcmp.eq.s32.totalorder %v885, %v925
        %vm1194 = vcmp.eq.s32.totalorder %v872, %v929
        %vm1195 = vcmp.eq.s32.totalorder %v885, %v929
        %vm1196 = vcmp.eq.s32.totalorder %v872, %v933
        %vm1197 = vcmp.eq.s32.totalorder %v885, %v933
        %vm1198 = vcmp.eq.s32.totalorder %v872, %v937
        %vm1199 = vcmp.eq.s32.totalorder %v885, %v937
        %vm1200 = vcmp.eq.s32.totalorder %v872, %v941
        %vm1201 = vcmp.eq.s32.totalorder %v885, %v941
        %vm1202 = vcmp.eq.s32.totalorder %v872, %v945
        %vm1203 = vcmp.eq.s32.totalorder %v885, %v945
        %vm1204 = vcmp.eq.s32.totalorder %v872, %v949
        %vm1205 = vcmp.eq.s32.totalorder %v885, %v949
        %1207 = vbcast.lane.b32.xlu0 %v493, 256
        %v1208 = vpop.permute.xlu0 %1207
        %s1210 = sor.u32 256, 8
        %1211 = vbcast.lane.b32.xlu0 %v493, %s1210
        %v1212 = vpop.permute.xlu0 %1211
        %1214 = vbcast.lane.b32.xlu0 %v497, 256
        %v1215 = vpop.permute.xlu0 %1214
        %s1217 = sor.u32 256, 8
        %1218 = vbcast.lane.b32.xlu0 %v497, %s1217
        %v1219 = vpop.permute.xlu0 %1218
        %1221 = vbcast.lane.b32.xlu0 %v501, 256
        %v1222 = vpop.permute.xlu0 %1221
        %s1224 = sor.u32 256, 8
        %1225 = vbcast.lane.b32.xlu0 %v501, %s1224
        %v1226 = vpop.permute.xlu0 %1225
        %1228 = vbcast.lane.b32.xlu0 %v505, 256
        %v1229 = vpop.permute.xlu0 %1228
        %s1231 = sor.u32 256, 8
        %1232 = vbcast.lane.b32.xlu0 %v505, %s1231
        %v1233 = vpop.permute.xlu0 %1232
        %1235 = vbcast.lane.b32.xlu0 %v509, 256
        %v1236 = vpop.permute.xlu0 %1235
        %s1238 = sor.u32 256, 8
        %1239 = vbcast.lane.b32.xlu0 %v509, %s1238
        %v1240 = vpop.permute.xlu0 %1239
        %1242 = vbcast.lane.b32.xlu0 %v513, 256
        %v1243 = vpop.permute.xlu0 %1242
        %s1245 = sor.u32 256, 8
        %1246 = vbcast.lane.b32.xlu0 %v513, %s1245
        %v1247 = vpop.permute.xlu0 %1246
        %1249 = vbcast.lane.b32.xlu0 %v517, 256
        %v1250 = vpop.permute.xlu0 %1249
        %s1252 = sor.u32 256, 8
        %1253 = vbcast.lane.b32.xlu0 %v517, %s1252
        %v1254 = vpop.permute.xlu0 %1253
        %1256 = vbcast.lane.b32.xlu0 %v521, 256
        %v1257 = vpop.permute.xlu0 %1256
        %s1259 = sor.u32 256, 8
        %1260 = vbcast.lane.b32.xlu0 %v521, %s1259
        %v1261 = vpop.permute.xlu0 %1260
        %v1278 = vsel %vm950, %v1208, 0.0
        %v1279 = vsel %vm951, %v1212, 0.0
        %v1280 = vsel %vm952, %v1208, 0.0
        %v1281 = vsel %vm953, %v1212, 0.0
        %v1282 = vsel %vm954, %v1208, 0.0
        %v1283 = vsel %vm955, %v1212, 0.0
        %v1284 = vsel %vm956, %v1208, 0.0
        %v1285 = vsel %vm957, %v1212, 0.0
        %v1286 = vsel %vm958, %v1208, 0.0
        %v1287 = vsel %vm959, %v1212, 0.0
        %v1288 = vsel %vm960, %v1208, 0.0
        %v1289 = vsel %vm961, %v1212, 0.0
        %v1290 = vsel %vm962, %v1208, 0.0
        %v1291 = vsel %vm963, %v1212, 0.0
        %v1292 = vsel %vm964, %v1208, 0.0
        %v1293 = vsel %vm965, %v1212, 0.0
        %v1294 = vsel %vm966, %v1208, 0.0
        %v1295 = vsel %vm967, %v1212, 0.0
        %v1296 = vsel %vm968, %v1208, 0.0
        %v1297 = vsel %vm969, %v1212, 0.0
        %v1298 = vsel %vm970, %v1208, 0.0
        %v1299 = vsel %vm971, %v1212, 0.0
        %v1300 = vsel %vm972, %v1208, 0.0
        %v1301 = vsel %vm973, %v1212, 0.0
        %v1302 = vsel %vm974, %v1208, 0.0
        %v1303 = vsel %vm975, %v1212, 0.0
        %v1304 = vsel %vm976, %v1208, 0.0
        %v1305 = vsel %vm977, %v1212, 0.0
        %v1306 = vsel %vm978, %v1208, 0.0
        %v1307 = vsel %vm979, %v1212, 0.0
        %v1308 = vsel %vm980, %v1208, 0.0
        %v1309 = vsel %vm981, %v1212, 0.0
        %v1310 = vsel %vm982, %v1215, 0.0
        %v1311 = vsel %vm983, %v1219, 0.0
        %v1312 = vsel %vm984, %v1215, 0.0
        %v1313 = vsel %vm985, %v1219, 0.0
        %v1314 = vsel %vm986, %v1215, 0.0
        %v1315 = vsel %vm987, %v1219, 0.0
        %v1316 = vsel %vm988, %v1215, 0.0
        %v1317 = vsel %vm989, %v1219, 0.0
        %v1318 = vsel %vm990, %v1215, 0.0
        %v1319 = vsel %vm991, %v1219, 0.0
        %v1320 = vsel %vm992, %v1215, 0.0
        %v1321 = vsel %vm993, %v1219, 0.0
        %v1322 = vsel %vm994, %v1215, 0.0
        %v1323 = vsel %vm995, %v1219, 0.0
        %v1324 = vsel %vm996, %v1215, 0.0
        %v1325 = vsel %vm997, %v1219, 0.0
        %v1326 = vsel %vm998, %v1215, 0.0
        %v1327 = vsel %vm999, %v1219, 0.0
        %v1328 = vsel %vm1000, %v1215, 0.0
        %v1329 = vsel %vm1001, %v1219, 0.0
        %v1330 = vsel %vm1002, %v1215, 0.0
        %v1331 = vsel %vm1003, %v1219, 0.0
        %v1332 = vsel %vm1004, %v1215, 0.0
        %v1333 = vsel %vm1005, %v1219, 0.0
        %v1334 = vsel %vm1006, %v1215, 0.0
        %v1335 = vsel %vm1007, %v1219, 0.0
        %v1336 = vsel %vm1008, %v1215, 0.0
        %v1337 = vsel %vm1009, %v1219, 0.0
        %v1338 = vsel %vm1010, %v1215, 0.0
        %v1339 = vsel %vm1011, %v1219, 0.0
        %v1340 = vsel %vm1012, %v1215, 0.0
        %v1341 = vsel %vm1013, %v1219, 0.0
        %v1342 = vsel %vm1014, %v1222, 0.0
        %v1343 = vsel %vm1015, %v1226, 0.0
        %v1344 = vsel %vm1016, %v1222, 0.0
        %v1345 = vsel %vm1017, %v1226, 0.0
        %v1346 = vsel %vm1018, %v1222, 0.0
        %v1347 = vsel %vm1019, %v1226, 0.0
        %v1348 = vsel %vm1020, %v1222, 0.0
        %v1349 = vsel %vm1021, %v1226, 0.0
        %v1350 = vsel %vm1022, %v1222, 0.0
        %v1351 = vsel %vm1023, %v1226, 0.0
        %v1352 = vsel %vm1024, %v1222, 0.0
        %v1353 = vsel %vm1025, %v1226, 0.0
        %v1354 = vsel %vm1026, %v1222, 0.0
        %v1355 = vsel %vm1027, %v1226, 0.0
        %v1356 = vsel %vm1028, %v1222, 0.0
        %v1357 = vsel %vm1029, %v1226, 0.0
        %v1358 = vsel %vm1030, %v1222, 0.0
        %v1359 = vsel %vm1031, %v1226, 0.0
        %v1360 = vsel %vm1032, %v1222, 0.0
        %v1361 = vsel %vm1033, %v1226, 0.0
        %v1362 = vsel %vm1034, %v1222, 0.0
        %v1363 = vsel %vm1035, %v1226, 0.0
        %v1364 = vsel %vm1036, %v1222, 0.0
        %v1365 = vsel %vm1037, %v1226, 0.0
        %v1366 = vsel %vm1038, %v1222, 0.0
        %v1367 = vsel %vm1039, %v1226, 0.0
        %v1368 = vsel %vm1040, %v1222, 0.0
        %v1369 = vsel %vm1041, %v1226, 0.0
        %v1370 = vsel %vm1042, %v1222, 0.0
        %v1371 = vsel %vm1043, %v1226, 0.0
        %v1372 = vsel %vm1044, %v1222, 0.0
        %v1373 = vsel %vm1045, %v1226, 0.0
        %v1374 = vsel %vm1046, %v1229, 0.0
        %v1375 = vsel %vm1047, %v1233, 0.0
        %v1376 = vsel %vm1048, %v1229, 0.0
        %v1377 = vsel %vm1049, %v1233, 0.0
        %v1378 = vsel %vm1050, %v1229, 0.0
        %v1379 = vsel %vm1051, %v1233, 0.0
        %v1380 = vsel %vm1052, %v1229, 0.0
        %v1381 = vsel %vm1053, %v1233, 0.0
        %v1382 = vsel %vm1054, %v1229, 0.0
        %v1383 = vsel %vm1055, %v1233, 0.0
        %v1384 = vsel %vm1056, %v1229, 0.0
        %v1385 = vsel %vm1057, %v1233, 0.0
        %v1386 = vsel %vm1058, %v1229, 0.0
        %v1387 = vsel %vm1059, %v1233, 0.0
        %v1388 = vsel %vm1060, %v1229, 0.0
        %v1389 = vsel %vm1061, %v1233, 0.0
        %v1390 = vsel %vm1062, %v1229, 0.0
        %v1391 = vsel %vm1063, %v1233, 0.0
        %v1392 = vsel %vm1064, %v1229, 0.0
        %v1393 = vsel %vm1065, %v1233, 0.0
        %v1394 = vsel %vm1066, %v1229, 0.0
        %v1395 = vsel %vm1067, %v1233, 0.0
        %v1396 = vsel %vm1068, %v1229, 0.0
        %v1397 = vsel %vm1069, %v1233, 0.0
        %v1398 = vsel %vm1070, %v1229, 0.0
        %v1399 = vsel %vm1071, %v1233, 0.0
        %v1400 = vsel %vm1072, %v1229, 0.0
        %v1401 = vsel %vm1073, %v1233, 0.0
        %v1402 = vsel %vm1074, %v1229, 0.0
        %v1403 = vsel %vm1075, %v1233, 0.0
        %v1404 = vsel %vm1076, %v1229, 0.0
        %v1405 = vsel %vm1077, %v1233, 0.0
        %v1406 = vsel %vm1078, %v1236, 0.0
        %v1407 = vsel %vm1079, %v1240, 0.0
        %v1408 = vsel %vm1080, %v1236, 0.0
        %v1409 = vsel %vm1081, %v1240, 0.0
        %v1410 = vsel %vm1082, %v1236, 0.0
        %v1411 = vsel %vm1083, %v1240, 0.0
        %v1412 = vsel %vm1084, %v1236, 0.0
        %v1413 = vsel %vm1085, %v1240, 0.0
        %v1414 = vsel %vm1086, %v1236, 0.0
        %v1415 = vsel %vm1087, %v1240, 0.0
        %v1416 = vsel %vm1088, %v1236, 0.0
        %v1417 = vsel %vm1089, %v1240, 0.0
        %v1418 = vsel %vm1090, %v1236, 0.0
        %v1419 = vsel %vm1091, %v1240, 0.0
        %v1420 = vsel %vm1092, %v1236, 0.0
        %v1421 = vsel %vm1093, %v1240, 0.0
        %v1422 = vsel %vm1094, %v1236, 0.0
        %v1423 = vsel %vm1095, %v1240, 0.0
        %v1424 = vsel %vm1096, %v1236, 0.0
        %v1425 = vsel %vm1097, %v1240, 0.0
        %v1426 = vsel %vm1098, %v1236, 0.0
        %v1427 = vsel %vm1099, %v1240, 0.0
        %v1428 = vsel %vm1100, %v1236, 0.0
        %v1429 = vsel %vm1101, %v1240, 0.0
        %v1430 = vsel %vm1102, %v1236, 0.0
        %v1431 = vsel %vm1103, %v1240, 0.0
        %v1432 = vsel %vm1104, %v1236, 0.0
        %v1433 = vsel %vm1105, %v1240, 0.0
        %v1434 = vsel %vm1106, %v1236, 0.0
        %v1435 = vsel %vm1107, %v1240, 0.0
        %v1436 = vsel %vm1108, %v1236, 0.0
        %v1437 = vsel %vm1109, %v1240, 0.0
        %v1438 = vsel %vm1110, %v1243, 0.0
        %v1439 = vsel %vm1111, %v1247, 0.0
        %v1440 = vsel %vm1112, %v1243, 0.0
        %v1441 = vsel %vm1113, %v1247, 0.0
        %v1442 = vsel %vm1114, %v1243, 0.0
        %v1443 = vsel %vm1115, %v1247, 0.0
        %v1444 = vsel %vm1116, %v1243, 0.0
        %v1445 = vsel %vm1117, %v1247, 0.0
        %v1446 = vsel %vm1118, %v1243, 0.0
        %v1447 = vsel %vm1119, %v1247, 0.0
        %v1448 = vsel %vm1120, %v1243, 0.0
        %v1449 = vsel %vm1121, %v1247, 0.0
        %v1450 = vsel %vm1122, %v1243, 0.0
        %v1451 = vsel %vm1123, %v1247, 0.0
        %v1452 = vsel %vm1124, %v1243, 0.0
        %v1453 = vsel %vm1125, %v1247, 0.0
        %v1454 = vsel %vm1126, %v1243, 0.0
        %v1455 = vsel %vm1127, %v1247, 0.0
        %v1456 = vsel %vm1128, %v1243, 0.0
        %v1457 = vsel %vm1129, %v1247, 0.0
        %v1458 = vsel %vm1130, %v1243, 0.0
        %v1459 = vsel %vm1131, %v1247, 0.0
        %v1460 = vsel %vm1132, %v1243, 0.0
        %v1461 = vsel %vm1133, %v1247, 0.0
        %v1462 = vsel %vm1134, %v1243, 0.0
        %v1463 = vsel %vm1135, %v1247, 0.0
        %v1464 = vsel %vm1136, %v1243, 0.0
        %v1465 = vsel %vm1137, %v1247, 0.0
        %v1466 = vsel %vm1138, %v1243, 0.0
        %v1467 = vsel %vm1139, %v1247, 0.0
        %v1468 = vsel %vm1140, %v1243, 0.0
        %v1469 = vsel %vm1141, %v1247, 0.0
        %v1470 = vsel %vm1142, %v1250, 0.0
        %v1471 = vsel %vm1143, %v1254, 0.0
        %v1472 = vsel %vm1144, %v1250, 0.0
        %v1473 = vsel %vm1145, %v1254, 0.0
        %v1474 = vsel %vm1146, %v1250, 0.0
        %v1475 = vsel %vm1147, %v1254, 0.0
        %v1476 = vsel %vm1148, %v1250, 0.0
        %v1477 = vsel %vm1149, %v1254, 0.0
        %v1478 = vsel %vm1150, %v1250, 0.0
        %v1479 = vsel %vm1151, %v1254, 0.0
        %v1480 = vsel %vm1152, %v1250, 0.0
        %v1481 = vsel %vm1153, %v1254, 0.0
        %v1482 = vsel %vm1154, %v1250, 0.0
        %v1483 = vsel %vm1155, %v1254, 0.0
        %v1484 = vsel %vm1156, %v1250, 0.0
        %v1485 = vsel %vm1157, %v1254, 0.0
        %v1486 = vsel %vm1158, %v1250, 0.0
        %v1487 = vsel %vm1159, %v1254, 0.0
        %v1488 = vsel %vm1160, %v1250, 0.0
        %v1489 = vsel %vm1161, %v1254, 0.0
        %v1490 = vsel %vm1162, %v1250, 0.0
        %v1491 = vsel %vm1163, %v1254, 0.0
        %v1492 = vsel %vm1164, %v1250, 0.0
        %v1493 = vsel %vm1165, %v1254, 0.0
        %v1494 = vsel %vm1166, %v1250, 0.0
        %v1495 = vsel %vm1167, %v1254, 0.0
        %v1496 = vsel %vm1168, %v1250, 0.0
        %v1497 = vsel %vm1169, %v1254, 0.0
        %v1498 = vsel %vm1170, %v1250, 0.0
        %v1499 = vsel %vm1171, %v1254, 0.0
        %v1500 = vsel %vm1172, %v1250, 0.0
        %v1501 = vsel %vm1173, %v1254, 0.0
        %v1502 = vsel %vm1174, %v1257, 0.0
        %v1503 = vsel %vm1175, %v1261, 0.0
        %v1504 = vsel %vm1176, %v1257, 0.0
        %v1505 = vsel %vm1177, %v1261, 0.0
        %v1506 = vsel %vm1178, %v1257, 0.0
        %v1507 = vsel %vm1179, %v1261, 0.0
        %v1508 = vsel %vm1180, %v1257, 0.0
        %v1509 = vsel %vm1181, %v1261, 0.0
        %v1510 = vsel %vm1182, %v1257, 0.0
        %v1511 = vsel %vm1183, %v1261, 0.0
        %v1512 = vsel %vm1184, %v1257, 0.0
        %v1513 = vsel %vm1185, %v1261, 0.0
        %v1514 = vsel %vm1186, %v1257, 0.0
        %v1515 = vsel %vm1187, %v1261, 0.0
        %v1516 = vsel %vm1188, %v1257, 0.0
        %v1517 = vsel %vm1189, %v1261, 0.0
        %v1518 = vsel %vm1190, %v1257, 0.0
        %v1519 = vsel %vm1191, %v1261, 0.0
        %v1520 = vsel %vm1192, %v1257, 0.0
        %v1521 = vsel %vm1193, %v1261, 0.0
        %v1522 = vsel %vm1194, %v1257, 0.0
        %v1523 = vsel %vm1195, %v1261, 0.0
        %v1524 = vsel %vm1196, %v1257, 0.0
        %v1525 = vsel %vm1197, %v1261, 0.0
        %v1526 = vsel %vm1198, %v1257, 0.0
        %v1527 = vsel %vm1199, %v1261, 0.0
        %v1528 = vsel %vm1200, %v1257, 0.0
        %v1529 = vsel %vm1201, %v1261, 0.0
        %v1530 = vsel %vm1202, %v1257, 0.0
        %v1531 = vsel %vm1203, %v1261, 0.0
        %v1532 = vsel %vm1204, %v1257, 0.0
        %v1533 = vsel %vm1205, %v1261, 0.0
        %1790 = vset.pattern.permute.xlu0 0
        %1791 = vperm.xlu0 %1790, %v1278
        %v1792 = vpop.permute.xlu0 %1791
        %1793 = vset.pattern.permute.xlu0 0
        %1794 = vperm.xlu0 %1793, %v1279
        %v1795 = vpop.permute.xlu0 %1794
        %1796 = vset.pattern.permute.xlu0 0
        %1797 = vperm.xlu0 %1796, %v1280
        %v1798 = vpop.permute.xlu0 %1797
        %1799 = vset.pattern.permute.xlu0 0
        %1800 = vperm.xlu0 %1799, %v1281
        %v1801 = vpop.permute.xlu0 %1800
        %1802 = vset.pattern.permute.xlu0 0
        %1803 = vperm.xlu0 %1802, %v1282
        %v1804 = vpop.permute.xlu0 %1803
        %1805 = vset.pattern.permute.xlu0 0
        %1806 = vperm.xlu0 %1805, %v1283
        %v1807 = vpop.permute.xlu0 %1806
        %1808 = vset.pattern.permute.xlu0 0
        %1809 = vperm.xlu0 %1808, %v1284
        %v1810 = vpop.permute.xlu0 %1809
        %1811 = vset.pattern.permute.xlu0 0
        %1812 = vperm.xlu0 %1811, %v1285
        %v1813 = vpop.permute.xlu0 %1812
        %1814 = vset.pattern.permute.xlu0 0
        %1815 = vperm.xlu0 %1814, %v1286
        %v1816 = vpop.permute.xlu0 %1815
        %1817 = vset.pattern.permute.xlu0 0
        %1818 = vperm.xlu0 %1817, %v1287
        %v1819 = vpop.permute.xlu0 %1818
        %1820 = vset.pattern.permute.xlu0 0
        %1821 = vperm.xlu0 %1820, %v1288
        %v1822 = vpop.permute.xlu0 %1821
        %1823 = vset.pattern.permute.xlu0 0
        %1824 = vperm.xlu0 %1823, %v1289
        %v1825 = vpop.permute.xlu0 %1824
        %1826 = vset.pattern.permute.xlu0 0
        %1827 = vperm.xlu0 %1826, %v1290
        %v1828 = vpop.permute.xlu0 %1827
        %1829 = vset.pattern.permute.xlu0 0
        %1830 = vperm.xlu0 %1829, %v1291
        %v1831 = vpop.permute.xlu0 %1830
        %1832 = vset.pattern.permute.xlu0 0
        %1833 = vperm.xlu0 %1832, %v1292
        %v1834 = vpop.permute.xlu0 %1833
        %1835 = vset.pattern.permute.xlu0 0
        %1836 = vperm.xlu0 %1835, %v1293
        %v1837 = vpop.permute.xlu0 %1836
        %1838 = vset.pattern.permute.xlu0 0
        %1839 = vperm.xlu0 %1838, %v1294
        %v1840 = vpop.permute.xlu0 %1839
        %1841 = vset.pattern.permute.xlu0 0
        %1842 = vperm.xlu0 %1841, %v1295
        %v1843 = vpop.permute.xlu0 %1842
        %1844 = vset.pattern.permute.xlu0 0
        %1845 = vperm.xlu0 %1844, %v1296
        %v1846 = vpop.permute.xlu0 %1845
        %1847 = vset.pattern.permute.xlu0 0
        %1848 = vperm.xlu0 %1847, %v1297
        %v1849 = vpop.permute.xlu0 %1848
        %1850 = vset.pattern.permute.xlu0 0
        %1851 = vperm.xlu0 %1850, %v1298
        %v1852 = vpop.permute.xlu0 %1851
        %1853 = vset.pattern.permute.xlu0 0
        %1854 = vperm.xlu0 %1853, %v1299
        %v1855 = vpop.permute.xlu0 %1854
        %1856 = vset.pattern.permute.xlu0 0
        %1857 = vperm.xlu0 %1856, %v1300
        %v1858 = vpop.permute.xlu0 %1857
        %1859 = vset.pattern.permute.xlu0 0
        %1860 = vperm.xlu0 %1859, %v1301
        %v1861 = vpop.permute.xlu0 %1860
        %1862 = vset.pattern.permute.xlu0 0
        %1863 = vperm.xlu0 %1862, %v1302
        %v1864 = vpop.permute.xlu0 %1863
        %1865 = vset.pattern.permute.xlu0 0
        %1866 = vperm.xlu0 %1865, %v1303
        %v1867 = vpop.permute.xlu0 %1866
        %1868 = vset.pattern.permute.xlu0 0
        %1869 = vperm.xlu0 %1868, %v1304
        %v1870 = vpop.permute.xlu0 %1869
        %1871 = vset.pattern.permute.xlu0 0
        %1872 = vperm.xlu0 %1871, %v1305
        %v1873 = vpop.permute.xlu0 %1872
        %1874 = vset.pattern.permute.xlu0 0
        %1875 = vperm.xlu0 %1874, %v1306
        %v1876 = vpop.permute.xlu0 %1875
        %1877 = vset.pattern.permute.xlu0 0
        %1878 = vperm.xlu0 %1877, %v1307
        %v1879 = vpop.permute.xlu0 %1878
        %1880 = vset.pattern.permute.xlu0 0
        %1881 = vperm.xlu0 %1880, %v1308
        %v1882 = vpop.permute.xlu0 %1881
        %1883 = vset.pattern.permute.xlu0 0
        %1884 = vperm.xlu0 %1883, %v1309
        %v1885 = vpop.permute.xlu0 %1884
        %1886 = vset.pattern.permute.xlu0 0
        %1887 = vperm.xlu0 %1886, %v1310
        %v1888 = vpop.permute.xlu0 %1887
        %1889 = vset.pattern.permute.xlu0 0
        %1890 = vperm.xlu0 %1889, %v1311
        %v1891 = vpop.permute.xlu0 %1890
        %1892 = vset.pattern.permute.xlu0 0
        %1893 = vperm.xlu0 %1892, %v1312
        %v1894 = vpop.permute.xlu0 %1893
        %1895 = vset.pattern.permute.xlu0 0
        %1896 = vperm.xlu0 %1895, %v1313
        %v1897 = vpop.permute.xlu0 %1896
        %1898 = vset.pattern.permute.xlu0 0
        %1899 = vperm.xlu0 %1898, %v1314
        %v1900 = vpop.permute.xlu0 %1899
        %1901 = vset.pattern.permute.xlu0 0
        %1902 = vperm.xlu0 %1901, %v1315
        %v1903 = vpop.permute.xlu0 %1902
        %1904 = vset.pattern.permute.xlu0 0
        %1905 = vperm.xlu0 %1904, %v1316
        %v1906 = vpop.permute.xlu0 %1905
        %1907 = vset.pattern.permute.xlu0 0
        %1908 = vperm.xlu0 %1907, %v1317
        %v1909 = vpop.permute.xlu0 %1908
        %1910 = vset.pattern.permute.xlu0 0
        %1911 = vperm.xlu0 %1910, %v1318
        %v1912 = vpop.permute.xlu0 %1911
        %1913 = vset.pattern.permute.xlu0 0
        %1914 = vperm.xlu0 %1913, %v1319
        %v1915 = vpop.permute.xlu0 %1914
        %1916 = vset.pattern.permute.xlu0 0
        %1917 = vperm.xlu0 %1916, %v1320
        %v1918 = vpop.permute.xlu0 %1917
        %1919 = vset.pattern.permute.xlu0 0
        %1920 = vperm.xlu0 %1919, %v1321
        %v1921 = vpop.permute.xlu0 %1920
        %1922 = vset.pattern.permute.xlu0 0
        %1923 = vperm.xlu0 %1922, %v1322
        %v1924 = vpop.permute.xlu0 %1923
        %1925 = vset.pattern.permute.xlu0 0
        %1926 = vperm.xlu0 %1925, %v1323
        %v1927 = vpop.permute.xlu0 %1926
        %1928 = vset.pattern.permute.xlu0 0
        %1929 = vperm.xlu0 %1928, %v1324
        %v1930 = vpop.permute.xlu0 %1929
        %1931 = vset.pattern.permute.xlu0 0
        %1932 = vperm.xlu0 %1931, %v1325
        %v1933 = vpop.permute.xlu0 %1932
        %1934 = vset.pattern.permute.xlu0 0
        %1935 = vperm.xlu0 %1934, %v1326
        %v1936 = vpop.permute.xlu0 %1935
        %1937 = vset.pattern.permute.xlu0 0
        %1938 = vperm.xlu0 %1937, %v1327
        %v1939 = vpop.permute.xlu0 %1938
        %1940 = vset.pattern.permute.xlu0 0
        %1941 = vperm.xlu0 %1940, %v1328
        %v1942 = vpop.permute.xlu0 %1941
        %1943 = vset.pattern.permute.xlu0 0
        %1944 = vperm.xlu0 %1943, %v1329
        %v1945 = vpop.permute.xlu0 %1944
        %1946 = vset.pattern.permute.xlu0 0
        %1947 = vperm.xlu0 %1946, %v1330
        %v1948 = vpop.permute.xlu0 %1947
        %1949 = vset.pattern.permute.xlu0 0
        %1950 = vperm.xlu0 %1949, %v1331
        %v1951 = vpop.permute.xlu0 %1950
        %1952 = vset.pattern.permute.xlu0 0
        %1953 = vperm.xlu0 %1952, %v1332
        %v1954 = vpop.permute.xlu0 %1953
        %1955 = vset.pattern.permute.xlu0 0
        %1956 = vperm.xlu0 %1955, %v1333
        %v1957 = vpop.permute.xlu0 %1956
        %1958 = vset.pattern.permute.xlu0 0
        %1959 = vperm.xlu0 %1958, %v1334
        %v1960 = vpop.permute.xlu0 %1959
        %1961 = vset.pattern.permute.xlu0 0
        %1962 = vperm.xlu0 %1961, %v1335
        %v1963 = vpop.permute.xlu0 %1962
        %1964 = vset.pattern.permute.xlu0 0
        %1965 = vperm.xlu0 %1964, %v1336
        %v1966 = vpop.permute.xlu0 %1965
        %1967 = vset.pattern.permute.xlu0 0
        %1968 = vperm.xlu0 %1967, %v1337
        %v1969 = vpop.permute.xlu0 %1968
        %1970 = vset.pattern.permute.xlu0 0
        %1971 = vperm.xlu0 %1970, %v1338
        %v1972 = vpop.permute.xlu0 %1971
        %1973 = vset.pattern.permute.xlu0 0
        %1974 = vperm.xlu0 %1973, %v1339
        %v1975 = vpop.permute.xlu0 %1974
        %1976 = vset.pattern.permute.xlu0 0
        %1977 = vperm.xlu0 %1976, %v1340
        %v1978 = vpop.permute.xlu0 %1977
        %1979 = vset.pattern.permute.xlu0 0
        %1980 = vperm.xlu0 %1979, %v1341
        %v1981 = vpop.permute.xlu0 %1980
        %1982 = vset.pattern.permute.xlu0 0
        %1983 = vperm.xlu0 %1982, %v1342
        %v1984 = vpop.permute.xlu0 %1983
        %1985 = vset.pattern.permute.xlu0 0
        %1986 = vperm.xlu0 %1985, %v1343
        %v1987 = vpop.permute.xlu0 %1986
        %1988 = vset.pattern.permute.xlu0 0
        %1989 = vperm.xlu0 %1988, %v1344
        %v1990 = vpop.permute.xlu0 %1989
        %1991 = vset.pattern.permute.xlu0 0
        %1992 = vperm.xlu0 %1991, %v1345
        %v1993 = vpop.permute.xlu0 %1992
        %1994 = vset.pattern.permute.xlu0 0
        %1995 = vperm.xlu0 %1994, %v1346
        %v1996 = vpop.permute.xlu0 %1995
        %1997 = vset.pattern.permute.xlu0 0
        %1998 = vperm.xlu0 %1997, %v1347
        %v1999 = vpop.permute.xlu0 %1998
        %2000 = vset.pattern.permute.xlu0 0
        %2001 = vperm.xlu0 %2000, %v1348
        %v2002 = vpop.permute.xlu0 %2001
        %2003 = vset.pattern.permute.xlu0 0
        %2004 = vperm.xlu0 %2003, %v1349
        %v2005 = vpop.permute.xlu0 %2004
        %2006 = vset.pattern.permute.xlu0 0
        %2007 = vperm.xlu0 %2006, %v1350
        %v2008 = vpop.permute.xlu0 %2007
        %2009 = vset.pattern.permute.xlu0 0
        %2010 = vperm.xlu0 %2009, %v1351
        %v2011 = vpop.permute.xlu0 %2010
        %2012 = vset.pattern.permute.xlu0 0
        %2013 = vperm.xlu0 %2012, %v1352
        %v2014 = vpop.permute.xlu0 %2013
        %2015 = vset.pattern.permute.xlu0 0
        %2016 = vperm.xlu0 %2015, %v1353
        %v2017 = vpop.permute.xlu0 %2016
        %2018 = vset.pattern.permute.xlu0 0
        %2019 = vperm.xlu0 %2018, %v1354
        %v2020 = vpop.permute.xlu0 %2019
        %2021 = vset.pattern.permute.xlu0 0
        %2022 = vperm.xlu0 %2021, %v1355
        %v2023 = vpop.permute.xlu0 %2022
        %2024 = vset.pattern.permute.xlu0 0
        %2025 = vperm.xlu0 %2024, %v1356
        %v2026 = vpop.permute.xlu0 %2025
        %2027 = vset.pattern.permute.xlu0 0
        %2028 = vperm.xlu0 %2027, %v1357
        %v2029 = vpop.permute.xlu0 %2028
        %2030 = vset.pattern.permute.xlu0 0
        %2031 = vperm.xlu0 %2030, %v1358
        %v2032 = vpop.permute.xlu0 %2031
        %2033 = vset.pattern.permute.xlu0 0
        %2034 = vperm.xlu0 %2033, %v1359
        %v2035 = vpop.permute.xlu0 %2034
        %2036 = vset.pattern.permute.xlu0 0
        %2037 = vperm.xlu0 %2036, %v1360
        %v2038 = vpop.permute.xlu0 %2037
        %2039 = vset.pattern.permute.xlu0 0
        %2040 = vperm.xlu0 %2039, %v1361
        %v2041 = vpop.permute.xlu0 %2040
        %2042 = vset.pattern.permute.xlu0 0
        %2043 = vperm.xlu0 %2042, %v1362
        %v2044 = vpop.permute.xlu0 %2043
        %2045 = vset.pattern.permute.xlu0 0
        %2046 = vperm.xlu0 %2045, %v1363
        %v2047 = vpop.permute.xlu0 %2046
        %2048 = vset.pattern.permute.xlu0 0
        %2049 = vperm.xlu0 %2048, %v1364
        %v2050 = vpop.permute.xlu0 %2049
        %2051 = vset.pattern.permute.xlu0 0
        %2052 = vperm.xlu0 %2051, %v1365
        %v2053 = vpop.permute.xlu0 %2052
        %2054 = vset.pattern.permute.xlu0 0
        %2055 = vperm.xlu0 %2054, %v1366
        %v2056 = vpop.permute.xlu0 %2055
        %2057 = vset.pattern.permute.xlu0 0
        %2058 = vperm.xlu0 %2057, %v1367
        %v2059 = vpop.permute.xlu0 %2058
        %2060 = vset.pattern.permute.xlu0 0
        %2061 = vperm.xlu0 %2060, %v1368
        %v2062 = vpop.permute.xlu0 %2061
        %2063 = vset.pattern.permute.xlu0 0
        %2064 = vperm.xlu0 %2063, %v1369
        %v2065 = vpop.permute.xlu0 %2064
        %2066 = vset.pattern.permute.xlu0 0
        %2067 = vperm.xlu0 %2066, %v1370
        %v2068 = vpop.permute.xlu0 %2067
        %2069 = vset.pattern.permute.xlu0 0
        %2070 = vperm.xlu0 %2069, %v1371
        %v2071 = vpop.permute.xlu0 %2070
        %2072 = vset.pattern.permute.xlu0 0
        %2073 = vperm.xlu0 %2072, %v1372
        %v2074 = vpop.permute.xlu0 %2073
        %2075 = vset.pattern.permute.xlu0 0
        %2076 = vperm.xlu0 %2075, %v1373
        %v2077 = vpop.permute.xlu0 %2076
        %2078 = vset.pattern.permute.xlu0 0
        %2079 = vperm.xlu0 %2078, %v1374
        %v2080 = vpop.permute.xlu0 %2079
        %2081 = vset.pattern.permute.xlu0 0
        %2082 = vperm.xlu0 %2081, %v1375
        %v2083 = vpop.permute.xlu0 %2082
        %2084 = vset.pattern.permute.xlu0 0
        %2085 = vperm.xlu0 %2084, %v1376
        %v2086 = vpop.permute.xlu0 %2085
        %2087 = vset.pattern.permute.xlu0 0
        %2088 = vperm.xlu0 %2087, %v1377
        %v2089 = vpop.permute.xlu0 %2088
        %2090 = vset.pattern.permute.xlu0 0
        %2091 = vperm.xlu0 %2090, %v1378
        %v2092 = vpop.permute.xlu0 %2091
        %2093 = vset.pattern.permute.xlu0 0
        %2094 = vperm.xlu0 %2093, %v1379
        %v2095 = vpop.permute.xlu0 %2094
        %2096 = vset.pattern.permute.xlu0 0
        %2097 = vperm.xlu0 %2096, %v1380
        %v2098 = vpop.permute.xlu0 %2097
        %2099 = vset.pattern.permute.xlu0 0
        %2100 = vperm.xlu0 %2099, %v1381
        %v2101 = vpop.permute.xlu0 %2100
        %2102 = vset.pattern.permute.xlu0 0
        %2103 = vperm.xlu0 %2102, %v1382
        %v2104 = vpop.permute.xlu0 %2103
        %2105 = vset.pattern.permute.xlu0 0
        %2106 = vperm.xlu0 %2105, %v1383
        %v2107 = vpop.permute.xlu0 %2106
        %2108 = vset.pattern.permute.xlu0 0
        %2109 = vperm.xlu0 %2108, %v1384
        %v2110 = vpop.permute.xlu0 %2109
        %2111 = vset.pattern.permute.xlu0 0
        %2112 = vperm.xlu0 %2111, %v1385
        %v2113 = vpop.permute.xlu0 %2112
        %2114 = vset.pattern.permute.xlu0 0
        %2115 = vperm.xlu0 %2114, %v1386
        %v2116 = vpop.permute.xlu0 %2115
        %2117 = vset.pattern.permute.xlu0 0
        %2118 = vperm.xlu0 %2117, %v1387
        %v2119 = vpop.permute.xlu0 %2118
        %2120 = vset.pattern.permute.xlu0 0
        %2121 = vperm.xlu0 %2120, %v1388
        %v2122 = vpop.permute.xlu0 %2121
        %2123 = vset.pattern.permute.xlu0 0
        %2124 = vperm.xlu0 %2123, %v1389
        %v2125 = vpop.permute.xlu0 %2124
        %2126 = vset.pattern.permute.xlu0 0
        %2127 = vperm.xlu0 %2126, %v1390
        %v2128 = vpop.permute.xlu0 %2127
        %2129 = vset.pattern.permute.xlu0 0
        %2130 = vperm.xlu0 %2129, %v1391
        %v2131 = vpop.permute.xlu0 %2130
        %2132 = vset.pattern.permute.xlu0 0
        %2133 = vperm.xlu0 %2132, %v1392
        %v2134 = vpop.permute.xlu0 %2133
        %2135 = vset.pattern.permute.xlu0 0
        %2136 = vperm.xlu0 %2135, %v1393
        %v2137 = vpop.permute.xlu0 %2136
        %2138 = vset.pattern.permute.xlu0 0
        %2139 = vperm.xlu0 %2138, %v1394
        %v2140 = vpop.permute.xlu0 %2139
        %2141 = vset.pattern.permute.xlu0 0
        %2142 = vperm.xlu0 %2141, %v1395
        %v2143 = vpop.permute.xlu0 %2142
        %2144 = vset.pattern.permute.xlu0 0
        %2145 = vperm.xlu0 %2144, %v1396
        %v2146 = vpop.permute.xlu0 %2145
        %2147 = vset.pattern.permute.xlu0 0
        %2148 = vperm.xlu0 %2147, %v1397
        %v2149 = vpop.permute.xlu0 %2148
        %2150 = vset.pattern.permute.xlu0 0
        %2151 = vperm.xlu0 %2150, %v1398
        %v2152 = vpop.permute.xlu0 %2151
        %2153 = vset.pattern.permute.xlu0 0
        %2154 = vperm.xlu0 %2153, %v1399
        %v2155 = vpop.permute.xlu0 %2154
        %2156 = vset.pattern.permute.xlu0 0
        %2157 = vperm.xlu0 %2156, %v1400
        %v2158 = vpop.permute.xlu0 %2157
        %2159 = vset.pattern.permute.xlu0 0
        %2160 = vperm.xlu0 %2159, %v1401
        %v2161 = vpop.permute.xlu0 %2160
        %2162 = vset.pattern.permute.xlu0 0
        %2163 = vperm.xlu0 %2162, %v1402
        %v2164 = vpop.permute.xlu0 %2163
        %2165 = vset.pattern.permute.xlu0 0
        %2166 = vperm.xlu0 %2165, %v1403
        %v2167 = vpop.permute.xlu0 %2166
        %2168 = vset.pattern.permute.xlu0 0
        %2169 = vperm.xlu0 %2168, %v1404
        %v2170 = vpop.permute.xlu0 %2169
        %2171 = vset.pattern.permute.xlu0 0
        %2172 = vperm.xlu0 %2171, %v1405
        %v2173 = vpop.permute.xlu0 %2172
        %2174 = vset.pattern.permute.xlu0 0
        %2175 = vperm.xlu0 %2174, %v1406
        %v2176 = vpop.permute.xlu0 %2175
        %2177 = vset.pattern.permute.xlu0 0
        %2178 = vperm.xlu0 %2177, %v1407
        %v2179 = vpop.permute.xlu0 %2178
        %2180 = vset.pattern.permute.xlu0 0
        %2181 = vperm.xlu0 %2180, %v1408
        %v2182 = vpop.permute.xlu0 %2181
        %2183 = vset.pattern.permute.xlu0 0
        %2184 = vperm.xlu0 %2183, %v1409
        %v2185 = vpop.permute.xlu0 %2184
        %2186 = vset.pattern.permute.xlu0 0
        %2187 = vperm.xlu0 %2186, %v1410
        %v2188 = vpop.permute.xlu0 %2187
        %2189 = vset.pattern.permute.xlu0 0
        %2190 = vperm.xlu0 %2189, %v1411
        %v2191 = vpop.permute.xlu0 %2190
        %2192 = vset.pattern.permute.xlu0 0
        %2193 = vperm.xlu0 %2192, %v1412
        %v2194 = vpop.permute.xlu0 %2193
        %2195 = vset.pattern.permute.xlu0 0
        %2196 = vperm.xlu0 %2195, %v1413
        %v2197 = vpop.permute.xlu0 %2196
        %2198 = vset.pattern.permute.xlu0 0
        %2199 = vperm.xlu0 %2198, %v1414
        %v2200 = vpop.permute.xlu0 %2199
        %2201 = vset.pattern.permute.xlu0 0
        %2202 = vperm.xlu0 %2201, %v1415
        %v2203 = vpop.permute.xlu0 %2202
        %2204 = vset.pattern.permute.xlu0 0
        %2205 = vperm.xlu0 %2204, %v1416
        %v2206 = vpop.permute.xlu0 %2205
        %2207 = vset.pattern.permute.xlu0 0
        %2208 = vperm.xlu0 %2207, %v1417
        %v2209 = vpop.permute.xlu0 %2208
        %2210 = vset.pattern.permute.xlu0 0
        %2211 = vperm.xlu0 %2210, %v1418
        %v2212 = vpop.permute.xlu0 %2211
        %2213 = vset.pattern.permute.xlu0 0
        %2214 = vperm.xlu0 %2213, %v1419
        %v2215 = vpop.permute.xlu0 %2214
        %2216 = vset.pattern.permute.xlu0 0
        %2217 = vperm.xlu0 %2216, %v1420
        %v2218 = vpop.permute.xlu0 %2217
        %2219 = vset.pattern.permute.xlu0 0
        %2220 = vperm.xlu0 %2219, %v1421
        %v2221 = vpop.permute.xlu0 %2220
        %2222 = vset.pattern.permute.xlu0 0
        %2223 = vperm.xlu0 %2222, %v1422
        %v2224 = vpop.permute.xlu0 %2223
        %2225 = vset.pattern.permute.xlu0 0
        %2226 = vperm.xlu0 %2225, %v1423
        %v2227 = vpop.permute.xlu0 %2226
        %2228 = vset.pattern.permute.xlu0 0
        %2229 = vperm.xlu0 %2228, %v1424
        %v2230 = vpop.permute.xlu0 %2229
        %2231 = vset.pattern.permute.xlu0 0
        %2232 = vperm.xlu0 %2231, %v1425
        %v2233 = vpop.permute.xlu0 %2232
        %2234 = vset.pattern.permute.xlu0 0
        %2235 = vperm.xlu0 %2234, %v1426
        %v2236 = vpop.permute.xlu0 %2235
        %2237 = vset.pattern.permute.xlu0 0
        %2238 = vperm.xlu0 %2237, %v1427
        %v2239 = vpop.permute.xlu0 %2238
        %2240 = vset.pattern.permute.xlu0 0
        %2241 = vperm.xlu0 %2240, %v1428
        %v2242 = vpop.permute.xlu0 %2241
        %2243 = vset.pattern.permute.xlu0 0
        %2244 = vperm.xlu0 %2243, %v1429
        %v2245 = vpop.permute.xlu0 %2244
        %2246 = vset.pattern.permute.xlu0 0
        %2247 = vperm.xlu0 %2246, %v1430
        %v2248 = vpop.permute.xlu0 %2247
        %2249 = vset.pattern.permute.xlu0 0
        %2250 = vperm.xlu0 %2249, %v1431
        %v2251 = vpop.permute.xlu0 %2250
        %2252 = vset.pattern.permute.xlu0 0
        %2253 = vperm.xlu0 %2252, %v1432
        %v2254 = vpop.permute.xlu0 %2253
        %2255 = vset.pattern.permute.xlu0 0
        %2256 = vperm.xlu0 %2255, %v1433
        %v2257 = vpop.permute.xlu0 %2256
        %2258 = vset.pattern.permute.xlu0 0
        %2259 = vperm.xlu0 %2258, %v1434
        %v2260 = vpop.permute.xlu0 %2259
        %2261 = vset.pattern.permute.xlu0 0
        %2262 = vperm.xlu0 %2261, %v1435
        %v2263 = vpop.permute.xlu0 %2262
        %2264 = vset.pattern.permute.xlu0 0
        %2265 = vperm.xlu0 %2264, %v1436
        %v2266 = vpop.permute.xlu0 %2265
        %2267 = vset.pattern.permute.xlu0 0
        %2268 = vperm.xlu0 %2267, %v1437
        %v2269 = vpop.permute.xlu0 %2268
        %2270 = vset.pattern.permute.xlu0 0
        %2271 = vperm.xlu0 %2270, %v1438
        %v2272 = vpop.permute.xlu0 %2271
        %2273 = vset.pattern.permute.xlu0 0
        %2274 = vperm.xlu0 %2273, %v1439
        %v2275 = vpop.permute.xlu0 %2274
        %2276 = vset.pattern.permute.xlu0 0
        %2277 = vperm.xlu0 %2276, %v1440
        %v2278 = vpop.permute.xlu0 %2277
        %2279 = vset.pattern.permute.xlu0 0
        %2280 = vperm.xlu0 %2279, %v1441
        %v2281 = vpop.permute.xlu0 %2280
        %2282 = vset.pattern.permute.xlu0 0
        %2283 = vperm.xlu0 %2282, %v1442
        %v2284 = vpop.permute.xlu0 %2283
        %2285 = vset.pattern.permute.xlu0 0
        %2286 = vperm.xlu0 %2285, %v1443
        %v2287 = vpop.permute.xlu0 %2286
        %2288 = vset.pattern.permute.xlu0 0
        %2289 = vperm.xlu0 %2288, %v1444
        %v2290 = vpop.permute.xlu0 %2289
        %2291 = vset.pattern.permute.xlu0 0
        %2292 = vperm.xlu0 %2291, %v1445
        %v2293 = vpop.permute.xlu0 %2292
        %2294 = vset.pattern.permute.xlu0 0
        %2295 = vperm.xlu0 %2294, %v1446
        %v2296 = vpop.permute.xlu0 %2295
        %2297 = vset.pattern.permute.xlu0 0
        %2298 = vperm.xlu0 %2297, %v1447
        %v2299 = vpop.permute.xlu0 %2298
        %2300 = vset.pattern.permute.xlu0 0
        %2301 = vperm.xlu0 %2300, %v1448
        %v2302 = vpop.permute.xlu0 %2301
        %2303 = vset.pattern.permute.xlu0 0
        %2304 = vperm.xlu0 %2303, %v1449
        %v2305 = vpop.permute.xlu0 %2304
        %2306 = vset.pattern.permute.xlu0 0
        %2307 = vperm.xlu0 %2306, %v1450
        %v2308 = vpop.permute.xlu0 %2307
        %2309 = vset.pattern.permute.xlu0 0
        %2310 = vperm.xlu0 %2309, %v1451
        %v2311 = vpop.permute.xlu0 %2310
        %2312 = vset.pattern.permute.xlu0 0
        %2313 = vperm.xlu0 %2312, %v1452
        %v2314 = vpop.permute.xlu0 %2313
        %2315 = vset.pattern.permute.xlu0 0
        %2316 = vperm.xlu0 %2315, %v1453
        %v2317 = vpop.permute.xlu0 %2316
        %2318 = vset.pattern.permute.xlu0 0
        %2319 = vperm.xlu0 %2318, %v1454
        %v2320 = vpop.permute.xlu0 %2319
        %2321 = vset.pattern.permute.xlu0 0
        %2322 = vperm.xlu0 %2321, %v1455
        %v2323 = vpop.permute.xlu0 %2322
        %2324 = vset.pattern.permute.xlu0 0
        %2325 = vperm.xlu0 %2324, %v1456
        %v2326 = vpop.permute.xlu0 %2325
        %2327 = vset.pattern.permute.xlu0 0
        %2328 = vperm.xlu0 %2327, %v1457
        %v2329 = vpop.permute.xlu0 %2328
        %2330 = vset.pattern.permute.xlu0 0
        %2331 = vperm.xlu0 %2330, %v1458
        %v2332 = vpop.permute.xlu0 %2331
        %2333 = vset.pattern.permute.xlu0 0
        %2334 = vperm.xlu0 %2333, %v1459
        %v2335 = vpop.permute.xlu0 %2334
        %2336 = vset.pattern.permute.xlu0 0
        %2337 = vperm.xlu0 %2336, %v1460
        %v2338 = vpop.permute.xlu0 %2337
        %2339 = vset.pattern.permute.xlu0 0
        %2340 = vperm.xlu0 %2339, %v1461
        %v2341 = vpop.permute.xlu0 %2340
        %2342 = vset.pattern.permute.xlu0 0
        %2343 = vperm.xlu0 %2342, %v1462
        %v2344 = vpop.permute.xlu0 %2343
        %2345 = vset.pattern.permute.xlu0 0
        %2346 = vperm.xlu0 %2345, %v1463
        %v2347 = vpop.permute.xlu0 %2346
        %2348 = vset.pattern.permute.xlu0 0
        %2349 = vperm.xlu0 %2348, %v1464
        %v2350 = vpop.permute.xlu0 %2349
        %2351 = vset.pattern.permute.xlu0 0
        %2352 = vperm.xlu0 %2351, %v1465
        %v2353 = vpop.permute.xlu0 %2352
        %2354 = vset.pattern.permute.xlu0 0
        %2355 = vperm.xlu0 %2354, %v1466
        %v2356 = vpop.permute.xlu0 %2355
        %2357 = vset.pattern.permute.xlu0 0
        %2358 = vperm.xlu0 %2357, %v1467
        %v2359 = vpop.permute.xlu0 %2358
        %2360 = vset.pattern.permute.xlu0 0
        %2361 = vperm.xlu0 %2360, %v1468
        %v2362 = vpop.permute.xlu0 %2361
        %2363 = vset.pattern.permute.xlu0 0
        %2364 = vperm.xlu0 %2363, %v1469
        %v2365 = vpop.permute.xlu0 %2364
        %2366 = vset.pattern.permute.xlu0 0
        %2367 = vperm.xlu0 %2366, %v1470
        %v2368 = vpop.permute.xlu0 %2367
        %2369 = vset.pattern.permute.xlu0 0
        %2370 = vperm.xlu0 %2369, %v1471
        %v2371 = vpop.permute.xlu0 %2370
        %2372 = vset.pattern.permute.xlu0 0
        %2373 = vperm.xlu0 %2372, %v1472
        %v2374 = vpop.permute.xlu0 %2373
        %2375 = vset.pattern.permute.xlu0 0
        %2376 = vperm.xlu0 %2375, %v1473
        %v2377 = vpop.permute.xlu0 %2376
        %2378 = vset.pattern.permute.xlu0 0
        %2379 = vperm.xlu0 %2378, %v1474
        %v2380 = vpop.permute.xlu0 %2379
        %2381 = vset.pattern.permute.xlu0 0
        %2382 = vperm.xlu0 %2381, %v1475
        %v2383 = vpop.permute.xlu0 %2382
        %2384 = vset.pattern.permute.xlu0 0
        %2385 = vperm.xlu0 %2384, %v1476
        %v2386 = vpop.permute.xlu0 %2385
        %2387 = vset.pattern.permute.xlu0 0
        %2388 = vperm.xlu0 %2387, %v1477
        %v2389 = vpop.permute.xlu0 %2388
        %2390 = vset.pattern.permute.xlu0 0
        %2391 = vperm.xlu0 %2390, %v1478
        %v2392 = vpop.permute.xlu0 %2391
        %2393 = vset.pattern.permute.xlu0 0
        %2394 = vperm.xlu0 %2393, %v1479
        %v2395 = vpop.permute.xlu0 %2394
        %2396 = vset.pattern.permute.xlu0 0
        %2397 = vperm.xlu0 %2396, %v1480
        %v2398 = vpop.permute.xlu0 %2397
        %2399 = vset.pattern.permute.xlu0 0
        %2400 = vperm.xlu0 %2399, %v1481
        %v2401 = vpop.permute.xlu0 %2400
        %2402 = vset.pattern.permute.xlu0 0
        %2403 = vperm.xlu0 %2402, %v1482
        %v2404 = vpop.permute.xlu0 %2403
        %2405 = vset.pattern.permute.xlu0 0
        %2406 = vperm.xlu0 %2405, %v1483
        %v2407 = vpop.permute.xlu0 %2406
        %2408 = vset.pattern.permute.xlu0 0
        %2409 = vperm.xlu0 %2408, %v1484
        %v2410 = vpop.permute.xlu0 %2409
        %2411 = vset.pattern.permute.xlu0 0
        %2412 = vperm.xlu0 %2411, %v1485
        %v2413 = vpop.permute.xlu0 %2412
        %2414 = vset.pattern.permute.xlu0 0
        %2415 = vperm.xlu0 %2414, %v1486
        %v2416 = vpop.permute.xlu0 %2415
        %2417 = vset.pattern.permute.xlu0 0
        %2418 = vperm.xlu0 %2417, %v1487
        %v2419 = vpop.permute.xlu0 %2418
        %2420 = vset.pattern.permute.xlu0 0
        %2421 = vperm.xlu0 %2420, %v1488
        %v2422 = vpop.permute.xlu0 %2421
        %2423 = vset.pattern.permute.xlu0 0
        %2424 = vperm.xlu0 %2423, %v1489
        %v2425 = vpop.permute.xlu0 %2424
        %2426 = vset.pattern.permute.xlu0 0
        %2427 = vperm.xlu0 %2426, %v1490
        %v2428 = vpop.permute.xlu0 %2427
        %2429 = vset.pattern.permute.xlu0 0
        %2430 = vperm.xlu0 %2429, %v1491
        %v2431 = vpop.permute.xlu0 %2430
        %2432 = vset.pattern.permute.xlu0 0
        %2433 = vperm.xlu0 %2432, %v1492
        %v2434 = vpop.permute.xlu0 %2433
        %2435 = vset.pattern.permute.xlu0 0
        %2436 = vperm.xlu0 %2435, %v1493
        %v2437 = vpop.permute.xlu0 %2436
        %2438 = vset.pattern.permute.xlu0 0
        %2439 = vperm.xlu0 %2438, %v1494
        %v2440 = vpop.permute.xlu0 %2439
        %2441 = vset.pattern.permute.xlu0 0
        %2442 = vperm.xlu0 %2441, %v1495
        %v2443 = vpop.permute.xlu0 %2442
        %2444 = vset.pattern.permute.xlu0 0
        %2445 = vperm.xlu0 %2444, %v1496
        %v2446 = vpop.permute.xlu0 %2445
        %2447 = vset.pattern.permute.xlu0 0
        %2448 = vperm.xlu0 %2447, %v1497
        %v2449 = vpop.permute.xlu0 %2448
        %2450 = vset.pattern.permute.xlu0 0
        %2451 = vperm.xlu0 %2450, %v1498
        %v2452 = vpop.permute.xlu0 %2451
        %2453 = vset.pattern.permute.xlu0 0
        %2454 = vperm.xlu0 %2453, %v1499
        %v2455 = vpop.permute.xlu0 %2454
        %2456 = vset.pattern.permute.xlu0 0
        %2457 = vperm.xlu0 %2456, %v1500
        %v2458 = vpop.permute.xlu0 %2457
        %2459 = vset.pattern.permute.xlu0 0
        %2460 = vperm.xlu0 %2459, %v1501
        %v2461 = vpop.permute.xlu0 %2460
        %2462 = vset.pattern.permute.xlu0 0
        %2463 = vperm.xlu0 %2462, %v1502
        %v2464 = vpop.permute.xlu0 %2463
        %2465 = vset.pattern.permute.xlu0 0
        %2466 = vperm.xlu0 %2465, %v1503
        %v2467 = vpop.permute.xlu0 %2466
        %2468 = vset.pattern.permute.xlu0 0
        %2469 = vperm.xlu0 %2468, %v1504
        %v2470 = vpop.permute.xlu0 %2469
        %2471 = vset.pattern.permute.xlu0 0
        %2472 = vperm.xlu0 %2471, %v1505
        %v2473 = vpop.permute.xlu0 %2472
        %2474 = vset.pattern.permute.xlu0 0
        %2475 = vperm.xlu0 %2474, %v1506
        %v2476 = vpop.permute.xlu0 %2475
        %2477 = vset.pattern.permute.xlu0 0
        %2478 = vperm.xlu0 %2477, %v1507
        %v2479 = vpop.permute.xlu0 %2478
        %2480 = vset.pattern.permute.xlu0 0
        %2481 = vperm.xlu0 %2480, %v1508
        %v2482 = vpop.permute.xlu0 %2481
        %2483 = vset.pattern.permute.xlu0 0
        %2484 = vperm.xlu0 %2483, %v1509
        %v2485 = vpop.permute.xlu0 %2484
        %2486 = vset.pattern.permute.xlu0 0
        %2487 = vperm.xlu0 %2486, %v1510
        %v2488 = vpop.permute.xlu0 %2487
        %2489 = vset.pattern.permute.xlu0 0
        %2490 = vperm.xlu0 %2489, %v1511
        %v2491 = vpop.permute.xlu0 %2490
        %2492 = vset.pattern.permute.xlu0 0
        %2493 = vperm.xlu0 %2492, %v1512
        %v2494 = vpop.permute.xlu0 %2493
        %2495 = vset.pattern.permute.xlu0 0
        %2496 = vperm.xlu0 %2495, %v1513
        %v2497 = vpop.permute.xlu0 %2496
        %2498 = vset.pattern.permute.xlu0 0
        %2499 = vperm.xlu0 %2498, %v1514
        %v2500 = vpop.permute.xlu0 %2499
        %2501 = vset.pattern.permute.xlu0 0
        %2502 = vperm.xlu0 %2501, %v1515
        %v2503 = vpop.permute.xlu0 %2502
        %2504 = vset.pattern.permute.xlu0 0
        %2505 = vperm.xlu0 %2504, %v1516
        %v2506 = vpop.permute.xlu0 %2505
        %2507 = vset.pattern.permute.xlu0 0
        %2508 = vperm.xlu0 %2507, %v1517
        %v2509 = vpop.permute.xlu0 %2508
        %2510 = vset.pattern.permute.xlu0 0
        %2511 = vperm.xlu0 %2510, %v1518
        %v2512 = vpop.permute.xlu0 %2511
        %2513 = vset.pattern.permute.xlu0 0
        %2514 = vperm.xlu0 %2513, %v1519
        %v2515 = vpop.permute.xlu0 %2514
        %2516 = vset.pattern.permute.xlu0 0
        %2517 = vperm.xlu0 %2516, %v1520
        %v2518 = vpop.permute.xlu0 %2517
        %2519 = vset.pattern.permute.xlu0 0
        %2520 = vperm.xlu0 %2519, %v1521
        %v2521 = vpop.permute.xlu0 %2520
        %2522 = vset.pattern.permute.xlu0 0
        %2523 = vperm.xlu0 %2522, %v1522
        %v2524 = vpop.permute.xlu0 %2523
        %2525 = vset.pattern.permute.xlu0 0
        %2526 = vperm.xlu0 %2525, %v1523
        %v2527 = vpop.permute.xlu0 %2526
        %2528 = vset.pattern.permute.xlu0 0
        %2529 = vperm.xlu0 %2528, %v1524
        %v2530 = vpop.permute.xlu0 %2529
        %2531 = vset.pattern.permute.xlu0 0
        %2532 = vperm.xlu0 %2531, %v1525
        %v2533 = vpop.permute.xlu0 %2532
        %2534 = vset.pattern.permute.xlu0 0
        %2535 = vperm.xlu0 %2534, %v1526
        %v2536 = vpop.permute.xlu0 %2535
        %2537 = vset.pattern.permute.xlu0 0
        %2538 = vperm.xlu0 %2537, %v1527
        %v2539 = vpop.permute.xlu0 %2538
        %2540 = vset.pattern.permute.xlu0 0
        %2541 = vperm.xlu0 %2540, %v1528
        %v2542 = vpop.permute.xlu0 %2541
        %2543 = vset.pattern.permute.xlu0 0
        %2544 = vperm.xlu0 %2543, %v1529
        %v2545 = vpop.permute.xlu0 %2544
        %2546 = vset.pattern.permute.xlu0 0
        %2547 = vperm.xlu0 %2546, %v1530
        %v2548 = vpop.permute.xlu0 %2547
        %2549 = vset.pattern.permute.xlu0 0
        %2550 = vperm.xlu0 %2549, %v1531
        %v2551 = vpop.permute.xlu0 %2550
        %2552 = vset.pattern.permute.xlu0 0
        %2553 = vperm.xlu0 %2552, %v1532
        %v2554 = vpop.permute.xlu0 %2553
        %2555 = vset.pattern.permute.xlu0 0
        %2556 = vperm.xlu0 %2555, %v1533
        %v2557 = vpop.permute.xlu0 %2556
        %v2558 = vlaneseq
        %v2559 = vshrl.u32 %v2558, 7
        %v2560 = vsub.s32 %v409, %v2559
        %v2561 = vrot.slane %v1792, %v2560
        %v2562 = vadd.s32 %v409, 4294967288
        %v2563 = vlaneseq
        %v2564 = vshrl.u32 %v2563, 7
        %v2565 = vsub.s32 %v2562, %v2564
        %v2566 = vrot.slane %v1795, %v2565
        %vm2567 = vcmask 130112
        %v2568 = vsel %vm2567, %v2566, %v2561
        %v2569 = vlaneseq
        %v2570 = vshrl.u32 %v2569, 7
        %v2571 = vsub.s32 %v409, %v2570
        %v2572 = vrot.slane %v1798, %v2571
        %v2573 = vlaneseq
        %v2574 = vshrl.u32 %v2573, 7
        %v2575 = vsub.s32 %v2562, %v2574
        %v2576 = vrot.slane %v1801, %v2575
        %v2577 = vsel %vm2567, %v2576, %v2572
        %v2578 = vlaneseq
        %v2579 = vshrl.u32 %v2578, 7
        %v2580 = vsub.s32 %v409, %v2579
        %v2581 = vrot.slane %v1804, %v2580
        %v2582 = vlaneseq
        %v2583 = vshrl.u32 %v2582, 7
        %v2584 = vsub.s32 %v2562, %v2583
        %v2585 = vrot.slane %v1807, %v2584
        %v2586 = vsel %vm2567, %v2585, %v2581
        %v2587 = vlaneseq
        %v2588 = vshrl.u32 %v2587, 7
        %v2589 = vsub.s32 %v409, %v2588
        %v2590 = vrot.slane %v1810, %v2589
        %v2591 = vlaneseq
        %v2592 = vshrl.u32 %v2591, 7
        %v2593 = vsub.s32 %v2562, %v2592
        %v2594 = vrot.slane %v1813, %v2593
        %v2595 = vsel %vm2567, %v2594, %v2590
        %v2596 = vlaneseq
        %v2597 = vshrl.u32 %v2596, 7
        %v2598 = vsub.s32 %v409, %v2597
        %v2599 = vrot.slane %v1816, %v2598
        %v2600 = vlaneseq
        %v2601 = vshrl.u32 %v2600, 7
        %v2602 = vsub.s32 %v2562, %v2601
        %v2603 = vrot.slane %v1819, %v2602
        %v2604 = vsel %vm2567, %v2603, %v2599
        %v2605 = vlaneseq
        %v2606 = vshrl.u32 %v2605, 7
        %v2607 = vsub.s32 %v409, %v2606
        %v2608 = vrot.slane %v1822, %v2607
        %v2609 = vlaneseq
        %v2610 = vshrl.u32 %v2609, 7
        %v2611 = vsub.s32 %v2562, %v2610
        %v2612 = vrot.slane %v1825, %v2611
        %v2613 = vsel %vm2567, %v2612, %v2608
        %v2614 = vlaneseq
        %v2615 = vshrl.u32 %v2614, 7
        %v2616 = vsub.s32 %v409, %v2615
        %v2617 = vrot.slane %v1828, %v2616
        %v2618 = vlaneseq
        %v2619 = vshrl.u32 %v2618, 7
        %v2620 = vsub.s32 %v2562, %v2619
        %v2621 = vrot.slane %v1831, %v2620
        %v2622 = vsel %vm2567, %v2621, %v2617
        %v2623 = vlaneseq
        %v2624 = vshrl.u32 %v2623, 7
        %v2625 = vsub.s32 %v409, %v2624
        %v2626 = vrot.slane %v1834, %v2625
        %v2627 = vlaneseq
        %v2628 = vshrl.u32 %v2627, 7
        %v2629 = vsub.s32 %v2562, %v2628
        %v2630 = vrot.slane %v1837, %v2629
        %v2631 = vsel %vm2567, %v2630, %v2626
        %v2632 = vlaneseq
        %v2633 = vshrl.u32 %v2632, 7
        %v2634 = vsub.s32 %v409, %v2633
        %v2635 = vrot.slane %v1840, %v2634
        %v2636 = vlaneseq
        %v2637 = vshrl.u32 %v2636, 7
        %v2638 = vsub.s32 %v2562, %v2637
        %v2639 = vrot.slane %v1843, %v2638
        %v2640 = vsel %vm2567, %v2639, %v2635
        %v2641 = vlaneseq
        %v2642 = vshrl.u32 %v2641, 7
        %v2643 = vsub.s32 %v409, %v2642
        %v2644 = vrot.slane %v1846, %v2643
        %v2645 = vlaneseq
        %v2646 = vshrl.u32 %v2645, 7
        %v2647 = vsub.s32 %v2562, %v2646
        %v2648 = vrot.slane %v1849, %v2647
        %v2649 = vsel %vm2567, %v2648, %v2644
        %v2650 = vlaneseq
        %v2651 = vshrl.u32 %v2650, 7
        %v2652 = vsub.s32 %v409, %v2651
        %v2653 = vrot.slane %v1852, %v2652
        %v2654 = vlaneseq
        %v2655 = vshrl.u32 %v2654, 7
        %v2656 = vsub.s32 %v2562, %v2655
        %v2657 = vrot.slane %v1855, %v2656
        %v2658 = vsel %vm2567, %v2657, %v2653
        %v2659 = vlaneseq
        %v2660 = vshrl.u32 %v2659, 7
        %v2661 = vsub.s32 %v409, %v2660
        %v2662 = vrot.slane %v1858, %v2661
        %v2663 = vlaneseq
        %v2664 = vshrl.u32 %v2663, 7
        %v2665 = vsub.s32 %v2562, %v2664
        %v2666 = vrot.slane %v1861, %v2665
        %v2667 = vsel %vm2567, %v2666, %v2662
        %v2668 = vlaneseq
        %v2669 = vshrl.u32 %v2668, 7
        %v2670 = vsub.s32 %v409, %v2669
        %v2671 = vrot.slane %v1864, %v2670
        %v2672 = vlaneseq
        %v2673 = vshrl.u32 %v2672, 7
        %v2674 = vsub.s32 %v2562, %v2673
        %v2675 = vrot.slane %v1867, %v2674
        %v2676 = vsel %vm2567, %v2675, %v2671
        %v2677 = vlaneseq
        %v2678 = vshrl.u32 %v2677, 7
        %v2679 = vsub.s32 %v409, %v2678
        %v2680 = vrot.slane %v1870, %v2679
        %v2681 = vlaneseq
        %v2682 = vshrl.u32 %v2681, 7
        %v2683 = vsub.s32 %v2562, %v2682
        %v2684 = vrot.slane %v1873, %v2683
        %v2685 = vsel %vm2567, %v2684, %v2680
        %v2686 = vlaneseq
        %v2687 = vshrl.u32 %v2686, 7
        %v2688 = vsub.s32 %v409, %v2687
        %v2689 = vrot.slane %v1876, %v2688
        %v2690 = vlaneseq
        %v2691 = vshrl.u32 %v2690, 7
        %v2692 = vsub.s32 %v2562, %v2691
        %v2693 = vrot.slane %v1879, %v2692
        %v2694 = vsel %vm2567, %v2693, %v2689
        %v2695 = vlaneseq
        %v2696 = vshrl.u32 %v2695, 7
        %v2697 = vsub.s32 %v409, %v2696
        %v2698 = vrot.slane %v1882, %v2697
        %v2699 = vlaneseq
        %v2700 = vshrl.u32 %v2699, 7
        %v2701 = vsub.s32 %v2562, %v2700
        %v2702 = vrot.slane %v1885, %v2701
        %v2703 = vsel %vm2567, %v2702, %v2698
        %v2704 = vlaneseq
        %v2705 = vshrl.u32 %v2704, 7
        %v2706 = vsub.s32 %v409, %v2705
        %v2707 = vrot.slane %v1888, %v2706
        %v2708 = vlaneseq
        %v2709 = vshrl.u32 %v2708, 7
        %v2710 = vsub.s32 %v2562, %v2709
        %v2711 = vrot.slane %v1891, %v2710
        %v2712 = vsel %vm2567, %v2711, %v2707
        %v2713 = vlaneseq
        %v2714 = vshrl.u32 %v2713, 7
        %v2715 = vsub.s32 %v409, %v2714
        %v2716 = vrot.slane %v1894, %v2715
        %v2717 = vlaneseq
        %v2718 = vshrl.u32 %v2717, 7
        %v2719 = vsub.s32 %v2562, %v2718
        %v2720 = vrot.slane %v1897, %v2719
        %v2721 = vsel %vm2567, %v2720, %v2716
        %v2722 = vlaneseq
        %v2723 = vshrl.u32 %v2722, 7
        %v2724 = vsub.s32 %v409, %v2723
        %v2725 = vrot.slane %v1900, %v2724
        %v2726 = vlaneseq
        %v2727 = vshrl.u32 %v2726, 7
        %v2728 = vsub.s32 %v2562, %v2727
        %v2729 = vrot.slane %v1903, %v2728
        %v2730 = vsel %vm2567, %v2729, %v2725
        %v2731 = vlaneseq
        %v2732 = vshrl.u32 %v2731, 7
        %v2733 = vsub.s32 %v409, %v2732
        %v2734 = vrot.slane %v1906, %v2733
        %v2735 = vlaneseq
        %v2736 = vshrl.u32 %v2735, 7
        %v2737 = vsub.s32 %v2562, %v2736
        %v2738 = vrot.slane %v1909, %v2737
        %v2739 = vsel %vm2567, %v2738, %v2734
        %v2740 = vlaneseq
        %v2741 = vshrl.u32 %v2740, 7
        %v2742 = vsub.s32 %v409, %v2741
        %v2743 = vrot.slane %v1912, %v2742
        %v2744 = vlaneseq
        %v2745 = vshrl.u32 %v2744, 7
        %v2746 = vsub.s32 %v2562, %v2745
        %v2747 = vrot.slane %v1915, %v2746
        %v2748 = vsel %vm2567, %v2747, %v2743
        %v2749 = vlaneseq
        %v2750 = vshrl.u32 %v2749, 7
        %v2751 = vsub.s32 %v409, %v2750
        %v2752 = vrot.slane %v1918, %v2751
        %v2753 = vlaneseq
        %v2754 = vshrl.u32 %v2753, 7
        %v2755 = vsub.s32 %v2562, %v2754
        %v2756 = vrot.slane %v1921, %v2755
        %v2757 = vsel %vm2567, %v2756, %v2752
        %v2758 = vlaneseq
        %v2759 = vshrl.u32 %v2758, 7
        %v2760 = vsub.s32 %v409, %v2759
        %v2761 = vrot.slane %v1924, %v2760
        %v2762 = vlaneseq
        %v2763 = vshrl.u32 %v2762, 7
        %v2764 = vsub.s32 %v2562, %v2763
        %v2765 = vrot.slane %v1927, %v2764
        %v2766 = vsel %vm2567, %v2765, %v2761
        %v2767 = vlaneseq
        %v2768 = vshrl.u32 %v2767, 7
        %v2769 = vsub.s32 %v409, %v2768
        %v2770 = vrot.slane %v1930, %v2769
        %v2771 = vlaneseq
        %v2772 = vshrl.u32 %v2771, 7
        %v2773 = vsub.s32 %v2562, %v2772
        %v2774 = vrot.slane %v1933, %v2773
        %v2775 = vsel %vm2567, %v2774, %v2770
        %v2776 = vlaneseq
        %v2777 = vshrl.u32 %v2776, 7
        %v2778 = vsub.s32 %v409, %v2777
        %v2779 = vrot.slane %v1936, %v2778
        %v2780 = vlaneseq
        %v2781 = vshrl.u32 %v2780, 7
        %v2782 = vsub.s32 %v2562, %v2781
        %v2783 = vrot.slane %v1939, %v2782
        %v2784 = vsel %vm2567, %v2783, %v2779
        %v2785 = vlaneseq
        %v2786 = vshrl.u32 %v2785, 7
        %v2787 = vsub.s32 %v409, %v2786
        %v2788 = vrot.slane %v1942, %v2787
        %v2789 = vlaneseq
        %v2790 = vshrl.u32 %v2789, 7
        %v2791 = vsub.s32 %v2562, %v2790
        %v2792 = vrot.slane %v1945, %v2791
        %v2793 = vsel %vm2567, %v2792, %v2788
        %v2794 = vlaneseq
        %v2795 = vshrl.u32 %v2794, 7
        %v2796 = vsub.s32 %v409, %v2795
        %v2797 = vrot.slane %v1948, %v2796
        %v2798 = vlaneseq
        %v2799 = vshrl.u32 %v2798, 7
        %v2800 = vsub.s32 %v2562, %v2799
        %v2801 = vrot.slane %v1951, %v2800
        %v2802 = vsel %vm2567, %v2801, %v2797
        %v2803 = vlaneseq
        %v2804 = vshrl.u32 %v2803, 7
        %v2805 = vsub.s32 %v409, %v2804
        %v2806 = vrot.slane %v1954, %v2805
        %v2807 = vlaneseq
        %v2808 = vshrl.u32 %v2807, 7
        %v2809 = vsub.s32 %v2562, %v2808
        %v2810 = vrot.slane %v1957, %v2809
        %v2811 = vsel %vm2567, %v2810, %v2806
        %v2812 = vlaneseq
        %v2813 = vshrl.u32 %v2812, 7
        %v2814 = vsub.s32 %v409, %v2813
        %v2815 = vrot.slane %v1960, %v2814
        %v2816 = vlaneseq
        %v2817 = vshrl.u32 %v2816, 7
        %v2818 = vsub.s32 %v2562, %v2817
        %v2819 = vrot.slane %v1963, %v2818
        %v2820 = vsel %vm2567, %v2819, %v2815
        %v2821 = vlaneseq
        %v2822 = vshrl.u32 %v2821, 7
        %v2823 = vsub.s32 %v409, %v2822
        %v2824 = vrot.slane %v1966, %v2823
        %v2825 = vlaneseq
        %v2826 = vshrl.u32 %v2825, 7
        %v2827 = vsub.s32 %v2562, %v2826
        %v2828 = vrot.slane %v1969, %v2827
        %v2829 = vsel %vm2567, %v2828, %v2824
        %v2830 = vlaneseq
        %v2831 = vshrl.u32 %v2830, 7
        %v2832 = vsub.s32 %v409, %v2831
        %v2833 = vrot.slane %v1972, %v2832
        %v2834 = vlaneseq
        %v2835 = vshrl.u32 %v2834, 7
        %v2836 = vsub.s32 %v2562, %v2835
        %v2837 = vrot.slane %v1975, %v2836
        %v2838 = vsel %vm2567, %v2837, %v2833
        %v2839 = vlaneseq
        %v2840 = vshrl.u32 %v2839, 7
        %v2841 = vsub.s32 %v409, %v2840
        %v2842 = vrot.slane %v1978, %v2841
        %v2843 = vlaneseq
        %v2844 = vshrl.u32 %v2843, 7
        %v2845 = vsub.s32 %v2562, %v2844
        %v2846 = vrot.slane %v1981, %v2845
        %v2847 = vsel %vm2567, %v2846, %v2842
        %v2848 = vlaneseq
        %v2849 = vshrl.u32 %v2848, 7
        %v2850 = vsub.s32 %v409, %v2849
        %v2851 = vrot.slane %v1984, %v2850
        %v2852 = vlaneseq
        %v2853 = vshrl.u32 %v2852, 7
        %v2854 = vsub.s32 %v2562, %v2853
        %v2855 = vrot.slane %v1987, %v2854
        %v2856 = vsel %vm2567, %v2855, %v2851
        %v2857 = vlaneseq
        %v2858 = vshrl.u32 %v2857, 7
        %v2859 = vsub.s32 %v409, %v2858
        %v2860 = vrot.slane %v1990, %v2859
        %v2861 = vlaneseq
        %v2862 = vshrl.u32 %v2861, 7
        %v2863 = vsub.s32 %v2562, %v2862
        %v2864 = vrot.slane %v1993, %v2863
        %v2865 = vsel %vm2567, %v2864, %v2860
        %v2866 = vlaneseq
        %v2867 = vshrl.u32 %v2866, 7
        %v2868 = vsub.s32 %v409, %v2867
        %v2869 = vrot.slane %v1996, %v2868
        %v2870 = vlaneseq
        %v2871 = vshrl.u32 %v2870, 7
        %v2872 = vsub.s32 %v2562, %v2871
        %v2873 = vrot.slane %v1999, %v2872
        %v2874 = vsel %vm2567, %v2873, %v2869
        %v2875 = vlaneseq
        %v2876 = vshrl.u32 %v2875, 7
        %v2877 = vsub.s32 %v409, %v2876
        %v2878 = vrot.slane %v2002, %v2877
        %v2879 = vlaneseq
        %v2880 = vshrl.u32 %v2879, 7
        %v2881 = vsub.s32 %v2562, %v2880
        %v2882 = vrot.slane %v2005, %v2881
        %v2883 = vsel %vm2567, %v2882, %v2878
        %v2884 = vlaneseq
        %v2885 = vshrl.u32 %v2884, 7
        %v2886 = vsub.s32 %v409, %v2885
        %v2887 = vrot.slane %v2008, %v2886
        %v2888 = vlaneseq
        %v2889 = vshrl.u32 %v2888, 7
        %v2890 = vsub.s32 %v2562, %v2889
        %v2891 = vrot.slane %v2011, %v2890
        %v2892 = vsel %vm2567, %v2891, %v2887
        %v2893 = vlaneseq
        %v2894 = vshrl.u32 %v2893, 7
        %v2895 = vsub.s32 %v409, %v2894
        %v2896 = vrot.slane %v2014, %v2895
        %v2897 = vlaneseq
        %v2898 = vshrl.u32 %v2897, 7
        %v2899 = vsub.s32 %v2562, %v2898
        %v2900 = vrot.slane %v2017, %v2899
        %v2901 = vsel %vm2567, %v2900, %v2896
        %v2902 = vlaneseq
        %v2903 = vshrl.u32 %v2902, 7
        %v2904 = vsub.s32 %v409, %v2903
        %v2905 = vrot.slane %v2020, %v2904
        %v2906 = vlaneseq
        %v2907 = vshrl.u32 %v2906, 7
        %v2908 = vsub.s32 %v2562, %v2907
        %v2909 = vrot.slane %v2023, %v2908
        %v2910 = vsel %vm2567, %v2909, %v2905
        %v2911 = vlaneseq
        %v2912 = vshrl.u32 %v2911, 7
        %v2913 = vsub.s32 %v409, %v2912
        %v2914 = vrot.slane %v2026, %v2913
        %v2915 = vlaneseq
        %v2916 = vshrl.u32 %v2915, 7
        %v2917 = vsub.s32 %v2562, %v2916
        %v2918 = vrot.slane %v2029, %v2917
        %v2919 = vsel %vm2567, %v2918, %v2914
        %v2920 = vlaneseq
        %v2921 = vshrl.u32 %v2920, 7
        %v2922 = vsub.s32 %v409, %v2921
        %v2923 = vrot.slane %v2032, %v2922
        %v2924 = vlaneseq
        %v2925 = vshrl.u32 %v2924, 7
        %v2926 = vsub.s32 %v2562, %v2925
        %v2927 = vrot.slane %v2035, %v2926
        %v2928 = vsel %vm2567, %v2927, %v2923
        %v2929 = vlaneseq
        %v2930 = vshrl.u32 %v2929, 7
        %v2931 = vsub.s32 %v409, %v2930
        %v2932 = vrot.slane %v2038, %v2931
        %v2933 = vlaneseq
        %v2934 = vshrl.u32 %v2933, 7
        %v2935 = vsub.s32 %v2562, %v2934
        %v2936 = vrot.slane %v2041, %v2935
        %v2937 = vsel %vm2567, %v2936, %v2932
        %v2938 = vlaneseq
        %v2939 = vshrl.u32 %v2938, 7
        %v2940 = vsub.s32 %v409, %v2939
        %v2941 = vrot.slane %v2044, %v2940
        %v2942 = vlaneseq
        %v2943 = vshrl.u32 %v2942, 7
        %v2944 = vsub.s32 %v2562, %v2943
        %v2945 = vrot.slane %v2047, %v2944
        %v2946 = vsel %vm2567, %v2945, %v2941
        %v2947 = vlaneseq
        %v2948 = vshrl.u32 %v2947, 7
        %v2949 = vsub.s32 %v409, %v2948
        %v2950 = vrot.slane %v2050, %v2949
        %v2951 = vlaneseq
        %v2952 = vshrl.u32 %v2951, 7
        %v2953 = vsub.s32 %v2562, %v2952
        %v2954 = vrot.slane %v2053, %v2953
        %v2955 = vsel %vm2567, %v2954, %v2950
        %v2956 = vlaneseq
        %v2957 = vshrl.u32 %v2956, 7
        %v2958 = vsub.s32 %v409, %v2957
        %v2959 = vrot.slane %v2056, %v2958
        %v2960 = vlaneseq
        %v2961 = vshrl.u32 %v2960, 7
        %v2962 = vsub.s32 %v2562, %v2961
        %v2963 = vrot.slane %v2059, %v2962
        %v2964 = vsel %vm2567, %v2963, %v2959
        %v2965 = vlaneseq
        %v2966 = vshrl.u32 %v2965, 7
        %v2967 = vsub.s32 %v409, %v2966
        %v2968 = vrot.slane %v2062, %v2967
        %v2969 = vlaneseq
        %v2970 = vshrl.u32 %v2969, 7
        %v2971 = vsub.s32 %v2562, %v2970
        %v2972 = vrot.slane %v2065, %v2971
        %v2973 = vsel %vm2567, %v2972, %v2968
        %v2974 = vlaneseq
        %v2975 = vshrl.u32 %v2974, 7
        %v2976 = vsub.s32 %v409, %v2975
        %v2977 = vrot.slane %v2068, %v2976
        %v2978 = vlaneseq
        %v2979 = vshrl.u32 %v2978, 7
        %v2980 = vsub.s32 %v2562, %v2979
        %v2981 = vrot.slane %v2071, %v2980
        %v2982 = vsel %vm2567, %v2981, %v2977
        %v2983 = vlaneseq
        %v2984 = vshrl.u32 %v2983, 7
        %v2985 = vsub.s32 %v409, %v2984
        %v2986 = vrot.slane %v2074, %v2985
        %v2987 = vlaneseq
        %v2988 = vshrl.u32 %v2987, 7
        %v2989 = vsub.s32 %v2562, %v2988
        %v2990 = vrot.slane %v2077, %v2989
        %v2991 = vsel %vm2567, %v2990, %v2986
        %v2992 = vlaneseq
        %v2993 = vshrl.u32 %v2992, 7
        %v2994 = vsub.s32 %v409, %v2993
        %v2995 = vrot.slane %v2080, %v2994
        %v2996 = vlaneseq
        %v2997 = vshrl.u32 %v2996, 7
        %v2998 = vsub.s32 %v2562, %v2997
        %v2999 = vrot.slane %v2083, %v2998
        %v3000 = vsel %vm2567, %v2999, %v2995
        %v3001 = vlaneseq
        %v3002 = vshrl.u32 %v3001, 7
        %v3003 = vsub.s32 %v409, %v3002
        %v3004 = vrot.slane %v2086, %v3003
        %v3005 = vlaneseq
        %v3006 = vshrl.u32 %v3005, 7
        %v3007 = vsub.s32 %v2562, %v3006
        %v3008 = vrot.slane %v2089, %v3007
        %v3009 = vsel %vm2567, %v3008, %v3004
        %v3010 = vlaneseq
        %v3011 = vshrl.u32 %v3010, 7
        %v3012 = vsub.s32 %v409, %v3011
        %v3013 = vrot.slane %v2092, %v3012
        %v3014 = vlaneseq
        %v3015 = vshrl.u32 %v3014, 7
        %v3016 = vsub.s32 %v2562, %v3015
        %v3017 = vrot.slane %v2095, %v3016
        %v3018 = vsel %vm2567, %v3017, %v3013
        %v3019 = vlaneseq
        %v3020 = vshrl.u32 %v3019, 7
        %v3021 = vsub.s32 %v409, %v3020
        %v3022 = vrot.slane %v2098, %v3021
        %v3023 = vlaneseq
        %v3024 = vshrl.u32 %v3023, 7
        %v3025 = vsub.s32 %v2562, %v3024
        %v3026 = vrot.slane %v2101, %v3025
        %v3027 = vsel %vm2567, %v3026, %v3022
        %v3028 = vlaneseq
        %v3029 = vshrl.u32 %v3028, 7
        %v3030 = vsub.s32 %v409, %v3029
        %v3031 = vrot.slane %v2104, %v3030
        %v3032 = vlaneseq
        %v3033 = vshrl.u32 %v3032, 7
        %v3034 = vsub.s32 %v2562, %v3033
        %v3035 = vrot.slane %v2107, %v3034
        %v3036 = vsel %vm2567, %v3035, %v3031
        %v3037 = vlaneseq
        %v3038 = vshrl.u32 %v3037, 7
        %v3039 = vsub.s32 %v409, %v3038
        %v3040 = vrot.slane %v2110, %v3039
        %v3041 = vlaneseq
        %v3042 = vshrl.u32 %v3041, 7
        %v3043 = vsub.s32 %v2562, %v3042
        %v3044 = vrot.slane %v2113, %v3043
        %v3045 = vsel %vm2567, %v3044, %v3040
        %v3046 = vlaneseq
        %v3047 = vshrl.u32 %v3046, 7
        %v3048 = vsub.s32 %v409, %v3047
        %v3049 = vrot.slane %v2116, %v3048
        %v3050 = vlaneseq
        %v3051 = vshrl.u32 %v3050, 7
        %v3052 = vsub.s32 %v2562, %v3051
        %v3053 = vrot.slane %v2119, %v3052
        %v3054 = vsel %vm2567, %v3053, %v3049
        %v3055 = vlaneseq
        %v3056 = vshrl.u32 %v3055, 7
        %v3057 = vsub.s32 %v409, %v3056
        %v3058 = vrot.slane %v2122, %v3057
        %v3059 = vlaneseq
        %v3060 = vshrl.u32 %v3059, 7
        %v3061 = vsub.s32 %v2562, %v3060
        %v3062 = vrot.slane %v2125, %v3061
        %v3063 = vsel %vm2567, %v3062, %v3058
        %v3064 = vlaneseq
        %v3065 = vshrl.u32 %v3064, 7
        %v3066 = vsub.s32 %v409, %v3065
        %v3067 = vrot.slane %v2128, %v3066
        %v3068 = vlaneseq
        %v3069 = vshrl.u32 %v3068, 7
        %v3070 = vsub.s32 %v2562, %v3069
        %v3071 = vrot.slane %v2131, %v3070
        %v3072 = vsel %vm2567, %v3071, %v3067
        %v3073 = vlaneseq
        %v3074 = vshrl.u32 %v3073, 7
        %v3075 = vsub.s32 %v409, %v3074
        %v3076 = vrot.slane %v2134, %v3075
        %v3077 = vlaneseq
        %v3078 = vshrl.u32 %v3077, 7
        %v3079 = vsub.s32 %v2562, %v3078
        %v3080 = vrot.slane %v2137, %v3079
        %v3081 = vsel %vm2567, %v3080, %v3076
        %v3082 = vlaneseq
        %v3083 = vshrl.u32 %v3082, 7
        %v3084 = vsub.s32 %v409, %v3083
        %v3085 = vrot.slane %v2140, %v3084
        %v3086 = vlaneseq
        %v3087 = vshrl.u32 %v3086, 7
        %v3088 = vsub.s32 %v2562, %v3087
        %v3089 = vrot.slane %v2143, %v3088
        %v3090 = vsel %vm2567, %v3089, %v3085
        %v3091 = vlaneseq
        %v3092 = vshrl.u32 %v3091, 7
        %v3093 = vsub.s32 %v409, %v3092
        %v3094 = vrot.slane %v2146, %v3093
        %v3095 = vlaneseq
        %v3096 = vshrl.u32 %v3095, 7
        %v3097 = vsub.s32 %v2562, %v3096
        %v3098 = vrot.slane %v2149, %v3097
        %v3099 = vsel %vm2567, %v3098, %v3094
        %v3100 = vlaneseq
        %v3101 = vshrl.u32 %v3100, 7
        %v3102 = vsub.s32 %v409, %v3101
        %v3103 = vrot.slane %v2152, %v3102
        %v3104 = vlaneseq
        %v3105 = vshrl.u32 %v3104, 7
        %v3106 = vsub.s32 %v2562, %v3105
        %v3107 = vrot.slane %v2155, %v3106
        %v3108 = vsel %vm2567, %v3107, %v3103
        %v3109 = vlaneseq
        %v3110 = vshrl.u32 %v3109, 7
        %v3111 = vsub.s32 %v409, %v3110
        %v3112 = vrot.slane %v2158, %v3111
        %v3113 = vlaneseq
        %v3114 = vshrl.u32 %v3113, 7
        %v3115 = vsub.s32 %v2562, %v3114
        %v3116 = vrot.slane %v2161, %v3115
        %v3117 = vsel %vm2567, %v3116, %v3112
        %v3118 = vlaneseq
        %v3119 = vshrl.u32 %v3118, 7
        %v3120 = vsub.s32 %v409, %v3119
        %v3121 = vrot.slane %v2164, %v3120
        %v3122 = vlaneseq
        %v3123 = vshrl.u32 %v3122, 7
        %v3124 = vsub.s32 %v2562, %v3123
        %v3125 = vrot.slane %v2167, %v3124
        %v3126 = vsel %vm2567, %v3125, %v3121
        %v3127 = vlaneseq
        %v3128 = vshrl.u32 %v3127, 7
        %v3129 = vsub.s32 %v409, %v3128
        %v3130 = vrot.slane %v2170, %v3129
        %v3131 = vlaneseq
        %v3132 = vshrl.u32 %v3131, 7
        %v3133 = vsub.s32 %v2562, %v3132
        %v3134 = vrot.slane %v2173, %v3133
        %v3135 = vsel %vm2567, %v3134, %v3130
        %v3136 = vlaneseq
        %v3137 = vshrl.u32 %v3136, 7
        %v3138 = vsub.s32 %v409, %v3137
        %v3139 = vrot.slane %v2176, %v3138
        %v3140 = vlaneseq
        %v3141 = vshrl.u32 %v3140, 7
        %v3142 = vsub.s32 %v2562, %v3141
        %v3143 = vrot.slane %v2179, %v3142
        %v3144 = vsel %vm2567, %v3143, %v3139
        %v3145 = vlaneseq
        %v3146 = vshrl.u32 %v3145, 7
        %v3147 = vsub.s32 %v409, %v3146
        %v3148 = vrot.slane %v2182, %v3147
        %v3149 = vlaneseq
        %v3150 = vshrl.u32 %v3149, 7
        %v3151 = vsub.s32 %v2562, %v3150
        %v3152 = vrot.slane %v2185, %v3151
        %v3153 = vsel %vm2567, %v3152, %v3148
        %v3154 = vlaneseq
        %v3155 = vshrl.u32 %v3154, 7
        %v3156 = vsub.s32 %v409, %v3155
        %v3157 = vrot.slane %v2188, %v3156
        %v3158 = vlaneseq
        %v3159 = vshrl.u32 %v3158, 7
        %v3160 = vsub.s32 %v2562, %v3159
        %v3161 = vrot.slane %v2191, %v3160
        %v3162 = vsel %vm2567, %v3161, %v3157
        %v3163 = vlaneseq
        %v3164 = vshrl.u32 %v3163, 7
        %v3165 = vsub.s32 %v409, %v3164
        %v3166 = vrot.slane %v2194, %v3165
        %v3167 = vlaneseq
        %v3168 = vshrl.u32 %v3167, 7
        %v3169 = vsub.s32 %v2562, %v3168
        %v3170 = vrot.slane %v2197, %v3169
        %v3171 = vsel %vm2567, %v3170, %v3166
        %v3172 = vlaneseq
        %v3173 = vshrl.u32 %v3172, 7
        %v3174 = vsub.s32 %v409, %v3173
        %v3175 = vrot.slane %v2200, %v3174
        %v3176 = vlaneseq
        %v3177 = vshrl.u32 %v3176, 7
        %v3178 = vsub.s32 %v2562, %v3177
        %v3179 = vrot.slane %v2203, %v3178
        %v3180 = vsel %vm2567, %v3179, %v3175
        %v3181 = vlaneseq
        %v3182 = vshrl.u32 %v3181, 7
        %v3183 = vsub.s32 %v409, %v3182
        %v3184 = vrot.slane %v2206, %v3183
        %v3185 = vlaneseq
        %v3186 = vshrl.u32 %v3185, 7
        %v3187 = vsub.s32 %v2562, %v3186
        %v3188 = vrot.slane %v2209, %v3187
        %v3189 = vsel %vm2567, %v3188, %v3184
        %v3190 = vlaneseq
        %v3191 = vshrl.u32 %v3190, 7
        %v3192 = vsub.s32 %v409, %v3191
        %v3193 = vrot.slane %v2212, %v3192
        %v3194 = vlaneseq
        %v3195 = vshrl.u32 %v3194, 7
        %v3196 = vsub.s32 %v2562, %v3195
        %v3197 = vrot.slane %v2215, %v3196
        %v3198 = vsel %vm2567, %v3197, %v3193
        %v3199 = vlaneseq
        %v3200 = vshrl.u32 %v3199, 7
        %v3201 = vsub.s32 %v409, %v3200
        %v3202 = vrot.slane %v2218, %v3201
        %v3203 = vlaneseq
        %v3204 = vshrl.u32 %v3203, 7
        %v3205 = vsub.s32 %v2562, %v3204
        %v3206 = vrot.slane %v2221, %v3205
        %v3207 = vsel %vm2567, %v3206, %v3202
        %v3208 = vlaneseq
        %v3209 = vshrl.u32 %v3208, 7
        %v3210 = vsub.s32 %v409, %v3209
        %v3211 = vrot.slane %v2224, %v3210
        %v3212 = vlaneseq
        %v3213 = vshrl.u32 %v3212, 7
        %v3214 = vsub.s32 %v2562, %v3213
        %v3215 = vrot.slane %v2227, %v3214
        %v3216 = vsel %vm2567, %v3215, %v3211
        %v3217 = vlaneseq
        %v3218 = vshrl.u32 %v3217, 7
        %v3219 = vsub.s32 %v409, %v3218
        %v3220 = vrot.slane %v2230, %v3219
        %v3221 = vlaneseq
        %v3222 = vshrl.u32 %v3221, 7
        %v3223 = vsub.s32 %v2562, %v3222
        %v3224 = vrot.slane %v2233, %v3223
        %v3225 = vsel %vm2567, %v3224, %v3220
        %v3226 = vlaneseq
        %v3227 = vshrl.u32 %v3226, 7
        %v3228 = vsub.s32 %v409, %v3227
        %v3229 = vrot.slane %v2236, %v3228
        %v3230 = vlaneseq
        %v3231 = vshrl.u32 %v3230, 7
        %v3232 = vsub.s32 %v2562, %v3231
        %v3233 = vrot.slane %v2239, %v3232
        %v3234 = vsel %vm2567, %v3233, %v3229
        %v3235 = vlaneseq
        %v3236 = vshrl.u32 %v3235, 7
        %v3237 = vsub.s32 %v409, %v3236
        %v3238 = vrot.slane %v2242, %v3237
        %v3239 = vlaneseq
        %v3240 = vshrl.u32 %v3239, 7
        %v3241 = vsub.s32 %v2562, %v3240
        %v3242 = vrot.slane %v2245, %v3241
        %v3243 = vsel %vm2567, %v3242, %v3238
        %v3244 = vlaneseq
        %v3245 = vshrl.u32 %v3244, 7
        %v3246 = vsub.s32 %v409, %v3245
        %v3247 = vrot.slane %v2248, %v3246
        %v3248 = vlaneseq
        %v3249 = vshrl.u32 %v3248, 7
        %v3250 = vsub.s32 %v2562, %v3249
        %v3251 = vrot.slane %v2251, %v3250
        %v3252 = vsel %vm2567, %v3251, %v3247
        %v3253 = vlaneseq
        %v3254 = vshrl.u32 %v3253, 7
        %v3255 = vsub.s32 %v409, %v3254
        %v3256 = vrot.slane %v2254, %v3255
        %v3257 = vlaneseq
        %v3258 = vshrl.u32 %v3257, 7
        %v3259 = vsub.s32 %v2562, %v3258
        %v3260 = vrot.slane %v2257, %v3259
        %v3261 = vsel %vm2567, %v3260, %v3256
        %v3262 = vlaneseq
        %v3263 = vshrl.u32 %v3262, 7
        %v3264 = vsub.s32 %v409, %v3263
        %v3265 = vrot.slane %v2260, %v3264
        %v3266 = vlaneseq
        %v3267 = vshrl.u32 %v3266, 7
        %v3268 = vsub.s32 %v2562, %v3267
        %v3269 = vrot.slane %v2263, %v3268
        %v3270 = vsel %vm2567, %v3269, %v3265
        %v3271 = vlaneseq
        %v3272 = vshrl.u32 %v3271, 7
        %v3273 = vsub.s32 %v409, %v3272
        %v3274 = vrot.slane %v2266, %v3273
        %v3275 = vlaneseq
        %v3276 = vshrl.u32 %v3275, 7
        %v3277 = vsub.s32 %v2562, %v3276
        %v3278 = vrot.slane %v2269, %v3277
        %v3279 = vsel %vm2567, %v3278, %v3274
        %v3280 = vlaneseq
        %v3281 = vshrl.u32 %v3280, 7
        %v3282 = vsub.s32 %v409, %v3281
        %v3283 = vrot.slane %v2272, %v3282
        %v3284 = vlaneseq
        %v3285 = vshrl.u32 %v3284, 7
        %v3286 = vsub.s32 %v2562, %v3285
        %v3287 = vrot.slane %v2275, %v3286
        %v3288 = vsel %vm2567, %v3287, %v3283
        %v3289 = vlaneseq
        %v3290 = vshrl.u32 %v3289, 7
        %v3291 = vsub.s32 %v409, %v3290
        %v3292 = vrot.slane %v2278, %v3291
        %v3293 = vlaneseq
        %v3294 = vshrl.u32 %v3293, 7
        %v3295 = vsub.s32 %v2562, %v3294
        %v3296 = vrot.slane %v2281, %v3295
        %v3297 = vsel %vm2567, %v3296, %v3292
        %v3298 = vlaneseq
        %v3299 = vshrl.u32 %v3298, 7
        %v3300 = vsub.s32 %v409, %v3299
        %v3301 = vrot.slane %v2284, %v3300
        %v3302 = vlaneseq
        %v3303 = vshrl.u32 %v3302, 7
        %v3304 = vsub.s32 %v2562, %v3303
        %v3305 = vrot.slane %v2287, %v3304
        %v3306 = vsel %vm2567, %v3305, %v3301
        %v3307 = vlaneseq
        %v3308 = vshrl.u32 %v3307, 7
        %v3309 = vsub.s32 %v409, %v3308
        %v3310 = vrot.slane %v2290, %v3309
        %v3311 = vlaneseq
        %v3312 = vshrl.u32 %v3311, 7
        %v3313 = vsub.s32 %v2562, %v3312
        %v3314 = vrot.slane %v2293, %v3313
        %v3315 = vsel %vm2567, %v3314, %v3310
        %v3316 = vlaneseq
        %v3317 = vshrl.u32 %v3316, 7
        %v3318 = vsub.s32 %v409, %v3317
        %v3319 = vrot.slane %v2296, %v3318
        %v3320 = vlaneseq
        %v3321 = vshrl.u32 %v3320, 7
        %v3322 = vsub.s32 %v2562, %v3321
        %v3323 = vrot.slane %v2299, %v3322
        %v3324 = vsel %vm2567, %v3323, %v3319
        %v3325 = vlaneseq
        %v3326 = vshrl.u32 %v3325, 7
        %v3327 = vsub.s32 %v409, %v3326
        %v3328 = vrot.slane %v2302, %v3327
        %v3329 = vlaneseq
        %v3330 = vshrl.u32 %v3329, 7
        %v3331 = vsub.s32 %v2562, %v3330
        %v3332 = vrot.slane %v2305, %v3331
        %v3333 = vsel %vm2567, %v3332, %v3328
        %v3334 = vlaneseq
        %v3335 = vshrl.u32 %v3334, 7
        %v3336 = vsub.s32 %v409, %v3335
        %v3337 = vrot.slane %v2308, %v3336
        %v3338 = vlaneseq
        %v3339 = vshrl.u32 %v3338, 7
        %v3340 = vsub.s32 %v2562, %v3339
        %v3341 = vrot.slane %v2311, %v3340
        %v3342 = vsel %vm2567, %v3341, %v3337
        %v3343 = vlaneseq
        %v3344 = vshrl.u32 %v3343, 7
        %v3345 = vsub.s32 %v409, %v3344
        %v3346 = vrot.slane %v2314, %v3345
        %v3347 = vlaneseq
        %v3348 = vshrl.u32 %v3347, 7
        %v3349 = vsub.s32 %v2562, %v3348
        %v3350 = vrot.slane %v2317, %v3349
        %v3351 = vsel %vm2567, %v3350, %v3346
        %v3352 = vlaneseq
        %v3353 = vshrl.u32 %v3352, 7
        %v3354 = vsub.s32 %v409, %v3353
        %v3355 = vrot.slane %v2320, %v3354
        %v3356 = vlaneseq
        %v3357 = vshrl.u32 %v3356, 7
        %v3358 = vsub.s32 %v2562, %v3357
        %v3359 = vrot.slane %v2323, %v3358
        %v3360 = vsel %vm2567, %v3359, %v3355
        %v3361 = vlaneseq
        %v3362 = vshrl.u32 %v3361, 7
        %v3363 = vsub.s32 %v409, %v3362
        %v3364 = vrot.slane %v2326, %v3363
        %v3365 = vlaneseq
        %v3366 = vshrl.u32 %v3365, 7
        %v3367 = vsub.s32 %v2562, %v3366
        %v3368 = vrot.slane %v2329, %v3367
        %v3369 = vsel %vm2567, %v3368, %v3364
        %v3370 = vlaneseq
        %v3371 = vshrl.u32 %v3370, 7
        %v3372 = vsub.s32 %v409, %v3371
        %v3373 = vrot.slane %v2332, %v3372
        %v3374 = vlaneseq
        %v3375 = vshrl.u32 %v3374, 7
        %v3376 = vsub.s32 %v2562, %v3375
        %v3377 = vrot.slane %v2335, %v3376
        %v3378 = vsel %vm2567, %v3377, %v3373
        %v3379 = vlaneseq
        %v3380 = vshrl.u32 %v3379, 7
        %v3381 = vsub.s32 %v409, %v3380
        %v3382 = vrot.slane %v2338, %v3381
        %v3383 = vlaneseq
        %v3384 = vshrl.u32 %v3383, 7
        %v3385 = vsub.s32 %v2562, %v3384
        %v3386 = vrot.slane %v2341, %v3385
        %v3387 = vsel %vm2567, %v3386, %v3382
        %v3388 = vlaneseq
        %v3389 = vshrl.u32 %v3388, 7
        %v3390 = vsub.s32 %v409, %v3389
        %v3391 = vrot.slane %v2344, %v3390
        %v3392 = vlaneseq
        %v3393 = vshrl.u32 %v3392, 7
        %v3394 = vsub.s32 %v2562, %v3393
        %v3395 = vrot.slane %v2347, %v3394
        %v3396 = vsel %vm2567, %v3395, %v3391
        %v3397 = vlaneseq
        %v3398 = vshrl.u32 %v3397, 7
        %v3399 = vsub.s32 %v409, %v3398
        %v3400 = vrot.slane %v2350, %v3399
        %v3401 = vlaneseq
        %v3402 = vshrl.u32 %v3401, 7
        %v3403 = vsub.s32 %v2562, %v3402
        %v3404 = vrot.slane %v2353, %v3403
        %v3405 = vsel %vm2567, %v3404, %v3400
        %v3406 = vlaneseq
        %v3407 = vshrl.u32 %v3406, 7
        %v3408 = vsub.s32 %v409, %v3407
        %v3409 = vrot.slane %v2356, %v3408
        %v3410 = vlaneseq
        %v3411 = vshrl.u32 %v3410, 7
        %v3412 = vsub.s32 %v2562, %v3411
        %v3413 = vrot.slane %v2359, %v3412
        %v3414 = vsel %vm2567, %v3413, %v3409
        %v3415 = vlaneseq
        %v3416 = vshrl.u32 %v3415, 7
        %v3417 = vsub.s32 %v409, %v3416
        %v3418 = vrot.slane %v2362, %v3417
        %v3419 = vlaneseq
        %v3420 = vshrl.u32 %v3419, 7
        %v3421 = vsub.s32 %v2562, %v3420
        %v3422 = vrot.slane %v2365, %v3421
        %v3423 = vsel %vm2567, %v3422, %v3418
        %v3424 = vlaneseq
        %v3425 = vshrl.u32 %v3424, 7
        %v3426 = vsub.s32 %v409, %v3425
        %v3427 = vrot.slane %v2368, %v3426
        %v3428 = vlaneseq
        %v3429 = vshrl.u32 %v3428, 7
        %v3430 = vsub.s32 %v2562, %v3429
        %v3431 = vrot.slane %v2371, %v3430
        %v3432 = vsel %vm2567, %v3431, %v3427
        %v3433 = vlaneseq
        %v3434 = vshrl.u32 %v3433, 7
        %v3435 = vsub.s32 %v409, %v3434
        %v3436 = vrot.slane %v2374, %v3435
        %v3437 = vlaneseq
        %v3438 = vshrl.u32 %v3437, 7
        %v3439 = vsub.s32 %v2562, %v3438
        %v3440 = vrot.slane %v2377, %v3439
        %v3441 = vsel %vm2567, %v3440, %v3436
        %v3442 = vlaneseq
        %v3443 = vshrl.u32 %v3442, 7
        %v3444 = vsub.s32 %v409, %v3443
        %v3445 = vrot.slane %v2380, %v3444
        %v3446 = vlaneseq
        %v3447 = vshrl.u32 %v3446, 7
        %v3448 = vsub.s32 %v2562, %v3447
        %v3449 = vrot.slane %v2383, %v3448
        %v3450 = vsel %vm2567, %v3449, %v3445
        %v3451 = vlaneseq
        %v3452 = vshrl.u32 %v3451, 7
        %v3453 = vsub.s32 %v409, %v3452
        %v3454 = vrot.slane %v2386, %v3453
        %v3455 = vlaneseq
        %v3456 = vshrl.u32 %v3455, 7
        %v3457 = vsub.s32 %v2562, %v3456
        %v3458 = vrot.slane %v2389, %v3457
        %v3459 = vsel %vm2567, %v3458, %v3454
        %v3460 = vlaneseq
        %v3461 = vshrl.u32 %v3460, 7
        %v3462 = vsub.s32 %v409, %v3461
        %v3463 = vrot.slane %v2392, %v3462
        %v3464 = vlaneseq
        %v3465 = vshrl.u32 %v3464, 7
        %v3466 = vsub.s32 %v2562, %v3465
        %v3467 = vrot.slane %v2395, %v3466
        %v3468 = vsel %vm2567, %v3467, %v3463
        %v3469 = vlaneseq
        %v3470 = vshrl.u32 %v3469, 7
        %v3471 = vsub.s32 %v409, %v3470
        %v3472 = vrot.slane %v2398, %v3471
        %v3473 = vlaneseq
        %v3474 = vshrl.u32 %v3473, 7
        %v3475 = vsub.s32 %v2562, %v3474
        %v3476 = vrot.slane %v2401, %v3475
        %v3477 = vsel %vm2567, %v3476, %v3472
        %v3478 = vlaneseq
        %v3479 = vshrl.u32 %v3478, 7
        %v3480 = vsub.s32 %v409, %v3479
        %v3481 = vrot.slane %v2404, %v3480
        %v3482 = vlaneseq
        %v3483 = vshrl.u32 %v3482, 7
        %v3484 = vsub.s32 %v2562, %v3483
        %v3485 = vrot.slane %v2407, %v3484
        %v3486 = vsel %vm2567, %v3485, %v3481
        %v3487 = vlaneseq
        %v3488 = vshrl.u32 %v3487, 7
        %v3489 = vsub.s32 %v409, %v3488
        %v3490 = vrot.slane %v2410, %v3489
        %v3491 = vlaneseq
        %v3492 = vshrl.u32 %v3491, 7
        %v3493 = vsub.s32 %v2562, %v3492
        %v3494 = vrot.slane %v2413, %v3493
        %v3495 = vsel %vm2567, %v3494, %v3490
        %v3496 = vlaneseq
        %v3497 = vshrl.u32 %v3496, 7
        %v3498 = vsub.s32 %v409, %v3497
        %v3499 = vrot.slane %v2416, %v3498
        %v3500 = vlaneseq
        %v3501 = vshrl.u32 %v3500, 7
        %v3502 = vsub.s32 %v2562, %v3501
        %v3503 = vrot.slane %v2419, %v3502
        %v3504 = vsel %vm2567, %v3503, %v3499
        %v3505 = vlaneseq
        %v3506 = vshrl.u32 %v3505, 7
        %v3507 = vsub.s32 %v409, %v3506
        %v3508 = vrot.slane %v2422, %v3507
        %v3509 = vlaneseq
        %v3510 = vshrl.u32 %v3509, 7
        %v3511 = vsub.s32 %v2562, %v3510
        %v3512 = vrot.slane %v2425, %v3511
        %v3513 = vsel %vm2567, %v3512, %v3508
        %v3514 = vlaneseq
        %v3515 = vshrl.u32 %v3514, 7
        %v3516 = vsub.s32 %v409, %v3515
        %v3517 = vrot.slane %v2428, %v3516
        %v3518 = vlaneseq
        %v3519 = vshrl.u32 %v3518, 7
        %v3520 = vsub.s32 %v2562, %v3519
        %v3521 = vrot.slane %v2431, %v3520
        %v3522 = vsel %vm2567, %v3521, %v3517
        %v3523 = vlaneseq
        %v3524 = vshrl.u32 %v3523, 7
        %v3525 = vsub.s32 %v409, %v3524
        %v3526 = vrot.slane %v2434, %v3525
        %v3527 = vlaneseq
        %v3528 = vshrl.u32 %v3527, 7
        %v3529 = vsub.s32 %v2562, %v3528
        %v3530 = vrot.slane %v2437, %v3529
        %v3531 = vsel %vm2567, %v3530, %v3526
        %v3532 = vlaneseq
        %v3533 = vshrl.u32 %v3532, 7
        %v3534 = vsub.s32 %v409, %v3533
        %v3535 = vrot.slane %v2440, %v3534
        %v3536 = vlaneseq
        %v3537 = vshrl.u32 %v3536, 7
        %v3538 = vsub.s32 %v2562, %v3537
        %v3539 = vrot.slane %v2443, %v3538
        %v3540 = vsel %vm2567, %v3539, %v3535
        %v3541 = vlaneseq
        %v3542 = vshrl.u32 %v3541, 7
        %v3543 = vsub.s32 %v409, %v3542
        %v3544 = vrot.slane %v2446, %v3543
        %v3545 = vlaneseq
        %v3546 = vshrl.u32 %v3545, 7
        %v3547 = vsub.s32 %v2562, %v3546
        %v3548 = vrot.slane %v2449, %v3547
        %v3549 = vsel %vm2567, %v3548, %v3544
        %v3550 = vlaneseq
        %v3551 = vshrl.u32 %v3550, 7
        %v3552 = vsub.s32 %v409, %v3551
        %v3553 = vrot.slane %v2452, %v3552
        %v3554 = vlaneseq
        %v3555 = vshrl.u32 %v3554, 7
        %v3556 = vsub.s32 %v2562, %v3555
        %v3557 = vrot.slane %v2455, %v3556
        %v3558 = vsel %vm2567, %v3557, %v3553
        %v3559 = vlaneseq
        %v3560 = vshrl.u32 %v3559, 7
        %v3561 = vsub.s32 %v409, %v3560
        %v3562 = vrot.slane %v2458, %v3561
        %v3563 = vlaneseq
        %v3564 = vshrl.u32 %v3563, 7
        %v3565 = vsub.s32 %v2562, %v3564
        %v3566 = vrot.slane %v2461, %v3565
        %v3567 = vsel %vm2567, %v3566, %v3562
        %v3568 = vlaneseq
        %v3569 = vshrl.u32 %v3568, 7
        %v3570 = vsub.s32 %v409, %v3569
        %v3571 = vrot.slane %v2464, %v3570
        %v3572 = vlaneseq
        %v3573 = vshrl.u32 %v3572, 7
        %v3574 = vsub.s32 %v2562, %v3573
        %v3575 = vrot.slane %v2467, %v3574
        %v3576 = vsel %vm2567, %v3575, %v3571
        %v3577 = vlaneseq
        %v3578 = vshrl.u32 %v3577, 7
        %v3579 = vsub.s32 %v409, %v3578
        %v3580 = vrot.slane %v2470, %v3579
        %v3581 = vlaneseq
        %v3582 = vshrl.u32 %v3581, 7
        %v3583 = vsub.s32 %v2562, %v3582
        %v3584 = vrot.slane %v2473, %v3583
        %v3585 = vsel %vm2567, %v3584, %v3580
        %v3586 = vlaneseq
        %v3587 = vshrl.u32 %v3586, 7
        %v3588 = vsub.s32 %v409, %v3587
        %v3589 = vrot.slane %v2476, %v3588
        %v3590 = vlaneseq
        %v3591 = vshrl.u32 %v3590, 7
        %v3592 = vsub.s32 %v2562, %v3591
        %v3593 = vrot.slane %v2479, %v3592
        %v3594 = vsel %vm2567, %v3593, %v3589
        %v3595 = vlaneseq
        %v3596 = vshrl.u32 %v3595, 7
        %v3597 = vsub.s32 %v409, %v3596
        %v3598 = vrot.slane %v2482, %v3597
        %v3599 = vlaneseq
        %v3600 = vshrl.u32 %v3599, 7
        %v3601 = vsub.s32 %v2562, %v3600
        %v3602 = vrot.slane %v2485, %v3601
        %v3603 = vsel %vm2567, %v3602, %v3598
        %v3604 = vlaneseq
        %v3605 = vshrl.u32 %v3604, 7
        %v3606 = vsub.s32 %v409, %v3605
        %v3607 = vrot.slane %v2488, %v3606
        %v3608 = vlaneseq
        %v3609 = vshrl.u32 %v3608, 7
        %v3610 = vsub.s32 %v2562, %v3609
        %v3611 = vrot.slane %v2491, %v3610
        %v3612 = vsel %vm2567, %v3611, %v3607
        %v3613 = vlaneseq
        %v3614 = vshrl.u32 %v3613, 7
        %v3615 = vsub.s32 %v409, %v3614
        %v3616 = vrot.slane %v2494, %v3615
        %v3617 = vlaneseq
        %v3618 = vshrl.u32 %v3617, 7
        %v3619 = vsub.s32 %v2562, %v3618
        %v3620 = vrot.slane %v2497, %v3619
        %v3621 = vsel %vm2567, %v3620, %v3616
        %v3622 = vlaneseq
        %v3623 = vshrl.u32 %v3622, 7
        %v3624 = vsub.s32 %v409, %v3623
        %v3625 = vrot.slane %v2500, %v3624
        %v3626 = vlaneseq
        %v3627 = vshrl.u32 %v3626, 7
        %v3628 = vsub.s32 %v2562, %v3627
        %v3629 = vrot.slane %v2503, %v3628
        %v3630 = vsel %vm2567, %v3629, %v3625
        %v3631 = vlaneseq
        %v3632 = vshrl.u32 %v3631, 7
        %v3633 = vsub.s32 %v409, %v3632
        %v3634 = vrot.slane %v2506, %v3633
        %v3635 = vlaneseq
        %v3636 = vshrl.u32 %v3635, 7
        %v3637 = vsub.s32 %v2562, %v3636
        %v3638 = vrot.slane %v2509, %v3637
        %v3639 = vsel %vm2567, %v3638, %v3634
        %v3640 = vlaneseq
        %v3641 = vshrl.u32 %v3640, 7
        %v3642 = vsub.s32 %v409, %v3641
        %v3643 = vrot.slane %v2512, %v3642
        %v3644 = vlaneseq
        %v3645 = vshrl.u32 %v3644, 7
        %v3646 = vsub.s32 %v2562, %v3645
        %v3647 = vrot.slane %v2515, %v3646
        %v3648 = vsel %vm2567, %v3647, %v3643
        %v3649 = vlaneseq
        %v3650 = vshrl.u32 %v3649, 7
        %v3651 = vsub.s32 %v409, %v3650
        %v3652 = vrot.slane %v2518, %v3651
        %v3653 = vlaneseq
        %v3654 = vshrl.u32 %v3653, 7
        %v3655 = vsub.s32 %v2562, %v3654
        %v3656 = vrot.slane %v2521, %v3655
        %v3657 = vsel %vm2567, %v3656, %v3652
        %v3658 = vlaneseq
        %v3659 = vshrl.u32 %v3658, 7
        %v3660 = vsub.s32 %v409, %v3659
        %v3661 = vrot.slane %v2524, %v3660
        %v3662 = vlaneseq
        %v3663 = vshrl.u32 %v3662, 7
        %v3664 = vsub.s32 %v2562, %v3663
        %v3665 = vrot.slane %v2527, %v3664
        %v3666 = vsel %vm2567, %v3665, %v3661
        %v3667 = vlaneseq
        %v3668 = vshrl.u32 %v3667, 7
        %v3669 = vsub.s32 %v409, %v3668
        %v3670 = vrot.slane %v2530, %v3669
        %v3671 = vlaneseq
        %v3672 = vshrl.u32 %v3671, 7
        %v3673 = vsub.s32 %v2562, %v3672
        %v3674 = vrot.slane %v2533, %v3673
        %v3675 = vsel %vm2567, %v3674, %v3670
        %v3676 = vlaneseq
        %v3677 = vshrl.u32 %v3676, 7
        %v3678 = vsub.s32 %v409, %v3677
        %v3679 = vrot.slane %v2536, %v3678
        %v3680 = vlaneseq
        %v3681 = vshrl.u32 %v3680, 7
        %v3682 = vsub.s32 %v2562, %v3681
        %v3683 = vrot.slane %v2539, %v3682
        %v3684 = vsel %vm2567, %v3683, %v3679
        %v3685 = vlaneseq
        %v3686 = vshrl.u32 %v3685, 7
        %v3687 = vsub.s32 %v409, %v3686
        %v3688 = vrot.slane %v2542, %v3687
        %v3689 = vlaneseq
        %v3690 = vshrl.u32 %v3689, 7
        %v3691 = vsub.s32 %v2562, %v3690
        %v3692 = vrot.slane %v2545, %v3691
        %v3693 = vsel %vm2567, %v3692, %v3688
        %v3694 = vlaneseq
        %v3695 = vshrl.u32 %v3694, 7
        %v3696 = vsub.s32 %v409, %v3695
        %v3697 = vrot.slane %v2548, %v3696
        %v3698 = vlaneseq
        %v3699 = vshrl.u32 %v3698, 7
        %v3700 = vsub.s32 %v2562, %v3699
        %v3701 = vrot.slane %v2551, %v3700
        %v3702 = vsel %vm2567, %v3701, %v3697
        %v3703 = vlaneseq
        %v3704 = vshrl.u32 %v3703, 7
        %v3705 = vsub.s32 %v409, %v3704
        %v3706 = vrot.slane %v2554, %v3705
        %v3707 = vlaneseq
        %v3708 = vshrl.u32 %v3707, 7
        %v3709 = vsub.s32 %v2562, %v3708
        %v3710 = vrot.slane %v2557, %v3709
        %v3711 = vsel %vm2567, %v3710, %v3706
        %vm3712 = vcmask 1041409
        %v3713 = vsel %vm3712, %v2577, %v2568
        %vm3714 = vcmask 1042434
        %v3715 = vsel %vm3714, %v2586, %v3713
        %vm3716 = vcmask 1043459
        %v3717 = vsel %vm3716, %v2595, %v3715
        %vm3718 = vcmask 1044484
        %v3719 = vsel %vm3718, %v2604, %v3717
        %vm3720 = vcmask 1045509
        %v3721 = vsel %vm3720, %v2613, %v3719
        %vm3722 = vcmask 1046534
        %v3723 = vsel %vm3722, %v2622, %v3721
        %vm3724 = vcmask 1047559
        %v3725 = vsel %vm3724, %v2631, %v3723
        %v3726 = vsel %vm3712, %v2649, %v2640
        %v3727 = vsel %vm3714, %v2658, %v3726
        %v3728 = vsel %vm3716, %v2667, %v3727
        %v3729 = vsel %vm3718, %v2676, %v3728
        %v3730 = vsel %vm3720, %v2685, %v3729
        %v3731 = vsel %vm3722, %v2694, %v3730
        %v3732 = vsel %vm3724, %v2703, %v3731
        %v3733 = vsel %vm3712, %v2721, %v2712
        %v3734 = vsel %vm3714, %v2730, %v3733
        %v3735 = vsel %vm3716, %v2739, %v3734
        %v3736 = vsel %vm3718, %v2748, %v3735
        %v3737 = vsel %vm3720, %v2757, %v3736
        %v3738 = vsel %vm3722, %v2766, %v3737
        %v3739 = vsel %vm3724, %v2775, %v3738
        %v3740 = vsel %vm3712, %v2793, %v2784
        %v3741 = vsel %vm3714, %v2802, %v3740
        %v3742 = vsel %vm3716, %v2811, %v3741
        %v3743 = vsel %vm3718, %v2820, %v3742
        %v3744 = vsel %vm3720, %v2829, %v3743
        %v3745 = vsel %vm3722, %v2838, %v3744
        %v3746 = vsel %vm3724, %v2847, %v3745
        %v3747 = vsel %vm3712, %v2865, %v2856
        %v3748 = vsel %vm3714, %v2874, %v3747
        %v3749 = vsel %vm3716, %v2883, %v3748
        %v3750 = vsel %vm3718, %v2892, %v3749
        %v3751 = vsel %vm3720, %v2901, %v3750
        %v3752 = vsel %vm3722, %v2910, %v3751
        %v3753 = vsel %vm3724, %v2919, %v3752
        %v3754 = vsel %vm3712, %v2937, %v2928
        %v3755 = vsel %vm3714, %v2946, %v3754
        %v3756 = vsel %vm3716, %v2955, %v3755
        %v3757 = vsel %vm3718, %v2964, %v3756
        %v3758 = vsel %vm3720, %v2973, %v3757
        %v3759 = vsel %vm3722, %v2982, %v3758
        %v3760 = vsel %vm3724, %v2991, %v3759
        %v3761 = vsel %vm3712, %v3009, %v3000
        %v3762 = vsel %vm3714, %v3018, %v3761
        %v3763 = vsel %vm3716, %v3027, %v3762
        %v3764 = vsel %vm3718, %v3036, %v3763
        %v3765 = vsel %vm3720, %v3045, %v3764
        %v3766 = vsel %vm3722, %v3054, %v3765
        %v3767 = vsel %vm3724, %v3063, %v3766
        %v3768 = vsel %vm3712, %v3081, %v3072
        %v3769 = vsel %vm3714, %v3090, %v3768
        %v3770 = vsel %vm3716, %v3099, %v3769
        %v3771 = vsel %vm3718, %v3108, %v3770
        %v3772 = vsel %vm3720, %v3117, %v3771
        %v3773 = vsel %vm3722, %v3126, %v3772
        %v3774 = vsel %vm3724, %v3135, %v3773
        %v3775 = vsel %vm3712, %v3153, %v3144
        %v3776 = vsel %vm3714, %v3162, %v3775
        %v3777 = vsel %vm3716, %v3171, %v3776
        %v3778 = vsel %vm3718, %v3180, %v3777
        %v3779 = vsel %vm3720, %v3189, %v3778
        %v3780 = vsel %vm3722, %v3198, %v3779
        %v3781 = vsel %vm3724, %v3207, %v3780
        %v3782 = vsel %vm3712, %v3225, %v3216
        %v3783 = vsel %vm3714, %v3234, %v3782
        %v3784 = vsel %vm3716, %v3243, %v3783
        %v3785 = vsel %vm3718, %v3252, %v3784
        %v3786 = vsel %vm3720, %v3261, %v3785
        %v3787 = vsel %vm3722, %v3270, %v3786
        %v3788 = vsel %vm3724, %v3279, %v3787
        %v3789 = vsel %vm3712, %v3297, %v3288
        %v3790 = vsel %vm3714, %v3306, %v3789
        %v3791 = vsel %vm3716, %v3315, %v3790
        %v3792 = vsel %vm3718, %v3324, %v3791
        %v3793 = vsel %vm3720, %v3333, %v3792
        %v3794 = vsel %vm3722, %v3342, %v3793
        %v3795 = vsel %vm3724, %v3351, %v3794
        %v3796 = vsel %vm3712, %v3369, %v3360
        %v3797 = vsel %vm3714, %v3378, %v3796
        %v3798 = vsel %vm3716, %v3387, %v3797
        %v3799 = vsel %vm3718, %v3396, %v3798
        %v3800 = vsel %vm3720, %v3405, %v3799
        %v3801 = vsel %vm3722, %v3414, %v3800
        %v3802 = vsel %vm3724, %v3423, %v3801
        %v3803 = vsel %vm3712, %v3441, %v3432
        %v3804 = vsel %vm3714, %v3450, %v3803
        %v3805 = vsel %vm3716, %v3459, %v3804
        %v3806 = vsel %vm3718, %v3468, %v3805
        %v3807 = vsel %vm3720, %v3477, %v3806
        %v3808 = vsel %vm3722, %v3486, %v3807
        %v3809 = vsel %vm3724, %v3495, %v3808
        %v3810 = vsel %vm3712, %v3513, %v3504
        %v3811 = vsel %vm3714, %v3522, %v3810
        %v3812 = vsel %vm3716, %v3531, %v3811
        %v3813 = vsel %vm3718, %v3540, %v3812
        %v3814 = vsel %vm3720, %v3549, %v3813
        %v3815 = vsel %vm3722, %v3558, %v3814
        %v3816 = vsel %vm3724, %v3567, %v3815
        %v3817 = vsel %vm3712, %v3585, %v3576
        %v3818 = vsel %vm3714, %v3594, %v3817
        %v3819 = vsel %vm3716, %v3603, %v3818
        %v3820 = vsel %vm3718, %v3612, %v3819
        %v3821 = vsel %vm3720, %v3621, %v3820
        %v3822 = vsel %vm3722, %v3630, %v3821
        %v3823 = vsel %vm3724, %v3639, %v3822
        %v3824 = vsel %vm3712, %v3657, %v3648
        %v3825 = vsel %vm3714, %v3666, %v3824
        %v3826 = vsel %vm3716, %v3675, %v3825
        %v3827 = vsel %vm3718, %v3684, %v3826
        %v3828 = vsel %vm3720, %v3693, %v3827
        %v3829 = vsel %vm3722, %v3702, %v3828
        %v3830 = vsel %vm3724, %v3711, %v3829
        %v3847 = vsel %vm414, %v3725, 0.0
        %3848 = vadd.xlane.f32.xlu0 %v3847
        %v3849 = vpop.xlane.xlu0 %3848
        %v3850 = vsel %vm414, %v3732, 0.0
        %3851 = vadd.xlane.f32.xlu0 %v3850
        %v3852 = vpop.xlane.xlu0 %3851
        %v3853 = vsel %vm414, %v3739, 0.0
        %3854 = vadd.xlane.f32.xlu0 %v3853
        %v3855 = vpop.xlane.xlu0 %3854
        %v3856 = vsel %vm414, %v3746, 0.0
        %3857 = vadd.xlane.f32.xlu0 %v3856
        %v3858 = vpop.xlane.xlu0 %3857
        %v3859 = vsel %vm414, %v3753, 0.0
        %3860 = vadd.xlane.f32.xlu0 %v3859
        %v3861 = vpop.xlane.xlu0 %3860
        %v3862 = vsel %vm414, %v3760, 0.0
        %3863 = vadd.xlane.f32.xlu0 %v3862
        %v3864 = vpop.xlane.xlu0 %3863
        %v3865 = vsel %vm414, %v3767, 0.0
        %3866 = vadd.xlane.f32.xlu0 %v3865
        %v3867 = vpop.xlane.xlu0 %3866
        %v3868 = vsel %vm414, %v3774, 0.0
        %3869 = vadd.xlane.f32.xlu0 %v3868
        %v3870 = vpop.xlane.xlu0 %3869
        %v3871 = vsel %vm414, %v3781, 0.0
        %3872 = vadd.xlane.f32.xlu0 %v3871
        %v3873 = vpop.xlane.xlu0 %3872
        %v3874 = vsel %vm414, %v3788, 0.0
        %3875 = vadd.xlane.f32.xlu0 %v3874
        %v3876 = vpop.xlane.xlu0 %3875
        %v3877 = vsel %vm414, %v3795, 0.0
        %3878 = vadd.xlane.f32.xlu0 %v3877
        %v3879 = vpop.xlane.xlu0 %3878
        %v3880 = vsel %vm414, %v3802, 0.0
        %3881 = vadd.xlane.f32.xlu0 %v3880
        %v3882 = vpop.xlane.xlu0 %3881
        %v3883 = vsel %vm414, %v3809, 0.0
        %3884 = vadd.xlane.f32.xlu0 %v3883
        %v3885 = vpop.xlane.xlu0 %3884
        %v3886 = vsel %vm414, %v3816, 0.0
        %3887 = vadd.xlane.f32.xlu0 %v3886
        %v3888 = vpop.xlane.xlu0 %3887
        %v3889 = vsel %vm414, %v3823, 0.0
        %3890 = vadd.xlane.f32.xlu0 %v3889
        %v3891 = vpop.xlane.xlu0 %3890
        %v3892 = vsel %vm414, %v3830, 0.0
        %3893 = vadd.xlane.f32.xlu0 %v3892
        %v3894 = vpop.xlane.xlu0 %3893
        %3896 = vbcast.lane.b32.xlu0 %v409, 256
        %v3897 = vpop.permute.xlu0 %3896
        %s3899 = sor.u32 256, 8
        %3900 = vbcast.lane.b32.xlu0 %v409, %s3899
        %v3901 = vpop.permute.xlu0 %3900
        %v3902 = vsel %vm950, %v3897, 0
        %v3903 = vsel %vm951, %v3901, 0
        %v3904 = vsel %vm952, %v3897, 0
        %v3905 = vsel %vm953, %v3901, 0
        %v3906 = vsel %vm954, %v3897, 0
        %v3907 = vsel %vm955, %v3901, 0
        %v3908 = vsel %vm956, %v3897, 0
        %v3909 = vsel %vm957, %v3901, 0
        %v3910 = vsel %vm958, %v3897, 0
        %v3911 = vsel %vm959, %v3901, 0
        %v3912 = vsel %vm960, %v3897, 0
        %v3913 = vsel %vm961, %v3901, 0
        %v3914 = vsel %vm962, %v3897, 0
        %v3915 = vsel %vm963, %v3901, 0
        %v3916 = vsel %vm964, %v3897, 0
        %v3917 = vsel %vm965, %v3901, 0
        %v3918 = vsel %vm966, %v3897, 0
        %v3919 = vsel %vm967, %v3901, 0
        %v3920 = vsel %vm968, %v3897, 0
        %v3921 = vsel %vm969, %v3901, 0
        %v3922 = vsel %vm970, %v3897, 0
        %v3923 = vsel %vm971, %v3901, 0
        %v3924 = vsel %vm972, %v3897, 0
        %v3925 = vsel %vm973, %v3901, 0
        %v3926 = vsel %vm974, %v3897, 0
        %v3927 = vsel %vm975, %v3901, 0
        %v3928 = vsel %vm976, %v3897, 0
        %v3929 = vsel %vm977, %v3901, 0
        %v3930 = vsel %vm978, %v3897, 0
        %v3931 = vsel %vm979, %v3901, 0
        %v3932 = vsel %vm980, %v3897, 0
        %v3933 = vsel %vm981, %v3901, 0
        %v3934 = vsel %vm982, %v3897, 0
        %v3935 = vsel %vm983, %v3901, 0
        %v3936 = vsel %vm984, %v3897, 0
        %v3937 = vsel %vm985, %v3901, 0
        %v3938 = vsel %vm986, %v3897, 0
        %v3939 = vsel %vm987, %v3901, 0
        %v3940 = vsel %vm988, %v3897, 0
        %v3941 = vsel %vm989, %v3901, 0
        %v3942 = vsel %vm990, %v3897, 0
        %v3943 = vsel %vm991, %v3901, 0
        %v3944 = vsel %vm992, %v3897, 0
        %v3945 = vsel %vm993, %v3901, 0
        %v3946 = vsel %vm994, %v3897, 0
        %v3947 = vsel %vm995, %v3901, 0
        %v3948 = vsel %vm996, %v3897, 0
        %v3949 = vsel %vm997, %v3901, 0
        %v3950 = vsel %vm998, %v3897, 0
        %v3951 = vsel %vm999, %v3901, 0
        %v3952 = vsel %vm1000, %v3897, 0
        %v3953 = vsel %vm1001, %v3901, 0
        %v3954 = vsel %vm1002, %v3897, 0
        %v3955 = vsel %vm1003, %v3901, 0
        %v3956 = vsel %vm1004, %v3897, 0
        %v3957 = vsel %vm1005, %v3901, 0
        %v3958 = vsel %vm1006, %v3897, 0
        %v3959 = vsel %vm1007, %v3901, 0
        %v3960 = vsel %vm1008, %v3897, 0
        %v3961 = vsel %vm1009, %v3901, 0
        %v3962 = vsel %vm1010, %v3897, 0
        %v3963 = vsel %vm1011, %v3901, 0
        %v3964 = vsel %vm1012, %v3897, 0
        %v3965 = vsel %vm1013, %v3901, 0
        %v3966 = vsel %vm1014, %v3897, 0
        %v3967 = vsel %vm1015, %v3901, 0
        %v3968 = vsel %vm1016, %v3897, 0
        %v3969 = vsel %vm1017, %v3901, 0
        %v3970 = vsel %vm1018, %v3897, 0
        %v3971 = vsel %vm1019, %v3901, 0
        %v3972 = vsel %vm1020, %v3897, 0
        %v3973 = vsel %vm1021, %v3901, 0
        %v3974 = vsel %vm1022, %v3897, 0
        %v3975 = vsel %vm1023, %v3901, 0
        %v3976 = vsel %vm1024, %v3897, 0
        %v3977 = vsel %vm1025, %v3901, 0
        %v3978 = vsel %vm1026, %v3897, 0
        %v3979 = vsel %vm1027, %v3901, 0
        %v3980 = vsel %vm1028, %v3897, 0
        %v3981 = vsel %vm1029, %v3901, 0
        %v3982 = vsel %vm1030, %v3897, 0
        %v3983 = vsel %vm1031, %v3901, 0
        %v3984 = vsel %vm1032, %v3897, 0
        %v3985 = vsel %vm1033, %v3901, 0
        %v3986 = vsel %vm1034, %v3897, 0
        %v3987 = vsel %vm1035, %v3901, 0
        %v3988 = vsel %vm1036, %v3897, 0
        %v3989 = vsel %vm1037, %v3901, 0
        %v3990 = vsel %vm1038, %v3897, 0
        %v3991 = vsel %vm1039, %v3901, 0
        %v3992 = vsel %vm1040, %v3897, 0
        %v3993 = vsel %vm1041, %v3901, 0
        %v3994 = vsel %vm1042, %v3897, 0
        %v3995 = vsel %vm1043, %v3901, 0
        %v3996 = vsel %vm1044, %v3897, 0
        %v3997 = vsel %vm1045, %v3901, 0
        %v3998 = vsel %vm1046, %v3897, 0
        %v3999 = vsel %vm1047, %v3901, 0
        %v4000 = vsel %vm1048, %v3897, 0
        %v4001 = vsel %vm1049, %v3901, 0
        %v4002 = vsel %vm1050, %v3897, 0
        %v4003 = vsel %vm1051, %v3901, 0
        %v4004 = vsel %vm1052, %v3897, 0
        %v4005 = vsel %vm1053, %v3901, 0
        %v4006 = vsel %vm1054, %v3897, 0
        %v4007 = vsel %vm1055, %v3901, 0
        %v4008 = vsel %vm1056, %v3897, 0
        %v4009 = vsel %vm1057, %v3901, 0
        %v4010 = vsel %vm1058, %v3897, 0
        %v4011 = vsel %vm1059, %v3901, 0
        %v4012 = vsel %vm1060, %v3897, 0
        %v4013 = vsel %vm1061, %v3901, 0
        %v4014 = vsel %vm1062, %v3897, 0
        %v4015 = vsel %vm1063, %v3901, 0
        %v4016 = vsel %vm1064, %v3897, 0
        %v4017 = vsel %vm1065, %v3901, 0
        %v4018 = vsel %vm1066, %v3897, 0
        %v4019 = vsel %vm1067, %v3901, 0
        %v4020 = vsel %vm1068, %v3897, 0
        %v4021 = vsel %vm1069, %v3901, 0
        %v4022 = vsel %vm1070, %v3897, 0
        %v4023 = vsel %vm1071, %v3901, 0
        %v4024 = vsel %vm1072, %v3897, 0
        %v4025 = vsel %vm1073, %v3901, 0
        %v4026 = vsel %vm1074, %v3897, 0
        %v4027 = vsel %vm1075, %v3901, 0
        %v4028 = vsel %vm1076, %v3897, 0
        %v4029 = vsel %vm1077, %v3901, 0
        %v4030 = vsel %vm1078, %v3897, 0
        %v4031 = vsel %vm1079, %v3901, 0
        %v4032 = vsel %vm1080, %v3897, 0
        %v4033 = vsel %vm1081, %v3901, 0
        %v4034 = vsel %vm1082, %v3897, 0
        %v4035 = vsel %vm1083, %v3901, 0
        %v4036 = vsel %vm1084, %v3897, 0
        %v4037 = vsel %vm1085, %v3901, 0
        %v4038 = vsel %vm1086, %v3897, 0
        %v4039 = vsel %vm1087, %v3901, 0
        %v4040 = vsel %vm1088, %v3897, 0
        %v4041 = vsel %vm1089, %v3901, 0
        %v4042 = vsel %vm1090, %v3897, 0
        %v4043 = vsel %vm1091, %v3901, 0
        %v4044 = vsel %vm1092, %v3897, 0
        %v4045 = vsel %vm1093, %v3901, 0
        %v4046 = vsel %vm1094, %v3897, 0
        %v4047 = vsel %vm1095, %v3901, 0
        %v4048 = vsel %vm1096, %v3897, 0
        %v4049 = vsel %vm1097, %v3901, 0
        %v4050 = vsel %vm1098, %v3897, 0
        %v4051 = vsel %vm1099, %v3901, 0
        %v4052 = vsel %vm1100, %v3897, 0
        %v4053 = vsel %vm1101, %v3901, 0
        %v4054 = vsel %vm1102, %v3897, 0
        %v4055 = vsel %vm1103, %v3901, 0
        %v4056 = vsel %vm1104, %v3897, 0
        %v4057 = vsel %vm1105, %v3901, 0
        %v4058 = vsel %vm1106, %v3897, 0
        %v4059 = vsel %vm1107, %v3901, 0
        %v4060 = vsel %vm1108, %v3897, 0
        %v4061 = vsel %vm1109, %v3901, 0
        %v4062 = vsel %vm1110, %v3897, 0
        %v4063 = vsel %vm1111, %v3901, 0
        %v4064 = vsel %vm1112, %v3897, 0
        %v4065 = vsel %vm1113, %v3901, 0
        %v4066 = vsel %vm1114, %v3897, 0
        %v4067 = vsel %vm1115, %v3901, 0
        %v4068 = vsel %vm1116, %v3897, 0
        %v4069 = vsel %vm1117, %v3901, 0
        %v4070 = vsel %vm1118, %v3897, 0
        %v4071 = vsel %vm1119, %v3901, 0
        %v4072 = vsel %vm1120, %v3897, 0
        %v4073 = vsel %vm1121, %v3901, 0
        %v4074 = vsel %vm1122, %v3897, 0
        %v4075 = vsel %vm1123, %v3901, 0
        %v4076 = vsel %vm1124, %v3897, 0
        %v4077 = vsel %vm1125, %v3901, 0
        %v4078 = vsel %vm1126, %v3897, 0
        %v4079 = vsel %vm1127, %v3901, 0
        %v4080 = vsel %vm1128, %v3897, 0
        %v4081 = vsel %vm1129, %v3901, 0
        %v4082 = vsel %vm1130, %v3897, 0
        %v4083 = vsel %vm1131, %v3901, 0
        %v4084 = vsel %vm1132, %v3897, 0
        %v4085 = vsel %vm1133, %v3901, 0
        %v4086 = vsel %vm1134, %v3897, 0
        %v4087 = vsel %vm1135, %v3901, 0
        %v4088 = vsel %vm1136, %v3897, 0
        %v4089 = vsel %vm1137, %v3901, 0
        %v4090 = vsel %vm1138, %v3897, 0
        %v4091 = vsel %vm1139, %v3901, 0
        %v4092 = vsel %vm1140, %v3897, 0
        %v4093 = vsel %vm1141, %v3901, 0
        %v4094 = vsel %vm1142, %v3897, 0
        %v4095 = vsel %vm1143, %v3901, 0
        %v4096 = vsel %vm1144, %v3897, 0
        %v4097 = vsel %vm1145, %v3901, 0
        %v4098 = vsel %vm1146, %v3897, 0
        %v4099 = vsel %vm1147, %v3901, 0
        %v4100 = vsel %vm1148, %v3897, 0
        %v4101 = vsel %vm1149, %v3901, 0
        %v4102 = vsel %vm1150, %v3897, 0
        %v4103 = vsel %vm1151, %v3901, 0
        %v4104 = vsel %vm1152, %v3897, 0
        %v4105 = vsel %vm1153, %v3901, 0
        %v4106 = vsel %vm1154, %v3897, 0
        %v4107 = vsel %vm1155, %v3901, 0
        %v4108 = vsel %vm1156, %v3897, 0
        %v4109 = vsel %vm1157, %v3901, 0
        %v4110 = vsel %vm1158, %v3897, 0
        %v4111 = vsel %vm1159, %v3901, 0
        %v4112 = vsel %vm1160, %v3897, 0
        %v4113 = vsel %vm1161, %v3901, 0
        %v4114 = vsel %vm1162, %v3897, 0
        %v4115 = vsel %vm1163, %v3901, 0
        %v4116 = vsel %vm1164, %v3897, 0
        %v4117 = vsel %vm1165, %v3901, 0
        %v4118 = vsel %vm1166, %v3897, 0
        %v4119 = vsel %vm1167, %v3901, 0
        %v4120 = vsel %vm1168, %v3897, 0
        %v4121 = vsel %vm1169, %v3901, 0
        %v4122 = vsel %vm1170, %v3897, 0
        %v4123 = vsel %vm1171, %v3901, 0
        %v4124 = vsel %vm1172, %v3897, 0
        %v4125 = vsel %vm1173, %v3901, 0
        %v4126 = vsel %vm1174, %v3897, 0
        %v4127 = vsel %vm1175, %v3901, 0
        %v4128 = vsel %vm1176, %v3897, 0
        %v4129 = vsel %vm1177, %v3901, 0
        %v4130 = vsel %vm1178, %v3897, 0
        %v4131 = vsel %vm1179, %v3901, 0
        %v4132 = vsel %vm1180, %v3897, 0
        %v4133 = vsel %vm1181, %v3901, 0
        %v4134 = vsel %vm1182, %v3897, 0
        %v4135 = vsel %vm1183, %v3901, 0
        %v4136 = vsel %vm1184, %v3897, 0
        %v4137 = vsel %vm1185, %v3901, 0
        %v4138 = vsel %vm1186, %v3897, 0
        %v4139 = vsel %vm1187, %v3901, 0
        %v4140 = vsel %vm1188, %v3897, 0
        %v4141 = vsel %vm1189, %v3901, 0
        %v4142 = vsel %vm1190, %v3897, 0
        %v4143 = vsel %vm1191, %v3901, 0
        %v4144 = vsel %vm1192, %v3897, 0
        %v4145 = vsel %vm1193, %v3901, 0
        %v4146 = vsel %vm1194, %v3897, 0
        %v4147 = vsel %vm1195, %v3901, 0
        %v4148 = vsel %vm1196, %v3897, 0
        %v4149 = vsel %vm1197, %v3901, 0
        %v4150 = vsel %vm1198, %v3897, 0
        %v4151 = vsel %vm1199, %v3901, 0
        %v4152 = vsel %vm1200, %v3897, 0
        %v4153 = vsel %vm1201, %v3901, 0
        %v4154 = vsel %vm1202, %v3897, 0
        %v4155 = vsel %vm1203, %v3901, 0
        %v4156 = vsel %vm1204, %v3897, 0
        %v4157 = vsel %vm1205, %v3901, 0
        %4158 = vset.pattern.permute.xlu0 0
        %4159 = vperm.xlu0 %4158, %v3902
        %v4160 = vpop.permute.xlu0 %4159
        %4161 = vset.pattern.permute.xlu0 0
        %4162 = vperm.xlu0 %4161, %v3903
        %v4163 = vpop.permute.xlu0 %4162
        %4164 = vset.pattern.permute.xlu0 0
        %4165 = vperm.xlu0 %4164, %v3904
        %v4166 = vpop.permute.xlu0 %4165
        %4167 = vset.pattern.permute.xlu0 0
        %4168 = vperm.xlu0 %4167, %v3905
        %v4169 = vpop.permute.xlu0 %4168
        %4170 = vset.pattern.permute.xlu0 0
        %4171 = vperm.xlu0 %4170, %v3906
        %v4172 = vpop.permute.xlu0 %4171
        %4173 = vset.pattern.permute.xlu0 0
        %4174 = vperm.xlu0 %4173, %v3907
        %v4175 = vpop.permute.xlu0 %4174
        %4176 = vset.pattern.permute.xlu0 0
        %4177 = vperm.xlu0 %4176, %v3908
        %v4178 = vpop.permute.xlu0 %4177
        %4179 = vset.pattern.permute.xlu0 0
        %4180 = vperm.xlu0 %4179, %v3909
        %v4181 = vpop.permute.xlu0 %4180
        %4182 = vset.pattern.permute.xlu0 0
        %4183 = vperm.xlu0 %4182, %v3910
        %v4184 = vpop.permute.xlu0 %4183
        %4185 = vset.pattern.permute.xlu0 0
        %4186 = vperm.xlu0 %4185, %v3911
        %v4187 = vpop.permute.xlu0 %4186
        %4188 = vset.pattern.permute.xlu0 0
        %4189 = vperm.xlu0 %4188, %v3912
        %v4190 = vpop.permute.xlu0 %4189
        %4191 = vset.pattern.permute.xlu0 0
        %4192 = vperm.xlu0 %4191, %v3913
        %v4193 = vpop.permute.xlu0 %4192
        %4194 = vset.pattern.permute.xlu0 0
        %4195 = vperm.xlu0 %4194, %v3914
        %v4196 = vpop.permute.xlu0 %4195
        %4197 = vset.pattern.permute.xlu0 0
        %4198 = vperm.xlu0 %4197, %v3915
        %v4199 = vpop.permute.xlu0 %4198
        %4200 = vset.pattern.permute.xlu0 0
        %4201 = vperm.xlu0 %4200, %v3916
        %v4202 = vpop.permute.xlu0 %4201
        %4203 = vset.pattern.permute.xlu0 0
        %4204 = vperm.xlu0 %4203, %v3917
        %v4205 = vpop.permute.xlu0 %4204
        %4206 = vset.pattern.permute.xlu0 0
        %4207 = vperm.xlu0 %4206, %v3918
        %v4208 = vpop.permute.xlu0 %4207
        %4209 = vset.pattern.permute.xlu0 0
        %4210 = vperm.xlu0 %4209, %v3919
        %v4211 = vpop.permute.xlu0 %4210
        %4212 = vset.pattern.permute.xlu0 0
        %4213 = vperm.xlu0 %4212, %v3920
        %v4214 = vpop.permute.xlu0 %4213
        %4215 = vset.pattern.permute.xlu0 0
        %4216 = vperm.xlu0 %4215, %v3921
        %v4217 = vpop.permute.xlu0 %4216
        %4218 = vset.pattern.permute.xlu0 0
        %4219 = vperm.xlu0 %4218, %v3922
        %v4220 = vpop.permute.xlu0 %4219
        %4221 = vset.pattern.permute.xlu0 0
        %4222 = vperm.xlu0 %4221, %v3923
        %v4223 = vpop.permute.xlu0 %4222
        %4224 = vset.pattern.permute.xlu0 0
        %4225 = vperm.xlu0 %4224, %v3924
        %v4226 = vpop.permute.xlu0 %4225
        %4227 = vset.pattern.permute.xlu0 0
        %4228 = vperm.xlu0 %4227, %v3925
        %v4229 = vpop.permute.xlu0 %4228
        %4230 = vset.pattern.permute.xlu0 0
        %4231 = vperm.xlu0 %4230, %v3926
        %v4232 = vpop.permute.xlu0 %4231
        %4233 = vset.pattern.permute.xlu0 0
        %4234 = vperm.xlu0 %4233, %v3927
        %v4235 = vpop.permute.xlu0 %4234
        %4236 = vset.pattern.permute.xlu0 0
        %4237 = vperm.xlu0 %4236, %v3928
        %v4238 = vpop.permute.xlu0 %4237
        %4239 = vset.pattern.permute.xlu0 0
        %4240 = vperm.xlu0 %4239, %v3929
        %v4241 = vpop.permute.xlu0 %4240
        %4242 = vset.pattern.permute.xlu0 0
        %4243 = vperm.xlu0 %4242, %v3930
        %v4244 = vpop.permute.xlu0 %4243
        %4245 = vset.pattern.permute.xlu0 0
        %4246 = vperm.xlu0 %4245, %v3931
        %v4247 = vpop.permute.xlu0 %4246
        %4248 = vset.pattern.permute.xlu0 0
        %4249 = vperm.xlu0 %4248, %v3932
        %v4250 = vpop.permute.xlu0 %4249
        %4251 = vset.pattern.permute.xlu0 0
        %4252 = vperm.xlu0 %4251, %v3933
        %v4253 = vpop.permute.xlu0 %4252
        %4254 = vset.pattern.permute.xlu0 0
        %4255 = vperm.xlu0 %4254, %v3934
        %v4256 = vpop.permute.xlu0 %4255
        %4257 = vset.pattern.permute.xlu0 0
        %4258 = vperm.xlu0 %4257, %v3935
        %v4259 = vpop.permute.xlu0 %4258
        %4260 = vset.pattern.permute.xlu0 0
        %4261 = vperm.xlu0 %4260, %v3936
        %v4262 = vpop.permute.xlu0 %4261
        %4263 = vset.pattern.permute.xlu0 0
        %4264 = vperm.xlu0 %4263, %v3937
        %v4265 = vpop.permute.xlu0 %4264
        %4266 = vset.pattern.permute.xlu0 0
        %4267 = vperm.xlu0 %4266, %v3938
        %v4268 = vpop.permute.xlu0 %4267
        %4269 = vset.pattern.permute.xlu0 0
        %4270 = vperm.xlu0 %4269, %v3939
        %v4271 = vpop.permute.xlu0 %4270
        %4272 = vset.pattern.permute.xlu0 0
        %4273 = vperm.xlu0 %4272, %v3940
        %v4274 = vpop.permute.xlu0 %4273
        %4275 = vset.pattern.permute.xlu0 0
        %4276 = vperm.xlu0 %4275, %v3941
        %v4277 = vpop.permute.xlu0 %4276
        %4278 = vset.pattern.permute.xlu0 0
        %4279 = vperm.xlu0 %4278, %v3942
        %v4280 = vpop.permute.xlu0 %4279
        %4281 = vset.pattern.permute.xlu0 0
        %4282 = vperm.xlu0 %4281, %v3943
        %v4283 = vpop.permute.xlu0 %4282
        %4284 = vset.pattern.permute.xlu0 0
        %4285 = vperm.xlu0 %4284, %v3944
        %v4286 = vpop.permute.xlu0 %4285
        %4287 = vset.pattern.permute.xlu0 0
        %4288 = vperm.xlu0 %4287, %v3945
        %v4289 = vpop.permute.xlu0 %4288
        %4290 = vset.pattern.permute.xlu0 0
        %4291 = vperm.xlu0 %4290, %v3946
        %v4292 = vpop.permute.xlu0 %4291
        %4293 = vset.pattern.permute.xlu0 0
        %4294 = vperm.xlu0 %4293, %v3947
        %v4295 = vpop.permute.xlu0 %4294
        %4296 = vset.pattern.permute.xlu0 0
        %4297 = vperm.xlu0 %4296, %v3948
        %v4298 = vpop.permute.xlu0 %4297
        %4299 = vset.pattern.permute.xlu0 0
        %4300 = vperm.xlu0 %4299, %v3949
        %v4301 = vpop.permute.xlu0 %4300
        %4302 = vset.pattern.permute.xlu0 0
        %4303 = vperm.xlu0 %4302, %v3950
        %v4304 = vpop.permute.xlu0 %4303
        %4305 = vset.pattern.permute.xlu0 0
        %4306 = vperm.xlu0 %4305, %v3951
        %v4307 = vpop.permute.xlu0 %4306
        %4308 = vset.pattern.permute.xlu0 0
        %4309 = vperm.xlu0 %4308, %v3952
        %v4310 = vpop.permute.xlu0 %4309
        %4311 = vset.pattern.permute.xlu0 0
        %4312 = vperm.xlu0 %4311, %v3953
        %v4313 = vpop.permute.xlu0 %4312
        %4314 = vset.pattern.permute.xlu0 0
        %4315 = vperm.xlu0 %4314, %v3954
        %v4316 = vpop.permute.xlu0 %4315
        %4317 = vset.pattern.permute.xlu0 0
        %4318 = vperm.xlu0 %4317, %v3955
        %v4319 = vpop.permute.xlu0 %4318
        %4320 = vset.pattern.permute.xlu0 0
        %4321 = vperm.xlu0 %4320, %v3956
        %v4322 = vpop.permute.xlu0 %4321
        %4323 = vset.pattern.permute.xlu0 0
        %4324 = vperm.xlu0 %4323, %v3957
        %v4325 = vpop.permute.xlu0 %4324
        %4326 = vset.pattern.permute.xlu0 0
        %4327 = vperm.xlu0 %4326, %v3958
        %v4328 = vpop.permute.xlu0 %4327
        %4329 = vset.pattern.permute.xlu0 0
        %4330 = vperm.xlu0 %4329, %v3959
        %v4331 = vpop.permute.xlu0 %4330
        %4332 = vset.pattern.permute.xlu0 0
        %4333 = vperm.xlu0 %4332, %v3960
        %v4334 = vpop.permute.xlu0 %4333
        %4335 = vset.pattern.permute.xlu0 0
        %4336 = vperm.xlu0 %4335, %v3961
        %v4337 = vpop.permute.xlu0 %4336
        %4338 = vset.pattern.permute.xlu0 0
        %4339 = vperm.xlu0 %4338, %v3962
        %v4340 = vpop.permute.xlu0 %4339
        %4341 = vset.pattern.permute.xlu0 0
        %4342 = vperm.xlu0 %4341, %v3963
        %v4343 = vpop.permute.xlu0 %4342
        %4344 = vset.pattern.permute.xlu0 0
        %4345 = vperm.xlu0 %4344, %v3964
        %v4346 = vpop.permute.xlu0 %4345
        %4347 = vset.pattern.permute.xlu0 0
        %4348 = vperm.xlu0 %4347, %v3965
        %v4349 = vpop.permute.xlu0 %4348
        %4350 = vset.pattern.permute.xlu0 0
        %4351 = vperm.xlu0 %4350, %v3966
        %v4352 = vpop.permute.xlu0 %4351
        %4353 = vset.pattern.permute.xlu0 0
        %4354 = vperm.xlu0 %4353, %v3967
        %v4355 = vpop.permute.xlu0 %4354
        %4356 = vset.pattern.permute.xlu0 0
        %4357 = vperm.xlu0 %4356, %v3968
        %v4358 = vpop.permute.xlu0 %4357
        %4359 = vset.pattern.permute.xlu0 0
        %4360 = vperm.xlu0 %4359, %v3969
        %v4361 = vpop.permute.xlu0 %4360
        %4362 = vset.pattern.permute.xlu0 0
        %4363 = vperm.xlu0 %4362, %v3970
        %v4364 = vpop.permute.xlu0 %4363
        %4365 = vset.pattern.permute.xlu0 0
        %4366 = vperm.xlu0 %4365, %v3971
        %v4367 = vpop.permute.xlu0 %4366
        %4368 = vset.pattern.permute.xlu0 0
        %4369 = vperm.xlu0 %4368, %v3972
        %v4370 = vpop.permute.xlu0 %4369
        %4371 = vset.pattern.permute.xlu0 0
        %4372 = vperm.xlu0 %4371, %v3973
        %v4373 = vpop.permute.xlu0 %4372
        %4374 = vset.pattern.permute.xlu0 0
        %4375 = vperm.xlu0 %4374, %v3974
        %v4376 = vpop.permute.xlu0 %4375
        %4377 = vset.pattern.permute.xlu0 0
        %4378 = vperm.xlu0 %4377, %v3975
        %v4379 = vpop.permute.xlu0 %4378
        %4380 = vset.pattern.permute.xlu0 0
        %4381 = vperm.xlu0 %4380, %v3976
        %v4382 = vpop.permute.xlu0 %4381
        %4383 = vset.pattern.permute.xlu0 0
        %4384 = vperm.xlu0 %4383, %v3977
        %v4385 = vpop.permute.xlu0 %4384
        %4386 = vset.pattern.permute.xlu0 0
        %4387 = vperm.xlu0 %4386, %v3978
        %v4388 = vpop.permute.xlu0 %4387
        %4389 = vset.pattern.permute.xlu0 0
        %4390 = vperm.xlu0 %4389, %v3979
        %v4391 = vpop.permute.xlu0 %4390
        %4392 = vset.pattern.permute.xlu0 0
        %4393 = vperm.xlu0 %4392, %v3980
        %v4394 = vpop.permute.xlu0 %4393
        %4395 = vset.pattern.permute.xlu0 0
        %4396 = vperm.xlu0 %4395, %v3981
        %v4397 = vpop.permute.xlu0 %4396
        %4398 = vset.pattern.permute.xlu0 0
        %4399 = vperm.xlu0 %4398, %v3982
        %v4400 = vpop.permute.xlu0 %4399
        %4401 = vset.pattern.permute.xlu0 0
        %4402 = vperm.xlu0 %4401, %v3983
        %v4403 = vpop.permute.xlu0 %4402
        %4404 = vset.pattern.permute.xlu0 0
        %4405 = vperm.xlu0 %4404, %v3984
        %v4406 = vpop.permute.xlu0 %4405
        %4407 = vset.pattern.permute.xlu0 0
        %4408 = vperm.xlu0 %4407, %v3985
        %v4409 = vpop.permute.xlu0 %4408
        %4410 = vset.pattern.permute.xlu0 0
        %4411 = vperm.xlu0 %4410, %v3986
        %v4412 = vpop.permute.xlu0 %4411
        %4413 = vset.pattern.permute.xlu0 0
        %4414 = vperm.xlu0 %4413, %v3987
        %v4415 = vpop.permute.xlu0 %4414
        %4416 = vset.pattern.permute.xlu0 0
        %4417 = vperm.xlu0 %4416, %v3988
        %v4418 = vpop.permute.xlu0 %4417
        %4419 = vset.pattern.permute.xlu0 0
        %4420 = vperm.xlu0 %4419, %v3989
        %v4421 = vpop.permute.xlu0 %4420
        %4422 = vset.pattern.permute.xlu0 0
        %4423 = vperm.xlu0 %4422, %v3990
        %v4424 = vpop.permute.xlu0 %4423
        %4425 = vset.pattern.permute.xlu0 0
        %4426 = vperm.xlu0 %4425, %v3991
        %v4427 = vpop.permute.xlu0 %4426
        %4428 = vset.pattern.permute.xlu0 0
        %4429 = vperm.xlu0 %4428, %v3992
        %v4430 = vpop.permute.xlu0 %4429
        %4431 = vset.pattern.permute.xlu0 0
        %4432 = vperm.xlu0 %4431, %v3993
        %v4433 = vpop.permute.xlu0 %4432
        %4434 = vset.pattern.permute.xlu0 0
        %4435 = vperm.xlu0 %4434, %v3994
        %v4436 = vpop.permute.xlu0 %4435
        %4437 = vset.pattern.permute.xlu0 0
        %4438 = vperm.xlu0 %4437, %v3995
        %v4439 = vpop.permute.xlu0 %4438
        %4440 = vset.pattern.permute.xlu0 0
        %4441 = vperm.xlu0 %4440, %v3996
        %v4442 = vpop.permute.xlu0 %4441
        %4443 = vset.pattern.permute.xlu0 0
        %4444 = vperm.xlu0 %4443, %v3997
        %v4445 = vpop.permute.xlu0 %4444
        %4446 = vset.pattern.permute.xlu0 0
        %4447 = vperm.xlu0 %4446, %v3998
        %v4448 = vpop.permute.xlu0 %4447
        %4449 = vset.pattern.permute.xlu0 0
        %4450 = vperm.xlu0 %4449, %v3999
        %v4451 = vpop.permute.xlu0 %4450
        %4452 = vset.pattern.permute.xlu0 0
        %4453 = vperm.xlu0 %4452, %v4000
        %v4454 = vpop.permute.xlu0 %4453
        %4455 = vset.pattern.permute.xlu0 0
        %4456 = vperm.xlu0 %4455, %v4001
        %v4457 = vpop.permute.xlu0 %4456
        %4458 = vset.pattern.permute.xlu0 0
        %4459 = vperm.xlu0 %4458, %v4002
        %v4460 = vpop.permute.xlu0 %4459
        %4461 = vset.pattern.permute.xlu0 0
        %4462 = vperm.xlu0 %4461, %v4003
        %v4463 = vpop.permute.xlu0 %4462
        %4464 = vset.pattern.permute.xlu0 0
        %4465 = vperm.xlu0 %4464, %v4004
        %v4466 = vpop.permute.xlu0 %4465
        %4467 = vset.pattern.permute.xlu0 0
        %4468 = vperm.xlu0 %4467, %v4005
        %v4469 = vpop.permute.xlu0 %4468
        %4470 = vset.pattern.permute.xlu0 0
        %4471 = vperm.xlu0 %4470, %v4006
        %v4472 = vpop.permute.xlu0 %4471
        %4473 = vset.pattern.permute.xlu0 0
        %4474 = vperm.xlu0 %4473, %v4007
        %v4475 = vpop.permute.xlu0 %4474
        %4476 = vset.pattern.permute.xlu0 0
        %4477 = vperm.xlu0 %4476, %v4008
        %v4478 = vpop.permute.xlu0 %4477
        %4479 = vset.pattern.permute.xlu0 0
        %4480 = vperm.xlu0 %4479, %v4009
        %v4481 = vpop.permute.xlu0 %4480
        %4482 = vset.pattern.permute.xlu0 0
        %4483 = vperm.xlu0 %4482, %v4010
        %v4484 = vpop.permute.xlu0 %4483
        %4485 = vset.pattern.permute.xlu0 0
        %4486 = vperm.xlu0 %4485, %v4011
        %v4487 = vpop.permute.xlu0 %4486
        %4488 = vset.pattern.permute.xlu0 0
        %4489 = vperm.xlu0 %4488, %v4012
        %v4490 = vpop.permute.xlu0 %4489
        %4491 = vset.pattern.permute.xlu0 0
        %4492 = vperm.xlu0 %4491, %v4013
        %v4493 = vpop.permute.xlu0 %4492
        %4494 = vset.pattern.permute.xlu0 0
        %4495 = vperm.xlu0 %4494, %v4014
        %v4496 = vpop.permute.xlu0 %4495
        %4497 = vset.pattern.permute.xlu0 0
        %4498 = vperm.xlu0 %4497, %v4015
        %v4499 = vpop.permute.xlu0 %4498
        %4500 = vset.pattern.permute.xlu0 0
        %4501 = vperm.xlu0 %4500, %v4016
        %v4502 = vpop.permute.xlu0 %4501
        %4503 = vset.pattern.permute.xlu0 0
        %4504 = vperm.xlu0 %4503, %v4017
        %v4505 = vpop.permute.xlu0 %4504
        %4506 = vset.pattern.permute.xlu0 0
        %4507 = vperm.xlu0 %4506, %v4018
        %v4508 = vpop.permute.xlu0 %4507
        %4509 = vset.pattern.permute.xlu0 0
        %4510 = vperm.xlu0 %4509, %v4019
        %v4511 = vpop.permute.xlu0 %4510
        %4512 = vset.pattern.permute.xlu0 0
        %4513 = vperm.xlu0 %4512, %v4020
        %v4514 = vpop.permute.xlu0 %4513
        %4515 = vset.pattern.permute.xlu0 0
        %4516 = vperm.xlu0 %4515, %v4021
        %v4517 = vpop.permute.xlu0 %4516
        %4518 = vset.pattern.permute.xlu0 0
        %4519 = vperm.xlu0 %4518, %v4022
        %v4520 = vpop.permute.xlu0 %4519
        %4521 = vset.pattern.permute.xlu0 0
        %4522 = vperm.xlu0 %4521, %v4023
        %v4523 = vpop.permute.xlu0 %4522
        %4524 = vset.pattern.permute.xlu0 0
        %4525 = vperm.xlu0 %4524, %v4024
        %v4526 = vpop.permute.xlu0 %4525
        %4527 = vset.pattern.permute.xlu0 0
        %4528 = vperm.xlu0 %4527, %v4025
        %v4529 = vpop.permute.xlu0 %4528
        %4530 = vset.pattern.permute.xlu0 0
        %4531 = vperm.xlu0 %4530, %v4026
        %v4532 = vpop.permute.xlu0 %4531
        %4533 = vset.pattern.permute.xlu0 0
        %4534 = vperm.xlu0 %4533, %v4027
        %v4535 = vpop.permute.xlu0 %4534
        %4536 = vset.pattern.permute.xlu0 0
        %4537 = vperm.xlu0 %4536, %v4028
        %v4538 = vpop.permute.xlu0 %4537
        %4539 = vset.pattern.permute.xlu0 0
        %4540 = vperm.xlu0 %4539, %v4029
        %v4541 = vpop.permute.xlu0 %4540
        %4542 = vset.pattern.permute.xlu0 0
        %4543 = vperm.xlu0 %4542, %v4030
        %v4544 = vpop.permute.xlu0 %4543
        %4545 = vset.pattern.permute.xlu0 0
        %4546 = vperm.xlu0 %4545, %v4031
        %v4547 = vpop.permute.xlu0 %4546
        %4548 = vset.pattern.permute.xlu0 0
        %4549 = vperm.xlu0 %4548, %v4032
        %v4550 = vpop.permute.xlu0 %4549
        %4551 = vset.pattern.permute.xlu0 0
        %4552 = vperm.xlu0 %4551, %v4033
        %v4553 = vpop.permute.xlu0 %4552
        %4554 = vset.pattern.permute.xlu0 0
        %4555 = vperm.xlu0 %4554, %v4034
        %v4556 = vpop.permute.xlu0 %4555
        %4557 = vset.pattern.permute.xlu0 0
        %4558 = vperm.xlu0 %4557, %v4035
        %v4559 = vpop.permute.xlu0 %4558
        %4560 = vset.pattern.permute.xlu0 0
        %4561 = vperm.xlu0 %4560, %v4036
        %v4562 = vpop.permute.xlu0 %4561
        %4563 = vset.pattern.permute.xlu0 0
        %4564 = vperm.xlu0 %4563, %v4037
        %v4565 = vpop.permute.xlu0 %4564
        %4566 = vset.pattern.permute.xlu0 0
        %4567 = vperm.xlu0 %4566, %v4038
        %v4568 = vpop.permute.xlu0 %4567
        %4569 = vset.pattern.permute.xlu0 0
        %4570 = vperm.xlu0 %4569, %v4039
        %v4571 = vpop.permute.xlu0 %4570
        %4572 = vset.pattern.permute.xlu0 0
        %4573 = vperm.xlu0 %4572, %v4040
        %v4574 = vpop.permute.xlu0 %4573
        %4575 = vset.pattern.permute.xlu0 0
        %4576 = vperm.xlu0 %4575, %v4041
        %v4577 = vpop.permute.xlu0 %4576
        %4578 = vset.pattern.permute.xlu0 0
        %4579 = vperm.xlu0 %4578, %v4042
        %v4580 = vpop.permute.xlu0 %4579
        %4581 = vset.pattern.permute.xlu0 0
        %4582 = vperm.xlu0 %4581, %v4043
        %v4583 = vpop.permute.xlu0 %4582
        %4584 = vset.pattern.permute.xlu0 0
        %4585 = vperm.xlu0 %4584, %v4044
        %v4586 = vpop.permute.xlu0 %4585
        %4587 = vset.pattern.permute.xlu0 0
        %4588 = vperm.xlu0 %4587, %v4045
        %v4589 = vpop.permute.xlu0 %4588
        %4590 = vset.pattern.permute.xlu0 0
        %4591 = vperm.xlu0 %4590, %v4046
        %v4592 = vpop.permute.xlu0 %4591
        %4593 = vset.pattern.permute.xlu0 0
        %4594 = vperm.xlu0 %4593, %v4047
        %v4595 = vpop.permute.xlu0 %4594
        %4596 = vset.pattern.permute.xlu0 0
        %4597 = vperm.xlu0 %4596, %v4048
        %v4598 = vpop.permute.xlu0 %4597
        %4599 = vset.pattern.permute.xlu0 0
        %4600 = vperm.xlu0 %4599, %v4049
        %v4601 = vpop.permute.xlu0 %4600
        %4602 = vset.pattern.permute.xlu0 0
        %4603 = vperm.xlu0 %4602, %v4050
        %v4604 = vpop.permute.xlu0 %4603
        %4605 = vset.pattern.permute.xlu0 0
        %4606 = vperm.xlu0 %4605, %v4051
        %v4607 = vpop.permute.xlu0 %4606
        %4608 = vset.pattern.permute.xlu0 0
        %4609 = vperm.xlu0 %4608, %v4052
        %v4610 = vpop.permute.xlu0 %4609
        %4611 = vset.pattern.permute.xlu0 0
        %4612 = vperm.xlu0 %4611, %v4053
        %v4613 = vpop.permute.xlu0 %4612
        %4614 = vset.pattern.permute.xlu0 0
        %4615 = vperm.xlu0 %4614, %v4054
        %v4616 = vpop.permute.xlu0 %4615
        %4617 = vset.pattern.permute.xlu0 0
        %4618 = vperm.xlu0 %4617, %v4055
        %v4619 = vpop.permute.xlu0 %4618
        %4620 = vset.pattern.permute.xlu0 0
        %4621 = vperm.xlu0 %4620, %v4056
        %v4622 = vpop.permute.xlu0 %4621
        %4623 = vset.pattern.permute.xlu0 0
        %4624 = vperm.xlu0 %4623, %v4057
        %v4625 = vpop.permute.xlu0 %4624
        %4626 = vset.pattern.permute.xlu0 0
        %4627 = vperm.xlu0 %4626, %v4058
        %v4628 = vpop.permute.xlu0 %4627
        %4629 = vset.pattern.permute.xlu0 0
        %4630 = vperm.xlu0 %4629, %v4059
        %v4631 = vpop.permute.xlu0 %4630
        %4632 = vset.pattern.permute.xlu0 0
        %4633 = vperm.xlu0 %4632, %v4060
        %v4634 = vpop.permute.xlu0 %4633
        %4635 = vset.pattern.permute.xlu0 0
        %4636 = vperm.xlu0 %4635, %v4061
        %v4637 = vpop.permute.xlu0 %4636
        %4638 = vset.pattern.permute.xlu0 0
        %4639 = vperm.xlu0 %4638, %v4062
        %v4640 = vpop.permute.xlu0 %4639
        %4641 = vset.pattern.permute.xlu0 0
        %4642 = vperm.xlu0 %4641, %v4063
        %v4643 = vpop.permute.xlu0 %4642
        %4644 = vset.pattern.permute.xlu0 0
        %4645 = vperm.xlu0 %4644, %v4064
        %v4646 = vpop.permute.xlu0 %4645
        %4647 = vset.pattern.permute.xlu0 0
        %4648 = vperm.xlu0 %4647, %v4065
        %v4649 = vpop.permute.xlu0 %4648
        %4650 = vset.pattern.permute.xlu0 0
        %4651 = vperm.xlu0 %4650, %v4066
        %v4652 = vpop.permute.xlu0 %4651
        %4653 = vset.pattern.permute.xlu0 0
        %4654 = vperm.xlu0 %4653, %v4067
        %v4655 = vpop.permute.xlu0 %4654
        %4656 = vset.pattern.permute.xlu0 0
        %4657 = vperm.xlu0 %4656, %v4068
        %v4658 = vpop.permute.xlu0 %4657
        %4659 = vset.pattern.permute.xlu0 0
        %4660 = vperm.xlu0 %4659, %v4069
        %v4661 = vpop.permute.xlu0 %4660
        %4662 = vset.pattern.permute.xlu0 0
        %4663 = vperm.xlu0 %4662, %v4070
        %v4664 = vpop.permute.xlu0 %4663
        %4665 = vset.pattern.permute.xlu0 0
        %4666 = vperm.xlu0 %4665, %v4071
        %v4667 = vpop.permute.xlu0 %4666
        %4668 = vset.pattern.permute.xlu0 0
        %4669 = vperm.xlu0 %4668, %v4072
        %v4670 = vpop.permute.xlu0 %4669
        %4671 = vset.pattern.permute.xlu0 0
        %4672 = vperm.xlu0 %4671, %v4073
        %v4673 = vpop.permute.xlu0 %4672
        %4674 = vset.pattern.permute.xlu0 0
        %4675 = vperm.xlu0 %4674, %v4074
        %v4676 = vpop.permute.xlu0 %4675
        %4677 = vset.pattern.permute.xlu0 0
        %4678 = vperm.xlu0 %4677, %v4075
        %v4679 = vpop.permute.xlu0 %4678
        %4680 = vset.pattern.permute.xlu0 0
        %4681 = vperm.xlu0 %4680, %v4076
        %v4682 = vpop.permute.xlu0 %4681
        %4683 = vset.pattern.permute.xlu0 0
        %4684 = vperm.xlu0 %4683, %v4077
        %v4685 = vpop.permute.xlu0 %4684
        %4686 = vset.pattern.permute.xlu0 0
        %4687 = vperm.xlu0 %4686, %v4078
        %v4688 = vpop.permute.xlu0 %4687
        %4689 = vset.pattern.permute.xlu0 0
        %4690 = vperm.xlu0 %4689, %v4079
        %v4691 = vpop.permute.xlu0 %4690
        %4692 = vset.pattern.permute.xlu0 0
        %4693 = vperm.xlu0 %4692, %v4080
        %v4694 = vpop.permute.xlu0 %4693
        %4695 = vset.pattern.permute.xlu0 0
        %4696 = vperm.xlu0 %4695, %v4081
        %v4697 = vpop.permute.xlu0 %4696
        %4698 = vset.pattern.permute.xlu0 0
        %4699 = vperm.xlu0 %4698, %v4082
        %v4700 = vpop.permute.xlu0 %4699
        %4701 = vset.pattern.permute.xlu0 0
        %4702 = vperm.xlu0 %4701, %v4083
        %v4703 = vpop.permute.xlu0 %4702
        %4704 = vset.pattern.permute.xlu0 0
        %4705 = vperm.xlu0 %4704, %v4084
        %v4706 = vpop.permute.xlu0 %4705
        %4707 = vset.pattern.permute.xlu0 0
        %4708 = vperm.xlu0 %4707, %v4085
        %v4709 = vpop.permute.xlu0 %4708
        %4710 = vset.pattern.permute.xlu0 0
        %4711 = vperm.xlu0 %4710, %v4086
        %v4712 = vpop.permute.xlu0 %4711
        %4713 = vset.pattern.permute.xlu0 0
        %4714 = vperm.xlu0 %4713, %v4087
        %v4715 = vpop.permute.xlu0 %4714
        %4716 = vset.pattern.permute.xlu0 0
        %4717 = vperm.xlu0 %4716, %v4088
        %v4718 = vpop.permute.xlu0 %4717
        %4719 = vset.pattern.permute.xlu0 0
        %4720 = vperm.xlu0 %4719, %v4089
        %v4721 = vpop.permute.xlu0 %4720
        %4722 = vset.pattern.permute.xlu0 0
        %4723 = vperm.xlu0 %4722, %v4090
        %v4724 = vpop.permute.xlu0 %4723
        %4725 = vset.pattern.permute.xlu0 0
        %4726 = vperm.xlu0 %4725, %v4091
        %v4727 = vpop.permute.xlu0 %4726
        %4728 = vset.pattern.permute.xlu0 0
        %4729 = vperm.xlu0 %4728, %v4092
        %v4730 = vpop.permute.xlu0 %4729
        %4731 = vset.pattern.permute.xlu0 0
        %4732 = vperm.xlu0 %4731, %v4093
        %v4733 = vpop.permute.xlu0 %4732
        %4734 = vset.pattern.permute.xlu0 0
        %4735 = vperm.xlu0 %4734, %v4094
        %v4736 = vpop.permute.xlu0 %4735
        %4737 = vset.pattern.permute.xlu0 0
        %4738 = vperm.xlu0 %4737, %v4095
        %v4739 = vpop.permute.xlu0 %4738
        %4740 = vset.pattern.permute.xlu0 0
        %4741 = vperm.xlu0 %4740, %v4096
        %v4742 = vpop.permute.xlu0 %4741
        %4743 = vset.pattern.permute.xlu0 0
        %4744 = vperm.xlu0 %4743, %v4097
        %v4745 = vpop.permute.xlu0 %4744
        %4746 = vset.pattern.permute.xlu0 0
        %4747 = vperm.xlu0 %4746, %v4098
        %v4748 = vpop.permute.xlu0 %4747
        %4749 = vset.pattern.permute.xlu0 0
        %4750 = vperm.xlu0 %4749, %v4099
        %v4751 = vpop.permute.xlu0 %4750
        %4752 = vset.pattern.permute.xlu0 0
        %4753 = vperm.xlu0 %4752, %v4100
        %v4754 = vpop.permute.xlu0 %4753
        %4755 = vset.pattern.permute.xlu0 0
        %4756 = vperm.xlu0 %4755, %v4101
        %v4757 = vpop.permute.xlu0 %4756
        %4758 = vset.pattern.permute.xlu0 0
        %4759 = vperm.xlu0 %4758, %v4102
        %v4760 = vpop.permute.xlu0 %4759
        %4761 = vset.pattern.permute.xlu0 0
        %4762 = vperm.xlu0 %4761, %v4103
        %v4763 = vpop.permute.xlu0 %4762
        %4764 = vset.pattern.permute.xlu0 0
        %4765 = vperm.xlu0 %4764, %v4104
        %v4766 = vpop.permute.xlu0 %4765
        %4767 = vset.pattern.permute.xlu0 0
        %4768 = vperm.xlu0 %4767, %v4105
        %v4769 = vpop.permute.xlu0 %4768
        %4770 = vset.pattern.permute.xlu0 0
        %4771 = vperm.xlu0 %4770, %v4106
        %v4772 = vpop.permute.xlu0 %4771
        %4773 = vset.pattern.permute.xlu0 0
        %4774 = vperm.xlu0 %4773, %v4107
        %v4775 = vpop.permute.xlu0 %4774
        %4776 = vset.pattern.permute.xlu0 0
        %4777 = vperm.xlu0 %4776, %v4108
        %v4778 = vpop.permute.xlu0 %4777
        %4779 = vset.pattern.permute.xlu0 0
        %4780 = vperm.xlu0 %4779, %v4109
        %v4781 = vpop.permute.xlu0 %4780
        %4782 = vset.pattern.permute.xlu0 0
        %4783 = vperm.xlu0 %4782, %v4110
        %v4784 = vpop.permute.xlu0 %4783
        %4785 = vset.pattern.permute.xlu0 0
        %4786 = vperm.xlu0 %4785, %v4111
        %v4787 = vpop.permute.xlu0 %4786
        %4788 = vset.pattern.permute.xlu0 0
        %4789 = vperm.xlu0 %4788, %v4112
        %v4790 = vpop.permute.xlu0 %4789
        %4791 = vset.pattern.permute.xlu0 0
        %4792 = vperm.xlu0 %4791, %v4113
        %v4793 = vpop.permute.xlu0 %4792
        %4794 = vset.pattern.permute.xlu0 0
        %4795 = vperm.xlu0 %4794, %v4114
        %v4796 = vpop.permute.xlu0 %4795
        %4797 = vset.pattern.permute.xlu0 0
        %4798 = vperm.xlu0 %4797, %v4115
        %v4799 = vpop.permute.xlu0 %4798
        %4800 = vset.pattern.permute.xlu0 0
        %4801 = vperm.xlu0 %4800, %v4116
        %v4802 = vpop.permute.xlu0 %4801
        %4803 = vset.pattern.permute.xlu0 0
        %4804 = vperm.xlu0 %4803, %v4117
        %v4805 = vpop.permute.xlu0 %4804
        %4806 = vset.pattern.permute.xlu0 0
        %4807 = vperm.xlu0 %4806, %v4118
        %v4808 = vpop.permute.xlu0 %4807
        %4809 = vset.pattern.permute.xlu0 0
        %4810 = vperm.xlu0 %4809, %v4119
        %v4811 = vpop.permute.xlu0 %4810
        %4812 = vset.pattern.permute.xlu0 0
        %4813 = vperm.xlu0 %4812, %v4120
        %v4814 = vpop.permute.xlu0 %4813
        %4815 = vset.pattern.permute.xlu0 0
        %4816 = vperm.xlu0 %4815, %v4121
        %v4817 = vpop.permute.xlu0 %4816
        %4818 = vset.pattern.permute.xlu0 0
        %4819 = vperm.xlu0 %4818, %v4122
        %v4820 = vpop.permute.xlu0 %4819
        %4821 = vset.pattern.permute.xlu0 0
        %4822 = vperm.xlu0 %4821, %v4123
        %v4823 = vpop.permute.xlu0 %4822
        %4824 = vset.pattern.permute.xlu0 0
        %4825 = vperm.xlu0 %4824, %v4124
        %v4826 = vpop.permute.xlu0 %4825
        %4827 = vset.pattern.permute.xlu0 0
        %4828 = vperm.xlu0 %4827, %v4125
        %v4829 = vpop.permute.xlu0 %4828
        %4830 = vset.pattern.permute.xlu0 0
        %4831 = vperm.xlu0 %4830, %v4126
        %v4832 = vpop.permute.xlu0 %4831
        %4833 = vset.pattern.permute.xlu0 0
        %4834 = vperm.xlu0 %4833, %v4127
        %v4835 = vpop.permute.xlu0 %4834
        %4836 = vset.pattern.permute.xlu0 0
        %4837 = vperm.xlu0 %4836, %v4128
        %v4838 = vpop.permute.xlu0 %4837
        %4839 = vset.pattern.permute.xlu0 0
        %4840 = vperm.xlu0 %4839, %v4129
        %v4841 = vpop.permute.xlu0 %4840
        %4842 = vset.pattern.permute.xlu0 0
        %4843 = vperm.xlu0 %4842, %v4130
        %v4844 = vpop.permute.xlu0 %4843
        %4845 = vset.pattern.permute.xlu0 0
        %4846 = vperm.xlu0 %4845, %v4131
        %v4847 = vpop.permute.xlu0 %4846
        %4848 = vset.pattern.permute.xlu0 0
        %4849 = vperm.xlu0 %4848, %v4132
        %v4850 = vpop.permute.xlu0 %4849
        %4851 = vset.pattern.permute.xlu0 0
        %4852 = vperm.xlu0 %4851, %v4133
        %v4853 = vpop.permute.xlu0 %4852
        %4854 = vset.pattern.permute.xlu0 0
        %4855 = vperm.xlu0 %4854, %v4134
        %v4856 = vpop.permute.xlu0 %4855
        %4857 = vset.pattern.permute.xlu0 0
        %4858 = vperm.xlu0 %4857, %v4135
        %v4859 = vpop.permute.xlu0 %4858
        %4860 = vset.pattern.permute.xlu0 0
        %4861 = vperm.xlu0 %4860, %v4136
        %v4862 = vpop.permute.xlu0 %4861
        %4863 = vset.pattern.permute.xlu0 0
        %4864 = vperm.xlu0 %4863, %v4137
        %v4865 = vpop.permute.xlu0 %4864
        %4866 = vset.pattern.permute.xlu0 0
        %4867 = vperm.xlu0 %4866, %v4138
        %v4868 = vpop.permute.xlu0 %4867
        %4869 = vset.pattern.permute.xlu0 0
        %4870 = vperm.xlu0 %4869, %v4139
        %v4871 = vpop.permute.xlu0 %4870
        %4872 = vset.pattern.permute.xlu0 0
        %4873 = vperm.xlu0 %4872, %v4140
        %v4874 = vpop.permute.xlu0 %4873
        %4875 = vset.pattern.permute.xlu0 0
        %4876 = vperm.xlu0 %4875, %v4141
        %v4877 = vpop.permute.xlu0 %4876
        %4878 = vset.pattern.permute.xlu0 0
        %4879 = vperm.xlu0 %4878, %v4142
        %v4880 = vpop.permute.xlu0 %4879
        %4881 = vset.pattern.permute.xlu0 0
        %4882 = vperm.xlu0 %4881, %v4143
        %v4883 = vpop.permute.xlu0 %4882
        %4884 = vset.pattern.permute.xlu0 0
        %4885 = vperm.xlu0 %4884, %v4144
        %v4886 = vpop.permute.xlu0 %4885
        %4887 = vset.pattern.permute.xlu0 0
        %4888 = vperm.xlu0 %4887, %v4145
        %v4889 = vpop.permute.xlu0 %4888
        %4890 = vset.pattern.permute.xlu0 0
        %4891 = vperm.xlu0 %4890, %v4146
        %v4892 = vpop.permute.xlu0 %4891
        %4893 = vset.pattern.permute.xlu0 0
        %4894 = vperm.xlu0 %4893, %v4147
        %v4895 = vpop.permute.xlu0 %4894
        %4896 = vset.pattern.permute.xlu0 0
        %4897 = vperm.xlu0 %4896, %v4148
        %v4898 = vpop.permute.xlu0 %4897
        %4899 = vset.pattern.permute.xlu0 0
        %4900 = vperm.xlu0 %4899, %v4149
        %v4901 = vpop.permute.xlu0 %4900
        %4902 = vset.pattern.permute.xlu0 0
        %4903 = vperm.xlu0 %4902, %v4150
        %v4904 = vpop.permute.xlu0 %4903
        %4905 = vset.pattern.permute.xlu0 0
        %4906 = vperm.xlu0 %4905, %v4151
        %v4907 = vpop.permute.xlu0 %4906
        %4908 = vset.pattern.permute.xlu0 0
        %4909 = vperm.xlu0 %4908, %v4152
        %v4910 = vpop.permute.xlu0 %4909
        %4911 = vset.pattern.permute.xlu0 0
        %4912 = vperm.xlu0 %4911, %v4153
        %v4913 = vpop.permute.xlu0 %4912
        %4914 = vset.pattern.permute.xlu0 0
        %4915 = vperm.xlu0 %4914, %v4154
        %v4916 = vpop.permute.xlu0 %4915
        %4917 = vset.pattern.permute.xlu0 0
        %4918 = vperm.xlu0 %4917, %v4155
        %v4919 = vpop.permute.xlu0 %4918
        %4920 = vset.pattern.permute.xlu0 0
        %4921 = vperm.xlu0 %4920, %v4156
        %v4922 = vpop.permute.xlu0 %4921
        %4923 = vset.pattern.permute.xlu0 0
        %4924 = vperm.xlu0 %4923, %v4157
        %v4925 = vpop.permute.xlu0 %4924
        %v4926 = vlaneseq
        %v4927 = vshrl.u32 %v4926, 7
        %v4928 = vsub.s32 %v409, %v4927
        %v4929 = vrot.slane %v4160, %v4928
        %v4930 = vlaneseq
        %v4931 = vshrl.u32 %v4930, 7
        %v4932 = vsub.s32 %v2562, %v4931
        %v4933 = vrot.slane %v4163, %v4932
        %v4934 = vsel %vm2567, %v4933, %v4929
        %v4935 = vlaneseq
        %v4936 = vshrl.u32 %v4935, 7
        %v4937 = vsub.s32 %v409, %v4936
        %v4938 = vrot.slane %v4166, %v4937
        %v4939 = vlaneseq
        %v4940 = vshrl.u32 %v4939, 7
        %v4941 = vsub.s32 %v2562, %v4940
        %v4942 = vrot.slane %v4169, %v4941
        %v4943 = vsel %vm2567, %v4942, %v4938
        %v4944 = vlaneseq
        %v4945 = vshrl.u32 %v4944, 7
        %v4946 = vsub.s32 %v409, %v4945
        %v4947 = vrot.slane %v4172, %v4946
        %v4948 = vlaneseq
        %v4949 = vshrl.u32 %v4948, 7
        %v4950 = vsub.s32 %v2562, %v4949
        %v4951 = vrot.slane %v4175, %v4950
        %v4952 = vsel %vm2567, %v4951, %v4947
        %v4953 = vlaneseq
        %v4954 = vshrl.u32 %v4953, 7
        %v4955 = vsub.s32 %v409, %v4954
        %v4956 = vrot.slane %v4178, %v4955
        %v4957 = vlaneseq
        %v4958 = vshrl.u32 %v4957, 7
        %v4959 = vsub.s32 %v2562, %v4958
        %v4960 = vrot.slane %v4181, %v4959
        %v4961 = vsel %vm2567, %v4960, %v4956
        %v4962 = vlaneseq
        %v4963 = vshrl.u32 %v4962, 7
        %v4964 = vsub.s32 %v409, %v4963
        %v4965 = vrot.slane %v4184, %v4964
        %v4966 = vlaneseq
        %v4967 = vshrl.u32 %v4966, 7
        %v4968 = vsub.s32 %v2562, %v4967
        %v4969 = vrot.slane %v4187, %v4968
        %v4970 = vsel %vm2567, %v4969, %v4965
        %v4971 = vlaneseq
        %v4972 = vshrl.u32 %v4971, 7
        %v4973 = vsub.s32 %v409, %v4972
        %v4974 = vrot.slane %v4190, %v4973
        %v4975 = vlaneseq
        %v4976 = vshrl.u32 %v4975, 7
        %v4977 = vsub.s32 %v2562, %v4976
        %v4978 = vrot.slane %v4193, %v4977
        %v4979 = vsel %vm2567, %v4978, %v4974
        %v4980 = vlaneseq
        %v4981 = vshrl.u32 %v4980, 7
        %v4982 = vsub.s32 %v409, %v4981
        %v4983 = vrot.slane %v4196, %v4982
        %v4984 = vlaneseq
        %v4985 = vshrl.u32 %v4984, 7
        %v4986 = vsub.s32 %v2562, %v4985
        %v4987 = vrot.slane %v4199, %v4986
        %v4988 = vsel %vm2567, %v4987, %v4983
        %v4989 = vlaneseq
        %v4990 = vshrl.u32 %v4989, 7
        %v4991 = vsub.s32 %v409, %v4990
        %v4992 = vrot.slane %v4202, %v4991
        %v4993 = vlaneseq
        %v4994 = vshrl.u32 %v4993, 7
        %v4995 = vsub.s32 %v2562, %v4994
        %v4996 = vrot.slane %v4205, %v4995
        %v4997 = vsel %vm2567, %v4996, %v4992
        %v4998 = vlaneseq
        %v4999 = vshrl.u32 %v4998, 7
        %v5000 = vsub.s32 %v409, %v4999
        %v5001 = vrot.slane %v4208, %v5000
        %v5002 = vlaneseq
        %v5003 = vshrl.u32 %v5002, 7
        %v5004 = vsub.s32 %v2562, %v5003
        %v5005 = vrot.slane %v4211, %v5004
        %v5006 = vsel %vm2567, %v5005, %v5001
        %v5007 = vlaneseq
        %v5008 = vshrl.u32 %v5007, 7
        %v5009 = vsub.s32 %v409, %v5008
        %v5010 = vrot.slane %v4214, %v5009
        %v5011 = vlaneseq
        %v5012 = vshrl.u32 %v5011, 7
        %v5013 = vsub.s32 %v2562, %v5012
        %v5014 = vrot.slane %v4217, %v5013
        %v5015 = vsel %vm2567, %v5014, %v5010
        %v5016 = vlaneseq
        %v5017 = vshrl.u32 %v5016, 7
        %v5018 = vsub.s32 %v409, %v5017
        %v5019 = vrot.slane %v4220, %v5018
        %v5020 = vlaneseq
        %v5021 = vshrl.u32 %v5020, 7
        %v5022 = vsub.s32 %v2562, %v5021
        %v5023 = vrot.slane %v4223, %v5022
        %v5024 = vsel %vm2567, %v5023, %v5019
        %v5025 = vlaneseq
        %v5026 = vshrl.u32 %v5025, 7
        %v5027 = vsub.s32 %v409, %v5026
        %v5028 = vrot.slane %v4226, %v5027
        %v5029 = vlaneseq
        %v5030 = vshrl.u32 %v5029, 7
        %v5031 = vsub.s32 %v2562, %v5030
        %v5032 = vrot.slane %v4229, %v5031
        %v5033 = vsel %vm2567, %v5032, %v5028
        %v5034 = vlaneseq
        %v5035 = vshrl.u32 %v5034, 7
        %v5036 = vsub.s32 %v409, %v5035
        %v5037 = vrot.slane %v4232, %v5036
        %v5038 = vlaneseq
        %v5039 = vshrl.u32 %v5038, 7
        %v5040 = vsub.s32 %v2562, %v5039
        %v5041 = vrot.slane %v4235, %v5040
        %v5042 = vsel %vm2567, %v5041, %v5037
        %v5043 = vlaneseq
        %v5044 = vshrl.u32 %v5043, 7
        %v5045 = vsub.s32 %v409, %v5044
        %v5046 = vrot.slane %v4238, %v5045
        %v5047 = vlaneseq
        %v5048 = vshrl.u32 %v5047, 7
        %v5049 = vsub.s32 %v2562, %v5048
        %v5050 = vrot.slane %v4241, %v5049
        %v5051 = vsel %vm2567, %v5050, %v5046
        %v5052 = vlaneseq
        %v5053 = vshrl.u32 %v5052, 7
        %v5054 = vsub.s32 %v409, %v5053
        %v5055 = vrot.slane %v4244, %v5054
        %v5056 = vlaneseq
        %v5057 = vshrl.u32 %v5056, 7
        %v5058 = vsub.s32 %v2562, %v5057
        %v5059 = vrot.slane %v4247, %v5058
        %v5060 = vsel %vm2567, %v5059, %v5055
        %v5061 = vlaneseq
        %v5062 = vshrl.u32 %v5061, 7
        %v5063 = vsub.s32 %v409, %v5062
        %v5064 = vrot.slane %v4250, %v5063
        %v5065 = vlaneseq
        %v5066 = vshrl.u32 %v5065, 7
        %v5067 = vsub.s32 %v2562, %v5066
        %v5068 = vrot.slane %v4253, %v5067
        %v5069 = vsel %vm2567, %v5068, %v5064
        %v5070 = vlaneseq
        %v5071 = vshrl.u32 %v5070, 7
        %v5072 = vsub.s32 %v409, %v5071
        %v5073 = vrot.slane %v4256, %v5072
        %v5074 = vlaneseq
        %v5075 = vshrl.u32 %v5074, 7
        %v5076 = vsub.s32 %v2562, %v5075
        %v5077 = vrot.slane %v4259, %v5076
        %v5078 = vsel %vm2567, %v5077, %v5073
        %v5079 = vlaneseq
        %v5080 = vshrl.u32 %v5079, 7
        %v5081 = vsub.s32 %v409, %v5080
        %v5082 = vrot.slane %v4262, %v5081
        %v5083 = vlaneseq
        %v5084 = vshrl.u32 %v5083, 7
        %v5085 = vsub.s32 %v2562, %v5084
        %v5086 = vrot.slane %v4265, %v5085
        %v5087 = vsel %vm2567, %v5086, %v5082
        %v5088 = vlaneseq
        %v5089 = vshrl.u32 %v5088, 7
        %v5090 = vsub.s32 %v409, %v5089
        %v5091 = vrot.slane %v4268, %v5090
        %v5092 = vlaneseq
        %v5093 = vshrl.u32 %v5092, 7
        %v5094 = vsub.s32 %v2562, %v5093
        %v5095 = vrot.slane %v4271, %v5094
        %v5096 = vsel %vm2567, %v5095, %v5091
        %v5097 = vlaneseq
        %v5098 = vshrl.u32 %v5097, 7
        %v5099 = vsub.s32 %v409, %v5098
        %v5100 = vrot.slane %v4274, %v5099
        %v5101 = vlaneseq
        %v5102 = vshrl.u32 %v5101, 7
        %v5103 = vsub.s32 %v2562, %v5102
        %v5104 = vrot.slane %v4277, %v5103
        %v5105 = vsel %vm2567, %v5104, %v5100
        %v5106 = vlaneseq
        %v5107 = vshrl.u32 %v5106, 7
        %v5108 = vsub.s32 %v409, %v5107
        %v5109 = vrot.slane %v4280, %v5108
        %v5110 = vlaneseq
        %v5111 = vshrl.u32 %v5110, 7
        %v5112 = vsub.s32 %v2562, %v5111
        %v5113 = vrot.slane %v4283, %v5112
        %v5114 = vsel %vm2567, %v5113, %v5109
        %v5115 = vlaneseq
        %v5116 = vshrl.u32 %v5115, 7
        %v5117 = vsub.s32 %v409, %v5116
        %v5118 = vrot.slane %v4286, %v5117
        %v5119 = vlaneseq
        %v5120 = vshrl.u32 %v5119, 7
        %v5121 = vsub.s32 %v2562, %v5120
        %v5122 = vrot.slane %v4289, %v5121
        %v5123 = vsel %vm2567, %v5122, %v5118
        %v5124 = vlaneseq
        %v5125 = vshrl.u32 %v5124, 7
        %v5126 = vsub.s32 %v409, %v5125
        %v5127 = vrot.slane %v4292, %v5126
        %v5128 = vlaneseq
        %v5129 = vshrl.u32 %v5128, 7
        %v5130 = vsub.s32 %v2562, %v5129
        %v5131 = vrot.slane %v4295, %v5130
        %v5132 = vsel %vm2567, %v5131, %v5127
        %v5133 = vlaneseq
        %v5134 = vshrl.u32 %v5133, 7
        %v5135 = vsub.s32 %v409, %v5134
        %v5136 = vrot.slane %v4298, %v5135
        %v5137 = vlaneseq
        %v5138 = vshrl.u32 %v5137, 7
        %v5139 = vsub.s32 %v2562, %v5138
        %v5140 = vrot.slane %v4301, %v5139
        %v5141 = vsel %vm2567, %v5140, %v5136
        %v5142 = vlaneseq
        %v5143 = vshrl.u32 %v5142, 7
        %v5144 = vsub.s32 %v409, %v5143
        %v5145 = vrot.slane %v4304, %v5144
        %v5146 = vlaneseq
        %v5147 = vshrl.u32 %v5146, 7
        %v5148 = vsub.s32 %v2562, %v5147
        %v5149 = vrot.slane %v4307, %v5148
        %v5150 = vsel %vm2567, %v5149, %v5145
        %v5151 = vlaneseq
        %v5152 = vshrl.u32 %v5151, 7
        %v5153 = vsub.s32 %v409, %v5152
        %v5154 = vrot.slane %v4310, %v5153
        %v5155 = vlaneseq
        %v5156 = vshrl.u32 %v5155, 7
        %v5157 = vsub.s32 %v2562, %v5156
        %v5158 = vrot.slane %v4313, %v5157
        %v5159 = vsel %vm2567, %v5158, %v5154
        %v5160 = vlaneseq
        %v5161 = vshrl.u32 %v5160, 7
        %v5162 = vsub.s32 %v409, %v5161
        %v5163 = vrot.slane %v4316, %v5162
        %v5164 = vlaneseq
        %v5165 = vshrl.u32 %v5164, 7
        %v5166 = vsub.s32 %v2562, %v5165
        %v5167 = vrot.slane %v4319, %v5166
        %v5168 = vsel %vm2567, %v5167, %v5163
        %v5169 = vlaneseq
        %v5170 = vshrl.u32 %v5169, 7
        %v5171 = vsub.s32 %v409, %v5170
        %v5172 = vrot.slane %v4322, %v5171
        %v5173 = vlaneseq
        %v5174 = vshrl.u32 %v5173, 7
        %v5175 = vsub.s32 %v2562, %v5174
        %v5176 = vrot.slane %v4325, %v5175
        %v5177 = vsel %vm2567, %v5176, %v5172
        %v5178 = vlaneseq
        %v5179 = vshrl.u32 %v5178, 7
        %v5180 = vsub.s32 %v409, %v5179
        %v5181 = vrot.slane %v4328, %v5180
        %v5182 = vlaneseq
        %v5183 = vshrl.u32 %v5182, 7
        %v5184 = vsub.s32 %v2562, %v5183
        %v5185 = vrot.slane %v4331, %v5184
        %v5186 = vsel %vm2567, %v5185, %v5181
        %v5187 = vlaneseq
        %v5188 = vshrl.u32 %v5187, 7
        %v5189 = vsub.s32 %v409, %v5188
        %v5190 = vrot.slane %v4334, %v5189
        %v5191 = vlaneseq
        %v5192 = vshrl.u32 %v5191, 7
        %v5193 = vsub.s32 %v2562, %v5192
        %v5194 = vrot.slane %v4337, %v5193
        %v5195 = vsel %vm2567, %v5194, %v5190
        %v5196 = vlaneseq
        %v5197 = vshrl.u32 %v5196, 7
        %v5198 = vsub.s32 %v409, %v5197
        %v5199 = vrot.slane %v4340, %v5198
        %v5200 = vlaneseq
        %v5201 = vshrl.u32 %v5200, 7
        %v5202 = vsub.s32 %v2562, %v5201
        %v5203 = vrot.slane %v4343, %v5202
        %v5204 = vsel %vm2567, %v5203, %v5199
        %v5205 = vlaneseq
        %v5206 = vshrl.u32 %v5205, 7
        %v5207 = vsub.s32 %v409, %v5206
        %v5208 = vrot.slane %v4346, %v5207
        %v5209 = vlaneseq
        %v5210 = vshrl.u32 %v5209, 7
        %v5211 = vsub.s32 %v2562, %v5210
        %v5212 = vrot.slane %v4349, %v5211
        %v5213 = vsel %vm2567, %v5212, %v5208
        %v5214 = vlaneseq
        %v5215 = vshrl.u32 %v5214, 7
        %v5216 = vsub.s32 %v409, %v5215
        %v5217 = vrot.slane %v4352, %v5216
        %v5218 = vlaneseq
        %v5219 = vshrl.u32 %v5218, 7
        %v5220 = vsub.s32 %v2562, %v5219
        %v5221 = vrot.slane %v4355, %v5220
        %v5222 = vsel %vm2567, %v5221, %v5217
        %v5223 = vlaneseq
        %v5224 = vshrl.u32 %v5223, 7
        %v5225 = vsub.s32 %v409, %v5224
        %v5226 = vrot.slane %v4358, %v5225
        %v5227 = vlaneseq
        %v5228 = vshrl.u32 %v5227, 7
        %v5229 = vsub.s32 %v2562, %v5228
        %v5230 = vrot.slane %v4361, %v5229
        %v5231 = vsel %vm2567, %v5230, %v5226
        %v5232 = vlaneseq
        %v5233 = vshrl.u32 %v5232, 7
        %v5234 = vsub.s32 %v409, %v5233
        %v5235 = vrot.slane %v4364, %v5234
        %v5236 = vlaneseq
        %v5237 = vshrl.u32 %v5236, 7
        %v5238 = vsub.s32 %v2562, %v5237
        %v5239 = vrot.slane %v4367, %v5238
        %v5240 = vsel %vm2567, %v5239, %v5235
        %v5241 = vlaneseq
        %v5242 = vshrl.u32 %v5241, 7
        %v5243 = vsub.s32 %v409, %v5242
        %v5244 = vrot.slane %v4370, %v5243
        %v5245 = vlaneseq
        %v5246 = vshrl.u32 %v5245, 7
        %v5247 = vsub.s32 %v2562, %v5246
        %v5248 = vrot.slane %v4373, %v5247
        %v5249 = vsel %vm2567, %v5248, %v5244
        %v5250 = vlaneseq
        %v5251 = vshrl.u32 %v5250, 7
        %v5252 = vsub.s32 %v409, %v5251
        %v5253 = vrot.slane %v4376, %v5252
        %v5254 = vlaneseq
        %v5255 = vshrl.u32 %v5254, 7
        %v5256 = vsub.s32 %v2562, %v5255
        %v5257 = vrot.slane %v4379, %v5256
        %v5258 = vsel %vm2567, %v5257, %v5253
        %v5259 = vlaneseq
        %v5260 = vshrl.u32 %v5259, 7
        %v5261 = vsub.s32 %v409, %v5260
        %v5262 = vrot.slane %v4382, %v5261
        %v5263 = vlaneseq
        %v5264 = vshrl.u32 %v5263, 7
        %v5265 = vsub.s32 %v2562, %v5264
        %v5266 = vrot.slane %v4385, %v5265
        %v5267 = vsel %vm2567, %v5266, %v5262
        %v5268 = vlaneseq
        %v5269 = vshrl.u32 %v5268, 7
        %v5270 = vsub.s32 %v409, %v5269
        %v5271 = vrot.slane %v4388, %v5270
        %v5272 = vlaneseq
        %v5273 = vshrl.u32 %v5272, 7
        %v5274 = vsub.s32 %v2562, %v5273
        %v5275 = vrot.slane %v4391, %v5274
        %v5276 = vsel %vm2567, %v5275, %v5271
        %v5277 = vlaneseq
        %v5278 = vshrl.u32 %v5277, 7
        %v5279 = vsub.s32 %v409, %v5278
        %v5280 = vrot.slane %v4394, %v5279
        %v5281 = vlaneseq
        %v5282 = vshrl.u32 %v5281, 7
        %v5283 = vsub.s32 %v2562, %v5282
        %v5284 = vrot.slane %v4397, %v5283
        %v5285 = vsel %vm2567, %v5284, %v5280
        %v5286 = vlaneseq
        %v5287 = vshrl.u32 %v5286, 7
        %v5288 = vsub.s32 %v409, %v5287
        %v5289 = vrot.slane %v4400, %v5288
        %v5290 = vlaneseq
        %v5291 = vshrl.u32 %v5290, 7
        %v5292 = vsub.s32 %v2562, %v5291
        %v5293 = vrot.slane %v4403, %v5292
        %v5294 = vsel %vm2567, %v5293, %v5289
        %v5295 = vlaneseq
        %v5296 = vshrl.u32 %v5295, 7
        %v5297 = vsub.s32 %v409, %v5296
        %v5298 = vrot.slane %v4406, %v5297
        %v5299 = vlaneseq
        %v5300 = vshrl.u32 %v5299, 7
        %v5301 = vsub.s32 %v2562, %v5300
        %v5302 = vrot.slane %v4409, %v5301
        %v5303 = vsel %vm2567, %v5302, %v5298
        %v5304 = vlaneseq
        %v5305 = vshrl.u32 %v5304, 7
        %v5306 = vsub.s32 %v409, %v5305
        %v5307 = vrot.slane %v4412, %v5306
        %v5308 = vlaneseq
        %v5309 = vshrl.u32 %v5308, 7
        %v5310 = vsub.s32 %v2562, %v5309
        %v5311 = vrot.slane %v4415, %v5310
        %v5312 = vsel %vm2567, %v5311, %v5307
        %v5313 = vlaneseq
        %v5314 = vshrl.u32 %v5313, 7
        %v5315 = vsub.s32 %v409, %v5314
        %v5316 = vrot.slane %v4418, %v5315
        %v5317 = vlaneseq
        %v5318 = vshrl.u32 %v5317, 7
        %v5319 = vsub.s32 %v2562, %v5318
        %v5320 = vrot.slane %v4421, %v5319
        %v5321 = vsel %vm2567, %v5320, %v5316
        %v5322 = vlaneseq
        %v5323 = vshrl.u32 %v5322, 7
        %v5324 = vsub.s32 %v409, %v5323
        %v5325 = vrot.slane %v4424, %v5324
        %v5326 = vlaneseq
        %v5327 = vshrl.u32 %v5326, 7
        %v5328 = vsub.s32 %v2562, %v5327
        %v5329 = vrot.slane %v4427, %v5328
        %v5330 = vsel %vm2567, %v5329, %v5325
        %v5331 = vlaneseq
        %v5332 = vshrl.u32 %v5331, 7
        %v5333 = vsub.s32 %v409, %v5332
        %v5334 = vrot.slane %v4430, %v5333
        %v5335 = vlaneseq
        %v5336 = vshrl.u32 %v5335, 7
        %v5337 = vsub.s32 %v2562, %v5336
        %v5338 = vrot.slane %v4433, %v5337
        %v5339 = vsel %vm2567, %v5338, %v5334
        %v5340 = vlaneseq
        %v5341 = vshrl.u32 %v5340, 7
        %v5342 = vsub.s32 %v409, %v5341
        %v5343 = vrot.slane %v4436, %v5342
        %v5344 = vlaneseq
        %v5345 = vshrl.u32 %v5344, 7
        %v5346 = vsub.s32 %v2562, %v5345
        %v5347 = vrot.slane %v4439, %v5346
        %v5348 = vsel %vm2567, %v5347, %v5343
        %v5349 = vlaneseq
        %v5350 = vshrl.u32 %v5349, 7
        %v5351 = vsub.s32 %v409, %v5350
        %v5352 = vrot.slane %v4442, %v5351
        %v5353 = vlaneseq
        %v5354 = vshrl.u32 %v5353, 7
        %v5355 = vsub.s32 %v2562, %v5354
        %v5356 = vrot.slane %v4445, %v5355
        %v5357 = vsel %vm2567, %v5356, %v5352
        %v5358 = vlaneseq
        %v5359 = vshrl.u32 %v5358, 7
        %v5360 = vsub.s32 %v409, %v5359
        %v5361 = vrot.slane %v4448, %v5360
        %v5362 = vlaneseq
        %v5363 = vshrl.u32 %v5362, 7
        %v5364 = vsub.s32 %v2562, %v5363
        %v5365 = vrot.slane %v4451, %v5364
        %v5366 = vsel %vm2567, %v5365, %v5361
        %v5367 = vlaneseq
        %v5368 = vshrl.u32 %v5367, 7
        %v5369 = vsub.s32 %v409, %v5368
        %v5370 = vrot.slane %v4454, %v5369
        %v5371 = vlaneseq
        %v5372 = vshrl.u32 %v5371, 7
        %v5373 = vsub.s32 %v2562, %v5372
        %v5374 = vrot.slane %v4457, %v5373
        %v5375 = vsel %vm2567, %v5374, %v5370
        %v5376 = vlaneseq
        %v5377 = vshrl.u32 %v5376, 7
        %v5378 = vsub.s32 %v409, %v5377
        %v5379 = vrot.slane %v4460, %v5378
        %v5380 = vlaneseq
        %v5381 = vshrl.u32 %v5380, 7
        %v5382 = vsub.s32 %v2562, %v5381
        %v5383 = vrot.slane %v4463, %v5382
        %v5384 = vsel %vm2567, %v5383, %v5379
        %v5385 = vlaneseq
        %v5386 = vshrl.u32 %v5385, 7
        %v5387 = vsub.s32 %v409, %v5386
        %v5388 = vrot.slane %v4466, %v5387
        %v5389 = vlaneseq
        %v5390 = vshrl.u32 %v5389, 7
        %v5391 = vsub.s32 %v2562, %v5390
        %v5392 = vrot.slane %v4469, %v5391
        %v5393 = vsel %vm2567, %v5392, %v5388
        %v5394 = vlaneseq
        %v5395 = vshrl.u32 %v5394, 7
        %v5396 = vsub.s32 %v409, %v5395
        %v5397 = vrot.slane %v4472, %v5396
        %v5398 = vlaneseq
        %v5399 = vshrl.u32 %v5398, 7
        %v5400 = vsub.s32 %v2562, %v5399
        %v5401 = vrot.slane %v4475, %v5400
        %v5402 = vsel %vm2567, %v5401, %v5397
        %v5403 = vlaneseq
        %v5404 = vshrl.u32 %v5403, 7
        %v5405 = vsub.s32 %v409, %v5404
        %v5406 = vrot.slane %v4478, %v5405
        %v5407 = vlaneseq
        %v5408 = vshrl.u32 %v5407, 7
        %v5409 = vsub.s32 %v2562, %v5408
        %v5410 = vrot.slane %v4481, %v5409
        %v5411 = vsel %vm2567, %v5410, %v5406
        %v5412 = vlaneseq
        %v5413 = vshrl.u32 %v5412, 7
        %v5414 = vsub.s32 %v409, %v5413
        %v5415 = vrot.slane %v4484, %v5414
        %v5416 = vlaneseq
        %v5417 = vshrl.u32 %v5416, 7
        %v5418 = vsub.s32 %v2562, %v5417
        %v5419 = vrot.slane %v4487, %v5418
        %v5420 = vsel %vm2567, %v5419, %v5415
        %v5421 = vlaneseq
        %v5422 = vshrl.u32 %v5421, 7
        %v5423 = vsub.s32 %v409, %v5422
        %v5424 = vrot.slane %v4490, %v5423
        %v5425 = vlaneseq
        %v5426 = vshrl.u32 %v5425, 7
        %v5427 = vsub.s32 %v2562, %v5426
        %v5428 = vrot.slane %v4493, %v5427
        %v5429 = vsel %vm2567, %v5428, %v5424
        %v5430 = vlaneseq
        %v5431 = vshrl.u32 %v5430, 7
        %v5432 = vsub.s32 %v409, %v5431
        %v5433 = vrot.slane %v4496, %v5432
        %v5434 = vlaneseq
        %v5435 = vshrl.u32 %v5434, 7
        %v5436 = vsub.s32 %v2562, %v5435
        %v5437 = vrot.slane %v4499, %v5436
        %v5438 = vsel %vm2567, %v5437, %v5433
        %v5439 = vlaneseq
        %v5440 = vshrl.u32 %v5439, 7
        %v5441 = vsub.s32 %v409, %v5440
        %v5442 = vrot.slane %v4502, %v5441
        %v5443 = vlaneseq
        %v5444 = vshrl.u32 %v5443, 7
        %v5445 = vsub.s32 %v2562, %v5444
        %v5446 = vrot.slane %v4505, %v5445
        %v5447 = vsel %vm2567, %v5446, %v5442
        %v5448 = vlaneseq
        %v5449 = vshrl.u32 %v5448, 7
        %v5450 = vsub.s32 %v409, %v5449
        %v5451 = vrot.slane %v4508, %v5450
        %v5452 = vlaneseq
        %v5453 = vshrl.u32 %v5452, 7
        %v5454 = vsub.s32 %v2562, %v5453
        %v5455 = vrot.slane %v4511, %v5454
        %v5456 = vsel %vm2567, %v5455, %v5451
        %v5457 = vlaneseq
        %v5458 = vshrl.u32 %v5457, 7
        %v5459 = vsub.s32 %v409, %v5458
        %v5460 = vrot.slane %v4514, %v5459
        %v5461 = vlaneseq
        %v5462 = vshrl.u32 %v5461, 7
        %v5463 = vsub.s32 %v2562, %v5462
        %v5464 = vrot.slane %v4517, %v5463
        %v5465 = vsel %vm2567, %v5464, %v5460
        %v5466 = vlaneseq
        %v5467 = vshrl.u32 %v5466, 7
        %v5468 = vsub.s32 %v409, %v5467
        %v5469 = vrot.slane %v4520, %v5468
        %v5470 = vlaneseq
        %v5471 = vshrl.u32 %v5470, 7
        %v5472 = vsub.s32 %v2562, %v5471
        %v5473 = vrot.slane %v4523, %v5472
        %v5474 = vsel %vm2567, %v5473, %v5469
        %v5475 = vlaneseq
        %v5476 = vshrl.u32 %v5475, 7
        %v5477 = vsub.s32 %v409, %v5476
        %v5478 = vrot.slane %v4526, %v5477
        %v5479 = vlaneseq
        %v5480 = vshrl.u32 %v5479, 7
        %v5481 = vsub.s32 %v2562, %v5480
        %v5482 = vrot.slane %v4529, %v5481
        %v5483 = vsel %vm2567, %v5482, %v5478
        %v5484 = vlaneseq
        %v5485 = vshrl.u32 %v5484, 7
        %v5486 = vsub.s32 %v409, %v5485
        %v5487 = vrot.slane %v4532, %v5486
        %v5488 = vlaneseq
        %v5489 = vshrl.u32 %v5488, 7
        %v5490 = vsub.s32 %v2562, %v5489
        %v5491 = vrot.slane %v4535, %v5490
        %v5492 = vsel %vm2567, %v5491, %v5487
        %v5493 = vlaneseq
        %v5494 = vshrl.u32 %v5493, 7
        %v5495 = vsub.s32 %v409, %v5494
        %v5496 = vrot.slane %v4538, %v5495
        %v5497 = vlaneseq
        %v5498 = vshrl.u32 %v5497, 7
        %v5499 = vsub.s32 %v2562, %v5498
        %v5500 = vrot.slane %v4541, %v5499
        %v5501 = vsel %vm2567, %v5500, %v5496
        %v5502 = vlaneseq
        %v5503 = vshrl.u32 %v5502, 7
        %v5504 = vsub.s32 %v409, %v5503
        %v5505 = vrot.slane %v4544, %v5504
        %v5506 = vlaneseq
        %v5507 = vshrl.u32 %v5506, 7
        %v5508 = vsub.s32 %v2562, %v5507
        %v5509 = vrot.slane %v4547, %v5508
        %v5510 = vsel %vm2567, %v5509, %v5505
        %v5511 = vlaneseq
        %v5512 = vshrl.u32 %v5511, 7
        %v5513 = vsub.s32 %v409, %v5512
        %v5514 = vrot.slane %v4550, %v5513
        %v5515 = vlaneseq
        %v5516 = vshrl.u32 %v5515, 7
        %v5517 = vsub.s32 %v2562, %v5516
        %v5518 = vrot.slane %v4553, %v5517
        %v5519 = vsel %vm2567, %v5518, %v5514
        %v5520 = vlaneseq
        %v5521 = vshrl.u32 %v5520, 7
        %v5522 = vsub.s32 %v409, %v5521
        %v5523 = vrot.slane %v4556, %v5522
        %v5524 = vlaneseq
        %v5525 = vshrl.u32 %v5524, 7
        %v5526 = vsub.s32 %v2562, %v5525
        %v5527 = vrot.slane %v4559, %v5526
        %v5528 = vsel %vm2567, %v5527, %v5523
        %v5529 = vlaneseq
        %v5530 = vshrl.u32 %v5529, 7
        %v5531 = vsub.s32 %v409, %v5530
        %v5532 = vrot.slane %v4562, %v5531
        %v5533 = vlaneseq
        %v5534 = vshrl.u32 %v5533, 7
        %v5535 = vsub.s32 %v2562, %v5534
        %v5536 = vrot.slane %v4565, %v5535
        %v5537 = vsel %vm2567, %v5536, %v5532
        %v5538 = vlaneseq
        %v5539 = vshrl.u32 %v5538, 7
        %v5540 = vsub.s32 %v409, %v5539
        %v5541 = vrot.slane %v4568, %v5540
        %v5542 = vlaneseq
        %v5543 = vshrl.u32 %v5542, 7
        %v5544 = vsub.s32 %v2562, %v5543
        %v5545 = vrot.slane %v4571, %v5544
        %v5546 = vsel %vm2567, %v5545, %v5541
        %v5547 = vlaneseq
        %v5548 = vshrl.u32 %v5547, 7
        %v5549 = vsub.s32 %v409, %v5548
        %v5550 = vrot.slane %v4574, %v5549
        %v5551 = vlaneseq
        %v5552 = vshrl.u32 %v5551, 7
        %v5553 = vsub.s32 %v2562, %v5552
        %v5554 = vrot.slane %v4577, %v5553
        %v5555 = vsel %vm2567, %v5554, %v5550
        %v5556 = vlaneseq
        %v5557 = vshrl.u32 %v5556, 7
        %v5558 = vsub.s32 %v409, %v5557
        %v5559 = vrot.slane %v4580, %v5558
        %v5560 = vlaneseq
        %v5561 = vshrl.u32 %v5560, 7
        %v5562 = vsub.s32 %v2562, %v5561
        %v5563 = vrot.slane %v4583, %v5562
        %v5564 = vsel %vm2567, %v5563, %v5559
        %v5565 = vlaneseq
        %v5566 = vshrl.u32 %v5565, 7
        %v5567 = vsub.s32 %v409, %v5566
        %v5568 = vrot.slane %v4586, %v5567
        %v5569 = vlaneseq
        %v5570 = vshrl.u32 %v5569, 7
        %v5571 = vsub.s32 %v2562, %v5570
        %v5572 = vrot.slane %v4589, %v5571
        %v5573 = vsel %vm2567, %v5572, %v5568
        %v5574 = vlaneseq
        %v5575 = vshrl.u32 %v5574, 7
        %v5576 = vsub.s32 %v409, %v5575
        %v5577 = vrot.slane %v4592, %v5576
        %v5578 = vlaneseq
        %v5579 = vshrl.u32 %v5578, 7
        %v5580 = vsub.s32 %v2562, %v5579
        %v5581 = vrot.slane %v4595, %v5580
        %v5582 = vsel %vm2567, %v5581, %v5577
        %v5583 = vlaneseq
        %v5584 = vshrl.u32 %v5583, 7
        %v5585 = vsub.s32 %v409, %v5584
        %v5586 = vrot.slane %v4598, %v5585
        %v5587 = vlaneseq
        %v5588 = vshrl.u32 %v5587, 7
        %v5589 = vsub.s32 %v2562, %v5588
        %v5590 = vrot.slane %v4601, %v5589
        %v5591 = vsel %vm2567, %v5590, %v5586
        %v5592 = vlaneseq
        %v5593 = vshrl.u32 %v5592, 7
        %v5594 = vsub.s32 %v409, %v5593
        %v5595 = vrot.slane %v4604, %v5594
        %v5596 = vlaneseq
        %v5597 = vshrl.u32 %v5596, 7
        %v5598 = vsub.s32 %v2562, %v5597
        %v5599 = vrot.slane %v4607, %v5598
        %v5600 = vsel %vm2567, %v5599, %v5595
        %v5601 = vlaneseq
        %v5602 = vshrl.u32 %v5601, 7
        %v5603 = vsub.s32 %v409, %v5602
        %v5604 = vrot.slane %v4610, %v5603
        %v5605 = vlaneseq
        %v5606 = vshrl.u32 %v5605, 7
        %v5607 = vsub.s32 %v2562, %v5606
        %v5608 = vrot.slane %v4613, %v5607
        %v5609 = vsel %vm2567, %v5608, %v5604
        %v5610 = vlaneseq
        %v5611 = vshrl.u32 %v5610, 7
        %v5612 = vsub.s32 %v409, %v5611
        %v5613 = vrot.slane %v4616, %v5612
        %v5614 = vlaneseq
        %v5615 = vshrl.u32 %v5614, 7
        %v5616 = vsub.s32 %v2562, %v5615
        %v5617 = vrot.slane %v4619, %v5616
        %v5618 = vsel %vm2567, %v5617, %v5613
        %v5619 = vlaneseq
        %v5620 = vshrl.u32 %v5619, 7
        %v5621 = vsub.s32 %v409, %v5620
        %v5622 = vrot.slane %v4622, %v5621
        %v5623 = vlaneseq
        %v5624 = vshrl.u32 %v5623, 7
        %v5625 = vsub.s32 %v2562, %v5624
        %v5626 = vrot.slane %v4625, %v5625
        %v5627 = vsel %vm2567, %v5626, %v5622
        %v5628 = vlaneseq
        %v5629 = vshrl.u32 %v5628, 7
        %v5630 = vsub.s32 %v409, %v5629
        %v5631 = vrot.slane %v4628, %v5630
        %v5632 = vlaneseq
        %v5633 = vshrl.u32 %v5632, 7
        %v5634 = vsub.s32 %v2562, %v5633
        %v5635 = vrot.slane %v4631, %v5634
        %v5636 = vsel %vm2567, %v5635, %v5631
        %v5637 = vlaneseq
        %v5638 = vshrl.u32 %v5637, 7
        %v5639 = vsub.s32 %v409, %v5638
        %v5640 = vrot.slane %v4634, %v5639
        %v5641 = vlaneseq
        %v5642 = vshrl.u32 %v5641, 7
        %v5643 = vsub.s32 %v2562, %v5642
        %v5644 = vrot.slane %v4637, %v5643
        %v5645 = vsel %vm2567, %v5644, %v5640
        %v5646 = vlaneseq
        %v5647 = vshrl.u32 %v5646, 7
        %v5648 = vsub.s32 %v409, %v5647
        %v5649 = vrot.slane %v4640, %v5648
        %v5650 = vlaneseq
        %v5651 = vshrl.u32 %v5650, 7
        %v5652 = vsub.s32 %v2562, %v5651
        %v5653 = vrot.slane %v4643, %v5652
        %v5654 = vsel %vm2567, %v5653, %v5649
        %v5655 = vlaneseq
        %v5656 = vshrl.u32 %v5655, 7
        %v5657 = vsub.s32 %v409, %v5656
        %v5658 = vrot.slane %v4646, %v5657
        %v5659 = vlaneseq
        %v5660 = vshrl.u32 %v5659, 7
        %v5661 = vsub.s32 %v2562, %v5660
        %v5662 = vrot.slane %v4649, %v5661
        %v5663 = vsel %vm2567, %v5662, %v5658
        %v5664 = vlaneseq
        %v5665 = vshrl.u32 %v5664, 7
        %v5666 = vsub.s32 %v409, %v5665
        %v5667 = vrot.slane %v4652, %v5666
        %v5668 = vlaneseq
        %v5669 = vshrl.u32 %v5668, 7
        %v5670 = vsub.s32 %v2562, %v5669
        %v5671 = vrot.slane %v4655, %v5670
        %v5672 = vsel %vm2567, %v5671, %v5667
        %v5673 = vlaneseq
        %v5674 = vshrl.u32 %v5673, 7
        %v5675 = vsub.s32 %v409, %v5674
        %v5676 = vrot.slane %v4658, %v5675
        %v5677 = vlaneseq
        %v5678 = vshrl.u32 %v5677, 7
        %v5679 = vsub.s32 %v2562, %v5678
        %v5680 = vrot.slane %v4661, %v5679
        %v5681 = vsel %vm2567, %v5680, %v5676
        %v5682 = vlaneseq
        %v5683 = vshrl.u32 %v5682, 7
        %v5684 = vsub.s32 %v409, %v5683
        %v5685 = vrot.slane %v4664, %v5684
        %v5686 = vlaneseq
        %v5687 = vshrl.u32 %v5686, 7
        %v5688 = vsub.s32 %v2562, %v5687
        %v5689 = vrot.slane %v4667, %v5688
        %v5690 = vsel %vm2567, %v5689, %v5685
        %v5691 = vlaneseq
        %v5692 = vshrl.u32 %v5691, 7
        %v5693 = vsub.s32 %v409, %v5692
        %v5694 = vrot.slane %v4670, %v5693
        %v5695 = vlaneseq
        %v5696 = vshrl.u32 %v5695, 7
        %v5697 = vsub.s32 %v2562, %v5696
        %v5698 = vrot.slane %v4673, %v5697
        %v5699 = vsel %vm2567, %v5698, %v5694
        %v5700 = vlaneseq
        %v5701 = vshrl.u32 %v5700, 7
        %v5702 = vsub.s32 %v409, %v5701
        %v5703 = vrot.slane %v4676, %v5702
        %v5704 = vlaneseq
        %v5705 = vshrl.u32 %v5704, 7
        %v5706 = vsub.s32 %v2562, %v5705
        %v5707 = vrot.slane %v4679, %v5706
        %v5708 = vsel %vm2567, %v5707, %v5703
        %v5709 = vlaneseq
        %v5710 = vshrl.u32 %v5709, 7
        %v5711 = vsub.s32 %v409, %v5710
        %v5712 = vrot.slane %v4682, %v5711
        %v5713 = vlaneseq
        %v5714 = vshrl.u32 %v5713, 7
        %v5715 = vsub.s32 %v2562, %v5714
        %v5716 = vrot.slane %v4685, %v5715
        %v5717 = vsel %vm2567, %v5716, %v5712
        %v5718 = vlaneseq
        %v5719 = vshrl.u32 %v5718, 7
        %v5720 = vsub.s32 %v409, %v5719
        %v5721 = vrot.slane %v4688, %v5720
        %v5722 = vlaneseq
        %v5723 = vshrl.u32 %v5722, 7
        %v5724 = vsub.s32 %v2562, %v5723
        %v5725 = vrot.slane %v4691, %v5724
        %v5726 = vsel %vm2567, %v5725, %v5721
        %v5727 = vlaneseq
        %v5728 = vshrl.u32 %v5727, 7
        %v5729 = vsub.s32 %v409, %v5728
        %v5730 = vrot.slane %v4694, %v5729
        %v5731 = vlaneseq
        %v5732 = vshrl.u32 %v5731, 7
        %v5733 = vsub.s32 %v2562, %v5732
        %v5734 = vrot.slane %v4697, %v5733
        %v5735 = vsel %vm2567, %v5734, %v5730
        %v5736 = vlaneseq
        %v5737 = vshrl.u32 %v5736, 7
        %v5738 = vsub.s32 %v409, %v5737
        %v5739 = vrot.slane %v4700, %v5738
        %v5740 = vlaneseq
        %v5741 = vshrl.u32 %v5740, 7
        %v5742 = vsub.s32 %v2562, %v5741
        %v5743 = vrot.slane %v4703, %v5742
        %v5744 = vsel %vm2567, %v5743, %v5739
        %v5745 = vlaneseq
        %v5746 = vshrl.u32 %v5745, 7
        %v5747 = vsub.s32 %v409, %v5746
        %v5748 = vrot.slane %v4706, %v5747
        %v5749 = vlaneseq
        %v5750 = vshrl.u32 %v5749, 7
        %v5751 = vsub.s32 %v2562, %v5750
        %v5752 = vrot.slane %v4709, %v5751
        %v5753 = vsel %vm2567, %v5752, %v5748
        %v5754 = vlaneseq
        %v5755 = vshrl.u32 %v5754, 7
        %v5756 = vsub.s32 %v409, %v5755
        %v5757 = vrot.slane %v4712, %v5756
        %v5758 = vlaneseq
        %v5759 = vshrl.u32 %v5758, 7
        %v5760 = vsub.s32 %v2562, %v5759
        %v5761 = vrot.slane %v4715, %v5760
        %v5762 = vsel %vm2567, %v5761, %v5757
        %v5763 = vlaneseq
        %v5764 = vshrl.u32 %v5763, 7
        %v5765 = vsub.s32 %v409, %v5764
        %v5766 = vrot.slane %v4718, %v5765
        %v5767 = vlaneseq
        %v5768 = vshrl.u32 %v5767, 7
        %v5769 = vsub.s32 %v2562, %v5768
        %v5770 = vrot.slane %v4721, %v5769
        %v5771 = vsel %vm2567, %v5770, %v5766
        %v5772 = vlaneseq
        %v5773 = vshrl.u32 %v5772, 7
        %v5774 = vsub.s32 %v409, %v5773
        %v5775 = vrot.slane %v4724, %v5774
        %v5776 = vlaneseq
        %v5777 = vshrl.u32 %v5776, 7
        %v5778 = vsub.s32 %v2562, %v5777
        %v5779 = vrot.slane %v4727, %v5778
        %v5780 = vsel %vm2567, %v5779, %v5775
        %v5781 = vlaneseq
        %v5782 = vshrl.u32 %v5781, 7
        %v5783 = vsub.s32 %v409, %v5782
        %v5784 = vrot.slane %v4730, %v5783
        %v5785 = vlaneseq
        %v5786 = vshrl.u32 %v5785, 7
        %v5787 = vsub.s32 %v2562, %v5786
        %v5788 = vrot.slane %v4733, %v5787
        %v5789 = vsel %vm2567, %v5788, %v5784
        %v5790 = vlaneseq
        %v5791 = vshrl.u32 %v5790, 7
        %v5792 = vsub.s32 %v409, %v5791
        %v5793 = vrot.slane %v4736, %v5792
        %v5794 = vlaneseq
        %v5795 = vshrl.u32 %v5794, 7
        %v5796 = vsub.s32 %v2562, %v5795
        %v5797 = vrot.slane %v4739, %v5796
        %v5798 = vsel %vm2567, %v5797, %v5793
        %v5799 = vlaneseq
        %v5800 = vshrl.u32 %v5799, 7
        %v5801 = vsub.s32 %v409, %v5800
        %v5802 = vrot.slane %v4742, %v5801
        %v5803 = vlaneseq
        %v5804 = vshrl.u32 %v5803, 7
        %v5805 = vsub.s32 %v2562, %v5804
        %v5806 = vrot.slane %v4745, %v5805
        %v5807 = vsel %vm2567, %v5806, %v5802
        %v5808 = vlaneseq
        %v5809 = vshrl.u32 %v5808, 7
        %v5810 = vsub.s32 %v409, %v5809
        %v5811 = vrot.slane %v4748, %v5810
        %v5812 = vlaneseq
        %v5813 = vshrl.u32 %v5812, 7
        %v5814 = vsub.s32 %v2562, %v5813
        %v5815 = vrot.slane %v4751, %v5814
        %v5816 = vsel %vm2567, %v5815, %v5811
        %v5817 = vlaneseq
        %v5818 = vshrl.u32 %v5817, 7
        %v5819 = vsub.s32 %v409, %v5818
        %v5820 = vrot.slane %v4754, %v5819
        %v5821 = vlaneseq
        %v5822 = vshrl.u32 %v5821, 7
        %v5823 = vsub.s32 %v2562, %v5822
        %v5824 = vrot.slane %v4757, %v5823
        %v5825 = vsel %vm2567, %v5824, %v5820
        %v5826 = vlaneseq
        %v5827 = vshrl.u32 %v5826, 7
        %v5828 = vsub.s32 %v409, %v5827
        %v5829 = vrot.slane %v4760, %v5828
        %v5830 = vlaneseq
        %v5831 = vshrl.u32 %v5830, 7
        %v5832 = vsub.s32 %v2562, %v5831
        %v5833 = vrot.slane %v4763, %v5832
        %v5834 = vsel %vm2567, %v5833, %v5829
        %v5835 = vlaneseq
        %v5836 = vshrl.u32 %v5835, 7
        %v5837 = vsub.s32 %v409, %v5836
        %v5838 = vrot.slane %v4766, %v5837
        %v5839 = vlaneseq
        %v5840 = vshrl.u32 %v5839, 7
        %v5841 = vsub.s32 %v2562, %v5840
        %v5842 = vrot.slane %v4769, %v5841
        %v5843 = vsel %vm2567, %v5842, %v5838
        %v5844 = vlaneseq
        %v5845 = vshrl.u32 %v5844, 7
        %v5846 = vsub.s32 %v409, %v5845
        %v5847 = vrot.slane %v4772, %v5846
        %v5848 = vlaneseq
        %v5849 = vshrl.u32 %v5848, 7
        %v5850 = vsub.s32 %v2562, %v5849
        %v5851 = vrot.slane %v4775, %v5850
        %v5852 = vsel %vm2567, %v5851, %v5847
        %v5853 = vlaneseq
        %v5854 = vshrl.u32 %v5853, 7
        %v5855 = vsub.s32 %v409, %v5854
        %v5856 = vrot.slane %v4778, %v5855
        %v5857 = vlaneseq
        %v5858 = vshrl.u32 %v5857, 7
        %v5859 = vsub.s32 %v2562, %v5858
        %v5860 = vrot.slane %v4781, %v5859
        %v5861 = vsel %vm2567, %v5860, %v5856
        %v5862 = vlaneseq
        %v5863 = vshrl.u32 %v5862, 7
        %v5864 = vsub.s32 %v409, %v5863
        %v5865 = vrot.slane %v4784, %v5864
        %v5866 = vlaneseq
        %v5867 = vshrl.u32 %v5866, 7
        %v5868 = vsub.s32 %v2562, %v5867
        %v5869 = vrot.slane %v4787, %v5868
        %v5870 = vsel %vm2567, %v5869, %v5865
        %v5871 = vlaneseq
        %v5872 = vshrl.u32 %v5871, 7
        %v5873 = vsub.s32 %v409, %v5872
        %v5874 = vrot.slane %v4790, %v5873
        %v5875 = vlaneseq
        %v5876 = vshrl.u32 %v5875, 7
        %v5877 = vsub.s32 %v2562, %v5876
        %v5878 = vrot.slane %v4793, %v5877
        %v5879 = vsel %vm2567, %v5878, %v5874
        %v5880 = vlaneseq
        %v5881 = vshrl.u32 %v5880, 7
        %v5882 = vsub.s32 %v409, %v5881
        %v5883 = vrot.slane %v4796, %v5882
        %v5884 = vlaneseq
        %v5885 = vshrl.u32 %v5884, 7
        %v5886 = vsub.s32 %v2562, %v5885
        %v5887 = vrot.slane %v4799, %v5886
        %v5888 = vsel %vm2567, %v5887, %v5883
        %v5889 = vlaneseq
        %v5890 = vshrl.u32 %v5889, 7
        %v5891 = vsub.s32 %v409, %v5890
        %v5892 = vrot.slane %v4802, %v5891
        %v5893 = vlaneseq
        %v5894 = vshrl.u32 %v5893, 7
        %v5895 = vsub.s32 %v2562, %v5894
        %v5896 = vrot.slane %v4805, %v5895
        %v5897 = vsel %vm2567, %v5896, %v5892
        %v5898 = vlaneseq
        %v5899 = vshrl.u32 %v5898, 7
        %v5900 = vsub.s32 %v409, %v5899
        %v5901 = vrot.slane %v4808, %v5900
        %v5902 = vlaneseq
        %v5903 = vshrl.u32 %v5902, 7
        %v5904 = vsub.s32 %v2562, %v5903
        %v5905 = vrot.slane %v4811, %v5904
        %v5906 = vsel %vm2567, %v5905, %v5901
        %v5907 = vlaneseq
        %v5908 = vshrl.u32 %v5907, 7
        %v5909 = vsub.s32 %v409, %v5908
        %v5910 = vrot.slane %v4814, %v5909
        %v5911 = vlaneseq
        %v5912 = vshrl.u32 %v5911, 7
        %v5913 = vsub.s32 %v2562, %v5912
        %v5914 = vrot.slane %v4817, %v5913
        %v5915 = vsel %vm2567, %v5914, %v5910
        %v5916 = vlaneseq
        %v5917 = vshrl.u32 %v5916, 7
        %v5918 = vsub.s32 %v409, %v5917
        %v5919 = vrot.slane %v4820, %v5918
        %v5920 = vlaneseq
        %v5921 = vshrl.u32 %v5920, 7
        %v5922 = vsub.s32 %v2562, %v5921
        %v5923 = vrot.slane %v4823, %v5922
        %v5924 = vsel %vm2567, %v5923, %v5919
        %v5925 = vlaneseq
        %v5926 = vshrl.u32 %v5925, 7
        %v5927 = vsub.s32 %v409, %v5926
        %v5928 = vrot.slane %v4826, %v5927
        %v5929 = vlaneseq
        %v5930 = vshrl.u32 %v5929, 7
        %v5931 = vsub.s32 %v2562, %v5930
        %v5932 = vrot.slane %v4829, %v5931
        %v5933 = vsel %vm2567, %v5932, %v5928
        %v5934 = vlaneseq
        %v5935 = vshrl.u32 %v5934, 7
        %v5936 = vsub.s32 %v409, %v5935
        %v5937 = vrot.slane %v4832, %v5936
        %v5938 = vlaneseq
        %v5939 = vshrl.u32 %v5938, 7
        %v5940 = vsub.s32 %v2562, %v5939
        %v5941 = vrot.slane %v4835, %v5940
        %v5942 = vsel %vm2567, %v5941, %v5937
        %v5943 = vlaneseq
        %v5944 = vshrl.u32 %v5943, 7
        %v5945 = vsub.s32 %v409, %v5944
        %v5946 = vrot.slane %v4838, %v5945
        %v5947 = vlaneseq
        %v5948 = vshrl.u32 %v5947, 7
        %v5949 = vsub.s32 %v2562, %v5948
        %v5950 = vrot.slane %v4841, %v5949
        %v5951 = vsel %vm2567, %v5950, %v5946
        %v5952 = vlaneseq
        %v5953 = vshrl.u32 %v5952, 7
        %v5954 = vsub.s32 %v409, %v5953
        %v5955 = vrot.slane %v4844, %v5954
        %v5956 = vlaneseq
        %v5957 = vshrl.u32 %v5956, 7
        %v5958 = vsub.s32 %v2562, %v5957
        %v5959 = vrot.slane %v4847, %v5958
        %v5960 = vsel %vm2567, %v5959, %v5955
        %v5961 = vlaneseq
        %v5962 = vshrl.u32 %v5961, 7
        %v5963 = vsub.s32 %v409, %v5962
        %v5964 = vrot.slane %v4850, %v5963
        %v5965 = vlaneseq
        %v5966 = vshrl.u32 %v5965, 7
        %v5967 = vsub.s32 %v2562, %v5966
        %v5968 = vrot.slane %v4853, %v5967
        %v5969 = vsel %vm2567, %v5968, %v5964
        %v5970 = vlaneseq
        %v5971 = vshrl.u32 %v5970, 7
        %v5972 = vsub.s32 %v409, %v5971
        %v5973 = vrot.slane %v4856, %v5972
        %v5974 = vlaneseq
        %v5975 = vshrl.u32 %v5974, 7
        %v5976 = vsub.s32 %v2562, %v5975
        %v5977 = vrot.slane %v4859, %v5976
        %v5978 = vsel %vm2567, %v5977, %v5973
        %v5979 = vlaneseq
        %v5980 = vshrl.u32 %v5979, 7
        %v5981 = vsub.s32 %v409, %v5980
        %v5982 = vrot.slane %v4862, %v5981
        %v5983 = vlaneseq
        %v5984 = vshrl.u32 %v5983, 7
        %v5985 = vsub.s32 %v2562, %v5984
        %v5986 = vrot.slane %v4865, %v5985
        %v5987 = vsel %vm2567, %v5986, %v5982
        %v5988 = vlaneseq
        %v5989 = vshrl.u32 %v5988, 7
        %v5990 = vsub.s32 %v409, %v5989
        %v5991 = vrot.slane %v4868, %v5990
        %v5992 = vlaneseq
        %v5993 = vshrl.u32 %v5992, 7
        %v5994 = vsub.s32 %v2562, %v5993
        %v5995 = vrot.slane %v4871, %v5994
        %v5996 = vsel %vm2567, %v5995, %v5991
        %v5997 = vlaneseq
        %v5998 = vshrl.u32 %v5997, 7
        %v5999 = vsub.s32 %v409, %v5998
        %v6000 = vrot.slane %v4874, %v5999
        %v6001 = vlaneseq
        %v6002 = vshrl.u32 %v6001, 7
        %v6003 = vsub.s32 %v2562, %v6002
        %v6004 = vrot.slane %v4877, %v6003
        %v6005 = vsel %vm2567, %v6004, %v6000
        %v6006 = vlaneseq
        %v6007 = vshrl.u32 %v6006, 7
        %v6008 = vsub.s32 %v409, %v6007
        %v6009 = vrot.slane %v4880, %v6008
        %v6010 = vlaneseq
        %v6011 = vshrl.u32 %v6010, 7
        %v6012 = vsub.s32 %v2562, %v6011
        %v6013 = vrot.slane %v4883, %v6012
        %v6014 = vsel %vm2567, %v6013, %v6009
        %v6015 = vlaneseq
        %v6016 = vshrl.u32 %v6015, 7
        %v6017 = vsub.s32 %v409, %v6016
        %v6018 = vrot.slane %v4886, %v6017
        %v6019 = vlaneseq
        %v6020 = vshrl.u32 %v6019, 7
        %v6021 = vsub.s32 %v2562, %v6020
        %v6022 = vrot.slane %v4889, %v6021
        %v6023 = vsel %vm2567, %v6022, %v6018
        %v6024 = vlaneseq
        %v6025 = vshrl.u32 %v6024, 7
        %v6026 = vsub.s32 %v409, %v6025
        %v6027 = vrot.slane %v4892, %v6026
        %v6028 = vlaneseq
        %v6029 = vshrl.u32 %v6028, 7
        %v6030 = vsub.s32 %v2562, %v6029
        %v6031 = vrot.slane %v4895, %v6030
        %v6032 = vsel %vm2567, %v6031, %v6027
        %v6033 = vlaneseq
        %v6034 = vshrl.u32 %v6033, 7
        %v6035 = vsub.s32 %v409, %v6034
        %v6036 = vrot.slane %v4898, %v6035
        %v6037 = vlaneseq
        %v6038 = vshrl.u32 %v6037, 7
        %v6039 = vsub.s32 %v2562, %v6038
        %v6040 = vrot.slane %v4901, %v6039
        %v6041 = vsel %vm2567, %v6040, %v6036
        %v6042 = vlaneseq
        %v6043 = vshrl.u32 %v6042, 7
        %v6044 = vsub.s32 %v409, %v6043
        %v6045 = vrot.slane %v4904, %v6044
        %v6046 = vlaneseq
        %v6047 = vshrl.u32 %v6046, 7
        %v6048 = vsub.s32 %v2562, %v6047
        %v6049 = vrot.slane %v4907, %v6048
        %v6050 = vsel %vm2567, %v6049, %v6045
        %v6051 = vlaneseq
        %v6052 = vshrl.u32 %v6051, 7
        %v6053 = vsub.s32 %v409, %v6052
        %v6054 = vrot.slane %v4910, %v6053
        %v6055 = vlaneseq
        %v6056 = vshrl.u32 %v6055, 7
        %v6057 = vsub.s32 %v2562, %v6056
        %v6058 = vrot.slane %v4913, %v6057
        %v6059 = vsel %vm2567, %v6058, %v6054
        %v6060 = vlaneseq
        %v6061 = vshrl.u32 %v6060, 7
        %v6062 = vsub.s32 %v409, %v6061
        %v6063 = vrot.slane %v4916, %v6062
        %v6064 = vlaneseq
        %v6065 = vshrl.u32 %v6064, 7
        %v6066 = vsub.s32 %v2562, %v6065
        %v6067 = vrot.slane %v4919, %v6066
        %v6068 = vsel %vm2567, %v6067, %v6063
        %v6069 = vlaneseq
        %v6070 = vshrl.u32 %v6069, 7
        %v6071 = vsub.s32 %v409, %v6070
        %v6072 = vrot.slane %v4922, %v6071
        %v6073 = vlaneseq
        %v6074 = vshrl.u32 %v6073, 7
        %v6075 = vsub.s32 %v2562, %v6074
        %v6076 = vrot.slane %v4925, %v6075
        %v6077 = vsel %vm2567, %v6076, %v6072
        %v6078 = vsel %vm3712, %v4943, %v4934
        %v6079 = vsel %vm3714, %v4952, %v6078
        %v6080 = vsel %vm3716, %v4961, %v6079
        %v6081 = vsel %vm3718, %v4970, %v6080
        %v6082 = vsel %vm3720, %v4979, %v6081
        %v6083 = vsel %vm3722, %v4988, %v6082
        %v6084 = vsel %vm3724, %v4997, %v6083
        %v6085 = vsel %vm3712, %v5015, %v5006
        %v6086 = vsel %vm3714, %v5024, %v6085
        %v6087 = vsel %vm3716, %v5033, %v6086
        %v6088 = vsel %vm3718, %v5042, %v6087
        %v6089 = vsel %vm3720, %v5051, %v6088
        %v6090 = vsel %vm3722, %v5060, %v6089
        %v6091 = vsel %vm3724, %v5069, %v6090
        %v6092 = vsel %vm3712, %v5087, %v5078
        %v6093 = vsel %vm3714, %v5096, %v6092
        %v6094 = vsel %vm3716, %v5105, %v6093
        %v6095 = vsel %vm3718, %v5114, %v6094
        %v6096 = vsel %vm3720, %v5123, %v6095
        %v6097 = vsel %vm3722, %v5132, %v6096
        %v6098 = vsel %vm3724, %v5141, %v6097
        %v6099 = vsel %vm3712, %v5159, %v5150
        %v6100 = vsel %vm3714, %v5168, %v6099
        %v6101 = vsel %vm3716, %v5177, %v6100
        %v6102 = vsel %vm3718, %v5186, %v6101
        %v6103 = vsel %vm3720, %v5195, %v6102
        %v6104 = vsel %vm3722, %v5204, %v6103
        %v6105 = vsel %vm3724, %v5213, %v6104
        %v6106 = vsel %vm3712, %v5231, %v5222
        %v6107 = vsel %vm3714, %v5240, %v6106
        %v6108 = vsel %vm3716, %v5249, %v6107
        %v6109 = vsel %vm3718, %v5258, %v6108
        %v6110 = vsel %vm3720, %v5267, %v6109
        %v6111 = vsel %vm3722, %v5276, %v6110
        %v6112 = vsel %vm3724, %v5285, %v6111
        %v6113 = vsel %vm3712, %v5303, %v5294
        %v6114 = vsel %vm3714, %v5312, %v6113
        %v6115 = vsel %vm3716, %v5321, %v6114
        %v6116 = vsel %vm3718, %v5330, %v6115
        %v6117 = vsel %vm3720, %v5339, %v6116
        %v6118 = vsel %vm3722, %v5348, %v6117
        %v6119 = vsel %vm3724, %v5357, %v6118
        %v6120 = vsel %vm3712, %v5375, %v5366
        %v6121 = vsel %vm3714, %v5384, %v6120
        %v6122 = vsel %vm3716, %v5393, %v6121
        %v6123 = vsel %vm3718, %v5402, %v6122
        %v6124 = vsel %vm3720, %v5411, %v6123
        %v6125 = vsel %vm3722, %v5420, %v6124
        %v6126 = vsel %vm3724, %v5429, %v6125
        %v6127 = vsel %vm3712, %v5447, %v5438
        %v6128 = vsel %vm3714, %v5456, %v6127
        %v6129 = vsel %vm3716, %v5465, %v6128
        %v6130 = vsel %vm3718, %v5474, %v6129
        %v6131 = vsel %vm3720, %v5483, %v6130
        %v6132 = vsel %vm3722, %v5492, %v6131
        %v6133 = vsel %vm3724, %v5501, %v6132
        %v6134 = vsel %vm3712, %v5519, %v5510
        %v6135 = vsel %vm3714, %v5528, %v6134
        %v6136 = vsel %vm3716, %v5537, %v6135
        %v6137 = vsel %vm3718, %v5546, %v6136
        %v6138 = vsel %vm3720, %v5555, %v6137
        %v6139 = vsel %vm3722, %v5564, %v6138
        %v6140 = vsel %vm3724, %v5573, %v6139
        %v6141 = vsel %vm3712, %v5591, %v5582
        %v6142 = vsel %vm3714, %v5600, %v6141
        %v6143 = vsel %vm3716, %v5609, %v6142
        %v6144 = vsel %vm3718, %v5618, %v6143
        %v6145 = vsel %vm3720, %v5627, %v6144
        %v6146 = vsel %vm3722, %v5636, %v6145
        %v6147 = vsel %vm3724, %v5645, %v6146
        %v6148 = vsel %vm3712, %v5663, %v5654
        %v6149 = vsel %vm3714, %v5672, %v6148
        %v6150 = vsel %vm3716, %v5681, %v6149
        %v6151 = vsel %vm3718, %v5690, %v6150
        %v6152 = vsel %vm3720, %v5699, %v6151
        %v6153 = vsel %vm3722, %v5708, %v6152
        %v6154 = vsel %vm3724, %v5717, %v6153
        %v6155 = vsel %vm3712, %v5735, %v5726
        %v6156 = vsel %vm3714, %v5744, %v6155
        %v6157 = vsel %vm3716, %v5753, %v6156
        %v6158 = vsel %vm3718, %v5762, %v6157
        %v6159 = vsel %vm3720, %v5771, %v6158
        %v6160 = vsel %vm3722, %v5780, %v6159
        %v6161 = vsel %vm3724, %v5789, %v6160
        %v6162 = vsel %vm3712, %v5807, %v5798
        %v6163 = vsel %vm3714, %v5816, %v6162
        %v6164 = vsel %vm3716, %v5825, %v6163
        %v6165 = vsel %vm3718, %v5834, %v6164
        %v6166 = vsel %vm3720, %v5843, %v6165
        %v6167 = vsel %vm3722, %v5852, %v6166
        %v6168 = vsel %vm3724, %v5861, %v6167
        %v6169 = vsel %vm3712, %v5879, %v5870
        %v6170 = vsel %vm3714, %v5888, %v6169
        %v6171 = vsel %vm3716, %v5897, %v6170
        %v6172 = vsel %vm3718, %v5906, %v6171
        %v6173 = vsel %vm3720, %v5915, %v6172
        %v6174 = vsel %vm3722, %v5924, %v6173
        %v6175 = vsel %vm3724, %v5933, %v6174
        %v6176 = vsel %vm3712, %v5951, %v5942
        %v6177 = vsel %vm3714, %v5960, %v6176
        %v6178 = vsel %vm3716, %v5969, %v6177
        %v6179 = vsel %vm3718, %v5978, %v6178
        %v6180 = vsel %vm3720, %v5987, %v6179
        %v6181 = vsel %vm3722, %v5996, %v6180
        %v6182 = vsel %vm3724, %v6005, %v6181
        %v6183 = vsel %vm3712, %v6023, %v6014
        %v6184 = vsel %vm3714, %v6032, %v6183
        %v6185 = vsel %vm3716, %v6041, %v6184
        %v6186 = vsel %vm3718, %v6050, %v6185
        %v6187 = vsel %vm3720, %v6059, %v6186
        %v6188 = vsel %vm3722, %v6068, %v6187
        %v6189 = vsel %vm3724, %v6077, %v6188
        %v6190 = vsel %vm414, %v6084, 0
        %v6191 = vand.u32 %v6190, 65535
        %v6192 = vshrl.u32 %v6190, 16
        %v6193 = vcvt.s32.f32 %v6191
        %v6194 = vcvt.s32.f32 %v6192
        %6195 = vadd.xlane.f32.xlu0 %v6193
        %v6196 = vpop.xlane.xlu0 %6195
        %6197 = vadd.xlane.f32.xlu0 %v6194
        %v6198 = vpop.xlane.xlu0 %6197
        %v6199 = vcvt.f32.s32 %v6196
        %v6200 = vcvt.f32.s32 %v6198
        %v6201 = vshll.u32 %v6200, 16
        %v6202 = vadd.s32 %v6201, %v6199
        %v6203 = vsel %vm414, %v6091, 0
        %v6204 = vand.u32 %v6203, 65535
        %v6205 = vshrl.u32 %v6203, 16
        %v6206 = vcvt.s32.f32 %v6204
        %v6207 = vcvt.s32.f32 %v6205
        %6208 = vadd.xlane.f32.xlu0 %v6206
        %v6209 = vpop.xlane.xlu0 %6208
        %6210 = vadd.xlane.f32.xlu0 %v6207
        %v6211 = vpop.xlane.xlu0 %6210
        %v6212 = vcvt.f32.s32 %v6209
        %v6213 = vcvt.f32.s32 %v6211
        %v6214 = vshll.u32 %v6213, 16
        %v6215 = vadd.s32 %v6214, %v6212
        %v6216 = vsel %vm414, %v6098, 0
        %v6217 = vand.u32 %v6216, 65535
        %v6218 = vshrl.u32 %v6216, 16
        %v6219 = vcvt.s32.f32 %v6217
        %v6220 = vcvt.s32.f32 %v6218
        %6221 = vadd.xlane.f32.xlu0 %v6219
        %v6222 = vpop.xlane.xlu0 %6221
        %6223 = vadd.xlane.f32.xlu0 %v6220
        %v6224 = vpop.xlane.xlu0 %6223
        %v6225 = vcvt.f32.s32 %v6222
        %v6226 = vcvt.f32.s32 %v6224
        %v6227 = vshll.u32 %v6226, 16
        %v6228 = vadd.s32 %v6227, %v6225
        %v6229 = vsel %vm414, %v6105, 0
        %v6230 = vand.u32 %v6229, 65535
        %v6231 = vshrl.u32 %v6229, 16
        %v6232 = vcvt.s32.f32 %v6230
        %v6233 = vcvt.s32.f32 %v6231
        %6234 = vadd.xlane.f32.xlu0 %v6232
        %v6235 = vpop.xlane.xlu0 %6234
        %6236 = vadd.xlane.f32.xlu0 %v6233
        %v6237 = vpop.xlane.xlu0 %6236
        %v6238 = vcvt.f32.s32 %v6235
        %v6239 = vcvt.f32.s32 %v6237
        %v6240 = vshll.u32 %v6239, 16
        %v6241 = vadd.s32 %v6240, %v6238
        %v6242 = vsel %vm414, %v6112, 0
        %v6243 = vand.u32 %v6242, 65535
        %v6244 = vshrl.u32 %v6242, 16
        %v6245 = vcvt.s32.f32 %v6243
        %v6246 = vcvt.s32.f32 %v6244
        %6247 = vadd.xlane.f32.xlu0 %v6245
        %v6248 = vpop.xlane.xlu0 %6247
        %6249 = vadd.xlane.f32.xlu0 %v6246
        %v6250 = vpop.xlane.xlu0 %6249
        %v6251 = vcvt.f32.s32 %v6248
        %v6252 = vcvt.f32.s32 %v6250
        %v6253 = vshll.u32 %v6252, 16
        %v6254 = vadd.s32 %v6253, %v6251
        %v6255 = vsel %vm414, %v6119, 0
        %v6256 = vand.u32 %v6255, 65535
        %v6257 = vshrl.u32 %v6255, 16
        %v6258 = vcvt.s32.f32 %v6256
        %v6259 = vcvt.s32.f32 %v6257
        %6260 = vadd.xlane.f32.xlu0 %v6258
        %v6261 = vpop.xlane.xlu0 %6260
        %6262 = vadd.xlane.f32.xlu0 %v6259
        %v6263 = vpop.xlane.xlu0 %6262
        %v6264 = vcvt.f32.s32 %v6261
        %v6265 = vcvt.f32.s32 %v6263
        %v6266 = vshll.u32 %v6265, 16
        %v6267 = vadd.s32 %v6266, %v6264
        %v6268 = vsel %vm414, %v6126, 0
        %v6269 = vand.u32 %v6268, 65535
        %v6270 = vshrl.u32 %v6268, 16
        %v6271 = vcvt.s32.f32 %v6269
        %v6272 = vcvt.s32.f32 %v6270
        %6273 = vadd.xlane.f32.xlu0 %v6271
        %v6274 = vpop.xlane.xlu0 %6273
        %6275 = vadd.xlane.f32.xlu0 %v6272
        %v6276 = vpop.xlane.xlu0 %6275
        %v6277 = vcvt.f32.s32 %v6274
        %v6278 = vcvt.f32.s32 %v6276
        %v6279 = vshll.u32 %v6278, 16
        %v6280 = vadd.s32 %v6279, %v6277
        %v6281 = vsel %vm414, %v6133, 0
        %v6282 = vand.u32 %v6281, 65535
        %v6283 = vshrl.u32 %v6281, 16
        %v6284 = vcvt.s32.f32 %v6282
        %v6285 = vcvt.s32.f32 %v6283
        %6286 = vadd.xlane.f32.xlu0 %v6284
        %v6287 = vpop.xlane.xlu0 %6286
        %6288 = vadd.xlane.f32.xlu0 %v6285
        %v6289 = vpop.xlane.xlu0 %6288
        %v6290 = vcvt.f32.s32 %v6287
        %v6291 = vcvt.f32.s32 %v6289
        %v6292 = vshll.u32 %v6291, 16
        %v6293 = vadd.s32 %v6292, %v6290
        %v6294 = vsel %vm414, %v6140, 0
        %v6295 = vand.u32 %v6294, 65535
        %v6296 = vshrl.u32 %v6294, 16
        %v6297 = vcvt.s32.f32 %v6295
        %v6298 = vcvt.s32.f32 %v6296
        %6299 = vadd.xlane.f32.xlu0 %v6297
        %v6300 = vpop.xlane.xlu0 %6299
        %6301 = vadd.xlane.f32.xlu0 %v6298
        %v6302 = vpop.xlane.xlu0 %6301
        %v6303 = vcvt.f32.s32 %v6300
        %v6304 = vcvt.f32.s32 %v6302
        %v6305 = vshll.u32 %v6304, 16
        %v6306 = vadd.s32 %v6305, %v6303
        %v6307 = vsel %vm414, %v6147, 0
        %v6308 = vand.u32 %v6307, 65535
        %v6309 = vshrl.u32 %v6307, 16
        %v6310 = vcvt.s32.f32 %v6308
        %v6311 = vcvt.s32.f32 %v6309
        %6312 = vadd.xlane.f32.xlu0 %v6310
        %v6313 = vpop.xlane.xlu0 %6312
        %6314 = vadd.xlane.f32.xlu0 %v6311
        %v6315 = vpop.xlane.xlu0 %6314
        %v6316 = vcvt.f32.s32 %v6313
        %v6317 = vcvt.f32.s32 %v6315
        %v6318 = vshll.u32 %v6317, 16
        %v6319 = vadd.s32 %v6318, %v6316
        %v6320 = vsel %vm414, %v6154, 0
        %v6321 = vand.u32 %v6320, 65535
        %v6322 = vshrl.u32 %v6320, 16
        %v6323 = vcvt.s32.f32 %v6321
        %v6324 = vcvt.s32.f32 %v6322
        %6325 = vadd.xlane.f32.xlu0 %v6323
        %v6326 = vpop.xlane.xlu0 %6325
        %6327 = vadd.xlane.f32.xlu0 %v6324
        %v6328 = vpop.xlane.xlu0 %6327
        %v6329 = vcvt.f32.s32 %v6326
        %v6330 = vcvt.f32.s32 %v6328
        %v6331 = vshll.u32 %v6330, 16
        %v6332 = vadd.s32 %v6331, %v6329
        %v6333 = vsel %vm414, %v6161, 0
        %v6334 = vand.u32 %v6333, 65535
        %v6335 = vshrl.u32 %v6333, 16
        %v6336 = vcvt.s32.f32 %v6334
        %v6337 = vcvt.s32.f32 %v6335
        %6338 = vadd.xlane.f32.xlu0 %v6336
        %v6339 = vpop.xlane.xlu0 %6338
        %6340 = vadd.xlane.f32.xlu0 %v6337
        %v6341 = vpop.xlane.xlu0 %6340
        %v6342 = vcvt.f32.s32 %v6339
        %v6343 = vcvt.f32.s32 %v6341
        %v6344 = vshll.u32 %v6343, 16
        %v6345 = vadd.s32 %v6344, %v6342
        %v6346 = vsel %vm414, %v6168, 0
        %v6347 = vand.u32 %v6346, 65535
        %v6348 = vshrl.u32 %v6346, 16
        %v6349 = vcvt.s32.f32 %v6347
        %v6350 = vcvt.s32.f32 %v6348
        %6351 = vadd.xlane.f32.xlu0 %v6349
        %v6352 = vpop.xlane.xlu0 %6351
        %6353 = vadd.xlane.f32.xlu0 %v6350
        %v6354 = vpop.xlane.xlu0 %6353
        %v6355 = vcvt.f32.s32 %v6352
        %v6356 = vcvt.f32.s32 %v6354
        %v6357 = vshll.u32 %v6356, 16
        %v6358 = vadd.s32 %v6357, %v6355
        %v6359 = vsel %vm414, %v6175, 0
        %v6360 = vand.u32 %v6359, 65535
        %v6361 = vshrl.u32 %v6359, 16
        %v6362 = vcvt.s32.f32 %v6360
        %v6363 = vcvt.s32.f32 %v6361
        %6364 = vadd.xlane.f32.xlu0 %v6362
        %v6365 = vpop.xlane.xlu0 %6364
        %6366 = vadd.xlane.f32.xlu0 %v6363
        %v6367 = vpop.xlane.xlu0 %6366
        %v6368 = vcvt.f32.s32 %v6365
        %v6369 = vcvt.f32.s32 %v6367
        %v6370 = vshll.u32 %v6369, 16
        %v6371 = vadd.s32 %v6370, %v6368
        %v6372 = vsel %vm414, %v6182, 0
        %v6373 = vand.u32 %v6372, 65535
        %v6374 = vshrl.u32 %v6372, 16
        %v6375 = vcvt.s32.f32 %v6373
        %v6376 = vcvt.s32.f32 %v6374
        %6377 = vadd.xlane.f32.xlu0 %v6375
        %v6378 = vpop.xlane.xlu0 %6377
        %6379 = vadd.xlane.f32.xlu0 %v6376
        %v6380 = vpop.xlane.xlu0 %6379
        %v6381 = vcvt.f32.s32 %v6378
        %v6382 = vcvt.f32.s32 %v6380
        %v6383 = vshll.u32 %v6382, 16
        %v6384 = vadd.s32 %v6383, %v6381
        %v6385 = vsel %vm414, %v6189, 0
        %v6386 = vand.u32 %v6385, 65535
        %v6387 = vshrl.u32 %v6385, 16
        %v6388 = vcvt.s32.f32 %v6386
        %v6389 = vcvt.s32.f32 %v6387
        %6390 = vadd.xlane.f32.xlu0 %v6388
        %v6391 = vpop.xlane.xlu0 %6390
        %6392 = vadd.xlane.f32.xlu0 %v6389
        %v6393 = vpop.xlane.xlu0 %6392
        %v6394 = vcvt.f32.s32 %v6391
        %v6395 = vcvt.f32.s32 %v6393
        %v6396 = vshll.u32 %v6395, 16
        %v6397 = vadd.s32 %v6396, %v6394
        %v6398 = vsel %vm434, 1, 0
        %v6399 = vsel %vm435, 1, 0
        %vm6400 = vcmp.eq.s32.totalorder %v6398, 1
        %vm6401 = vcmp.eq.s32.totalorder %v6399, 1
        %v6418 = vlaneseq
        %v6419 = vshrl.u32 %v6418, 7
        %v6420 = vsub.s32 %v409, %v6419
        %v6421 = vrot.slane %v3849, %v6420
        %v6422 = vlaneseq
        %v6423 = vshrl.u32 %v6422, 7
        %v6424 = vsub.s32 %v2562, %v6423
        %v6425 = vrot.slane %v3852, %v6424
        %v6426 = vsel %vm2567, %v6425, %v6421
        %v6427 = vlaneseq
        %v6428 = vshrl.u32 %v6427, 7
        %v6429 = vsub.s32 %v409, %v6428
        %v6430 = vrot.slane %v3855, %v6429
        %v6431 = vlaneseq
        %v6432 = vshrl.u32 %v6431, 7
        %v6433 = vsub.s32 %v2562, %v6432
        %v6434 = vrot.slane %v3858, %v6433
        %v6435 = vsel %vm2567, %v6434, %v6430
        %v6436 = vlaneseq
        %v6437 = vshrl.u32 %v6436, 7
        %v6438 = vsub.s32 %v409, %v6437
        %v6439 = vrot.slane %v3861, %v6438
        %v6440 = vlaneseq
        %v6441 = vshrl.u32 %v6440, 7
        %v6442 = vsub.s32 %v2562, %v6441
        %v6443 = vrot.slane %v3864, %v6442
        %v6444 = vsel %vm2567, %v6443, %v6439
        %v6445 = vlaneseq
        %v6446 = vshrl.u32 %v6445, 7
        %v6447 = vsub.s32 %v409, %v6446
        %v6448 = vrot.slane %v3867, %v6447
        %v6449 = vlaneseq
        %v6450 = vshrl.u32 %v6449, 7
        %v6451 = vsub.s32 %v2562, %v6450
        %v6452 = vrot.slane %v3870, %v6451
        %v6453 = vsel %vm2567, %v6452, %v6448
        %v6454 = vlaneseq
        %v6455 = vshrl.u32 %v6454, 7
        %v6456 = vsub.s32 %v409, %v6455
        %v6457 = vrot.slane %v3873, %v6456
        %v6458 = vlaneseq
        %v6459 = vshrl.u32 %v6458, 7
        %v6460 = vsub.s32 %v2562, %v6459
        %v6461 = vrot.slane %v3876, %v6460
        %v6462 = vsel %vm2567, %v6461, %v6457
        %v6463 = vlaneseq
        %v6464 = vshrl.u32 %v6463, 7
        %v6465 = vsub.s32 %v409, %v6464
        %v6466 = vrot.slane %v3879, %v6465
        %v6467 = vlaneseq
        %v6468 = vshrl.u32 %v6467, 7
        %v6469 = vsub.s32 %v2562, %v6468
        %v6470 = vrot.slane %v3882, %v6469
        %v6471 = vsel %vm2567, %v6470, %v6466
        %v6472 = vlaneseq
        %v6473 = vshrl.u32 %v6472, 7
        %v6474 = vsub.s32 %v409, %v6473
        %v6475 = vrot.slane %v3885, %v6474
        %v6476 = vlaneseq
        %v6477 = vshrl.u32 %v6476, 7
        %v6478 = vsub.s32 %v2562, %v6477
        %v6479 = vrot.slane %v3888, %v6478
        %v6480 = vsel %vm2567, %v6479, %v6475
        %v6481 = vlaneseq
        %v6482 = vshrl.u32 %v6481, 7
        %v6483 = vsub.s32 %v409, %v6482
        %v6484 = vrot.slane %v3891, %v6483
        %v6485 = vlaneseq
        %v6486 = vshrl.u32 %v6485, 7
        %v6487 = vsub.s32 %v2562, %v6486
        %v6488 = vrot.slane %v3894, %v6487
        %v6489 = vsel %vm2567, %v6488, %v6484
        %v6490 = vsel %vm3714, %v6426, %v6426
        %v6491 = vsel %vm3716, %v6426, %v6490
        %v6492 = vsel %vm3718, %v6426, %v6491
        %v6493 = vsel %vm3720, %v6426, %v6492
        %v6494 = vsel %vm3722, %v6426, %v6493
        %v6495 = vsel %vm3724, %v6426, %v6494
        %v6496 = vsel %vm3714, %v6435, %v6435
        %v6497 = vsel %vm3716, %v6435, %v6496
        %v6498 = vsel %vm3718, %v6435, %v6497
        %v6499 = vsel %vm3720, %v6435, %v6498
        %v6500 = vsel %vm3722, %v6435, %v6499
        %v6501 = vsel %vm3724, %v6435, %v6500
        %v6502 = vsel %vm3714, %v6444, %v6444
        %v6503 = vsel %vm3716, %v6444, %v6502
        %v6504 = vsel %vm3718, %v6444, %v6503
        %v6505 = vsel %vm3720, %v6444, %v6504
        %v6506 = vsel %vm3722, %v6444, %v6505
        %v6507 = vsel %vm3724, %v6444, %v6506
        %v6508 = vsel %vm3714, %v6453, %v6453
        %v6509 = vsel %vm3716, %v6453, %v6508
        %v6510 = vsel %vm3718, %v6453, %v6509
        %v6511 = vsel %vm3720, %v6453, %v6510
        %v6512 = vsel %vm3722, %v6453, %v6511
        %v6513 = vsel %vm3724, %v6453, %v6512
        %v6514 = vsel %vm3714, %v6462, %v6462
        %v6515 = vsel %vm3716, %v6462, %v6514
        %v6516 = vsel %vm3718, %v6462, %v6515
        %v6517 = vsel %vm3720, %v6462, %v6516
        %v6518 = vsel %vm3722, %v6462, %v6517
        %v6519 = vsel %vm3724, %v6462, %v6518
        %v6520 = vsel %vm3714, %v6471, %v6471
        %v6521 = vsel %vm3716, %v6471, %v6520
        %v6522 = vsel %vm3718, %v6471, %v6521
        %v6523 = vsel %vm3720, %v6471, %v6522
        %v6524 = vsel %vm3722, %v6471, %v6523
        %v6525 = vsel %vm3724, %v6471, %v6524
        %v6526 = vsel %vm3714, %v6480, %v6480
        %v6527 = vsel %vm3716, %v6480, %v6526
        %v6528 = vsel %vm3718, %v6480, %v6527
        %v6529 = vsel %vm3720, %v6480, %v6528
        %v6530 = vsel %vm3722, %v6480, %v6529
        %v6531 = vsel %vm3724, %v6480, %v6530
        %v6532 = vsel %vm3714, %v6489, %v6489
        %v6533 = vsel %vm3716, %v6489, %v6532
        %v6534 = vsel %vm3718, %v6489, %v6533
        %v6535 = vsel %vm3720, %v6489, %v6534
        %v6536 = vsel %vm3722, %v6489, %v6535
        %v6537 = vsel %vm3724, %v6489, %v6536
        %v6546 = vsel %vm6400, %v6495, 0.0
        %v6547 = vsel %vm6401, %v6495, 0.0
        %v6548 = vsel %vm6400, %v6501, 0.0
        %v6549 = vsel %vm6401, %v6501, 0.0
        %v6550 = vsel %vm6400, %v6507, 0.0
        %v6551 = vsel %vm6401, %v6507, 0.0
        %v6552 = vsel %vm6400, %v6513, 0.0
        %v6553 = vsel %vm6401, %v6513, 0.0
        %v6554 = vsel %vm6400, %v6519, 0.0
        %v6555 = vsel %vm6401, %v6519, 0.0
        %v6556 = vsel %vm6400, %v6525, 0.0
        %v6557 = vsel %vm6401, %v6525, 0.0
        %v6558 = vsel %vm6400, %v6531, 0.0
        %v6559 = vsel %vm6401, %v6531, 0.0
        %v6560 = vsel %vm6400, %v6537, 0.0
        %v6561 = vsel %vm6401, %v6537, 0.0
        %v6562 = vsel %vm414, %v6546, 0.0
        %6563 = vadd.xlane.f32.xlu0 %v6562
        %v6564 = vpop.xlane.xlu0 %6563
        %v6565 = vsel %vm414, %v6547, 0.0
        %6566 = vadd.xlane.f32.xlu0 %v6565
        %v6567 = vpop.xlane.xlu0 %6566
        %v6568 = vsel %vm414, %v6548, 0.0
        %6569 = vadd.xlane.f32.xlu0 %v6568
        %v6570 = vpop.xlane.xlu0 %6569
        %v6571 = vsel %vm414, %v6549, 0.0
        %6572 = vadd.xlane.f32.xlu0 %v6571
        %v6573 = vpop.xlane.xlu0 %6572
        %v6574 = vsel %vm414, %v6550, 0.0
        %6575 = vadd.xlane.f32.xlu0 %v6574
        %v6576 = vpop.xlane.xlu0 %6575
        %v6577 = vsel %vm414, %v6551, 0.0
        %6578 = vadd.xlane.f32.xlu0 %v6577
        %v6579 = vpop.xlane.xlu0 %6578
        %v6580 = vsel %vm414, %v6552, 0.0
        %6581 = vadd.xlane.f32.xlu0 %v6580
        %v6582 = vpop.xlane.xlu0 %6581
        %v6583 = vsel %vm414, %v6553, 0.0
        %6584 = vadd.xlane.f32.xlu0 %v6583
        %v6585 = vpop.xlane.xlu0 %6584
        %v6586 = vsel %vm414, %v6554, 0.0
        %6587 = vadd.xlane.f32.xlu0 %v6586
        %v6588 = vpop.xlane.xlu0 %6587
        %v6589 = vsel %vm414, %v6555, 0.0
        %6590 = vadd.xlane.f32.xlu0 %v6589
        %v6591 = vpop.xlane.xlu0 %6590
        %v6592 = vsel %vm414, %v6556, 0.0
        %6593 = vadd.xlane.f32.xlu0 %v6592
        %v6594 = vpop.xlane.xlu0 %6593
        %v6595 = vsel %vm414, %v6557, 0.0
        %6596 = vadd.xlane.f32.xlu0 %v6595
        %v6597 = vpop.xlane.xlu0 %6596
        %v6598 = vsel %vm414, %v6558, 0.0
        %6599 = vadd.xlane.f32.xlu0 %v6598
        %v6600 = vpop.xlane.xlu0 %6599
        %v6601 = vsel %vm414, %v6559, 0.0
        %6602 = vadd.xlane.f32.xlu0 %v6601
        %v6603 = vpop.xlane.xlu0 %6602
        %v6604 = vsel %vm414, %v6560, 0.0
        %6605 = vadd.xlane.f32.xlu0 %v6604
        %v6606 = vpop.xlane.xlu0 %6605
        %v6607 = vsel %vm414, %v6561, 0.0
        %6608 = vadd.xlane.f32.xlu0 %v6607
        %v6609 = vpop.xlane.xlu0 %6608
        %v6610 = vld [vmem:[%s5] sm:$0x1]
        %v6612 = vlaneseq
        %v6613 = vshrl.u32 %v6612, 7
        %v6614 = vsub.s32 0, %v6613
        %v6615 = vrot.slane %v6610, %v6614
        %6618 = vbcast.lane.b32.xlu0 %v6615, 256
        %v6619 = vpop.permute.xlu0 %6618
        %s6621 = sor.u32 256, 8
        %6622 = vbcast.lane.b32.xlu0 %v6615, %s6621
        %v6623 = vpop.permute.xlu0 %6622
        %v6626 = vadd.f32 %v6564, %v6619
        %v6627 = vadd.f32 %v6567, %v6623
        %v6628 = vadd.f32 %v6570, %v6619
        %v6629 = vadd.f32 %v6573, %v6623
        %v6630 = vadd.f32 %v6576, %v6619
        %v6631 = vadd.f32 %v6579, %v6623
        %v6632 = vadd.f32 %v6582, %v6619
        %v6633 = vadd.f32 %v6585, %v6623
        %v6634 = vadd.f32 %v6588, %v6619
        %v6635 = vadd.f32 %v6591, %v6623
        %v6636 = vadd.f32 %v6594, %v6619
        %v6637 = vadd.f32 %v6597, %v6623
        %v6638 = vadd.f32 %v6600, %v6619
        %v6639 = vadd.f32 %v6603, %v6623
        %v6640 = vadd.f32 %v6606, %v6619
        %v6641 = vadd.f32 %v6609, %v6623
        %v6642 = vstv %s320
        %vm6643 = vcmp.le.f32.partialorder %v6626, %v6642
        %vm6644 = vcmp.le.f32.partialorder %v6627, %v6642
        %vm6645 = vcmp.le.f32.partialorder %v6628, %v6642
        %vm6646 = vcmp.le.f32.partialorder %v6629, %v6642
        %vm6647 = vcmp.le.f32.partialorder %v6630, %v6642
        %vm6648 = vcmp.le.f32.partialorder %v6631, %v6642
        %vm6649 = vcmp.le.f32.partialorder %v6632, %v6642
        %vm6650 = vcmp.le.f32.partialorder %v6633, %v6642
        %vm6651 = vcmp.le.f32.partialorder %v6634, %v6642
        %vm6652 = vcmp.le.f32.partialorder %v6635, %v6642
        %vm6653 = vcmp.le.f32.partialorder %v6636, %v6642
        %vm6654 = vcmp.le.f32.partialorder %v6637, %v6642
        %vm6655 = vcmp.le.f32.partialorder %v6638, %v6642
        %vm6656 = vcmp.le.f32.partialorder %v6639, %v6642
        %vm6657 = vcmp.le.f32.partialorder %v6640, %v6642
        %vm6658 = vcmp.le.f32.partialorder %v6641, %v6642
        %v6659 = vsel %vm410, 1, 0
        %6661 = vbcast.lane.b32.xlu0 %v6659, 256
        %v6662 = vpop.permute.xlu0 %6661
        %s6664 = sor.u32 256, 8
        %6665 = vbcast.lane.b32.xlu0 %v6659, %s6664
        %v6666 = vpop.permute.xlu0 %6665
        %vm6667 = vcmp.ne.s32.totalorder %v6662, 0
        %vm6668 = vcmp.ne.s32.totalorder %v6666, 0
        %vm6669 = vmand %vm6643, %vm6667
        %vm6670 = vmand %vm6644, %vm6668
        %vm6671 = vmand %vm6645, %vm6667
        %vm6672 = vmand %vm6646, %vm6668
        %vm6673 = vmand %vm6647, %vm6667
        %vm6674 = vmand %vm6648, %vm6668
        %vm6675 = vmand %vm6649, %vm6667
        %vm6676 = vmand %vm6650, %vm6668
        %vm6677 = vmand %vm6651, %vm6667
        %vm6678 = vmand %vm6652, %vm6668
        %vm6679 = vmand %vm6653, %vm6667
        %vm6680 = vmand %vm6654, %vm6668
        %vm6681 = vmand %vm6655, %vm6667
        %vm6682 = vmand %vm6656, %vm6668
        %vm6683 = vmand %vm6657, %vm6667
        %vm6684 = vmand %vm6658, %vm6668
        %v6685 = vsel %vm6669, 1, 0
        %v6686 = vsel %vm6670, 1, 0
        %v6687 = vsel %vm6671, 1, 0
        %v6688 = vsel %vm6672, 1, 0
        %v6689 = vsel %vm6673, 1, 0
        %v6690 = vsel %vm6674, 1, 0
        %v6691 = vsel %vm6675, 1, 0
        %v6692 = vsel %vm6676, 1, 0
        %v6693 = vsel %vm6677, 1, 0
        %v6694 = vsel %vm6678, 1, 0
        %v6695 = vsel %vm6679, 1, 0
        %v6696 = vsel %vm6680, 1, 0
        %v6697 = vsel %vm6681, 1, 0
        %v6698 = vsel %vm6682, 1, 0
        %v6699 = vsel %vm6683, 1, 0
        %v6700 = vsel %vm6684, 1, 0
        %6701 = vset.pattern.permute.xlu0 0
        %6702 = vperm.xlu0 %6701, %v6685
        %v6703 = vpop.permute.xlu0 %6702
        %6704 = vset.pattern.permute.xlu0 0
        %6705 = vperm.xlu0 %6704, %v6686
        %v6706 = vpop.permute.xlu0 %6705
        %6707 = vset.pattern.permute.xlu0 0
        %6708 = vperm.xlu0 %6707, %v6687
        %v6709 = vpop.permute.xlu0 %6708
        %6710 = vset.pattern.permute.xlu0 0
        %6711 = vperm.xlu0 %6710, %v6688
        %v6712 = vpop.permute.xlu0 %6711
        %6713 = vset.pattern.permute.xlu0 0
        %6714 = vperm.xlu0 %6713, %v6689
        %v6715 = vpop.permute.xlu0 %6714
        %6716 = vset.pattern.permute.xlu0 0
        %6717 = vperm.xlu0 %6716, %v6690
        %v6718 = vpop.permute.xlu0 %6717
        %6719 = vset.pattern.permute.xlu0 0
        %6720 = vperm.xlu0 %6719, %v6691
        %v6721 = vpop.permute.xlu0 %6720
        %6722 = vset.pattern.permute.xlu0 0
        %6723 = vperm.xlu0 %6722, %v6692
        %v6724 = vpop.permute.xlu0 %6723
        %6725 = vset.pattern.permute.xlu0 0
        %6726 = vperm.xlu0 %6725, %v6693
        %v6727 = vpop.permute.xlu0 %6726
        %6728 = vset.pattern.permute.xlu0 0
        %6729 = vperm.xlu0 %6728, %v6694
        %v6730 = vpop.permute.xlu0 %6729
        %6731 = vset.pattern.permute.xlu0 0
        %6732 = vperm.xlu0 %6731, %v6695
        %v6733 = vpop.permute.xlu0 %6732
        %6734 = vset.pattern.permute.xlu0 0
        %6735 = vperm.xlu0 %6734, %v6696
        %v6736 = vpop.permute.xlu0 %6735
        %6737 = vset.pattern.permute.xlu0 0
        %6738 = vperm.xlu0 %6737, %v6697
        %v6739 = vpop.permute.xlu0 %6738
        %6740 = vset.pattern.permute.xlu0 0
        %6741 = vperm.xlu0 %6740, %v6698
        %v6742 = vpop.permute.xlu0 %6741
        %6743 = vset.pattern.permute.xlu0 0
        %6744 = vperm.xlu0 %6743, %v6699
        %v6745 = vpop.permute.xlu0 %6744
        %6746 = vset.pattern.permute.xlu0 0
        %6747 = vperm.xlu0 %6746, %v6700
        %v6748 = vpop.permute.xlu0 %6747
        %v6749 = vlaneseq
        %v6750 = vshrl.u32 %v6749, 7
        %v6751 = vsub.s32 %v409, %v6750
        %v6752 = vrot.slane %v6703, %v6751
        %v6753 = vlaneseq
        %v6754 = vshrl.u32 %v6753, 7
        %v6755 = vsub.s32 %v2562, %v6754
        %v6756 = vrot.slane %v6706, %v6755
        %v6757 = vsel %vm2567, %v6756, %v6752
        %v6758 = vlaneseq
        %v6759 = vshrl.u32 %v6758, 7
        %v6760 = vsub.s32 %v409, %v6759
        %v6761 = vrot.slane %v6709, %v6760
        %v6762 = vlaneseq
        %v6763 = vshrl.u32 %v6762, 7
        %v6764 = vsub.s32 %v2562, %v6763
        %v6765 = vrot.slane %v6712, %v6764
        %v6766 = vsel %vm2567, %v6765, %v6761
        %v6767 = vlaneseq
        %v6768 = vshrl.u32 %v6767, 7
        %v6769 = vsub.s32 %v409, %v6768
        %v6770 = vrot.slane %v6715, %v6769
        %v6771 = vlaneseq
        %v6772 = vshrl.u32 %v6771, 7
        %v6773 = vsub.s32 %v2562, %v6772
        %v6774 = vrot.slane %v6718, %v6773
        %v6775 = vsel %vm2567, %v6774, %v6770
        %v6776 = vlaneseq
        %v6777 = vshrl.u32 %v6776, 7
        %v6778 = vsub.s32 %v409, %v6777
        %v6779 = vrot.slane %v6721, %v6778
        %v6780 = vlaneseq
        %v6781 = vshrl.u32 %v6780, 7
        %v6782 = vsub.s32 %v2562, %v6781
        %v6783 = vrot.slane %v6724, %v6782
        %v6784 = vsel %vm2567, %v6783, %v6779
        %v6785 = vlaneseq
        %v6786 = vshrl.u32 %v6785, 7
        %v6787 = vsub.s32 %v409, %v6786
        %v6788 = vrot.slane %v6727, %v6787
        %v6789 = vlaneseq
        %v6790 = vshrl.u32 %v6789, 7
        %v6791 = vsub.s32 %v2562, %v6790
        %v6792 = vrot.slane %v6730, %v6791
        %v6793 = vsel %vm2567, %v6792, %v6788
        %v6794 = vlaneseq
        %v6795 = vshrl.u32 %v6794, 7
        %v6796 = vsub.s32 %v409, %v6795
        %v6797 = vrot.slane %v6733, %v6796
        %v6798 = vlaneseq
        %v6799 = vshrl.u32 %v6798, 7
        %v6800 = vsub.s32 %v2562, %v6799
        %v6801 = vrot.slane %v6736, %v6800
        %v6802 = vsel %vm2567, %v6801, %v6797
        %v6803 = vlaneseq
        %v6804 = vshrl.u32 %v6803, 7
        %v6805 = vsub.s32 %v409, %v6804
        %v6806 = vrot.slane %v6739, %v6805
        %v6807 = vlaneseq
        %v6808 = vshrl.u32 %v6807, 7
        %v6809 = vsub.s32 %v2562, %v6808
        %v6810 = vrot.slane %v6742, %v6809
        %v6811 = vsel %vm2567, %v6810, %v6806
        %v6812 = vlaneseq
        %v6813 = vshrl.u32 %v6812, 7
        %v6814 = vsub.s32 %v409, %v6813
        %v6815 = vrot.slane %v6745, %v6814
        %v6816 = vlaneseq
        %v6817 = vshrl.u32 %v6816, 7
        %v6818 = vsub.s32 %v2562, %v6817
        %v6819 = vrot.slane %v6748, %v6818
        %v6820 = vsel %vm2567, %v6819, %v6815
        %v6821 = vsel %vm3712, %v6766, %v6757
        %v6822 = vsel %vm3714, %v6775, %v6821
        %v6823 = vsel %vm3716, %v6784, %v6822
        %v6824 = vsel %vm3718, %v6793, %v6823
        %v6825 = vsel %vm3720, %v6802, %v6824
        %v6826 = vsel %vm3722, %v6811, %v6825
        %v6827 = vsel %vm3724, %v6820, %v6826
        %v6828 = vsel %vm414, %v6827, 0
        %v6829 = vand.u32 %v6828, 65535
        %v6830 = vshrl.u32 %v6828, 16
        %v6831 = vcvt.s32.f32 %v6829
        %v6832 = vcvt.s32.f32 %v6830
        %6833 = vadd.xlane.f32.xlu0 %v6831
        %v6834 = vpop.xlane.xlu0 %6833
        %6835 = vadd.xlane.f32.xlu0 %v6832
        %v6836 = vpop.xlane.xlu0 %6835
        %v6837 = vcvt.f32.s32 %v6834
        %v6838 = vcvt.f32.s32 %v6836
        %v6839 = vshll.u32 %v6838, 16
        %v6840 = vadd.s32 %v6839, %v6837
        %v6841 = vadd.s32 %v6840, 1
        %vm6842 = vcmp.lt.s32.totalorder %v6841, 16
        %v6843 = vsel %vm6842, %v6841, 16
        %v6844 = vsub.s32 %v6843, 1
        %vm6845 = vcmp.eq.s32.totalorder %v409, %v6844
        %v6846 = vsel %vm3712, %v6435, %v6426
        %v6847 = vsel %vm3714, %v6444, %v6846
        %v6848 = vsel %vm3716, %v6453, %v6847
        %v6849 = vsel %vm3718, %v6462, %v6848
        %v6850 = vsel %vm3720, %v6471, %v6849
        %v6851 = vsel %vm3722, %v6480, %v6850
        %v6852 = vsel %vm3724, %v6489, %v6851
        %v6854 = vsel %vm6845, %v6852, 0.0
        %v6855 = vsel %vm414, %v6854, 0.0
        %6856 = vadd.xlane.f32.xlu0 %v6855
        %v6857 = vpop.xlane.xlu0 %6856
        %v6874 = vlaneseq
        %v6875 = vshrl.u32 %v6874, 7
        %v6876 = vsub.s32 %v409, %v6875
        %v6877 = vrot.slane %v6564, %v6876
        %v6878 = vlaneseq
        %v6879 = vshrl.u32 %v6878, 7
        %v6880 = vsub.s32 %v2562, %v6879
        %v6881 = vrot.slane %v6567, %v6880
        %v6882 = vsel %vm2567, %v6881, %v6877
        %v6883 = vlaneseq
        %v6884 = vshrl.u32 %v6883, 7
        %v6885 = vsub.s32 %v409, %v6884
        %v6886 = vrot.slane %v6570, %v6885
        %v6887 = vlaneseq
        %v6888 = vshrl.u32 %v6887, 7
        %v6889 = vsub.s32 %v2562, %v6888
        %v6890 = vrot.slane %v6573, %v6889
        %v6891 = vsel %vm2567, %v6890, %v6886
        %v6892 = vlaneseq
        %v6893 = vshrl.u32 %v6892, 7
        %v6894 = vsub.s32 %v409, %v6893
        %v6895 = vrot.slane %v6576, %v6894
        %v6896 = vlaneseq
        %v6897 = vshrl.u32 %v6896, 7
        %v6898 = vsub.s32 %v2562, %v6897
        %v6899 = vrot.slane %v6579, %v6898
        %v6900 = vsel %vm2567, %v6899, %v6895
        %v6901 = vlaneseq
        %v6902 = vshrl.u32 %v6901, 7
        %v6903 = vsub.s32 %v409, %v6902
        %v6904 = vrot.slane %v6582, %v6903
        %v6905 = vlaneseq
        %v6906 = vshrl.u32 %v6905, 7
        %v6907 = vsub.s32 %v2562, %v6906
        %v6908 = vrot.slane %v6585, %v6907
        %v6909 = vsel %vm2567, %v6908, %v6904
        %v6910 = vlaneseq
        %v6911 = vshrl.u32 %v6910, 7
        %v6912 = vsub.s32 %v409, %v6911
        %v6913 = vrot.slane %v6588, %v6912
        %v6914 = vlaneseq
        %v6915 = vshrl.u32 %v6914, 7
        %v6916 = vsub.s32 %v2562, %v6915
        %v6917 = vrot.slane %v6591, %v6916
        %v6918 = vsel %vm2567, %v6917, %v6913
        %v6919 = vlaneseq
        %v6920 = vshrl.u32 %v6919, 7
        %v6921 = vsub.s32 %v409, %v6920
        %v6922 = vrot.slane %v6594, %v6921
        %v6923 = vlaneseq
        %v6924 = vshrl.u32 %v6923, 7
        %v6925 = vsub.s32 %v2562, %v6924
        %v6926 = vrot.slane %v6597, %v6925
        %v6927 = vsel %vm2567, %v6926, %v6922
        %v6928 = vlaneseq
        %v6929 = vshrl.u32 %v6928, 7
        %v6930 = vsub.s32 %v409, %v6929
        %v6931 = vrot.slane %v6600, %v6930
        %v6932 = vlaneseq
        %v6933 = vshrl.u32 %v6932, 7
        %v6934 = vsub.s32 %v2562, %v6933
        %v6935 = vrot.slane %v6603, %v6934
        %v6936 = vsel %vm2567, %v6935, %v6931
        %v6937 = vlaneseq
        %v6938 = vshrl.u32 %v6937, 7
        %v6939 = vsub.s32 %v409, %v6938
        %v6940 = vrot.slane %v6606, %v6939
        %v6941 = vlaneseq
        %v6942 = vshrl.u32 %v6941, 7
        %v6943 = vsub.s32 %v2562, %v6942
        %v6944 = vrot.slane %v6609, %v6943
        %v6945 = vsel %vm2567, %v6944, %v6940
        %v6946 = vsel %vm3712, %v6891, %v6882
        %v6947 = vsel %vm3714, %v6900, %v6946
        %v6948 = vsel %vm3716, %v6909, %v6947
        %v6949 = vsel %vm3718, %v6918, %v6948
        %v6950 = vsel %vm3720, %v6927, %v6949
        %v6951 = vsel %vm3722, %v6936, %v6950
        %v6952 = vsel %vm3724, %v6945, %v6951
        %v6954 = vsel %vm6845, %v6952, 0.0
        %v6955 = vsel %vm414, %v6954, 0.0
        %6956 = vadd.xlane.f32.xlu0 %v6955
        %v6957 = vpop.xlane.xlu0 %6956
        %v6958 = vsel %vm6845, %v6615, 0.0
        %v6959 = vsel %vm414, %v6958, 0.0
        %6960 = vadd.xlane.f32.xlu0 %v6959
        %v6961 = vpop.xlane.xlu0 %6960
        %v6962 = vsub.f32 %v6957, %v6857
        %v6963 = vsub.f32 %v6642, %v6962
        %v6964 = vsub.f32 %v6963, %v6961
        %v6965 = vmax.f32 %v6857, 1e-30
        %v6966 = vrcp.pop %v6965
        %v6967 = vmul.f32 %v6964, %v6966
        %v6968 = vld [vmem:[%s314] sm:$0xff]
        %vm6969 = vcmp.ge.f32.partialorder %v6968, %v6967
        %v6970 = vsel %vm6969, 1, 0
        %v6971 = vsub.s32 %v6843, %v6970
        %p6972 = scmp.eq.f32.partialorder %s320, 1.0
        %s6973 = scalar_select %p6972, 1, 0
        %s6974 = ssub.s32 1, %s6973
        %v6975 = vstv %s6974
        %v6976 = vmul.u32 %v6971, %v6975
        %s6977 = smul.u32 %s6973, 16
        %v6978 = vstv %s6977
        %v6979 = vadd.s32 %v6976, %v6978
        %vm6980 = vcmp.gt.s32.totalorder %v6979, 1
        %v6981 = vsel %vm6980, %v6979, 1
        %vm6982 = vcmask 7168
        %6983 = vst.msk [vmem:[%s318] sm:$0xff] %vm6982, %v6981
        %6984 = vst [vmem:[%s300] sm:$0xff] %v409
        %v6985 = vlaneseq
        %v6986 = vshrl.u32 %v6985, 7
        %v6987 = vsub.s32 %v409, %v6986
        %v6988 = vrot.slane %v6202, %v6987
        %v6989 = vlaneseq
        %v6990 = vshrl.u32 %v6989, 7
        %v6991 = vsub.s32 %v2562, %v6990
        %v6992 = vrot.slane %v6215, %v6991
        %v6993 = vsel %vm2567, %v6992, %v6988
        %v6994 = vlaneseq
        %v6995 = vshrl.u32 %v6994, 7
        %v6996 = vsub.s32 %v409, %v6995
        %v6997 = vrot.slane %v6228, %v6996
        %v6998 = vlaneseq
        %v6999 = vshrl.u32 %v6998, 7
        %v7000 = vsub.s32 %v2562, %v6999
        %v7001 = vrot.slane %v6241, %v7000
        %v7002 = vsel %vm2567, %v7001, %v6997
        %v7003 = vlaneseq
        %v7004 = vshrl.u32 %v7003, 7
        %v7005 = vsub.s32 %v409, %v7004
        %v7006 = vrot.slane %v6254, %v7005
        %v7007 = vlaneseq
        %v7008 = vshrl.u32 %v7007, 7
        %v7009 = vsub.s32 %v2562, %v7008
        %v7010 = vrot.slane %v6267, %v7009
        %v7011 = vsel %vm2567, %v7010, %v7006
        %v7012 = vlaneseq
        %v7013 = vshrl.u32 %v7012, 7
        %v7014 = vsub.s32 %v409, %v7013
        %v7015 = vrot.slane %v6280, %v7014
        %v7016 = vlaneseq
        %v7017 = vshrl.u32 %v7016, 7
        %v7018 = vsub.s32 %v2562, %v7017
        %v7019 = vrot.slane %v6293, %v7018
        %v7020 = vsel %vm2567, %v7019, %v7015
        %v7021 = vlaneseq
        %v7022 = vshrl.u32 %v7021, 7
        %v7023 = vsub.s32 %v409, %v7022
        %v7024 = vrot.slane %v6306, %v7023
        %v7025 = vlaneseq
        %v7026 = vshrl.u32 %v7025, 7
        %v7027 = vsub.s32 %v2562, %v7026
        %v7028 = vrot.slane %v6319, %v7027
        %v7029 = vsel %vm2567, %v7028, %v7024
        %v7030 = vlaneseq
        %v7031 = vshrl.u32 %v7030, 7
        %v7032 = vsub.s32 %v409, %v7031
        %v7033 = vrot.slane %v6332, %v7032
        %v7034 = vlaneseq
        %v7035 = vshrl.u32 %v7034, 7
        %v7036 = vsub.s32 %v2562, %v7035
        %v7037 = vrot.slane %v6345, %v7036
        %v7038 = vsel %vm2567, %v7037, %v7033
        %v7039 = vlaneseq
        %v7040 = vshrl.u32 %v7039, 7
        %v7041 = vsub.s32 %v409, %v7040
        %v7042 = vrot.slane %v6358, %v7041
        %v7043 = vlaneseq
        %v7044 = vshrl.u32 %v7043, 7
        %v7045 = vsub.s32 %v2562, %v7044
        %v7046 = vrot.slane %v6371, %v7045
        %v7047 = vsel %vm2567, %v7046, %v7042
        %v7048 = vlaneseq
        %v7049 = vshrl.u32 %v7048, 7
        %v7050 = vsub.s32 %v409, %v7049
        %v7051 = vrot.slane %v6384, %v7050
        %v7052 = vlaneseq
        %v7053 = vshrl.u32 %v7052, 7
        %v7054 = vsub.s32 %v2562, %v7053
        %v7055 = vrot.slane %v6397, %v7054
        %v7056 = vsel %vm2567, %v7055, %v7051
        %v7057 = vsel %vm3712, %v7002, %v6993
        %v7058 = vsel %vm3714, %v7011, %v7057
        %v7059 = vsel %vm3716, %v7020, %v7058
        %v7060 = vsel %vm3718, %v7029, %v7059
        %v7061 = vsel %vm3720, %v7038, %v7060
        %v7062 = vsel %vm3722, %v7047, %v7061
        %v7063 = vsel %vm3724, %v7056, %v7062
        %7064 = vst.msk [vmem:[%s300] sm:$0xff] %vm414, %v7063
        %s7065 = sand.u32 %s155, 1
        %s7066 = scalar_lea.sflag [#allocation5], %s7065
        %s7067 = sand.u32 %s155, 1
        %s7068 = smul.addr %s7067, 8
        %s7069 = scalar_lea.vmem [#allocation4], %s7068
        %s7070 = sand.u32 %s181, 1
        %s7071 = scalar_lea.sflag [#allocation7], %s7070
        %s7072 = sand.u32 %s181, 1
        %s7073 = smul.addr %s7072, 8
        %s7074 = scalar_lea.vmem [#allocation6], %s7073
        %p7075 = scmp.lt.s32.totalorder %s32, 1
        %s7076 = scalar_select %p7075, %s32, 1
        %s7077 = smul.addr %s7076, 8
        %s7078 = scalar_lea.vmem %s8, %s7077
        // Predicated region
        $region41: #{_device_forward.1} parent=39 // pred_check
          %p7079 = pneg %p165
        $region42: #{_device_forward.1} parent=39 // pred_check_branch
          %7081 = sbr.rel (%p7079) target = $region44
        $region43: #{_device_forward.1} parent=39 // pred_region
          %s7083 = ssub.s32 128, 128
          %7084 = vsyncadd %s7066, %s7083
          %s7085 = smul.addr %s32, 128
          %s7086 = scalar_lea.hbm %s6, %s7085
          %s7088 = sshll.u32 %s7069, 4
          %s7089 = int_to_ptr.vmem [resolvable:$true] %s7088
          %7091 = dma.vmem_to_hbm [thread:$0]  %s7089, 128, %s7086, %s7066
        $region44: #{_device_forward.1} parent=39 // pred_fallthru
          _
        // Predicated region
        $region45: #{_device_forward.1} parent=39 // pred_check
          %p7092 = pneg %p191
        $region46: #{_device_forward.1} parent=39 // pred_check_branch
          %7094 = sbr.rel (%p7092) target = $region48
        $region47: #{_device_forward.1} parent=39 // pred_region
          %s7096 = ssub.s32 128, 128
          %7097 = vsyncadd %s7071, %s7096
          %s7098 = smul.addr %s32, 128
          %s7099 = scalar_lea.hbm %s7, %s7098
          %s7101 = sshll.u32 %s7074, 4
          %s7102 = int_to_ptr.vmem [resolvable:$true] %s7101
          %7104 = dma.vmem_to_hbm [thread:$0]  %s7102, 128, %s7099, %s7071
        $region48: #{_device_forward.1} parent=39 // pred_fallthru
          _
        // Predicated region
        $region49: #{_device_forward.1} parent=39 // pred_check
          %p7105 = pneg %p217
        $region50: #{_device_forward.1} parent=39 // pred_check_branch
          %7107 = sbr.rel (%p7105) target = $region52
        $region51: #{_device_forward.1} parent=39 // pred_region
          _
        $region52: #{_device_forward.1} parent=39 // pred_fallthru
          _
      $region40: #{_device_forward.1} parent=5 // pred_fallthru
        _
      %p7108 = scmp.le.s32.totalorder 2, %s27
      // Predicated region
      $region53: #{_device_forward.1} parent=5 // pred_check
        %p7109 = pneg %p7108
      $region54: #{_device_forward.1} parent=5 // pred_check_branch
        %7111 = sbr.rel (%p7109) target = $region56
      $region55: #{_device_forward.1} parent=5 // pred_region
        %s7112 = ssub.s32 %s27, 2
        // Predicated region
        $region57: #{_device_forward.1} parent=55 // pred_check
          %p7113 = pneg %p171
        $region58: #{_device_forward.1} parent=55 // pred_check_branch
          %7115 = sbr.rel (%p7113) target = $region60
        $region59: #{_device_forward.1} parent=55 // pred_region
          %s7116 = sand.u32 %s156, 1
          %s7117 = scalar_lea.sflag [#allocation5], %s7116
          %s7118 = sand.u32 %s156, 1
          %s7119 = smul.addr %s7118, 8
          %s7120 = scalar_lea.vmem [#allocation4], %s7119
          %7121 = dma.done %s7117, 128
        $region60: #{_device_forward.1} parent=55 // pred_fallthru
          _
        // Predicated region
        $region61: #{_device_forward.1} parent=55 // pred_check
          %p7122 = pneg %p197
        $region62: #{_device_forward.1} parent=55 // pred_check_branch
          %7124 = sbr.rel (%p7122) target = $region64
        $region63: #{_device_forward.1} parent=55 // pred_region
          %s7125 = sand.u32 %s182, 1
          %s7126 = scalar_lea.sflag [#allocation7], %s7125
          %s7127 = sand.u32 %s182, 1
          %s7128 = smul.addr %s7127, 8
          %s7129 = scalar_lea.vmem [#allocation6], %s7128
          %7130 = dma.done %s7126, 128
        $region64: #{_device_forward.1} parent=55 // pred_fallthru
          _
        // Predicated region
        $region65: #{_device_forward.1} parent=55 // pred_check
          %p7131 = pneg %p223
        $region66: #{_device_forward.1} parent=55 // pred_check_branch
          %7133 = sbr.rel (%p7131) target = $region68
        $region67: #{_device_forward.1} parent=55 // pred_region
          %p7134 = scmp.lt.s32.totalorder %s33, 1
          %s7135 = scalar_select %p7134, %s33, 1
          %s7136 = smul.addr %s7135, 8
          %s7137 = scalar_lea.vmem %s8, %s7136
        $region68: #{_device_forward.1} parent=55 // pred_fallthru
          _
      $region56: #{_device_forward.1} parent=5 // pred_fallthru
        _
    $region6: #{_device_forward.1} parent=1 // loop_footer
      %s31 = sadd.s32 1, %s27
    $region7: #{_device_forward.1} parent=1 // loop_footer_branch
      %26 = sbr.rel target = $region3
    $region8: #{_device_forward.1} parent=1 // loop_exit
      _
    %7138 = vsyncpa [#allocation5], 1
    %s7139 = scalar_lea.sflag [#allocation5], 1
    %7140 = vsyncpa %s7139, 1
    %7141 = vsyncpa [#allocation7], 1
    %s7142 = scalar_lea.sflag [#allocation7], 1
    %7143 = vsyncpa %s7142, 1

</llo_original>
